<compile_context>
chip_gen: v7x
topology: tpu7x:2x2x1
jax: 0.10.0
libtpu: 0.0.40
codegen_flags: <defaults>
</compile_context>

<pallas_src>
import functools

import numpy as np

import jax
import jax.numpy as jnp
from jax import lax
from jax.experimental import pallas as pl
from jax.experimental.pallas import tpu as pltpu


# ------------------------------- Pallas kernel --------------------------------


def _conv_in_lrelu_kernel(x_ref, band_ref, sel_ref, selt_ref, o_ref, pad_ref, *,
                          D, H, W, Cin, Cout, Do, Ho, Wo, stride):
    """Fused Conv3d(k=3, pad=1, stride) + InstanceNorm3d + LeakyReLU(0.2) for one sample.

    x_ref:    [D, H, W*Cin]          bf16, channels fused into lanes (w-major, c-minor)
    band_ref: [3, 3, W*Cin, Wo*Cout] bf16 banded weights (kw taps, W pad and W stride folded in)
    sel_ref:  [Wo*Cout, Cout]        f32 0/1 lane->channel fold matrix
    selt_ref: [Cout, Wo*Cout]        f32 channel->lane broadcast matrix (sel transposed)
    o_ref:    [Do, Ho, Wo*Cout]
    pad_ref:  [D+2, H+2, W*Cin]      bf16 VMEM scratch holding the D/H zero-padded sample
    """
    WC = W * Cin
    Lout = Wo * Cout
    M = Do * Ho

    # Build the D/H halo in VMEM (the W padding is already folded into the band weights),
    # avoiding a padded-copy round trip through HBM.
    pad_ref[...] = jnp.zeros_like(pad_ref)
    pad_ref[pl.ds(1, D), pl.ds(1, H), :] = x_ref[...]

    # 9 fat matmuls (one per (kd, kh) tap): [Do*Ho, W*Cin] @ [W*Cin, Wo*Cout], bf16 operands,
    # f32 accumulation, lane-dense accumulator. The W stride is handled by the band layout,
    # so only D (leading dim) and H carry a stride in the slice.
    acc = jnp.zeros((M, Lout), jnp.float32)
    for kd in range(3):
        for kh in range(3):
            if stride == 1:
                patch = pad_ref[pl.ds(kd, Do), pl.ds(kh, Ho), :]
            else:
                patch = pad_ref[pl.ds(kd, Do, stride=stride),
                                pl.ds(kh, Ho, stride=stride), :]
            acc = acc + jnp.dot(patch.reshape(M, WC), band_ref[kd, kh],
                                preferred_element_type=jnp.float32)

    # InstanceNorm3d (affine=False, track_running_stats=False): per-channel stats over D*H*W
    # from one sum / sum-of-squares pass. The conv bias is dropped entirely: a per-channel
    # constant is cancelled exactly by the mean subtraction below. Tiny selector matmuls fold
    # lanes -> channels and broadcast back without any narrow-lane relayout of `acc`.
    n_spatial = float(Do * Ho * Wo)
    col_sum = jnp.sum(acc, axis=0, keepdims=True)            # [1, Lout]
    col_sumsq = jnp.sum(acc * acc, axis=0, keepdims=True)    # [1, Lout]
    mean_c = jnp.dot(col_sum, sel_ref[...], precision=lax.Precision.HIGHEST,
                     preferred_element_type=jnp.float32) / n_spatial        # [1, Cout]
    ex2_c = jnp.dot(col_sumsq, sel_ref[...], precision=lax.Precision.HIGHEST,
                    preferred_element_type=jnp.float32) / n_spatial         # [1, Cout]
    var_c = ex2_c - mean_c * mean_c
    inv_c = lax.rsqrt(var_c + 1e-5)
    mean_l = jnp.dot(mean_c, selt_ref[...], precision=lax.Precision.HIGHEST,
                     preferred_element_type=jnp.float32)                    # [1, Lout]
    inv_l = jnp.dot(inv_c, selt_ref[...], precision=lax.Precision.HIGHEST,
                    preferred_element_type=jnp.float32)                     # [1, Lout]

    y = (acc - mean_l) * inv_l
    y = jnp.where(y >= 0, y, 0.2 * y)                        # LeakyReLU(0.2)
    o_ref[...] = y.reshape(Do, Ho, Lout).astype(o_ref.dtype)


# ------------------------------ stage wrapper ---------------------------------


def _band_weights(wk, W, Wo, stride):
    """Banded weight matrix folding the kw taps, the W zero-padding and the W stride.

    wk: [3, 3, 3, Cin, Cout] -> band: [3, 3, W*Cin, Wo*Cout] with
        band[kd, kh, w_in*Cin + ci, w*Cout + co] = wk[kd, kh, kw, ci, co]
    for w_in = stride*w + kw - 1 when 0 <= w_in < W (taps landing in the W pad contribute 0).
    """
    Cin, Cout = int(wk.shape[3]), int(wk.shape[4])
    scat = np.zeros((3, W, Wo), np.float32)
    for kw in range(3):
        for w in range(Wo):
            w_in = stride * w + kw - 1
            if 0 <= w_in < W:
                scat[kw, w_in, w] = 1.0
    band = jnp.einsum("dhkio,kpw->dhpiwo", wk, jnp.asarray(scat))
    return band.reshape(3, 3, W * Cin, Wo * Cout)


def _conv_stage(x, wk, stride, out_dtype):
    """One stage: spectral-normed Conv3d(k=3, pad=1, stride) + InstanceNorm3d + LeakyReLU(0.2).

    x:  [N, D, H, W*Cin]  fused channels-last activations
    wk: [3, 3, 3, Cin, Cout]  (already spectral-normalized; bias dropped — see kernel comment)
    returns [N, Do, Ho, Wo*Cout] in out_dtype
    """
    N, D, H, WC = x.shape
    Cin, Cout = int(wk.shape[3]), int(wk.shape[4])
    assert WC % Cin == 0
    W = WC // Cin
    Do = (D - 1) // stride + 1
    Ho = (H - 1) // stride + 1
    Wo = (W - 1) // stride + 1
    Lout = Wo * Cout

    band = _band_weights(wk, W, Wo, stride).astype(jnp.bfloat16)
    x = x.astype(jnp.bfloat16)

    sel_np = np.zeros((Lout, Cout), np.float32)
    sel_np[np.arange(Lout), np.arange(Lout) % Cout] = 1.0
    sel = jnp.asarray(sel_np)
    sel_t = jnp.asarray(sel_np.T.copy())

    kernel = functools.partial(
        _conv_in_lrelu_kernel,
        D=D, H=H, W=W, Cin=Cin, Cout=Cout, Do=Do, Ho=Ho, Wo=Wo, stride=stride,
    )

    # VMEM cap: generous headroom over the real per-program footprint, but well under the
    # 64 MiB physical VMEM of a v7x TensorCore.
    # TODO(synk): for large volumes, additionally tile the grid over output depth with a
    # +2-plane halo so per-program blocks keep fitting v7x's 64 MiB VMEM.
    bytes_needed = (
        2 * D * H * WC * 2                                        # double-buffered bf16 input
        + 2 * Do * Ho * Lout * jnp.dtype(out_dtype).itemsize      # double-buffered output
        + int(band.size) * 2 + int(sel.size) * 4 + int(sel_t.size) * 4
        + (D + 2) * (H + 2) * WC * 2                              # pad scratch
        + Do * Ho * Lout * 4                                      # f32 accumulator
    )
    vmem_limit = int(min(48 * 1024 * 1024, max(8 * 1024 * 1024, 4 * bytes_needed)))

    return pl.pallas_call(
        kernel,
        out_shape=jax.ShapeDtypeStruct((N, Do, Ho, Lout), out_dtype),
        grid_spec=pltpu.PrefetchScalarGridSpec(
            num_scalar_prefetch=0,
            grid=(N,),
            in_specs=[
                pl.BlockSpec((None, D, H, WC), lambda n: (n, 0, 0, 0)),
                pl.BlockSpec((3, 3, W * Cin, Lout), lambda n: (0, 0, 0, 0)),
                pl.BlockSpec((Lout, Cout), lambda n: (0, 0)),
                pl.BlockSpec((Cout, Lout), lambda n: (0, 0)),
            ],
            out_specs=pl.BlockSpec((None, Do, Ho, Lout), lambda n: (n, 0, 0, 0)),
            scratch_shapes=[pltpu.VMEM((D + 2, H + 2, WC), jnp.bfloat16)],
        ),
        compiler_params=pltpu.CompilerParams(
            dimension_semantics=("parallel",),
            vmem_limit_bytes=vmem_limit,
        ),
    )(x, band, sel, sel_t)


# --------------------------- parameters / block glue ---------------------------


def spectral_normalize(w, u, n_power_iterations=1, eps=1e-12):
    """Forward-time weight normalization mirroring torch.nn.utils.spectral_norm.

    w: [Cout, Cin, 3, 3, 3]; u: [Cout] power-iteration vector.
    """
    w_mat = w.reshape(w.shape[0], -1)

    def l2n(v):
        return v / (jnp.linalg.norm(v) + eps)

    v = l2n(w_mat.T @ u)
    for _ in range(n_power_iterations):
        v = l2n(w_mat.T @ u)
        u = l2n(w_mat @ v)
    sigma = u @ (w_mat @ v)
    return w / sigma


def init_conv3d_params(key, cin, cout):
    """Deterministic synthetic init (Conv3d-style uniform bounds) + spectral-norm u vector."""
    k_w, k_b, k_u = jax.random.split(key, 3)
    fan_in = cin * 3 * 3 * 3
    bound = 1.0 / (fan_in ** 0.5)
    w = jax.random.uniform(k_w, (cout, cin, 3, 3, 3), jnp.float32, -bound, bound)
    b = jax.random.uniform(k_b, (cout,), jnp.float32, -bound, bound)
    u = jax.random.normal(k_u, (cout,), jnp.float32)
    u = u / (jnp.linalg.norm(u) + 1e-12)
    return w, b, u


def conv3d_block(x, params, use_dropout=False):
    """conv3DBlock forward: conv2(conv1(x)). x: [N, Cin, D, H, W] (NCDHW); returns NCDHW."""
    w1, _b1, u1 = params["conv1"]
    w2, _b2, u2 = params["conv2"]
    # The conv biases are intentionally unused: InstanceNorm3d (affine=False) subtracts the
    # per-channel mean, which cancels a per-channel constant bias exactly (dead compute + DMA).

    N, Cin, D, H, W = x.shape
    wk1 = jnp.transpose(spectral_normalize(w1, u1), (2, 3, 4, 1, 0))   # [3,3,3,Cin,Cmid]
    wk2 = jnp.transpose(spectral_normalize(w2, u2), (2, 3, 4, 1, 0))   # [3,3,3,Cmid,Cout]
    Cout = int(wk2.shape[4])

    # Single layout change at the block boundary; the two stages chain in the fused
    # channels-last layout [N, D, H, W*C] with a bf16 intermediate (no NCDHW round trip).
    xcl = jnp.transpose(x, (0, 2, 3, 4, 1)).reshape(N, D, H, W * Cin)
    h = _conv_stage(xcl, wk1, stride=1, out_dtype=jnp.bfloat16)        # [N, D, H, W*Cmid]
    y = _conv_stage(h, wk2, stride=2, out_dtype=jnp.float32)           # [N, Do, Ho, Wo*Cout]

    Do, Ho, Wo = (D - 1) // 2 + 1, (H - 1) // 2 + 1, (W - 1) // 2 + 1
    y = y.reshape(N, Do, Ho, Wo, Cout)
    # TODO(synk): nn.Dropout(0.2) (use_dropout=True) is train-mode only; identity at eval.
    return jnp.transpose(y, (0, 4, 1, 2, 3))                           # back to NCDHW


# ------------------------------ pure-JAX reference -----------------------------


def _reference_stage(x, w, b, stride):
    y = lax.conv_general_dilated(
        x, w,
        window_strides=(stride, stride, stride),
        padding=((1, 1), (1, 1), (1, 1)),
        dimension_numbers=("NCDHW", "OIDHW", "NCDHW"),
        precision=lax.Precision.HIGHEST,
    )
    y = y + b[None, :, None, None, None]
    mean = y.mean(axis=(2, 3, 4), keepdims=True)
    var = ((y - mean) ** 2).mean(axis=(2, 3, 4), keepdims=True)
    y = (y - mean) * lax.rsqrt(var + 1e-5)
    return jnp.where(y >= 0, y, 0.2 * y)


# ----------------------------------- main --------------------------------------


if __name__ == "__main__":
    key = jax.random.PRNGKey(0)
    kx, k1, k2 = jax.random.split(key, 3)

    N, Cin, Cout, D = 2, 4, 8, 16
    x = jax.random.normal(kx, (N, Cin, D, D, D), jnp.float32)

    params = {
        "conv1": init_conv3d_params(k1, Cin, Cout),
        "conv2": init_conv3d_params(k2, Cout, Cout),
    }

    y = jax.block_until_ready(conv3d_block(x, params))
    assert y.shape == (N, Cout, D // 2, D // 2, D // 2), y.shape

    # Correctness check against a full-f32 reference of the same forward pass (the reference
    # keeps the conv bias, demonstrating that InstanceNorm cancels it).
    w1, b1, u1 = params["conv1"]
    w2, b2, u2 = params["conv2"]
    h_ref = _reference_stage(x, spectral_normalize(w1, u1), b1, stride=1)
    y_ref = _reference_stage(h_ref, spectral_normalize(w2, u2), b2, stride=2)

    max_err = float(jnp.max(jnp.abs(y - y_ref)))
    rel_l2 = float(jnp.linalg.norm(y - y_ref) / (jnp.linalg.norm(y_ref) + 1e-12))
    assert max_err < 1e-1, f"max abs error too large: {max_err}"
    assert rel_l2 < 3e-2, f"relative L2 error too large: {rel_l2}"

    print("KERNEL_OK")
</pallas_src>

<mosaic_0001>
module attributes {stable_mosaic.version = 11 : i64} {
  func.func @_conv_in_lrelu_kernel(%arg0: i32, %arg1: memref<1x16x16x64xbf16, #tpu.memory_space<vmem>>, %arg2: memref<3x3x64x128xbf16, #tpu.memory_space<vmem>>, %arg3: memref<128x8xf32, #tpu.memory_space<vmem>>, %arg4: memref<8x128xf32, #tpu.memory_space<vmem>>, %arg5: memref<1x16x16x128xbf16, #tpu.memory_space<vmem>>, %arg6: memref<18x18x64xbf16, #tpu.memory_space<vmem>>) attributes {dimension_semantics = [#tpu.dimension_semantics<parallel>], iteration_bounds = array<i64: 2>, scalar_prefetch = 0 : i64, scratch_operands = 1 : i64, tpu.core_type = #tpu.core_type<tc>, window_params = [{transform_indices = @transform_0, window_bounds = array<i64: 1, 16, 16, 64>}, {pipeline_mode = #tpu.pipeline_mode<synchronous>, transform_indices = @transform_1, window_bounds = array<i64: 3, 3, 64, 128>}, {pipeline_mode = #tpu.pipeline_mode<synchronous>, transform_indices = @transform_2, window_bounds = array<i64: 128, 8>}, {pipeline_mode = #tpu.pipeline_mode<synchronous>, transform_indices = @transform_3, window_bounds = array<i64: 8, 128>}, {transform_indices = @transform_4, window_bounds = array<i64: 1, 16, 16, 128>}]} {
    %cst = arith.constant 0.000000e+00 : bf16
    %0 = vector.broadcast %cst : bf16 to vector<18x18x64xbf16>
    %c0 = arith.constant 0 : index
    %c0_0 = arith.constant 0 : index
    %c0_1 = arith.constant 0 : index
    %1 = vector.load %arg6[%c0, %c0_0, %c0_1] : memref<18x18x64xbf16, #tpu.memory_space<vmem>>, vector<18x18x64xbf16>
    tpu.vector_store %arg6[%c0, %c0_0, %c0_1], %0 {strides = array<i32>} : memref<18x18x64xbf16, #tpu.memory_space<vmem>>, vector<18x18x64xbf16>,
    %c0_2 = arith.constant 0 : index
    %c0_3 = arith.constant 0 : index
    %c0_4 = arith.constant 0 : index
    %c0_5 = arith.constant 0 : index
    %2 = vector.load %arg1[%c0_2, %c0_3, %c0_4, %c0_5] : memref<1x16x16x64xbf16, #tpu.memory_space<vmem>>, vector<1x16x16x64xbf16>
    %3 = vector.shape_cast %2 : vector<1x16x16x64xbf16> to vector<16x16x64xbf16>
    %c1 = arith.constant 1 : index
    %c1_6 = arith.constant 1 : index
    %c0_7 = arith.constant 0 : index
    %4 = vector.load %arg6[%c1, %c1_6, %c0_7] : memref<18x18x64xbf16, #tpu.memory_space<vmem>>, vector<16x16x64xbf16>
    tpu.vector_store %arg6[%c1, %c1_6, %c0_7], %3 {strides = array<i32>} : memref<18x18x64xbf16, #tpu.memory_space<vmem>>, vector<16x16x64xbf16>,
    %cst_8 = arith.constant 0.000000e+00 : f32
    %5 = vector.broadcast %cst_8 : f32 to vector<256x128xf32>
    %c0_9 = arith.constant 0 : index
    %c0_10 = arith.constant 0 : index
    %c0_11 = arith.constant 0 : index
    %6 = vector.load %arg6[%c0_9, %c0_10, %c0_11] : memref<18x18x64xbf16, #tpu.memory_space<vmem>>, vector<16x16x64xbf16>
    %7 = vector.shape_cast %6 : vector<16x16x64xbf16> to vector<256x64xbf16>
    %c0_12 = arith.constant 0 : index
    %c0_13 = arith.constant 0 : index
    %c0_14 = arith.constant 0 : index
    %c0_15 = arith.constant 0 : index
    %8 = vector.load %arg2[%c0_12, %c0_13, %c0_14, %c0_15] : memref<3x3x64x128xbf16, #tpu.memory_space<vmem>>, vector<1x1x64x128xbf16>
    %9 = vector.shape_cast %8 : vector<1x1x64x128xbf16> to vector<64x128xbf16>
    %cst_16 = arith.constant dense<0.000000e+00> : vector<256x128xf32>
    %10 = tpu.matmul %7, %9, %cst_16 {dimension_numbers = #tpu.dot_dimension_numbers<[1], [0], [0], [1], [0, 0, 1, 1], [], []>} : vector<256x64xbf16>, vector<64x128xbf16>, vector<256x128xf32> -> vector<256x128xf32>
    %11 = arith.addf %5, %10 : vector<256x128xf32>
    %c0_17 = arith.constant 0 : index
    %c1_18 = arith.constant 1 : index
    %c0_19 = arith.constant 0 : index
    %12 = vector.load %arg6[%c0_17, %c1_18, %c0_19] : memref<18x18x64xbf16, #tpu.memory_space<vmem>>, vector<16x16x64xbf16>
    %13 = vector.shape_cast %12 : vector<16x16x64xbf16> to vector<256x64xbf16>
    %c0_20 = arith.constant 0 : index
    %c1_21 = arith.constant 1 : index
    %c0_22 = arith.constant 0 : index
    %c0_23 = arith.constant 0 : index
    %14 = vector.load %arg2[%c0_20, %c1_21, %c0_22, %c0_23] : memref<3x3x64x128xbf16, #tpu.memory_space<vmem>>, vector<1x1x64x128xbf16>
    %15 = vector.shape_cast %14 : vector<1x1x64x128xbf16> to vector<64x128xbf16>
    %cst_24 = arith.constant dense<0.000000e+00> : vector<256x128xf32>
    %16 = tpu.matmul %13, %15, %cst_24 {dimension_numbers = #tpu.dot_dimension_numbers<[1], [0], [0], [1], [0, 0, 1, 1], [], []>} : vector<256x64xbf16>, vector<64x128xbf16>, vector<256x128xf32> -> vector<256x128xf32>
    %17 = arith.addf %11, %16 : vector<256x128xf32>
    %c0_25 = arith.constant 0 : index
    %c2 = arith.constant 2 : index
    %c0_26 = arith.constant 0 : index
    %18 = vector.load %arg6[%c0_25, %c2, %c0_26] : memref<18x18x64xbf16, #tpu.memory_space<vmem>>, vector<16x16x64xbf16>
    %19 = vector.shape_cast %18 : vector<16x16x64xbf16> to vector<256x64xbf16>
    %c0_27 = arith.constant 0 : index
    %c2_28 = arith.constant 2 : index
    %c0_29 = arith.constant 0 : index
    %c0_30 = arith.constant 0 : index
    %20 = vector.load %arg2[%c0_27, %c2_28, %c0_29, %c0_30] : memref<3x3x64x128xbf16, #tpu.memory_space<vmem>>, vector<1x1x64x128xbf16>
    %21 = vector.shape_cast %20 : vector<1x1x64x128xbf16> to vector<64x128xbf16>
    %cst_31 = arith.constant dense<0.000000e+00> : vector<256x128xf32>
    %22 = tpu.matmul %19, %21, %cst_31 {dimension_numbers = #tpu.dot_dimension_numbers<[1], [0], [0], [1], [0, 0, 1, 1], [], []>} : vector<256x64xbf16>, vector<64x128xbf16>, vector<256x128xf32> -> vector<256x128xf32>
    %23 = arith.addf %17, %22 : vector<256x128xf32>
    %c1_32 = arith.constant 1 : index
    %c0_33 = arith.constant 0 : index
    %c0_34 = arith.constant 0 : index
    %24 = vector.load %arg6[%c1_32, %c0_33, %c0_34] : memref<18x18x64xbf16, #tpu.memory_space<vmem>>, vector<16x16x64xbf16>
    %25 = vector.shape_cast %24 : vector<16x16x64xbf16> to vector<256x64xbf16>
    %c1_35 = arith.constant 1 : index
    %c0_36 = arith.constant 0 : index
    %c0_37 = arith.constant 0 : index
    %c0_38 = arith.constant 0 : index
    %26 = vector.load %arg2[%c1_35, %c0_36, %c0_37, %c0_38] : memref<3x3x64x128xbf16, #tpu.memory_space<vmem>>, vector<1x1x64x128xbf16>
    %27 = vector.shape_cast %26 : vector<1x1x64x128xbf16> to vector<64x128xbf16>
    %cst_39 = arith.constant dense<0.000000e+00> : vector<256x128xf32>
    %28 = tpu.matmul %25, %27, %cst_39 {dimension_numbers = #tpu.dot_dimension_numbers<[1], [0], [0], [1], [0, 0, 1, 1], [], []>} : vector<256x64xbf16>, vector<64x128xbf16>, vector<256x128xf32> -> vector<256x128xf32>
    %29 = arith.addf %23, %28 : vector<256x128xf32>
    %c1_40 = arith.constant 1 : index
    %c1_41 = arith.constant 1 : index
    %c0_42 = arith.constant 0 : index
    %30 = vector.load %arg6[%c1_40, %c1_41, %c0_42] : memref<18x18x64xbf16, #tpu.memory_space<vmem>>, vector<16x16x64xbf16>
    %31 = vector.shape_cast %30 : vector<16x16x64xbf16> to vector<256x64xbf16>
    %c1_43 = arith.constant 1 : index
    %c1_44 = arith.constant 1 : index
    %c0_45 = arith.constant 0 : index
    %c0_46 = arith.constant 0 : index
    %32 = vector.load %arg2[%c1_43, %c1_44, %c0_45, %c0_46] : memref<3x3x64x128xbf16, #tpu.memory_space<vmem>>, vector<1x1x64x128xbf16>
    %33 = vector.shape_cast %32 : vector<1x1x64x128xbf16> to vector<64x128xbf16>
    %cst_47 = arith.constant dense<0.000000e+00> : vector<256x128xf32>
    %34 = tpu.matmul %31, %33, %cst_47 {dimension_numbers = #tpu.dot_dimension_numbers<[1], [0], [0], [1], [0, 0, 1, 1], [], []>} : vector<256x64xbf16>, vector<64x128xbf16>, vector<256x128xf32> -> vector<256x128xf32>
    %35 = arith.addf %29, %34 : vector<256x128xf32>
    %c1_48 = arith.constant 1 : index
    %c2_49 = arith.constant 2 : index
    %c0_50 = arith.constant 0 : index
    %36 = vector.load %arg6[%c1_48, %c2_49, %c0_50] : memref<18x18x64xbf16, #tpu.memory_space<vmem>>, vector<16x16x64xbf16>
    %37 = vector.shape_cast %36 : vector<16x16x64xbf16> to vector<256x64xbf16>
    %c1_51 = arith.constant 1 : index
    %c2_52 = arith.constant 2 : index
    %c0_53 = arith.constant 0 : index
    %c0_54 = arith.constant 0 : index
    %38 = vector.load %arg2[%c1_51, %c2_52, %c0_53, %c0_54] : memref<3x3x64x128xbf16, #tpu.memory_space<vmem>>, vector<1x1x64x128xbf16>
    %39 = vector.shape_cast %38 : vector<1x1x64x128xbf16> to vector<64x128xbf16>
    %cst_55 = arith.constant dense<0.000000e+00> : vector<256x128xf32>
    %40 = tpu.matmul %37, %39, %cst_55 {dimension_numbers = #tpu.dot_dimension_numbers<[1], [0], [0], [1], [0, 0, 1, 1], [], []>} : vector<256x64xbf16>, vector<64x128xbf16>, vector<256x128xf32> -> vector<256x128xf32>
    %41 = arith.addf %35, %40 : vector<256x128xf32>
    %c2_56 = arith.constant 2 : index
    %c0_57 = arith.constant 0 : index
    %c0_58 = arith.constant 0 : index
    %42 = vector.load %arg6[%c2_56, %c0_57, %c0_58] : memref<18x18x64xbf16, #tpu.memory_space<vmem>>, vector<16x16x64xbf16>
    %43 = vector.shape_cast %42 : vector<16x16x64xbf16> to vector<256x64xbf16>
    %c2_59 = arith.constant 2 : index
    %c0_60 = arith.constant 0 : index
    %c0_61 = arith.constant 0 : index
    %c0_62 = arith.constant 0 : index
    %44 = vector.load %arg2[%c2_59, %c0_60, %c0_61, %c0_62] : memref<3x3x64x128xbf16, #tpu.memory_space<vmem>>, vector<1x1x64x128xbf16>
    %45 = vector.shape_cast %44 : vector<1x1x64x128xbf16> to vector<64x128xbf16>
    %cst_63 = arith.constant dense<0.000000e+00> : vector<256x128xf32>
    %46 = tpu.matmul %43, %45, %cst_63 {dimension_numbers = #tpu.dot_dimension_numbers<[1], [0], [0], [1], [0, 0, 1, 1], [], []>} : vector<256x64xbf16>, vector<64x128xbf16>, vector<256x128xf32> -> vector<256x128xf32>
    %47 = arith.addf %41, %46 : vector<256x128xf32>
    %c2_64 = arith.constant 2 : index
    %c1_65 = arith.constant 1 : index
    %c0_66 = arith.constant 0 : index
    %48 = vector.load %arg6[%c2_64, %c1_65, %c0_66] : memref<18x18x64xbf16, #tpu.memory_space<vmem>>, vector<16x16x64xbf16>
    %49 = vector.shape_cast %48 : vector<16x16x64xbf16> to vector<256x64xbf16>
    %c2_67 = arith.constant 2 : index
    %c1_68 = arith.constant 1 : index
    %c0_69 = arith.constant 0 : index
    %c0_70 = arith.constant 0 : index
    %50 = vector.load %arg2[%c2_67, %c1_68, %c0_69, %c0_70] : memref<3x3x64x128xbf16, #tpu.memory_space<vmem>>, vector<1x1x64x128xbf16>
    %51 = vector.shape_cast %50 : vector<1x1x64x128xbf16> to vector<64x128xbf16>
    %cst_71 = arith.constant dense<0.000000e+00> : vector<256x128xf32>
    %52 = tpu.matmul %49, %51, %cst_71 {dimension_numbers = #tpu.dot_dimension_numbers<[1], [0], [0], [1], [0, 0, 1, 1], [], []>} : vector<256x64xbf16>, vector<64x128xbf16>, vector<256x128xf32> -> vector<256x128xf32>
    %53 = arith.addf %47, %52 : vector<256x128xf32>
    %c2_72 = arith.constant 2 : index
    %c2_73 = arith.constant 2 : index
    %c0_74 = arith.constant 0 : index
    %54 = vector.load %arg6[%c2_72, %c2_73, %c0_74] : memref<18x18x64xbf16, #tpu.memory_space<vmem>>, vector<16x16x64xbf16>
    %55 = vector.shape_cast %54 : vector<16x16x64xbf16> to vector<256x64xbf16>
    %c2_75 = arith.constant 2 : index
    %c2_76 = arith.constant 2 : index
    %c0_77 = arith.constant 0 : index
    %c0_78 = arith.constant 0 : index
    %56 = vector.load %arg2[%c2_75, %c2_76, %c0_77, %c0_78] : memref<3x3x64x128xbf16, #tpu.memory_space<vmem>>, vector<1x1x64x128xbf16>
    %57 = vector.shape_cast %56 : vector<1x1x64x128xbf16> to vector<64x128xbf16>
    %cst_79 = arith.constant dense<0.000000e+00> : vector<256x128xf32>
    %58 = tpu.matmul %55, %57, %cst_79 {dimension_numbers = #tpu.dot_dimension_numbers<[1], [0], [0], [1], [0, 0, 1, 1], [], []>} : vector<256x64xbf16>, vector<64x128xbf16>, vector<256x128xf32> -> vector<256x128xf32>
    %59 = arith.addf %53, %58 : vector<256x128xf32>
    %cst_80 = arith.constant dense<0.000000e+00> : vector<128xf32>
    %60 = vector.multi_reduction <add>, %59, %cst_80 [0] : vector<256x128xf32> to vector<128xf32>
    %61 = vector.shape_cast %60 : vector<128xf32> to vector<1x128xf32>
    %62 = arith.mulf %59, %59 : vector<256x128xf32>
    %cst_81 = arith.constant dense<0.000000e+00> : vector<128xf32>
    %63 = vector.multi_reduction <add>, %62, %cst_81 [0] : vector<256x128xf32> to vector<128xf32>
    %64 = vector.shape_cast %63 : vector<128xf32> to vector<1x128xf32>
    %c0_82 = arith.constant 0 : index
    %c0_83 = arith.constant 0 : index
    %65 = vector.load %arg3[%c0_82, %c0_83] : memref<128x8xf32, #tpu.memory_space<vmem>>, vector<128x8xf32>
    %cst_84 = arith.constant dense<0.000000e+00> : vector<1x8xf32>
    %66 = tpu.matmul %61, %65, %cst_84 {dimension_numbers = #tpu.dot_dimension_numbers<[1], [0], [0], [1], [0, 0, 1, 1], [], []>, precision = #tpu.contract_precision<fp32>} : vector<1x128xf32>, vector<128x8xf32>, vector<1x8xf32> -> vector<1x8xf32>
    %cst_85 = arith.constant 4.096000e+03 : f32
    %67 = vector.broadcast %cst_85 : f32 to vector<1x8xf32>
    %68 = arith.divf %66, %67 : vector<1x8xf32>
    %c0_86 = arith.constant 0 : index
    %c0_87 = arith.constant 0 : index
    %69 = vector.load %arg3[%c0_86, %c0_87] : memref<128x8xf32, #tpu.memory_space<vmem>>, vector<128x8xf32>
    %cst_88 = arith.constant dense<0.000000e+00> : vector<1x8xf32>
    %70 = tpu.matmul %64, %69, %cst_88 {dimension_numbers = #tpu.dot_dimension_numbers<[1], [0], [0], [1], [0, 0, 1, 1], [], []>, precision = #tpu.contract_precision<fp32>} : vector<1x128xf32>, vector<128x8xf32>, vector<1x8xf32> -> vector<1x8xf32>
    %cst_89 = arith.constant 4.096000e+03 : f32
    %71 = vector.broadcast %cst_89 : f32 to vector<1x8xf32>
    %72 = arith.divf %70, %71 : vector<1x8xf32>
    %73 = arith.mulf %68, %68 : vector<1x8xf32>
    %74 = arith.subf %72, %73 : vector<1x8xf32>
    %cst_90 = arith.constant 9.99999974E-6 : f32
    %75 = vector.broadcast %cst_90 : f32 to vector<1x8xf32>
    %76 = arith.addf %74, %75 : vector<1x8xf32>
    %77 = math.rsqrt %76 : vector<1x8xf32>
    %c0_91 = arith.constant 0 : index
    %c0_92 = arith.constant 0 : index
    %78 = vector.load %arg4[%c0_91, %c0_92] : memref<8x128xf32, #tpu.memory_space<vmem>>, vector<8x128xf32>
    %cst_93 = arith.constant dense<0.000000e+00> : vector<1x128xf32>
    %79 = tpu.matmul %68, %78, %cst_93 {dimension_numbers = #tpu.dot_dimension_numbers<[1], [0], [0], [1], [0, 0, 1, 1], [], []>, precision = #tpu.contract_precision<fp32>} : vector<1x8xf32>, vector<8x128xf32>, vector<1x128xf32> -> vector<1x128xf32>
    %c0_94 = arith.constant 0 : index
    %c0_95 = arith.constant 0 : index
    %80 = vector.load %arg4[%c0_94, %c0_95] : memref<8x128xf32, #tpu.memory_space<vmem>>, vector<8x128xf32>
    %cst_96 = arith.constant dense<0.000000e+00> : vector<1x128xf32>
    %81 = tpu.matmul %77, %80, %cst_96 {dimension_numbers = #tpu.dot_dimension_numbers<[1], [0], [0], [1], [0, 0, 1, 1], [], []>, precision = #tpu.contract_precision<fp32>} : vector<1x8xf32>, vector<8x128xf32>, vector<1x128xf32> -> vector<1x128xf32>
    %82 = vector.broadcast %79 : vector<1x128xf32> to vector<256x128xf32>
    %83 = arith.subf %59, %82 : vector<256x128xf32>
    %84 = vector.broadcast %81 : vector<1x128xf32> to vector<256x128xf32>
    %85 = arith.mulf %83, %84 : vector<256x128xf32>
    %cst_97 = arith.constant 0.000000e+00 : f32
    %86 = vector.broadcast %cst_97 : f32 to vector<256x128xf32>
    %87 = arith.cmpf oge, %85, %86 : vector<256x128xf32>
    %cst_98 = arith.constant 2.000000e-01 : f32
    %88 = vector.broadcast %cst_98 : f32 to vector<256x128xf32>
    %89 = arith.mulf %88, %85 : vector<256x128xf32>
    %90 = arith.select %87, %85, %89 : vector<256x128xi1>, vector<256x128xf32>
    %91 = vector.shape_cast %90 : vector<256x128xf32> to vector<16x16x128xf32>
    %92 = arith.truncf %91 : vector<16x16x128xf32> to vector<16x16x128xbf16>
    %c0_99 = arith.constant 0 : index
    %c0_100 = arith.constant 0 : index
    %c0_101 = arith.constant 0 : index
    %c0_102 = arith.constant 0 : index
    %93 = vector.load %arg5[%c0_99, %c0_100, %c0_101, %c0_102] : memref<1x16x16x128xbf16, #tpu.memory_space<vmem>>, vector<1x16x16x128xbf16>
    %94 = vector.shape_cast %93 : vector<1x16x16x128xbf16> to vector<16x16x128xbf16>
    %95 = vector.shape_cast %92 : vector<16x16x128xbf16> to vector<1x16x16x128xbf16>
    tpu.vector_store %arg5[%c0_99, %c0_100, %c0_101, %c0_102], %95 {strides = array<i32>} : memref<1x16x16x128xbf16, #tpu.memory_space<vmem>>, vector<1x16x16x128xbf16>,
    return
  }
  func.func @transform_0(%arg0: i32) -> (i32, i32, i32, i32) {
    %c0_i32 = arith.constant 0 : i32
    %c0_i32_0 = arith.constant 0 : i32
    %c0_i32_1 = arith.constant 0 : i32
    %c0_i32_2 = arith.constant 0 : i32
    return %arg0, %c0_i32, %c0_i32_0, %c0_i32_1 : i32, i32, i32, i32
  }
  func.func @transform_1(%arg0: i32) -> (i32, i32, i32, i32) {
    %c0_i32 = arith.constant 0 : i32
    %c0_i32_0 = arith.constant 0 : i32
    %c0_i32_1 = arith.constant 0 : i32
    %c0_i32_2 = arith.constant 0 : i32
    %c0_i32_3 = arith.constant 0 : i32
    return %c0_i32, %c0_i32_0, %c0_i32_1, %c0_i32_2 : i32, i32, i32, i32
  }
  func.func @transform_2(%arg0: i32) -> (i32, i32) {
    %c0_i32 = arith.constant 0 : i32
    %c0_i32_0 = arith.constant 0 : i32
    %c0_i32_1 = arith.constant 0 : i32
    return %c0_i32, %c0_i32_0 : i32, i32
  }
  func.func @transform_3(%arg0: i32) -> (i32, i32) {
    %c0_i32 = arith.constant 0 : i32
    %c0_i32_0 = arith.constant 0 : i32
    %c0_i32_1 = arith.constant 0 : i32
    return %c0_i32, %c0_i32_0 : i32, i32
  }
  func.func @transform_4(%arg0: i32) -> (i32, i32, i32, i32) {
    %c0_i32 = arith.constant 0 : i32
    %c0_i32_0 = arith.constant 0 : i32
    %c0_i32_1 = arith.constant 0 : i32
    %c0_i32_2 = arith.constant 0 : i32
    return %arg0, %c0_i32, %c0_i32_0, %c0_i32_1 : i32, i32, i32, i32
  }
}

</mosaic_0001>

<llo_original>
// kernel: tpu_custom_call.1
$region0: #{tpu_custom_call.1}
  #allocation0 [shape = 'u32[]', space=smem, size = 0x4, offset = 0x4, fixed_abs, tag = 'smem constant byte address 0x4 - core index']
  #allocation1 [shape = 'u32[144,128]{1,0:T(1,128)}', space=vmem, size = 0x12000, scoped, tag = 'internal scratch']
  #allocation2 [shape = 'bf16[18,18,64]{2,1,0:T(8,128)(2,1)}', space=vmem, size = 0x1b000, scoped, tag = 'scratch operand']
  %s0 = inlined_call_operand.hbm [shape: bf16[2,16,16,64], index: 0, kind: input, shape index: {}]
  %s1 = inlined_call_operand.hbm [shape: bf16[3,3,64,128], index: 1, kind: input, shape index: {}]
  %s2 = inlined_call_operand.vmem [shape: f32[128,8], index: 2, kind: input, shape index: {}]
  %s3 = inlined_call_operand.vmem [shape: f32[8,128], index: 3, kind: input, shape index: {}]
  %s4 = inlined_call_operand.hbm [shape: bf16[2,16,16,128], index: 4, kind: output, shape index: {}]
  %s5 = sld [smem:[#allocation0]]
  $region57: #{tpu_custom_call.1} parent=0
    _
  %s7 = ssub.s32 1, %s5
  %s8 = scalar_select 0, %s7, %s5
  $region1: #{tpu_custom_call.1} parent=0
    #allocation3 [shape = 'u8[131072]{0}', space=vmem, size = 0x20000, scoped, tag = 'input window, operand 0']
    #allocation4 [shape = 's32[2]{0}', space=sflag, size = 0x8, scoped, tag = 'scoped memory for tpu_custom_call.1']
    #allocation5 [shape = 's32[2]{0}', space=sflag, size = 0x8, scoped, tag = 'scoped memory for tpu_custom_call.1']
    #allocation6 [shape = 'u8[147456]{0}', space=vmem, size = 0x24000, scoped, tag = 'input window, operand 1, single buffered']
    #allocation7 [shape = 's32[1]{0}', space=sflag, size = 0x4, scoped, tag = 'scoped memory for tpu_custom_call.1']
    #allocation8 [shape = 'u8[131072]{0}', space=vmem, size = 0x20000, scoped, tag = 'output window, operand 0']
    %9 = vsyncpa [#allocation4], 0
    %s10 = scalar_lea.sflag [#allocation4], 1
    %11 = vsyncpa %s10, 0
    %12 = vsyncpa [#allocation7], 0
    %13 = vsyncpa [#allocation5], 0
    %s14 = scalar_lea.sflag [#allocation5], 1
    %15 = vsyncpa %s14, 0
    loop: start=0, step=1, limit=4
    $region2: #{tpu_custom_call.1} parent=1 // loop_pre_header
      _
    $region3: #{tpu_custom_call.1} parent=1 // loop_header
      %s17 = sphi 0, %s21
      %p18 = scmp.ge.s32.totalorder %s17, 4
      %s27 = sphi 0, %s29
      %s30 = sphi 0, %s27
      %s31 = sphi 0, %s30
      %s47 = sphi 0, %s31
      %s51 = sphi 0, %s51
      %s53 = sphi 0, %s51
      %s54 = sphi 0, %s53
      %s68 = sphi 0, %s54
      %s72 = sphi 0, %s72
      %s74 = sphi 0, %s72
      %s75 = sphi 0, %s74
      %s89 = sphi 0, %s75
      %s93 = sphi 0, %s93
      %s95 = sphi 0, %s93
      %s96 = sphi 0, %s95
      %s110 = sphi 0, %s96
      %s116 = sphi 0, %s118
      %s119 = sphi 0, %s116
      %s120 = sphi 0, %s119
      %s136 = sphi 0, %s120
    $region4: #{tpu_custom_call.1} parent=1 // loop_header_branch
      %20 = sbr.rel (%p18) target = $region8
    $region5: #{tpu_custom_call.1} parent=1 // loop_body
      %s22 = ssub.s32 %s17, 1
      %s23 = ssub.s32 %s17, 2
      %s24 = sadd.s32 %s17, 1
      %s25 = ssub.s32 %s17, %s24
      %p26 = scmp.eq.s32.totalorder %s25, 0
      %s28 = sadd.s32 %s27, 1
      %s29 = scalar_select %p26, %s27, %s28
      %p32 = pneg %p26
      %p33 = scmp.eq.s32.totalorder %s17, 1
      %p34 = por %p32, %p33
      %p35 = scmp.ne.s32.totalorder %s27, %s30
      %p36 = scmp.eq.s32.totalorder %s17, 0
      %p37 = por %p35, %p36
      %p38 = scmp.ne.s32.totalorder %s27, %s30
      %p39 = scmp.eq.s32.totalorder %s22, 1
      %p40 = por %p38, %p39
      %p41 = scmp.ne.s32.totalorder %s30, %s31
      %p42 = scmp.eq.s32.totalorder %s22, 0
      %p43 = por %p41, %p42
      %p44 = scmp.ne.s32.totalorder %s30, %s31
      %p45 = scmp.eq.s32.totalorder %s23, 1
      %p46 = por %p44, %p45
      %p48 = scmp.ne.s32.totalorder %s31, %s47
      %p49 = scmp.eq.s32.totalorder %s23, 0
      %p50 = por %p48, %p49
      %s52 = sadd.s32 %s51, 1
      %p55 = scmp.eq.s32.totalorder %s17, 1
      %p56 = scmp.ne.s32.totalorder %s51, %s53
      %p57 = scmp.eq.s32.totalorder %s17, 0
      %p58 = por %p56, %p57
      %p59 = scmp.ne.s32.totalorder %s51, %s53
      %p60 = scmp.eq.s32.totalorder %s22, 1
      %p61 = por %p59, %p60
      %p62 = scmp.ne.s32.totalorder %s53, %s54
      %p63 = scmp.eq.s32.totalorder %s22, 0
      %p64 = por %p62, %p63
      %p65 = scmp.ne.s32.totalorder %s53, %s54
      %p66 = scmp.eq.s32.totalorder %s23, 1
      %p67 = por %p65, %p66
      %p69 = scmp.ne.s32.totalorder %s54, %s68
      %p70 = scmp.eq.s32.totalorder %s23, 0
      %p71 = por %p69, %p70
      %s73 = sadd.s32 %s72, 1
      %p76 = scmp.eq.s32.totalorder %s17, 1
      %p77 = scmp.ne.s32.totalorder %s72, %s74
      %p78 = scmp.eq.s32.totalorder %s17, 0
      %p79 = por %p77, %p78
      %p80 = scmp.ne.s32.totalorder %s72, %s74
      %p81 = scmp.eq.s32.totalorder %s22, 1
      %p82 = por %p80, %p81
      %p83 = scmp.ne.s32.totalorder %s74, %s75
      %p84 = scmp.eq.s32.totalorder %s22, 0
      %p85 = por %p83, %p84
      %p86 = scmp.ne.s32.totalorder %s74, %s75
      %p87 = scmp.eq.s32.totalorder %s23, 1
      %p88 = por %p86, %p87
      %p90 = scmp.ne.s32.totalorder %s75, %s89
      %p91 = scmp.eq.s32.totalorder %s23, 0
      %p92 = por %p90, %p91
      %s94 = sadd.s32 %s93, 1
      %p97 = scmp.eq.s32.totalorder %s17, 1
      %p98 = scmp.ne.s32.totalorder %s93, %s95
      %p99 = scmp.eq.s32.totalorder %s17, 0
      %p100 = por %p98, %p99
      %p101 = scmp.ne.s32.totalorder %s93, %s95
      %p102 = scmp.eq.s32.totalorder %s22, 1
      %p103 = por %p101, %p102
      %p104 = scmp.ne.s32.totalorder %s95, %s96
      %p105 = scmp.eq.s32.totalorder %s22, 0
      %p106 = por %p104, %p105
      %p107 = scmp.ne.s32.totalorder %s95, %s96
      %p108 = scmp.eq.s32.totalorder %s23, 1
      %p109 = por %p107, %p108
      %p111 = scmp.ne.s32.totalorder %s96, %s110
      %p112 = scmp.eq.s32.totalorder %s23, 0
      %p113 = por %p111, %p112
      %s114 = ssub.s32 %s17, %s24
      %p115 = scmp.eq.s32.totalorder %s114, 0
      %s117 = sadd.s32 %s116, 1
      %s118 = scalar_select %p115, %s116, %s117
      %p121 = pneg %p115
      %p122 = scmp.eq.s32.totalorder %s17, 1
      %p123 = por %p121, %p122
      %p124 = scmp.ne.s32.totalorder %s116, %s119
      %p125 = scmp.eq.s32.totalorder %s17, 0
      %p126 = por %p124, %p125
      %p127 = scmp.ne.s32.totalorder %s116, %s119
      %p128 = scmp.eq.s32.totalorder %s22, 1
      %p129 = por %p127, %p128
      %p130 = scmp.ne.s32.totalorder %s119, %s120
      %p131 = scmp.eq.s32.totalorder %s22, 0
      %p132 = por %p130, %p131
      %p133 = scmp.ne.s32.totalorder %s119, %s120
      %p134 = scmp.eq.s32.totalorder %s23, 1
      %p135 = por %p133, %p134
      %p137 = scmp.ne.s32.totalorder %s120, %s136
      %p138 = scmp.eq.s32.totalorder %s23, 0
      %p139 = por %p137, %p138
      %p140 = scmp.le.s32.totalorder 1, %s17
      %p141 = scmp.lt.s32.totalorder %s17, 3
      %p142 = pnand %p140, %p141
      %p143 = pneg %p142
      // Predicated region
      $region9: #{tpu_custom_call.1} parent=5 // pred_check
        _
      $region10: #{tpu_custom_call.1} parent=5 // pred_check_branch
        %145 = sbr.rel (%p142) target = $region12
      $region11: #{tpu_custom_call.1} parent=5 // pred_region
        %s146 = ssub.s32 %s17, 1
        // Predicated region
        $region13: #{tpu_custom_call.1} parent=11 // pred_check
          %p147 = pneg %p64
        $region14: #{tpu_custom_call.1} parent=11 // pred_check_branch
          %149 = sbr.rel (%p147) target = $region16
        $region15: #{tpu_custom_call.1} parent=11 // pred_region
          %s151 = ssub.s32 4608, 4608
          %152 = vsyncadd [#allocation7], %s151
          %s153 = sshll.u32 [#allocation6], 4
          %s154 = int_to_ptr.vmem [resolvable:$true] %s153
          %159 = dma.hbm_to_vmem [thread:$0]  %s1, 4608, %s154, [#allocation7], 64, 64, 4
        $region16: #{tpu_custom_call.1} parent=11 // pred_fallthru
          _
        // Predicated region
        $region17: #{tpu_custom_call.1} parent=11 // pred_check
          %p160 = pneg %p85
        $region18: #{tpu_custom_call.1} parent=11 // pred_check_branch
          %162 = sbr.rel (%p160) target = $region20
        $region19: #{tpu_custom_call.1} parent=11 // pred_region
          _
        $region20: #{tpu_custom_call.1} parent=11 // pred_fallthru
          _
        // Predicated region
        $region21: #{tpu_custom_call.1} parent=11 // pred_check
          %p163 = pneg %p106
        $region22: #{tpu_custom_call.1} parent=11 // pred_check_branch
          %165 = sbr.rel (%p163) target = $region24
        $region23: #{tpu_custom_call.1} parent=11 // pred_region
          _
        $region24: #{tpu_custom_call.1} parent=11 // pred_fallthru
          _
      $region12: #{tpu_custom_call.1} parent=5 // pred_fallthru
        _
      %p166 = scmp.lt.s32.totalorder %s17, 2
      // Predicated region
      $region25: #{tpu_custom_call.1} parent=5 // pred_check
        %p167 = pneg %p166
      $region26: #{tpu_custom_call.1} parent=5 // pred_check_branch
        %169 = sbr.rel (%p167) target = $region28
      $region27: #{tpu_custom_call.1} parent=5 // pred_region
        // Predicated region
        $region29: #{tpu_custom_call.1} parent=27 // pred_check
          %p170 = pneg %p37
        $region30: #{tpu_custom_call.1} parent=27 // pred_check_branch
          %172 = sbr.rel (%p170) target = $region32
        $region31: #{tpu_custom_call.1} parent=27 // pred_region
          %s173 = sand.u32 %s27, 1
          %s174 = scalar_lea.sflag [#allocation4], %s173
          %s175 = sand.u32 %s27, 1
          %s176 = smul.addr %s175, 128
          %s177 = scalar_lea.vmem [#allocation3], %s176
          %s179 = ssub.s32 2048, 2048
          %180 = vsyncadd %s174, %s179
          %s181 = smul.addr %s17, 32
          %s182 = smul.addr %s181, 64
          %s183 = scalar_lea.hbm %s0, %s182
          %s184 = sshll.u32 %s177, 4
          %s185 = int_to_ptr.vmem [resolvable:$true] %s184
          %190 = dma.hbm_to_vmem [thread:$0]  %s183, 2048, %s185, %s174, 64, 64, 4
        $region32: #{tpu_custom_call.1} parent=27 // pred_fallthru
          _
      $region28: #{tpu_custom_call.1} parent=5 // pred_fallthru
        _
      %p191 = scmp.le.s32.totalorder 1, %s17
      %p192 = scmp.lt.s32.totalorder %s17, 3
      %p193 = pnand %p191, %p192
      %p194 = pneg %p193
      // Predicated region
      $region33: #{tpu_custom_call.1} parent=5 // pred_check
        _
      $region34: #{tpu_custom_call.1} parent=5 // pred_check_branch
        %196 = sbr.rel (%p193) target = $region36
      $region35: #{tpu_custom_call.1} parent=5 // pred_region
        %s197 = ssub.s32 %s17, 1
        %s198 = sand.u32 %s30, 1
        %s199 = scalar_lea.sflag [#allocation4], %s198
        %s200 = sand.u32 %s30, 1
        %s201 = smul.addr %s200, 128
        %s202 = scalar_lea.vmem [#allocation3], %s201
        // Predicated region
        $region37: #{tpu_custom_call.1} parent=35 // pred_check
          %p203 = pneg %p43
        $region38: #{tpu_custom_call.1} parent=35 // pred_check_branch
          %205 = sbr.rel (%p203) target = $region40
        $region39: #{tpu_custom_call.1} parent=35 // pred_region
          %206 = dma.done %s199, 2048
        $region40: #{tpu_custom_call.1} parent=35 // pred_fallthru
          _
        // Predicated region
        $region41: #{tpu_custom_call.1} parent=35 // pred_check
          %p207 = pneg %p64
        $region42: #{tpu_custom_call.1} parent=35 // pred_check_branch
          %209 = sbr.rel (%p207) target = $region44
        $region43: #{tpu_custom_call.1} parent=35 // pred_region
          %210 = dma.done [#allocation7], 4608
        $region44: #{tpu_custom_call.1} parent=35 // pred_fallthru
          _
        %s211 = sand.u32 %s30, 1
        %s212 = scalar_lea.sflag [#allocation4], %s211
        %s213 = sand.u32 %s30, 1
        %s214 = smul.addr %s213, 128
        %s215 = scalar_lea.vmem [#allocation3], %s214
        %p216 = pneg %p43
        %p217 = pneg %p40
        %p218 = pneg %p64
        %p219 = pneg %p61
        %p220 = pneg %p85
        %p221 = pneg %p82
        %p222 = pneg %p106
        %p223 = pneg %p103
        %p224 = pneg %p132
        %p225 = pneg %p129
        %s226 = sand.u32 %s119, 1
        %s227 = scalar_lea.sflag [#allocation5], %s226
        %s228 = sand.u32 %s119, 1
        %s229 = smul.addr %s228, 128
        %s230 = scalar_lea.vmem [#allocation8], %s229
        %vm232 = vcmask 519168
        %233 = vst.msk [vmem:[#allocation2] sm:$0xf] %vm232, 0
        %234 = vst.msk [vmem:[#allocation2 + $0x4] sm:$0xf] %vm232, 0
        %vm235 = vcmask 516096
        %236 = vst.msk [vmem:[#allocation2 + $0x8] sm:$0x1] %vm235, 0
        %237 = vst.msk [vmem:[#allocation2 + $0xc] sm:$0xf] %vm232, 0
        %238 = vst.msk [vmem:[#allocation2 + $0x10] sm:$0xf] %vm232, 0
        %239 = vst.msk [vmem:[#allocation2 + $0x14] sm:$0x1] %vm235, 0
        %240 = vst.msk [vmem:[#allocation2 + $0x18] sm:$0xf] %vm232, 0
        %241 = vst.msk [vmem:[#allocation2 + $0x1c] sm:$0xf] %vm232, 0
        %242 = vst.msk [vmem:[#allocation2 + $0x20] sm:$0x1] %vm235, 0
        %243 = vst.msk [vmem:[#allocation2 + $0x24] sm:$0xf] %vm232, 0
        %244 = vst.msk [vmem:[#allocation2 + $0x28] sm:$0xf] %vm232, 0
        %245 = vst.msk [vmem:[#allocation2 + $0x2c] sm:$0x1] %vm235, 0
        %246 = vst.msk [vmem:[#allocation2 + $0x30] sm:$0xf] %vm232, 0
        %247 = vst.msk [vmem:[#allocation2 + $0x34] sm:$0xf] %vm232, 0
        %248 = vst.msk [vmem:[#allocation2 + $0x38] sm:$0x1] %vm235, 0
        %249 = vst.msk [vmem:[#allocation2 + $0x3c] sm:$0xf] %vm232, 0
        %250 = vst.msk [vmem:[#allocation2 + $0x40] sm:$0xf] %vm232, 0
        %251 = vst.msk [vmem:[#allocation2 + $0x44] sm:$0x1] %vm235, 0
        %252 = vst.msk [vmem:[#allocation2 + $0x48] sm:$0xf] %vm232, 0
        %253 = vst.msk [vmem:[#allocation2 + $0x4c] sm:$0xf] %vm232, 0
        %254 = vst.msk [vmem:[#allocation2 + $0x50] sm:$0x1] %vm235, 0
        %255 = vst.msk [vmem:[#allocation2 + $0x54] sm:$0xf] %vm232, 0
        %256 = vst.msk [vmem:[#allocation2 + $0x58] sm:$0xf] %vm232, 0
        %257 = vst.msk [vmem:[#allocation2 + $0x5c] sm:$0x1] %vm235, 0
        %258 = vst.msk [vmem:[#allocation2 + $0x60] sm:$0xf] %vm232, 0
        %259 = vst.msk [vmem:[#allocation2 + $0x64] sm:$0xf] %vm232, 0
        %260 = vst.msk [vmem:[#allocation2 + $0x68] sm:$0x1] %vm235, 0
        %261 = vst.msk [vmem:[#allocation2 + $0x6c] sm:$0xf] %vm232, 0
        %262 = vst.msk [vmem:[#allocation2 + $0x70] sm:$0xf] %vm232, 0
        %263 = vst.msk [vmem:[#allocation2 + $0x74] sm:$0x1] %vm235, 0
        %264 = vst.msk [vmem:[#allocation2 + $0x78] sm:$0xf] %vm232, 0
        %265 = vst.msk [vmem:[#allocation2 + $0x7c] sm:$0xf] %vm232, 0
        %266 = vst.msk [vmem:[#allocation2 + $0x80] sm:$0x1] %vm235, 0
        %267 = vst.msk [vmem:[#allocation2 + $0x84] sm:$0xf] %vm232, 0
        %268 = vst.msk [vmem:[#allocation2 + $0x88] sm:$0xf] %vm232, 0
        %269 = vst.msk [vmem:[#allocation2 + $0x8c] sm:$0x1] %vm235, 0
        %270 = vst.msk [vmem:[#allocation2 + $0x90] sm:$0xf] %vm232, 0
        %271 = vst.msk [vmem:[#allocation2 + $0x94] sm:$0xf] %vm232, 0
        %272 = vst.msk [vmem:[#allocation2 + $0x98] sm:$0x1] %vm235, 0
        %273 = vst.msk [vmem:[#allocation2 + $0x9c] sm:$0xf] %vm232, 0
        %274 = vst.msk [vmem:[#allocation2 + $0xa0] sm:$0xf] %vm232, 0
        %275 = vst.msk [vmem:[#allocation2 + $0xa4] sm:$0x1] %vm235, 0
        %276 = vst.msk [vmem:[#allocation2 + $0xa8] sm:$0xf] %vm232, 0
        %277 = vst.msk [vmem:[#allocation2 + $0xac] sm:$0xf] %vm232, 0
        %278 = vst.msk [vmem:[#allocation2 + $0xb0] sm:$0x1] %vm235, 0
        %279 = vst.msk [vmem:[#allocation2 + $0xb4] sm:$0xf] %vm232, 0
        %280 = vst.msk [vmem:[#allocation2 + $0xb8] sm:$0xf] %vm232, 0
        %281 = vst.msk [vmem:[#allocation2 + $0xbc] sm:$0x1] %vm235, 0
        %282 = vst.msk [vmem:[#allocation2 + $0xc0] sm:$0xf] %vm232, 0
        %283 = vst.msk [vmem:[#allocation2 + $0xc4] sm:$0xf] %vm232, 0
        %284 = vst.msk [vmem:[#allocation2 + $0xc8] sm:$0x1] %vm235, 0
        %285 = vst.msk [vmem:[#allocation2 + $0xcc] sm:$0xf] %vm232, 0
        %286 = vst.msk [vmem:[#allocation2 + $0xd0] sm:$0xf] %vm232, 0
        %287 = vst.msk [vmem:[#allocation2 + $0xd4] sm:$0x1] %vm235, 0
        %v288 = vld [vmem:[%s202] sm:$0xf]
        %v289 = vld [vmem:[%s202 + $0x4] sm:$0xf]
        %v290 = vld [vmem:[%s202 + $0x8] sm:$0xf]
        %v291 = vld [vmem:[%s202 + $0xc] sm:$0xf]
        %v292 = vld [vmem:[%s202 + $0x10] sm:$0xf]
        %v293 = vld [vmem:[%s202 + $0x14] sm:$0xf]
        %v294 = vld [vmem:[%s202 + $0x18] sm:$0xf]
        %v295 = vld [vmem:[%s202 + $0x1c] sm:$0xf]
        %v296 = vld [vmem:[%s202 + $0x20] sm:$0xf]
        %v297 = vld [vmem:[%s202 + $0x24] sm:$0xf]
        %v298 = vld [vmem:[%s202 + $0x28] sm:$0xf]
        %v299 = vld [vmem:[%s202 + $0x2c] sm:$0xf]
        %v300 = vld [vmem:[%s202 + $0x30] sm:$0xf]
        %v301 = vld [vmem:[%s202 + $0x34] sm:$0xf]
        %v302 = vld [vmem:[%s202 + $0x38] sm:$0xf]
        %v303 = vld [vmem:[%s202 + $0x3c] sm:$0xf]
        %v304 = vld [vmem:[%s202 + $0x40] sm:$0xf]
        %v305 = vld [vmem:[%s202 + $0x44] sm:$0xf]
        %v306 = vld [vmem:[%s202 + $0x48] sm:$0xf]
        %v307 = vld [vmem:[%s202 + $0x4c] sm:$0xf]
        %v308 = vld [vmem:[%s202 + $0x50] sm:$0xf]
        %v309 = vld [vmem:[%s202 + $0x54] sm:$0xf]
        %v310 = vld [vmem:[%s202 + $0x58] sm:$0xf]
        %v311 = vld [vmem:[%s202 + $0x5c] sm:$0xf]
        %v312 = vld [vmem:[%s202 + $0x60] sm:$0xf]
        %v313 = vld [vmem:[%s202 + $0x64] sm:$0xf]
        %v314 = vld [vmem:[%s202 + $0x68] sm:$0xf]
        %v315 = vld [vmem:[%s202 + $0x6c] sm:$0xf]
        %v316 = vld [vmem:[%s202 + $0x70] sm:$0xf]
        %v317 = vld [vmem:[%s202 + $0x74] sm:$0xf]
        %v318 = vld [vmem:[%s202 + $0x78] sm:$0xf]
        %v319 = vld [vmem:[%s202 + $0x7c] sm:$0xf]
        %vm320 = vsmask.f32 256
        %vm321 = vsmask.f32 4368
        %vm322 = vmor %vm320, %vm321
        %v324 = vshrl.u32 %v288, 16
        %v326 = vrot.slane %v324, 7
        %v327 = vshll.u32 %v288, 16
        %v329 = vor.u32 %v326, %v327
        %v330 = vrot.slane %v326, 4
        %v332 = vshrl.u32 %v289, 16
        %v334 = vrot.slane %v332, 7
        %v335 = vshll.u32 %v289, 16
        %v337 = vor.u32 %v334, %v335
        %v338 = vsel %vm322, %v330, %v337
        %v339 = vrot.slane %v334, 4
        %v341 = vshrl.u32 %v290, 16
        %v343 = vrot.slane %v341, 7
        %v344 = vshll.u32 %v290, 16
        %v346 = vor.u32 %v343, %v344
        %v347 = vrot.slane %v343, 4
        %v349 = vshrl.u32 %v291, 16
        %v351 = vrot.slane %v349, 7
        %v352 = vshll.u32 %v291, 16
        %v354 = vor.u32 %v351, %v352
        %v355 = vsel %vm322, %v347, %v354
        %v356 = vrot.slane %v351, 4
        %v358 = vshrl.u32 %v292, 16
        %v360 = vrot.slane %v358, 7
        %v361 = vshll.u32 %v292, 16
        %v363 = vor.u32 %v360, %v361
        %v364 = vrot.slane %v360, 4
        %v366 = vshrl.u32 %v293, 16
        %v368 = vrot.slane %v366, 7
        %v369 = vshll.u32 %v293, 16
        %v371 = vor.u32 %v368, %v369
        %v372 = vsel %vm322, %v364, %v371
        %v373 = vrot.slane %v368, 4
        %v375 = vshrl.u32 %v294, 16
        %v377 = vrot.slane %v375, 7
        %v378 = vshll.u32 %v294, 16
        %v380 = vor.u32 %v377, %v378
        %v381 = vrot.slane %v377, 4
        %v383 = vshrl.u32 %v295, 16
        %v385 = vrot.slane %v383, 7
        %v386 = vshll.u32 %v295, 16
        %v388 = vor.u32 %v385, %v386
        %v389 = vsel %vm322, %v381, %v388
        %v390 = vrot.slane %v385, 4
        %v392 = vshrl.u32 %v296, 16
        %v394 = vrot.slane %v392, 7
        %v395 = vshll.u32 %v296, 16
        %v397 = vor.u32 %v394, %v395
        %v398 = vrot.slane %v394, 4
        %v400 = vshrl.u32 %v297, 16
        %v402 = vrot.slane %v400, 7
        %v403 = vshll.u32 %v297, 16
        %v405 = vor.u32 %v402, %v403
        %v406 = vsel %vm322, %v398, %v405
        %v407 = vrot.slane %v402, 4
        %v409 = vshrl.u32 %v298, 16
        %v411 = vrot.slane %v409, 7
        %v412 = vshll.u32 %v298, 16
        %v414 = vor.u32 %v411, %v412
        %v415 = vrot.slane %v411, 4
        %v417 = vshrl.u32 %v299, 16
        %v419 = vrot.slane %v417, 7
        %v420 = vshll.u32 %v299, 16
        %v422 = vor.u32 %v419, %v420
        %v423 = vsel %vm322, %v415, %v422
        %v424 = vrot.slane %v419, 4
        %v426 = vshrl.u32 %v300, 16
        %v428 = vrot.slane %v426, 7
        %v429 = vshll.u32 %v300, 16
        %v431 = vor.u32 %v428, %v429
        %v432 = vrot.slane %v428, 4
        %v434 = vshrl.u32 %v301, 16
        %v436 = vrot.slane %v434, 7
        %v437 = vshll.u32 %v301, 16
        %v439 = vor.u32 %v436, %v437
        %v440 = vsel %vm322, %v432, %v439
        %v441 = vrot.slane %v436, 4
        %v443 = vshrl.u32 %v302, 16
        %v445 = vrot.slane %v443, 7
        %v446 = vshll.u32 %v302, 16
        %v448 = vor.u32 %v445, %v446
        %v449 = vrot.slane %v445, 4
        %v451 = vshrl.u32 %v303, 16
        %v453 = vrot.slane %v451, 7
        %v454 = vshll.u32 %v303, 16
        %v456 = vor.u32 %v453, %v454
        %v457 = vsel %vm322, %v449, %v456
        %v458 = vrot.slane %v453, 4
        %v460 = vshrl.u32 %v304, 16
        %v462 = vrot.slane %v460, 7
        %v463 = vshll.u32 %v304, 16
        %v465 = vor.u32 %v462, %v463
        %v466 = vrot.slane %v462, 4
        %v468 = vshrl.u32 %v305, 16
        %v470 = vrot.slane %v468, 7
        %v471 = vshll.u32 %v305, 16
        %v473 = vor.u32 %v470, %v471
        %v474 = vsel %vm322, %v466, %v473
        %v475 = vrot.slane %v470, 4
        %v477 = vshrl.u32 %v306, 16
        %v479 = vrot.slane %v477, 7
        %v480 = vshll.u32 %v306, 16
        %v482 = vor.u32 %v479, %v480
        %v483 = vrot.slane %v479, 4
        %v485 = vshrl.u32 %v307, 16
        %v487 = vrot.slane %v485, 7
        %v488 = vshll.u32 %v307, 16
        %v490 = vor.u32 %v487, %v488
        %v491 = vsel %vm322, %v483, %v490
        %v492 = vrot.slane %v487, 4
        %v494 = vshrl.u32 %v308, 16
        %v496 = vrot.slane %v494, 7
        %v497 = vshll.u32 %v308, 16
        %v499 = vor.u32 %v496, %v497
        %v500 = vrot.slane %v496, 4
        %v502 = vshrl.u32 %v309, 16
        %v504 = vrot.slane %v502, 7
        %v505 = vshll.u32 %v309, 16
        %v507 = vor.u32 %v504, %v505
        %v508 = vsel %vm322, %v500, %v507
        %v509 = vrot.slane %v504, 4
        %v511 = vshrl.u32 %v310, 16
        %v513 = vrot.slane %v511, 7
        %v514 = vshll.u32 %v310, 16
        %v516 = vor.u32 %v513, %v514
        %v517 = vrot.slane %v513, 4
        %v519 = vshrl.u32 %v311, 16
        %v521 = vrot.slane %v519, 7
        %v522 = vshll.u32 %v311, 16
        %v524 = vor.u32 %v521, %v522
        %v525 = vsel %vm322, %v517, %v524
        %v526 = vrot.slane %v521, 4
        %v528 = vshrl.u32 %v312, 16
        %v530 = vrot.slane %v528, 7
        %v531 = vshll.u32 %v312, 16
        %v533 = vor.u32 %v530, %v531
        %v534 = vrot.slane %v530, 4
        %v536 = vshrl.u32 %v313, 16
        %v538 = vrot.slane %v536, 7
        %v539 = vshll.u32 %v313, 16
        %v541 = vor.u32 %v538, %v539
        %v542 = vsel %vm322, %v534, %v541
        %v543 = vrot.slane %v538, 4
        %v545 = vshrl.u32 %v314, 16
        %v547 = vrot.slane %v545, 7
        %v548 = vshll.u32 %v314, 16
        %v550 = vor.u32 %v547, %v548
        %v551 = vrot.slane %v547, 4
        %v553 = vshrl.u32 %v315, 16
        %v555 = vrot.slane %v553, 7
        %v556 = vshll.u32 %v315, 16
        %v558 = vor.u32 %v555, %v556
        %v559 = vsel %vm322, %v551, %v558
        %v560 = vrot.slane %v555, 4
        %v562 = vshrl.u32 %v316, 16
        %v564 = vrot.slane %v562, 7
        %v565 = vshll.u32 %v316, 16
        %v567 = vor.u32 %v564, %v565
        %v568 = vrot.slane %v564, 4
        %v570 = vshrl.u32 %v317, 16
        %v572 = vrot.slane %v570, 7
        %v573 = vshll.u32 %v317, 16
        %v575 = vor.u32 %v572, %v573
        %v576 = vsel %vm322, %v568, %v575
        %v577 = vrot.slane %v572, 4
        %v579 = vshrl.u32 %v318, 16
        %v581 = vrot.slane %v579, 7
        %v582 = vshll.u32 %v318, 16
        %v584 = vor.u32 %v581, %v582
        %v585 = vrot.slane %v581, 4
        %v587 = vshrl.u32 %v319, 16
        %v589 = vrot.slane %v587, 7
        %v590 = vshll.u32 %v319, 16
        %v592 = vor.u32 %v589, %v590
        %v593 = vsel %vm322, %v585, %v592
        %v594 = vrot.slane %v589, 4
        %s643 = scalar_lea.vmem [#allocation2], 12
        %vm644 = vcmask 519168
        %vm645 = vsmask.f32 7938
        %vm646 = vmand %vm644, %vm645
        %v647 = vld [vmem:[%s643] sm:$0xf]
        %v648 = vsel %vm646, %v329, %v647
        %649 = vst [vmem:[%s643] sm:$0xf] %v648
        %650 = vst.msk [vmem:[%s643 + $0x4] sm:$0xf] %vm232, %v338
        %vm651 = vcmask 516096
        %vm652 = vmand %vm651, %vm320
        %v653 = vld [vmem:[%s643 + $0x8] sm:$0x1]
        %v654 = vsel %vm652, %v339, %v653
        %655 = vst [vmem:[%s643 + $0x8] sm:$0x1] %v654
        %v656 = vld [vmem:[%s643 + $0xc] sm:$0xf]
        %v657 = vsel %vm646, %v346, %v656
        %658 = vst [vmem:[%s643 + $0xc] sm:$0xf] %v657
        %659 = vst.msk [vmem:[%s643 + $0x10] sm:$0xf] %vm232, %v355
        %v660 = vld [vmem:[%s643 + $0x14] sm:$0x1]
        %v661 = vsel %vm652, %v356, %v660
        %662 = vst [vmem:[%s643 + $0x14] sm:$0x1] %v661
        %v663 = vld [vmem:[%s643 + $0x18] sm:$0xf]
        %v664 = vsel %vm646, %v363, %v663
        %665 = vst [vmem:[%s643 + $0x18] sm:$0xf] %v664
        %666 = vst.msk [vmem:[%s643 + $0x1c] sm:$0xf] %vm232, %v372
        %v667 = vld [vmem:[%s643 + $0x20] sm:$0x1]
        %v668 = vsel %vm652, %v373, %v667
        %669 = vst [vmem:[%s643 + $0x20] sm:$0x1] %v668
        %v670 = vld [vmem:[%s643 + $0x24] sm:$0xf]
        %v671 = vsel %vm646, %v380, %v670
        %672 = vst [vmem:[%s643 + $0x24] sm:$0xf] %v671
        %673 = vst.msk [vmem:[%s643 + $0x28] sm:$0xf] %vm232, %v389
        %v674 = vld [vmem:[%s643 + $0x2c] sm:$0x1]
        %v675 = vsel %vm652, %v390, %v674
        %676 = vst [vmem:[%s643 + $0x2c] sm:$0x1] %v675
        %v677 = vld [vmem:[%s643 + $0x30] sm:$0xf]
        %v678 = vsel %vm646, %v397, %v677
        %679 = vst [vmem:[%s643 + $0x30] sm:$0xf] %v678
        %680 = vst.msk [vmem:[%s643 + $0x34] sm:$0xf] %vm232, %v406
        %v681 = vld [vmem:[%s643 + $0x38] sm:$0x1]
        %v682 = vsel %vm652, %v407, %v681
        %683 = vst [vmem:[%s643 + $0x38] sm:$0x1] %v682
        %v684 = vld [vmem:[%s643 + $0x3c] sm:$0xf]
        %v685 = vsel %vm646, %v414, %v684
        %686 = vst [vmem:[%s643 + $0x3c] sm:$0xf] %v685
        %687 = vst.msk [vmem:[%s643 + $0x40] sm:$0xf] %vm232, %v423
        %v688 = vld [vmem:[%s643 + $0x44] sm:$0x1]
        %v689 = vsel %vm652, %v424, %v688
        %690 = vst [vmem:[%s643 + $0x44] sm:$0x1] %v689
        %v691 = vld [vmem:[%s643 + $0x48] sm:$0xf]
        %v692 = vsel %vm646, %v431, %v691
        %693 = vst [vmem:[%s643 + $0x48] sm:$0xf] %v692
        %694 = vst.msk [vmem:[%s643 + $0x4c] sm:$0xf] %vm232, %v440
        %v695 = vld [vmem:[%s643 + $0x50] sm:$0x1]
        %v696 = vsel %vm652, %v441, %v695
        %697 = vst [vmem:[%s643 + $0x50] sm:$0x1] %v696
        %v698 = vld [vmem:[%s643 + $0x54] sm:$0xf]
        %v699 = vsel %vm646, %v448, %v698
        %700 = vst [vmem:[%s643 + $0x54] sm:$0xf] %v699
        %701 = vst.msk [vmem:[%s643 + $0x58] sm:$0xf] %vm232, %v457
        %v702 = vld [vmem:[%s643 + $0x5c] sm:$0x1]
        %v703 = vsel %vm652, %v458, %v702
        %704 = vst [vmem:[%s643 + $0x5c] sm:$0x1] %v703
        %v705 = vld [vmem:[%s643 + $0x60] sm:$0xf]
        %v706 = vsel %vm646, %v465, %v705
        %707 = vst [vmem:[%s643 + $0x60] sm:$0xf] %v706
        %708 = vst.msk [vmem:[%s643 + $0x64] sm:$0xf] %vm232, %v474
        %v709 = vld [vmem:[%s643 + $0x68] sm:$0x1]
        %v710 = vsel %vm652, %v475, %v709
        %711 = vst [vmem:[%s643 + $0x68] sm:$0x1] %v710
        %v712 = vld [vmem:[%s643 + $0x6c] sm:$0xf]
        %v713 = vsel %vm646, %v482, %v712
        %714 = vst [vmem:[%s643 + $0x6c] sm:$0xf] %v713
        %715 = vst.msk [vmem:[%s643 + $0x70] sm:$0xf] %vm232, %v491
        %v716 = vld [vmem:[%s643 + $0x74] sm:$0x1]
        %v717 = vsel %vm652, %v492, %v716
        %718 = vst [vmem:[%s643 + $0x74] sm:$0x1] %v717
        %v719 = vld [vmem:[%s643 + $0x78] sm:$0xf]
        %v720 = vsel %vm646, %v499, %v719
        %721 = vst [vmem:[%s643 + $0x78] sm:$0xf] %v720
        %722 = vst.msk [vmem:[%s643 + $0x7c] sm:$0xf] %vm232, %v508
        %v723 = vld [vmem:[%s643 + $0x80] sm:$0x1]
        %v724 = vsel %vm652, %v509, %v723
        %725 = vst [vmem:[%s643 + $0x80] sm:$0x1] %v724
        %v726 = vld [vmem:[%s643 + $0x84] sm:$0xf]
        %v727 = vsel %vm646, %v516, %v726
        %728 = vst [vmem:[%s643 + $0x84] sm:$0xf] %v727
        %729 = vst.msk [vmem:[%s643 + $0x88] sm:$0xf] %vm232, %v525
        %v730 = vld [vmem:[%s643 + $0x8c] sm:$0x1]
        %v731 = vsel %vm652, %v526, %v730
        %732 = vst [vmem:[%s643 + $0x8c] sm:$0x1] %v731
        %v733 = vld [vmem:[%s643 + $0x90] sm:$0xf]
        %v734 = vsel %vm646, %v533, %v733
        %735 = vst [vmem:[%s643 + $0x90] sm:$0xf] %v734
        %736 = vst.msk [vmem:[%s643 + $0x94] sm:$0xf] %vm232, %v542
        %v737 = vld [vmem:[%s643 + $0x98] sm:$0x1]
        %v738 = vsel %vm652, %v543, %v737
        %739 = vst [vmem:[%s643 + $0x98] sm:$0x1] %v738
        %v740 = vld [vmem:[%s643 + $0x9c] sm:$0xf]
        %v741 = vsel %vm646, %v550, %v740
        %742 = vst [vmem:[%s643 + $0x9c] sm:$0xf] %v741
        %743 = vst.msk [vmem:[%s643 + $0xa0] sm:$0xf] %vm232, %v559
        %v744 = vld [vmem:[%s643 + $0xa4] sm:$0x1]
        %v745 = vsel %vm652, %v560, %v744
        %746 = vst [vmem:[%s643 + $0xa4] sm:$0x1] %v745
        %v747 = vld [vmem:[%s643 + $0xa8] sm:$0xf]
        %v748 = vsel %vm646, %v567, %v747
        %749 = vst [vmem:[%s643 + $0xa8] sm:$0xf] %v748
        %750 = vst.msk [vmem:[%s643 + $0xac] sm:$0xf] %vm232, %v576
        %v751 = vld [vmem:[%s643 + $0xb0] sm:$0x1]
        %v752 = vsel %vm652, %v577, %v751
        %753 = vst [vmem:[%s643 + $0xb0] sm:$0x1] %v752
        %v754 = vld [vmem:[%s643 + $0xb4] sm:$0xf]
        %v755 = vsel %vm646, %v584, %v754
        %756 = vst [vmem:[%s643 + $0xb4] sm:$0xf] %v755
        %757 = vst.msk [vmem:[%s643 + $0xb8] sm:$0xf] %vm232, %v593
        %v758 = vld [vmem:[%s643 + $0xbc] sm:$0x1]
        %v759 = vsel %vm652, %v594, %v758
        %760 = vst [vmem:[%s643 + $0xbc] sm:$0x1] %v759
        %v761 = vld [vmem:[#allocation2] sm:$0xf]
        %v762 = vld [vmem:[#allocation2 + $0x4] sm:$0xf]
        %v763 = vld [vmem:[#allocation2 + $0xc] sm:$0xf]
        %v764 = vld [vmem:[#allocation2 + $0x10] sm:$0xf]
        %v765 = vld [vmem:[#allocation2 + $0x18] sm:$0xf]
        %v766 = vld [vmem:[#allocation2 + $0x1c] sm:$0xf]
        %v767 = vld [vmem:[#allocation2 + $0x24] sm:$0xf]
        %v768 = vld [vmem:[#allocation2 + $0x28] sm:$0xf]
        %v769 = vld [vmem:[#allocation2 + $0x30] sm:$0xf]
        %v770 = vld [vmem:[#allocation2 + $0x34] sm:$0xf]
        %v771 = vld [vmem:[#allocation2 + $0x3c] sm:$0xf]
        %v772 = vld [vmem:[#allocation2 + $0x40] sm:$0xf]
        %v773 = vld [vmem:[#allocation2 + $0x48] sm:$0xf]
        %v774 = vld [vmem:[#allocation2 + $0x4c] sm:$0xf]
        %v775 = vld [vmem:[#allocation2 + $0x54] sm:$0xf]
        %v776 = vld [vmem:[#allocation2 + $0x58] sm:$0xf]
        %v777 = vld [vmem:[#allocation2 + $0x60] sm:$0xf]
        %v778 = vld [vmem:[#allocation2 + $0x64] sm:$0xf]
        %v779 = vld [vmem:[#allocation2 + $0x6c] sm:$0xf]
        %v780 = vld [vmem:[#allocation2 + $0x70] sm:$0xf]
        %v781 = vld [vmem:[#allocation2 + $0x78] sm:$0xf]
        %v782 = vld [vmem:[#allocation2 + $0x7c] sm:$0xf]
        %v783 = vld [vmem:[#allocation2 + $0x84] sm:$0xf]
        %v784 = vld [vmem:[#allocation2 + $0x88] sm:$0xf]
        %v785 = vld [vmem:[#allocation2 + $0x90] sm:$0xf]
        %v786 = vld [vmem:[#allocation2 + $0x94] sm:$0xf]
        %v787 = vld [vmem:[#allocation2 + $0x9c] sm:$0xf]
        %v788 = vld [vmem:[#allocation2 + $0xa0] sm:$0xf]
        %v789 = vld [vmem:[#allocation2 + $0xa8] sm:$0xf]
        %v790 = vld [vmem:[#allocation2 + $0xac] sm:$0xf]
        %v791 = vld [vmem:[#allocation2 + $0xb4] sm:$0xf]
        %v792 = vld [vmem:[#allocation2 + $0xb8] sm:$0xf]
        %v793 = vld [vmem:[#allocation6] sm:$0xf]
        %v794 = vld [vmem:[#allocation6 + $0x4] sm:$0xf]
        %v795 = vld [vmem:[#allocation6 + $0x8] sm:$0xf]
        %v796 = vld [vmem:[#allocation6 + $0xc] sm:$0xf]
        %v797 = vld [vmem:[#allocation6 + $0x10] sm:$0xf]
        %v798 = vld [vmem:[#allocation6 + $0x14] sm:$0xf]
        %v799 = vld [vmem:[#allocation6 + $0x18] sm:$0xf]
        %v800 = vld [vmem:[#allocation6 + $0x1c] sm:$0xf]
        %v801 = vld [vmem:[#allocation2 + $0x8] sm:$0x1]
        %v802 = vld [vmem:[#allocation2 + $0x14] sm:$0x1]
        %v803 = vld [vmem:[#allocation2 + $0x20] sm:$0x1]
        %v804 = vld [vmem:[#allocation2 + $0x2c] sm:$0x1]
        %v805 = vld [vmem:[#allocation2 + $0x38] sm:$0x1]
        %v806 = vld [vmem:[#allocation2 + $0x44] sm:$0x1]
        %v807 = vld [vmem:[#allocation2 + $0x50] sm:$0x1]
        %v808 = vld [vmem:[#allocation2 + $0x5c] sm:$0x1]
        %v809 = vld [vmem:[#allocation2 + $0x68] sm:$0x1]
        %v810 = vld [vmem:[#allocation2 + $0x74] sm:$0x1]
        %v811 = vld [vmem:[#allocation2 + $0x80] sm:$0x1]
        %v812 = vld [vmem:[#allocation2 + $0x8c] sm:$0x1]
        %v813 = vld [vmem:[#allocation2 + $0x98] sm:$0x1]
        %v814 = vld [vmem:[#allocation2 + $0xa4] sm:$0x1]
        %v815 = vld [vmem:[#allocation2 + $0xb0] sm:$0x1]
        %v816 = vld [vmem:[#allocation2 + $0xbc] sm:$0x1]
        %vm817 = vsmask.f32 3328
        %vm818 = vsmask.f32 7440
        %vm819 = vmor %vm817, %vm818
        %v821 = vshrl.u32 %v761, 16
        %v823 = vrot.slane %v821, 4
        %v824 = vshll.u32 %v761, 16
        %v826 = vrot.slane %v824, 5
        %v827 = vor.u32 %v823, %v826
        %v828 = vrot.slane %v827, 4
        %v830 = vshll.u32 %v762, 16
        %v832 = vrot.slane %v830, 5
        %v833 = vsel %vm819, %v828, %v832
        %v834 = vshrl.u32 %v762, 16
        %v836 = vrot.slane %v834, 4
        %v837 = vor.u32 %v836, %v832
        %v838 = vrot.slane %v837, 4
        %v840 = vshll.u32 %v801, 16
        %v842 = vrot.slane %v840, 5
        %v843 = vsel %vm819, %v838, %v842
        %v845 = vshrl.u32 %v763, 16
        %v847 = vrot.slane %v845, 4
        %v848 = vshll.u32 %v763, 16
        %v850 = vrot.slane %v848, 5
        %v851 = vor.u32 %v847, %v850
        %v852 = vrot.slane %v851, 4
        %v854 = vshll.u32 %v764, 16
        %v856 = vrot.slane %v854, 5
        %v857 = vsel %vm819, %v852, %v856
        %v858 = vshrl.u32 %v764, 16
        %v860 = vrot.slane %v858, 4
        %v861 = vor.u32 %v860, %v856
        %v862 = vrot.slane %v861, 4
        %v864 = vshll.u32 %v802, 16
        %v866 = vrot.slane %v864, 5
        %v867 = vsel %vm819, %v862, %v866
        %v869 = vshrl.u32 %v765, 16
        %v871 = vrot.slane %v869, 4
        %v872 = vshll.u32 %v765, 16
        %v874 = vrot.slane %v872, 5
        %v875 = vor.u32 %v871, %v874
        %v876 = vrot.slane %v875, 4
        %v878 = vshll.u32 %v766, 16
        %v880 = vrot.slane %v878, 5
        %v881 = vsel %vm819, %v876, %v880
        %v882 = vshrl.u32 %v766, 16
        %v884 = vrot.slane %v882, 4
        %v885 = vor.u32 %v884, %v880
        %v886 = vrot.slane %v885, 4
        %v888 = vshll.u32 %v803, 16
        %v890 = vrot.slane %v888, 5
        %v891 = vsel %vm819, %v886, %v890
        %v893 = vshrl.u32 %v767, 16
        %v895 = vrot.slane %v893, 4
        %v896 = vshll.u32 %v767, 16
        %v898 = vrot.slane %v896, 5
        %v899 = vor.u32 %v895, %v898
        %v900 = vrot.slane %v899, 4
        %v902 = vshll.u32 %v768, 16
        %v904 = vrot.slane %v902, 5
        %v905 = vsel %vm819, %v900, %v904
        %v906 = vshrl.u32 %v768, 16
        %v908 = vrot.slane %v906, 4
        %v909 = vor.u32 %v908, %v904
        %v910 = vrot.slane %v909, 4
        %v912 = vshll.u32 %v804, 16
        %v914 = vrot.slane %v912, 5
        %v915 = vsel %vm819, %v910, %v914
        %v917 = vshrl.u32 %v769, 16
        %v919 = vrot.slane %v917, 4
        %v920 = vshll.u32 %v769, 16
        %v922 = vrot.slane %v920, 5
        %v923 = vor.u32 %v919, %v922
        %v924 = vrot.slane %v923, 4
        %v926 = vshll.u32 %v770, 16
        %v928 = vrot.slane %v926, 5
        %v929 = vsel %vm819, %v924, %v928
        %v930 = vshrl.u32 %v770, 16
        %v932 = vrot.slane %v930, 4
        %v933 = vor.u32 %v932, %v928
        %v934 = vrot.slane %v933, 4
        %v936 = vshll.u32 %v805, 16
        %v938 = vrot.slane %v936, 5
        %v939 = vsel %vm819, %v934, %v938
        %v941 = vshrl.u32 %v771, 16
        %v943 = vrot.slane %v941, 4
        %v944 = vshll.u32 %v771, 16
        %v946 = vrot.slane %v944, 5
        %v947 = vor.u32 %v943, %v946
        %v948 = vrot.slane %v947, 4
        %v950 = vshll.u32 %v772, 16
        %v952 = vrot.slane %v950, 5
        %v953 = vsel %vm819, %v948, %v952
        %v954 = vshrl.u32 %v772, 16
        %v956 = vrot.slane %v954, 4
        %v957 = vor.u32 %v956, %v952
        %v958 = vrot.slane %v957, 4
        %v960 = vshll.u32 %v806, 16
        %v962 = vrot.slane %v960, 5
        %v963 = vsel %vm819, %v958, %v962
        %v965 = vshrl.u32 %v773, 16
        %v967 = vrot.slane %v965, 4
        %v968 = vshll.u32 %v773, 16
        %v970 = vrot.slane %v968, 5
        %v971 = vor.u32 %v967, %v970
        %v972 = vrot.slane %v971, 4
        %v974 = vshll.u32 %v774, 16
        %v976 = vrot.slane %v974, 5
        %v977 = vsel %vm819, %v972, %v976
        %v978 = vshrl.u32 %v774, 16
        %v980 = vrot.slane %v978, 4
        %v981 = vor.u32 %v980, %v976
        %v982 = vrot.slane %v981, 4
        %v984 = vshll.u32 %v807, 16
        %v986 = vrot.slane %v984, 5
        %v987 = vsel %vm819, %v982, %v986
        %v989 = vshrl.u32 %v775, 16
        %v991 = vrot.slane %v989, 4
        %v992 = vshll.u32 %v775, 16
        %v994 = vrot.slane %v992, 5
        %v995 = vor.u32 %v991, %v994
        %v996 = vrot.slane %v995, 4
        %v998 = vshll.u32 %v776, 16
        %v1000 = vrot.slane %v998, 5
        %v1001 = vsel %vm819, %v996, %v1000
        %v1002 = vshrl.u32 %v776, 16
        %v1004 = vrot.slane %v1002, 4
        %v1005 = vor.u32 %v1004, %v1000
        %v1006 = vrot.slane %v1005, 4
        %v1008 = vshll.u32 %v808, 16
        %v1010 = vrot.slane %v1008, 5
        %v1011 = vsel %vm819, %v1006, %v1010
        %v1013 = vshrl.u32 %v777, 16
        %v1015 = vrot.slane %v1013, 4
        %v1016 = vshll.u32 %v777, 16
        %v1018 = vrot.slane %v1016, 5
        %v1019 = vor.u32 %v1015, %v1018
        %v1020 = vrot.slane %v1019, 4
        %v1022 = vshll.u32 %v778, 16
        %v1024 = vrot.slane %v1022, 5
        %v1025 = vsel %vm819, %v1020, %v1024
        %v1026 = vshrl.u32 %v778, 16
        %v1028 = vrot.slane %v1026, 4
        %v1029 = vor.u32 %v1028, %v1024
        %v1030 = vrot.slane %v1029, 4
        %v1032 = vshll.u32 %v809, 16
        %v1034 = vrot.slane %v1032, 5
        %v1035 = vsel %vm819, %v1030, %v1034
        %v1037 = vshrl.u32 %v779, 16
        %v1039 = vrot.slane %v1037, 4
        %v1040 = vshll.u32 %v779, 16
        %v1042 = vrot.slane %v1040, 5
        %v1043 = vor.u32 %v1039, %v1042
        %v1044 = vrot.slane %v1043, 4
        %v1046 = vshll.u32 %v780, 16
        %v1048 = vrot.slane %v1046, 5
        %v1049 = vsel %vm819, %v1044, %v1048
        %v1050 = vshrl.u32 %v780, 16
        %v1052 = vrot.slane %v1050, 4
        %v1053 = vor.u32 %v1052, %v1048
        %v1054 = vrot.slane %v1053, 4
        %v1056 = vshll.u32 %v810, 16
        %v1058 = vrot.slane %v1056, 5
        %v1059 = vsel %vm819, %v1054, %v1058
        %v1061 = vshrl.u32 %v781, 16
        %v1063 = vrot.slane %v1061, 4
        %v1064 = vshll.u32 %v781, 16
        %v1066 = vrot.slane %v1064, 5
        %v1067 = vor.u32 %v1063, %v1066
        %v1068 = vrot.slane %v1067, 4
        %v1070 = vshll.u32 %v782, 16
        %v1072 = vrot.slane %v1070, 5
        %v1073 = vsel %vm819, %v1068, %v1072
        %v1074 = vshrl.u32 %v782, 16
        %v1076 = vrot.slane %v1074, 4
        %v1077 = vor.u32 %v1076, %v1072
        %v1078 = vrot.slane %v1077, 4
        %v1080 = vshll.u32 %v811, 16
        %v1082 = vrot.slane %v1080, 5
        %v1083 = vsel %vm819, %v1078, %v1082
        %v1085 = vshrl.u32 %v783, 16
        %v1087 = vrot.slane %v1085, 4
        %v1088 = vshll.u32 %v783, 16
        %v1090 = vrot.slane %v1088, 5
        %v1091 = vor.u32 %v1087, %v1090
        %v1092 = vrot.slane %v1091, 4
        %v1094 = vshll.u32 %v784, 16
        %v1096 = vrot.slane %v1094, 5
        %v1097 = vsel %vm819, %v1092, %v1096
        %v1098 = vshrl.u32 %v784, 16
        %v1100 = vrot.slane %v1098, 4
        %v1101 = vor.u32 %v1100, %v1096
        %v1102 = vrot.slane %v1101, 4
        %v1104 = vshll.u32 %v812, 16
        %v1106 = vrot.slane %v1104, 5
        %v1107 = vsel %vm819, %v1102, %v1106
        %v1109 = vshrl.u32 %v785, 16
        %v1111 = vrot.slane %v1109, 4
        %v1112 = vshll.u32 %v785, 16
        %v1114 = vrot.slane %v1112, 5
        %v1115 = vor.u32 %v1111, %v1114
        %v1116 = vrot.slane %v1115, 4
        %v1118 = vshll.u32 %v786, 16
        %v1120 = vrot.slane %v1118, 5
        %v1121 = vsel %vm819, %v1116, %v1120
        %v1122 = vshrl.u32 %v786, 16
        %v1124 = vrot.slane %v1122, 4
        %v1125 = vor.u32 %v1124, %v1120
        %v1126 = vrot.slane %v1125, 4
        %v1128 = vshll.u32 %v813, 16
        %v1130 = vrot.slane %v1128, 5
        %v1131 = vsel %vm819, %v1126, %v1130
        %v1133 = vshrl.u32 %v787, 16
        %v1135 = vrot.slane %v1133, 4
        %v1136 = vshll.u32 %v787, 16
        %v1138 = vrot.slane %v1136, 5
        %v1139 = vor.u32 %v1135, %v1138
        %v1140 = vrot.slane %v1139, 4
        %v1142 = vshll.u32 %v788, 16
        %v1144 = vrot.slane %v1142, 5
        %v1145 = vsel %vm819, %v1140, %v1144
        %v1146 = vshrl.u32 %v788, 16
        %v1148 = vrot.slane %v1146, 4
        %v1149 = vor.u32 %v1148, %v1144
        %v1150 = vrot.slane %v1149, 4
        %v1152 = vshll.u32 %v814, 16
        %v1154 = vrot.slane %v1152, 5
        %v1155 = vsel %vm819, %v1150, %v1154
        %v1157 = vshrl.u32 %v789, 16
        %v1159 = vrot.slane %v1157, 4
        %v1160 = vshll.u32 %v789, 16
        %v1162 = vrot.slane %v1160, 5
        %v1163 = vor.u32 %v1159, %v1162
        %v1164 = vrot.slane %v1163, 4
        %v1166 = vshll.u32 %v790, 16
        %v1168 = vrot.slane %v1166, 5
        %v1169 = vsel %vm819, %v1164, %v1168
        %v1170 = vshrl.u32 %v790, 16
        %v1172 = vrot.slane %v1170, 4
        %v1173 = vor.u32 %v1172, %v1168
        %v1174 = vrot.slane %v1173, 4
        %v1176 = vshll.u32 %v815, 16
        %v1178 = vrot.slane %v1176, 5
        %v1179 = vsel %vm819, %v1174, %v1178
        %v1181 = vshrl.u32 %v791, 16
        %v1183 = vrot.slane %v1181, 4
        %v1184 = vshll.u32 %v791, 16
        %v1186 = vrot.slane %v1184, 5
        %v1187 = vor.u32 %v1183, %v1186
        %v1188 = vrot.slane %v1187, 4
        %v1190 = vshll.u32 %v792, 16
        %v1192 = vrot.slane %v1190, 5
        %v1193 = vsel %vm819, %v1188, %v1192
        %v1194 = vshrl.u32 %v792, 16
        %v1196 = vrot.slane %v1194, 4
        %v1197 = vor.u32 %v1196, %v1192
        %v1198 = vrot.slane %v1197, 4
        %v1200 = vshll.u32 %v816, 16
        %v1202 = vrot.slane %v1200, 5
        %v1203 = vsel %vm819, %v1198, %v1202
        %s1204 = scalar_lea.vmem [#allocation6], 32
        %v1205 = vld [vmem:[%s1204] sm:$0xf]
        %v1206 = vld [vmem:[%s1204 + $0x4] sm:$0xf]
        %v1207 = vld [vmem:[%s1204 + $0x8] sm:$0xf]
        %v1208 = vld [vmem:[%s1204 + $0xc] sm:$0xf]
        %v1209 = vld [vmem:[%s1204 + $0x10] sm:$0xf]
        %v1210 = vld [vmem:[%s1204 + $0x14] sm:$0xf]
        %v1211 = vld [vmem:[%s1204 + $0x18] sm:$0xf]
        %v1212 = vld [vmem:[%s1204 + $0x1c] sm:$0xf]
        %v1213 = vunpack.c.l.b16 %v833
        %v1214 = vunpack.c.l.b16 %v843
        %v1215 = vunpack.c.l.b16 %v857
        %v1216 = vunpack.c.l.b16 %v867
        %v1217 = vunpack.c.l.b16 %v881
        %v1218 = vunpack.c.l.b16 %v891
        %v1219 = vunpack.c.l.b16 %v905
        %v1220 = vunpack.c.l.b16 %v915
        %v1221 = vunpack.c.l.b16 %v929
        %v1222 = vunpack.c.l.b16 %v939
        %v1223 = vunpack.c.l.b16 %v953
        %v1224 = vunpack.c.l.b16 %v963
        %v1225 = vunpack.c.l.b16 %v977
        %v1226 = vunpack.c.l.b16 %v987
        %v1227 = vunpack.c.l.b16 %v1001
        %v1228 = vunpack.c.l.b16 %v1011
        %v1229 = vunpack.c.l.b16 %v1025
        %v1230 = vunpack.c.l.b16 %v1035
        %v1231 = vunpack.c.l.b16 %v1049
        %v1232 = vunpack.c.l.b16 %v1059
        %v1233 = vunpack.c.l.b16 %v1073
        %v1234 = vunpack.c.l.b16 %v1083
        %v1235 = vunpack.c.l.b16 %v1097
        %v1236 = vunpack.c.l.b16 %v1107
        %v1237 = vunpack.c.l.b16 %v1121
        %v1238 = vunpack.c.l.b16 %v1131
        %v1239 = vunpack.c.l.b16 %v1145
        %v1240 = vunpack.c.l.b16 %v1155
        %v1241 = vunpack.c.l.b16 %v1169
        %v1242 = vunpack.c.l.b16 %v1179
        %v1243 = vunpack.c.l.b16 %v1193
        %v1244 = vunpack.c.l.b16 %v1203
        %v1245 = vpack.c.b16 %v1214, %v1213
        %v1246 = vpack.c.b16 %v1216, %v1215
        %v1247 = vpack.c.b16 %v1218, %v1217
        %v1248 = vpack.c.b16 %v1220, %v1219
        %v1249 = vpack.c.b16 %v1222, %v1221
        %v1250 = vpack.c.b16 %v1224, %v1223
        %v1251 = vpack.c.b16 %v1226, %v1225
        %v1252 = vpack.c.b16 %v1228, %v1227
        %v1253 = vpack.c.b16 %v1230, %v1229
        %v1254 = vpack.c.b16 %v1232, %v1231
        %v1255 = vpack.c.b16 %v1234, %v1233
        %v1256 = vpack.c.b16 %v1236, %v1235
        %v1257 = vpack.c.b16 %v1238, %v1237
        %v1258 = vpack.c.b16 %v1240, %v1239
        %v1259 = vpack.c.b16 %v1242, %v1241
        %v1260 = vpack.c.b16 %v1244, %v1243
        %v1269 = vunpack.c.l.b16 %v1205
        %v1270 = vunpack.c.l.b16 %v1206
        %v1271 = vunpack.c.l.b16 %v1207
        %v1272 = vunpack.c.l.b16 %v1208
        %v1273 = vunpack.c.l.b16 %v1209
        %v1274 = vunpack.c.l.b16 %v1210
        %v1275 = vunpack.c.l.b16 %v1211
        %v1276 = vunpack.c.l.b16 %v1212
        %v1277 = vpack.c.b16 %v1270, %v1269
        %v1278 = vpack.c.b16 %v1272, %v1271
        %v1279 = vpack.c.b16 %v1274, %v1273
        %v1280 = vpack.c.b16 %v1276, %v1275
        %vm1285 = vcmask 523264
        %v1287 = vsel %vm1285, %v1245, 0
        %v1290 = vsel %vm1285, %v1246, 0
        %v1293 = vsel %vm1285, %v1247, 0
        %v1296 = vsel %vm1285, %v1248, 0
        %v1299 = vsel %vm1285, %v1249, 0
        %v1302 = vsel %vm1285, %v1250, 0
        %v1305 = vsel %vm1285, %v1251, 0
        %v1308 = vsel %vm1285, %v1252, 0
        %v1311 = vsel %vm1285, %v1253, 0
        %v1314 = vsel %vm1285, %v1254, 0
        %v1317 = vsel %vm1285, %v1255, 0
        %v1320 = vsel %vm1285, %v1256, 0
        %v1323 = vsel %vm1285, %v1257, 0
        %v1326 = vsel %vm1285, %v1258, 0
        %v1329 = vsel %vm1285, %v1259, 0
        %v1332 = vsel %vm1285, %v1260, 0
        %1334 = vmatprep.subr.bf16.mxu0 0
        %1335 = vmatpush1.bf16.msra.mxu0 %v1277
        %1336 = vmatprep.subr.bf16.mxu0 0
        %1337 = vmatpush1.bf16.msra.mxu0 %v1278
        %1338 = vmatprep.subr.bf16.mxu0 0
        %1339 = vmatpush1.bf16.msra.mxu0 %v1279
        %1340 = vmatprep.subr.bf16.mxu0 0
        %1341 = vmatpush1.bf16.msra.mxu0 %v1280
        %1342 = vmatprep.subr.bf16.mxu0 0
        %1343 = vmatpush1.bf16.msra.mxu0 0
        %1344 = vmatprep.subr.bf16.mxu0 0
        %1345 = vmatpush1.bf16.msra.mxu0 0
        %1346 = vmatprep.subr.bf16.mxu0 0
        %1347 = vmatpush1.bf16.msra.mxu0 0
        %1348 = vmatprep.subr.bf16.mxu0 0
        %1349 = vmatpush1.bf16.msra.mxu0 0
        %1350 = vmatprep.subr.bf16.mxu0 0
        %1351 = vmatpush1.bf16.msra.mxu0 0
        %1352 = vmatprep.subr.bf16.mxu0 0
        %1353 = vmatpush1.bf16.msra.mxu0 0
        %1354 = vmatprep.subr.bf16.mxu0 0
        %1355 = vmatpush1.bf16.msra.mxu0 0
        %1356 = vmatprep.subr.bf16.mxu0 0
        %1357 = vmatpush1.bf16.msra.mxu0 0
        %1358 = vmatprep.subr.bf16.mxu0 0
        %1359 = vmatpush1.bf16.msra.mxu0 0
        %1360 = vmatprep.subr.bf16.mxu0 0
        %1361 = vmatpush1.bf16.msra.mxu0 0
        %1362 = vmatprep.subr.bf16.mxu0 0
        %1363 = vmatpush1.bf16.msra.mxu0 0
        %1364 = vmatprep.subr.bf16.mxu0 0
        %1365 = vmatpush1.bf16.msra.mxu0 0
        %1366 = vmatprep.mubr.bf16.mxu0 0
        %1367 = vmatmul.mubr.bf16.gmra.mrb[0].mxu0 %v1287
        %v1368 = vpop.f32.mrb[0].mxu0
        %v1369 = vadd.f32 0.0, %v1368
        %v1370 = vpop.f32.mrb[0].mxu0
        %v1371 = vpop.f32.mrb[0].mxu0
        %v1372 = vadd.f32 0.0, %v1371
        %v1373 = vpop.f32.mrb[0].mxu0
        %1374 = vmatprep.mubr.bf16.mxu0 0
        %1375 = vmatmul.mubr.bf16.gmra.mrb[0].mxu0 %v1290
        %v1376 = vpop.f32.mrb[0].mxu0
        %v1377 = vadd.f32 0.0, %v1376
        %v1378 = vpop.f32.mrb[0].mxu0
        %v1379 = vpop.f32.mrb[0].mxu0
        %v1380 = vadd.f32 0.0, %v1379
        %v1381 = vpop.f32.mrb[0].mxu0
        %1382 = vmatprep.mubr.bf16.mxu0 0
        %1383 = vmatmul.mubr.bf16.gmra.mrb[0].mxu0 %v1293
        %v1384 = vpop.f32.mrb[0].mxu0
        %v1385 = vadd.f32 0.0, %v1384
        %v1386 = vpop.f32.mrb[0].mxu0
        %v1387 = vpop.f32.mrb[0].mxu0
        %v1388 = vadd.f32 0.0, %v1387
        %v1389 = vpop.f32.mrb[0].mxu0
        %1390 = vmatprep.mubr.bf16.mxu0 0
        %1391 = vmatmul.mubr.bf16.gmra.mrb[0].mxu0 %v1296
        %v1392 = vpop.f32.mrb[0].mxu0
        %v1393 = vadd.f32 0.0, %v1392
        %v1394 = vpop.f32.mrb[0].mxu0
        %v1395 = vpop.f32.mrb[0].mxu0
        %v1396 = vadd.f32 0.0, %v1395
        %v1397 = vpop.f32.mrb[0].mxu0
        %1398 = vmatprep.mubr.bf16.mxu0 0
        %1399 = vmatmul.mubr.bf16.gmra.mrb[0].mxu0 %v1299
        %v1400 = vpop.f32.mrb[0].mxu0
        %v1401 = vadd.f32 0.0, %v1400
        %v1402 = vpop.f32.mrb[0].mxu0
        %v1403 = vpop.f32.mrb[0].mxu0
        %v1404 = vadd.f32 0.0, %v1403
        %v1405 = vpop.f32.mrb[0].mxu0
        %1406 = vmatprep.mubr.bf16.mxu0 0
        %1407 = vmatmul.mubr.bf16.gmra.mrb[0].mxu0 %v1302
        %v1408 = vpop.f32.mrb[0].mxu0
        %v1409 = vadd.f32 0.0, %v1408
        %v1410 = vpop.f32.mrb[0].mxu0
        %v1411 = vpop.f32.mrb[0].mxu0
        %v1412 = vadd.f32 0.0, %v1411
        %v1413 = vpop.f32.mrb[0].mxu0
        %1414 = vmatprep.mubr.bf16.mxu0 0
        %1415 = vmatmul.mubr.bf16.gmra.mrb[0].mxu0 %v1305
        %v1416 = vpop.f32.mrb[0].mxu0
        %v1417 = vadd.f32 0.0, %v1416
        %v1418 = vpop.f32.mrb[0].mxu0
        %v1419 = vpop.f32.mrb[0].mxu0
        %v1420 = vadd.f32 0.0, %v1419
        %v1421 = vpop.f32.mrb[0].mxu0
        %1422 = vmatprep.mubr.bf16.mxu0 0
        %1423 = vmatmul.mubr.bf16.gmra.mrb[0].mxu0 %v1308
        %v1424 = vpop.f32.mrb[0].mxu0
        %v1425 = vadd.f32 0.0, %v1424
        %v1426 = vpop.f32.mrb[0].mxu0
        %v1427 = vpop.f32.mrb[0].mxu0
        %v1428 = vadd.f32 0.0, %v1427
        %v1429 = vpop.f32.mrb[0].mxu0
        %1430 = vmatprep.mubr.bf16.mxu0 0
        %1431 = vmatmul.mubr.bf16.gmra.mrb[0].mxu0 %v1311
        %v1432 = vpop.f32.mrb[0].mxu0
        %v1433 = vadd.f32 0.0, %v1432
        %v1434 = vpop.f32.mrb[0].mxu0
        %v1435 = vpop.f32.mrb[0].mxu0
        %v1436 = vadd.f32 0.0, %v1435
        %v1437 = vpop.f32.mrb[0].mxu0
        %1438 = vmatprep.mubr.bf16.mxu0 0
        %1439 = vmatmul.mubr.bf16.gmra.mrb[0].mxu0 %v1314
        %v1440 = vpop.f32.mrb[0].mxu0
        %v1441 = vadd.f32 0.0, %v1440
        %v1442 = vpop.f32.mrb[0].mxu0
        %v1443 = vpop.f32.mrb[0].mxu0
        %v1444 = vadd.f32 0.0, %v1443
        %v1445 = vpop.f32.mrb[0].mxu0
        %1446 = vmatprep.mubr.bf16.mxu0 0
        %1447 = vmatmul.mubr.bf16.gmra.mrb[0].mxu0 %v1317
        %v1448 = vpop.f32.mrb[0].mxu0
        %v1449 = vadd.f32 0.0, %v1448
        %v1450 = vpop.f32.mrb[0].mxu0
        %v1451 = vpop.f32.mrb[0].mxu0
        %v1452 = vadd.f32 0.0, %v1451
        %v1453 = vpop.f32.mrb[0].mxu0
        %1454 = vmatprep.mubr.bf16.mxu0 0
        %1455 = vmatmul.mubr.bf16.gmra.mrb[0].mxu0 %v1320
        %v1456 = vpop.f32.mrb[0].mxu0
        %v1457 = vadd.f32 0.0, %v1456
        %v1458 = vpop.f32.mrb[0].mxu0
        %v1459 = vpop.f32.mrb[0].mxu0
        %v1460 = vadd.f32 0.0, %v1459
        %v1461 = vpop.f32.mrb[0].mxu0
        %1462 = vmatprep.mubr.bf16.mxu0 0
        %1463 = vmatmul.mubr.bf16.gmra.mrb[0].mxu0 %v1323
        %v1464 = vpop.f32.mrb[0].mxu0
        %v1465 = vadd.f32 0.0, %v1464
        %v1466 = vpop.f32.mrb[0].mxu0
        %v1467 = vpop.f32.mrb[0].mxu0
        %v1468 = vadd.f32 0.0, %v1467
        %v1469 = vpop.f32.mrb[0].mxu0
        %1470 = vmatprep.mubr.bf16.mxu0 0
        %1471 = vmatmul.mubr.bf16.gmra.mrb[0].mxu0 %v1326
        %v1472 = vpop.f32.mrb[0].mxu0
        %v1473 = vadd.f32 0.0, %v1472
        %v1474 = vpop.f32.mrb[0].mxu0
        %v1475 = vpop.f32.mrb[0].mxu0
        %v1476 = vadd.f32 0.0, %v1475
        %v1477 = vpop.f32.mrb[0].mxu0
        %1478 = vmatprep.mubr.bf16.mxu0 0
        %1479 = vmatmul.mubr.bf16.gmra.mrb[0].mxu0 %v1329
        %v1480 = vpop.f32.mrb[0].mxu0
        %v1481 = vadd.f32 0.0, %v1480
        %v1482 = vpop.f32.mrb[0].mxu0
        %v1483 = vpop.f32.mrb[0].mxu0
        %v1484 = vadd.f32 0.0, %v1483
        %v1485 = vpop.f32.mrb[0].mxu0
        %1486 = vmatprep.mubr.bf16.mxu0 0
        %1487 = vmatmul.mubr.bf16.gmra.mrb[0].mxu0 %v1332
        %v1488 = vpop.f32.mrb[0].mxu0
        %v1489 = vadd.f32 0.0, %v1488
        %v1490 = vpop.f32.mrb[0].mxu0
        %v1491 = vpop.f32.mrb[0].mxu0
        %v1492 = vadd.f32 0.0, %v1491
        %v1493 = vpop.f32.mrb[0].mxu0
        %1494 = vdwg.mxu0
        %v1527 = vunpack.c.l.b16 %v761
        %v1528 = vunpack.c.l.b16 %v762
        %v1529 = vunpack.c.l.b16 %v763
        %v1530 = vunpack.c.l.b16 %v764
        %v1531 = vunpack.c.l.b16 %v765
        %v1532 = vunpack.c.l.b16 %v766
        %v1533 = vunpack.c.l.b16 %v767
        %v1534 = vunpack.c.l.b16 %v768
        %v1535 = vunpack.c.l.b16 %v769
        %v1536 = vunpack.c.l.b16 %v770
        %v1537 = vunpack.c.l.b16 %v771
        %v1538 = vunpack.c.l.b16 %v772
        %v1539 = vunpack.c.l.b16 %v773
        %v1540 = vunpack.c.l.b16 %v774
        %v1541 = vunpack.c.l.b16 %v775
        %v1542 = vunpack.c.l.b16 %v776
        %v1543 = vunpack.c.l.b16 %v777
        %v1544 = vunpack.c.l.b16 %v778
        %v1545 = vunpack.c.l.b16 %v779
        %v1546 = vunpack.c.l.b16 %v780
        %v1547 = vunpack.c.l.b16 %v781
        %v1548 = vunpack.c.l.b16 %v782
        %v1549 = vunpack.c.l.b16 %v783
        %v1550 = vunpack.c.l.b16 %v784
        %v1551 = vunpack.c.l.b16 %v785
        %v1552 = vunpack.c.l.b16 %v786
        %v1553 = vunpack.c.l.b16 %v787
        %v1554 = vunpack.c.l.b16 %v788
        %v1555 = vunpack.c.l.b16 %v789
        %v1556 = vunpack.c.l.b16 %v790
        %v1557 = vunpack.c.l.b16 %v791
        %v1558 = vunpack.c.l.b16 %v792
        %v1559 = vpack.c.b16 %v1528, %v1527
        %v1560 = vpack.c.b16 %v1530, %v1529
        %v1561 = vpack.c.b16 %v1532, %v1531
        %v1562 = vpack.c.b16 %v1534, %v1533
        %v1563 = vpack.c.b16 %v1536, %v1535
        %v1564 = vpack.c.b16 %v1538, %v1537
        %v1565 = vpack.c.b16 %v1540, %v1539
        %v1566 = vpack.c.b16 %v1542, %v1541
        %v1567 = vpack.c.b16 %v1544, %v1543
        %v1568 = vpack.c.b16 %v1546, %v1545
        %v1569 = vpack.c.b16 %v1548, %v1547
        %v1570 = vpack.c.b16 %v1550, %v1549
        %v1571 = vpack.c.b16 %v1552, %v1551
        %v1572 = vpack.c.b16 %v1554, %v1553
        %v1573 = vpack.c.b16 %v1556, %v1555
        %v1574 = vpack.c.b16 %v1558, %v1557
        %v1583 = vunpack.c.l.b16 %v793
        %v1584 = vunpack.c.l.b16 %v794
        %v1585 = vunpack.c.l.b16 %v795
        %v1586 = vunpack.c.l.b16 %v796
        %v1587 = vunpack.c.l.b16 %v797
        %v1588 = vunpack.c.l.b16 %v798
        %v1589 = vunpack.c.l.b16 %v799
        %v1590 = vunpack.c.l.b16 %v800
        %v1591 = vpack.c.b16 %v1584, %v1583
        %v1592 = vpack.c.b16 %v1586, %v1585
        %v1593 = vpack.c.b16 %v1588, %v1587
        %v1594 = vpack.c.b16 %v1590, %v1589
        %v1600 = vsel %vm1285, %v1559, 0
        %v1603 = vsel %vm1285, %v1560, 0
        %v1606 = vsel %vm1285, %v1561, 0
        %v1609 = vsel %vm1285, %v1562, 0
        %v1612 = vsel %vm1285, %v1563, 0
        %v1615 = vsel %vm1285, %v1564, 0
        %v1618 = vsel %vm1285, %v1565, 0
        %v1621 = vsel %vm1285, %v1566, 0
        %v1624 = vsel %vm1285, %v1567, 0
        %v1627 = vsel %vm1285, %v1568, 0
        %v1630 = vsel %vm1285, %v1569, 0
        %v1633 = vsel %vm1285, %v1570, 0
        %v1636 = vsel %vm1285, %v1571, 0
        %v1639 = vsel %vm1285, %v1572, 0
        %v1642 = vsel %vm1285, %v1573, 0
        %v1645 = vsel %vm1285, %v1574, 0
        %1647 = vmatprep.subr.bf16.mxu0 0
        %1648 = vmatpush1.bf16.msra.mxu0 %v1591
        %1649 = vmatprep.subr.bf16.mxu0 0
        %1650 = vmatpush1.bf16.msra.mxu0 %v1592
        %1651 = vmatprep.subr.bf16.mxu0 0
        %1652 = vmatpush1.bf16.msra.mxu0 %v1593
        %1653 = vmatprep.subr.bf16.mxu0 0
        %1654 = vmatpush1.bf16.msra.mxu0 %v1594
        %1655 = vmatprep.subr.bf16.mxu0 0
        %1656 = vmatpush1.bf16.msra.mxu0 0
        %1657 = vmatprep.subr.bf16.mxu0 0
        %1658 = vmatpush1.bf16.msra.mxu0 0
        %1659 = vmatprep.subr.bf16.mxu0 0
        %1660 = vmatpush1.bf16.msra.mxu0 0
        %1661 = vmatprep.subr.bf16.mxu0 0
        %1662 = vmatpush1.bf16.msra.mxu0 0
        %1663 = vmatprep.subr.bf16.mxu0 0
        %1664 = vmatpush1.bf16.msra.mxu0 0
        %1665 = vmatprep.subr.bf16.mxu0 0
        %1666 = vmatpush1.bf16.msra.mxu0 0
        %1667 = vmatprep.subr.bf16.mxu0 0
        %1668 = vmatpush1.bf16.msra.mxu0 0
        %1669 = vmatprep.subr.bf16.mxu0 0
        %1670 = vmatpush1.bf16.msra.mxu0 0
        %1671 = vmatprep.subr.bf16.mxu0 0
        %1672 = vmatpush1.bf16.msra.mxu0 0
        %1673 = vmatprep.subr.bf16.mxu0 0
        %1674 = vmatpush1.bf16.msra.mxu0 0
        %1675 = vmatprep.subr.bf16.mxu0 0
        %1676 = vmatpush1.bf16.msra.mxu0 0
        %1677 = vmatprep.subr.bf16.mxu0 0
        %1678 = vmatpush1.bf16.msra.mxu0 0
        %1679 = vmatprep.mubr.bf16.mxu0 0
        %1680 = vmatmul.mubr.bf16.gmra.mrb[0].mxu0 %v1600
        %v1681 = vpop.f32.mrb[0].mxu0
        %v1682 = vadd.f32 %v1369, %v1681
        %v1683 = vpop.f32.mrb[0].mxu0
        %v1684 = vpop.f32.mrb[0].mxu0
        %v1685 = vadd.f32 %v1372, %v1684
        %v1686 = vpop.f32.mrb[0].mxu0
        %1687 = vmatprep.mubr.bf16.mxu0 0
        %1688 = vmatmul.mubr.bf16.gmra.mrb[0].mxu0 %v1603
        %v1689 = vpop.f32.mrb[0].mxu0
        %v1690 = vadd.f32 %v1377, %v1689
        %v1691 = vpop.f32.mrb[0].mxu0
        %v1692 = vpop.f32.mrb[0].mxu0
        %v1693 = vadd.f32 %v1380, %v1692
        %v1694 = vpop.f32.mrb[0].mxu0
        %1695 = vmatprep.mubr.bf16.mxu0 0
        %1696 = vmatmul.mubr.bf16.gmra.mrb[0].mxu0 %v1606
        %v1697 = vpop.f32.mrb[0].mxu0
        %v1698 = vadd.f32 %v1385, %v1697
        %v1699 = vpop.f32.mrb[0].mxu0
        %v1700 = vpop.f32.mrb[0].mxu0
        %v1701 = vadd.f32 %v1388, %v1700
        %v1702 = vpop.f32.mrb[0].mxu0
        %1703 = vmatprep.mubr.bf16.mxu0 0
        %1704 = vmatmul.mubr.bf16.gmra.mrb[0].mxu0 %v1609
        %v1705 = vpop.f32.mrb[0].mxu0
        %v1706 = vadd.f32 %v1393, %v1705
        %v1707 = vpop.f32.mrb[0].mxu0
        %v1708 = vpop.f32.mrb[0].mxu0
        %v1709 = vadd.f32 %v1396, %v1708
        %v1710 = vpop.f32.mrb[0].mxu0
        %1711 = vmatprep.mubr.bf16.mxu0 0
        %1712 = vmatmul.mubr.bf16.gmra.mrb[0].mxu0 %v1612
        %v1713 = vpop.f32.mrb[0].mxu0
        %v1714 = vadd.f32 %v1401, %v1713
        %v1715 = vpop.f32.mrb[0].mxu0
        %v1716 = vpop.f32.mrb[0].mxu0
        %v1717 = vadd.f32 %v1404, %v1716
        %v1718 = vpop.f32.mrb[0].mxu0
        %1719 = vmatprep.mubr.bf16.mxu0 0
        %1720 = vmatmul.mubr.bf16.gmra.mrb[0].mxu0 %v1615
        %v1721 = vpop.f32.mrb[0].mxu0
        %v1722 = vadd.f32 %v1409, %v1721
        %v1723 = vpop.f32.mrb[0].mxu0
        %v1724 = vpop.f32.mrb[0].mxu0
        %v1725 = vadd.f32 %v1412, %v1724
        %v1726 = vpop.f32.mrb[0].mxu0
        %1727 = vmatprep.mubr.bf16.mxu0 0
        %1728 = vmatmul.mubr.bf16.gmra.mrb[0].mxu0 %v1618
        %v1729 = vpop.f32.mrb[0].mxu0
        %v1730 = vadd.f32 %v1417, %v1729
        %v1731 = vpop.f32.mrb[0].mxu0
        %v1732 = vpop.f32.mrb[0].mxu0
        %v1733 = vadd.f32 %v1420, %v1732
        %v1734 = vpop.f32.mrb[0].mxu0
        %1735 = vmatprep.mubr.bf16.mxu0 0
        %1736 = vmatmul.mubr.bf16.gmra.mrb[0].mxu0 %v1621
        %v1737 = vpop.f32.mrb[0].mxu0
        %v1738 = vadd.f32 %v1425, %v1737
        %v1739 = vpop.f32.mrb[0].mxu0
        %v1740 = vpop.f32.mrb[0].mxu0
        %v1741 = vadd.f32 %v1428, %v1740
        %v1742 = vpop.f32.mrb[0].mxu0
        %1743 = vmatprep.mubr.bf16.mxu0 0
        %1744 = vmatmul.mubr.bf16.gmra.mrb[0].mxu0 %v1624
        %v1745 = vpop.f32.mrb[0].mxu0
        %v1746 = vadd.f32 %v1433, %v1745
        %v1747 = vpop.f32.mrb[0].mxu0
        %v1748 = vpop.f32.mrb[0].mxu0
        %v1749 = vadd.f32 %v1436, %v1748
        %v1750 = vpop.f32.mrb[0].mxu0
        %1751 = vmatprep.mubr.bf16.mxu0 0
        %1752 = vmatmul.mubr.bf16.gmra.mrb[0].mxu0 %v1627
        %v1753 = vpop.f32.mrb[0].mxu0
        %v1754 = vadd.f32 %v1441, %v1753
        %v1755 = vpop.f32.mrb[0].mxu0
        %v1756 = vpop.f32.mrb[0].mxu0
        %v1757 = vadd.f32 %v1444, %v1756
        %v1758 = vpop.f32.mrb[0].mxu0
        %1759 = vmatprep.mubr.bf16.mxu0 0
        %1760 = vmatmul.mubr.bf16.gmra.mrb[0].mxu0 %v1630
        %v1761 = vpop.f32.mrb[0].mxu0
        %v1762 = vadd.f32 %v1449, %v1761
        %v1763 = vpop.f32.mrb[0].mxu0
        %v1764 = vpop.f32.mrb[0].mxu0
        %v1765 = vadd.f32 %v1452, %v1764
        %v1766 = vpop.f32.mrb[0].mxu0
        %1767 = vmatprep.mubr.bf16.mxu0 0
        %1768 = vmatmul.mubr.bf16.gmra.mrb[0].mxu0 %v1633
        %v1769 = vpop.f32.mrb[0].mxu0
        %v1770 = vadd.f32 %v1457, %v1769
        %v1771 = vpop.f32.mrb[0].mxu0
        %v1772 = vpop.f32.mrb[0].mxu0
        %v1773 = vadd.f32 %v1460, %v1772
        %v1774 = vpop.f32.mrb[0].mxu0
        %1775 = vmatprep.mubr.bf16.mxu0 0
        %1776 = vmatmul.mubr.bf16.gmra.mrb[0].mxu0 %v1636
        %v1777 = vpop.f32.mrb[0].mxu0
        %v1778 = vadd.f32 %v1465, %v1777
        %v1779 = vpop.f32.mrb[0].mxu0
        %v1780 = vpop.f32.mrb[0].mxu0
        %v1781 = vadd.f32 %v1468, %v1780
        %v1782 = vpop.f32.mrb[0].mxu0
        %1783 = vmatprep.mubr.bf16.mxu0 0
        %1784 = vmatmul.mubr.bf16.gmra.mrb[0].mxu0 %v1639
        %v1785 = vpop.f32.mrb[0].mxu0
        %v1786 = vadd.f32 %v1473, %v1785
        %v1787 = vpop.f32.mrb[0].mxu0
        %v1788 = vpop.f32.mrb[0].mxu0
        %v1789 = vadd.f32 %v1476, %v1788
        %v1790 = vpop.f32.mrb[0].mxu0
        %1791 = vmatprep.mubr.bf16.mxu0 0
        %1792 = vmatmul.mubr.bf16.gmra.mrb[0].mxu0 %v1642
        %v1793 = vpop.f32.mrb[0].mxu0
        %v1794 = vadd.f32 %v1481, %v1793
        %v1795 = vpop.f32.mrb[0].mxu0
        %v1796 = vpop.f32.mrb[0].mxu0
        %v1797 = vadd.f32 %v1484, %v1796
        %v1798 = vpop.f32.mrb[0].mxu0
        %1799 = vmatprep.mubr.bf16.mxu0 0
        %1800 = vmatmul.mubr.bf16.gmra.mrb[0].mxu0 %v1645
        %v1801 = vpop.f32.mrb[0].mxu0
        %v1802 = vadd.f32 %v1489, %v1801
        %v1803 = vpop.f32.mrb[0].mxu0
        %v1804 = vpop.f32.mrb[0].mxu0
        %v1805 = vadd.f32 %v1492, %v1804
        %v1806 = vpop.f32.mrb[0].mxu0
        %1807 = vdwg.mxu0
        %v1808 = vld [vmem:[#allocation2] sm:$0xe]
        %v1809 = vld [vmem:[#allocation2 + $0xc] sm:$0xe]
        %v1810 = vld [vmem:[#allocation2 + $0x18] sm:$0xe]
        %v1811 = vld [vmem:[#allocation2 + $0x24] sm:$0xe]
        %v1812 = vld [vmem:[#allocation2 + $0x30] sm:$0xe]
        %v1813 = vld [vmem:[#allocation2 + $0x3c] sm:$0xe]
        %v1814 = vld [vmem:[#allocation2 + $0x48] sm:$0xe]
        %v1815 = vld [vmem:[#allocation2 + $0x54] sm:$0xe]
        %v1816 = vld [vmem:[#allocation2 + $0x60] sm:$0xe]
        %v1817 = vld [vmem:[#allocation2 + $0x6c] sm:$0xe]
        %v1818 = vld [vmem:[#allocation2 + $0x78] sm:$0xe]
        %v1819 = vld [vmem:[#allocation2 + $0x84] sm:$0xe]
        %v1820 = vld [vmem:[#allocation2 + $0x90] sm:$0xe]
        %v1821 = vld [vmem:[#allocation2 + $0x9c] sm:$0xe]
        %v1822 = vld [vmem:[#allocation2 + $0xa8] sm:$0xe]
        %v1823 = vld [vmem:[#allocation2 + $0xb4] sm:$0xe]
        %vm1856 = vcmask 1042432
        %vm1857 = vcmask 1046532
        %vm1858 = vmor %vm1856, %vm1857
        %v1859 = vrot.slane %v1808, 5
        %v1860 = vrot.slane %v1859, 4
        %v1861 = vrot.slane %v762, 5
        %v1862 = vsel %vm1858, %v1860, %v1861
        %v1863 = vrot.slane %v1861, 4
        %v1864 = vrot.slane %v801, 5
        %v1865 = vsel %vm1858, %v1863, %v1864
        %v1866 = vrot.slane %v1809, 5
        %v1867 = vrot.slane %v1866, 4
        %v1868 = vrot.slane %v764, 5
        %v1869 = vsel %vm1858, %v1867, %v1868
        %v1870 = vrot.slane %v1868, 4
        %v1871 = vrot.slane %v802, 5
        %v1872 = vsel %vm1858, %v1870, %v1871
        %v1873 = vrot.slane %v1810, 5
        %v1874 = vrot.slane %v1873, 4
        %v1875 = vrot.slane %v766, 5
        %v1876 = vsel %vm1858, %v1874, %v1875
        %v1877 = vrot.slane %v1875, 4
        %v1878 = vrot.slane %v803, 5
        %v1879 = vsel %vm1858, %v1877, %v1878
        %v1880 = vrot.slane %v1811, 5
        %v1881 = vrot.slane %v1880, 4
        %v1882 = vrot.slane %v768, 5
        %v1883 = vsel %vm1858, %v1881, %v1882
        %v1884 = vrot.slane %v1882, 4
        %v1885 = vrot.slane %v804, 5
        %v1886 = vsel %vm1858, %v1884, %v1885
        %v1887 = vrot.slane %v1812, 5
        %v1888 = vrot.slane %v1887, 4
        %v1889 = vrot.slane %v770, 5
        %v1890 = vsel %vm1858, %v1888, %v1889
        %v1891 = vrot.slane %v1889, 4
        %v1892 = vrot.slane %v805, 5
        %v1893 = vsel %vm1858, %v1891, %v1892
        %v1894 = vrot.slane %v1813, 5
        %v1895 = vrot.slane %v1894, 4
        %v1896 = vrot.slane %v772, 5
        %v1897 = vsel %vm1858, %v1895, %v1896
        %v1898 = vrot.slane %v1896, 4
        %v1899 = vrot.slane %v806, 5
        %v1900 = vsel %vm1858, %v1898, %v1899
        %v1901 = vrot.slane %v1814, 5
        %v1902 = vrot.slane %v1901, 4
        %v1903 = vrot.slane %v774, 5
        %v1904 = vsel %vm1858, %v1902, %v1903
        %v1905 = vrot.slane %v1903, 4
        %v1906 = vrot.slane %v807, 5
        %v1907 = vsel %vm1858, %v1905, %v1906
        %v1908 = vrot.slane %v1815, 5
        %v1909 = vrot.slane %v1908, 4
        %v1910 = vrot.slane %v776, 5
        %v1911 = vsel %vm1858, %v1909, %v1910
        %v1912 = vrot.slane %v1910, 4
        %v1913 = vrot.slane %v808, 5
        %v1914 = vsel %vm1858, %v1912, %v1913
        %v1915 = vrot.slane %v1816, 5
        %v1916 = vrot.slane %v1915, 4
        %v1917 = vrot.slane %v778, 5
        %v1918 = vsel %vm1858, %v1916, %v1917
        %v1919 = vrot.slane %v1917, 4
        %v1920 = vrot.slane %v809, 5
        %v1921 = vsel %vm1858, %v1919, %v1920
        %v1922 = vrot.slane %v1817, 5
        %v1923 = vrot.slane %v1922, 4
        %v1924 = vrot.slane %v780, 5
        %v1925 = vsel %vm1858, %v1923, %v1924
        %v1926 = vrot.slane %v1924, 4
        %v1927 = vrot.slane %v810, 5
        %v1928 = vsel %vm1858, %v1926, %v1927
        %v1929 = vrot.slane %v1818, 5
        %v1930 = vrot.slane %v1929, 4
        %v1931 = vrot.slane %v782, 5
        %v1932 = vsel %vm1858, %v1930, %v1931
        %v1933 = vrot.slane %v1931, 4
        %v1934 = vrot.slane %v811, 5
        %v1935 = vsel %vm1858, %v1933, %v1934
        %v1936 = vrot.slane %v1819, 5
        %v1937 = vrot.slane %v1936, 4
        %v1938 = vrot.slane %v784, 5
        %v1939 = vsel %vm1858, %v1937, %v1938
        %v1940 = vrot.slane %v1938, 4
        %v1941 = vrot.slane %v812, 5
        %v1942 = vsel %vm1858, %v1940, %v1941
        %v1943 = vrot.slane %v1820, 5
        %v1944 = vrot.slane %v1943, 4
        %v1945 = vrot.slane %v786, 5
        %v1946 = vsel %vm1858, %v1944, %v1945
        %v1947 = vrot.slane %v1945, 4
        %v1948 = vrot.slane %v813, 5
        %v1949 = vsel %vm1858, %v1947, %v1948
        %v1950 = vrot.slane %v1821, 5
        %v1951 = vrot.slane %v1950, 4
        %v1952 = vrot.slane %v788, 5
        %v1953 = vsel %vm1858, %v1951, %v1952
        %v1954 = vrot.slane %v1952, 4
        %v1955 = vrot.slane %v814, 5
        %v1956 = vsel %vm1858, %v1954, %v1955
        %v1957 = vrot.slane %v1822, 5
        %v1958 = vrot.slane %v1957, 4
        %v1959 = vrot.slane %v790, 5
        %v1960 = vsel %vm1858, %v1958, %v1959
        %v1961 = vrot.slane %v1959, 4
        %v1962 = vrot.slane %v815, 5
        %v1963 = vsel %vm1858, %v1961, %v1962
        %v1964 = vrot.slane %v1823, 5
        %v1965 = vrot.slane %v1964, 4
        %v1966 = vrot.slane %v792, 5
        %v1967 = vsel %vm1858, %v1965, %v1966
        %v1968 = vrot.slane %v1966, 4
        %v1969 = vrot.slane %v816, 5
        %v1970 = vsel %vm1858, %v1968, %v1969
        %s1971 = scalar_lea.vmem [#allocation6], 64
        %v1972 = vld [vmem:[%s1971] sm:$0xf]
        %v1973 = vld [vmem:[%s1971 + $0x4] sm:$0xf]
        %v1974 = vld [vmem:[%s1971 + $0x8] sm:$0xf]
        %v1975 = vld [vmem:[%s1971 + $0xc] sm:$0xf]
        %v1976 = vld [vmem:[%s1971 + $0x10] sm:$0xf]
        %v1977 = vld [vmem:[%s1971 + $0x14] sm:$0xf]
        %v1978 = vld [vmem:[%s1971 + $0x18] sm:$0xf]
        %v1979 = vld [vmem:[%s1971 + $0x1c] sm:$0xf]
        %v1980 = vunpack.c.l.b16 %v1862
        %v1981 = vunpack.c.l.b16 %v1865
        %v1982 = vunpack.c.l.b16 %v1869
        %v1983 = vunpack.c.l.b16 %v1872
        %v1984 = vunpack.c.l.b16 %v1876
        %v1985 = vunpack.c.l.b16 %v1879
        %v1986 = vunpack.c.l.b16 %v1883
        %v1987 = vunpack.c.l.b16 %v1886
        %v1988 = vunpack.c.l.b16 %v1890
        %v1989 = vunpack.c.l.b16 %v1893
        %v1990 = vunpack.c.l.b16 %v1897
        %v1991 = vunpack.c.l.b16 %v1900
        %v1992 = vunpack.c.l.b16 %v1904
        %v1993 = vunpack.c.l.b16 %v1907
        %v1994 = vunpack.c.l.b16 %v1911
        %v1995 = vunpack.c.l.b16 %v1914
        %v1996 = vunpack.c.l.b16 %v1918
        %v1997 = vunpack.c.l.b16 %v1921
        %v1998 = vunpack.c.l.b16 %v1925
        %v1999 = vunpack.c.l.b16 %v1928
        %v2000 = vunpack.c.l.b16 %v1932
        %v2001 = vunpack.c.l.b16 %v1935
        %v2002 = vunpack.c.l.b16 %v1939
        %v2003 = vunpack.c.l.b16 %v1942
        %v2004 = vunpack.c.l.b16 %v1946
        %v2005 = vunpack.c.l.b16 %v1949
        %v2006 = vunpack.c.l.b16 %v1953
        %v2007 = vunpack.c.l.b16 %v1956
        %v2008 = vunpack.c.l.b16 %v1960
        %v2009 = vunpack.c.l.b16 %v1963
        %v2010 = vunpack.c.l.b16 %v1967
        %v2011 = vunpack.c.l.b16 %v1970
        %v2012 = vpack.c.b16 %v1981, %v1980
        %v2013 = vpack.c.b16 %v1983, %v1982
        %v2014 = vpack.c.b16 %v1985, %v1984
        %v2015 = vpack.c.b16 %v1987, %v1986
        %v2016 = vpack.c.b16 %v1989, %v1988
        %v2017 = vpack.c.b16 %v1991, %v1990
        %v2018 = vpack.c.b16 %v1993, %v1992
        %v2019 = vpack.c.b16 %v1995, %v1994
        %v2020 = vpack.c.b16 %v1997, %v1996
        %v2021 = vpack.c.b16 %v1999, %v1998
        %v2022 = vpack.c.b16 %v2001, %v2000
        %v2023 = vpack.c.b16 %v2003, %v2002
        %v2024 = vpack.c.b16 %v2005, %v2004
        %v2025 = vpack.c.b16 %v2007, %v2006
        %v2026 = vpack.c.b16 %v2009, %v2008
        %v2027 = vpack.c.b16 %v2011, %v2010
        %v2036 = vunpack.c.l.b16 %v1972
        %v2037 = vunpack.c.l.b16 %v1973
        %v2038 = vunpack.c.l.b16 %v1974
        %v2039 = vunpack.c.l.b16 %v1975
        %v2040 = vunpack.c.l.b16 %v1976
        %v2041 = vunpack.c.l.b16 %v1977
        %v2042 = vunpack.c.l.b16 %v1978
        %v2043 = vunpack.c.l.b16 %v1979
        %v2044 = vpack.c.b16 %v2037, %v2036
        %v2045 = vpack.c.b16 %v2039, %v2038
        %v2046 = vpack.c.b16 %v2041, %v2040
        %v2047 = vpack.c.b16 %v2043, %v2042
        %v2053 = vsel %vm1285, %v2012, 0
        %v2056 = vsel %vm1285, %v2013, 0
        %v2059 = vsel %vm1285, %v2014, 0
        %v2062 = vsel %vm1285, %v2015, 0
        %v2065 = vsel %vm1285, %v2016, 0
        %v2068 = vsel %vm1285, %v2017, 0
        %v2071 = vsel %vm1285, %v2018, 0
        %v2074 = vsel %vm1285, %v2019, 0
        %v2077 = vsel %vm1285, %v2020, 0
        %v2080 = vsel %vm1285, %v2021, 0
        %v2083 = vsel %vm1285, %v2022, 0
        %v2086 = vsel %vm1285, %v2023, 0
        %v2089 = vsel %vm1285, %v2024, 0
        %v2092 = vsel %vm1285, %v2025, 0
        %v2095 = vsel %vm1285, %v2026, 0
        %v2098 = vsel %vm1285, %v2027, 0
        %2100 = vmatprep.subr.bf16.mxu0 0
        %2101 = vmatpush1.bf16.msra.mxu0 %v2044
        %2102 = vmatprep.subr.bf16.mxu0 0
        %2103 = vmatpush1.bf16.msra.mxu0 %v2045
        %2104 = vmatprep.subr.bf16.mxu0 0
        %2105 = vmatpush1.bf16.msra.mxu0 %v2046
        %2106 = vmatprep.subr.bf16.mxu0 0
        %2107 = vmatpush1.bf16.msra.mxu0 %v2047
        %2108 = vmatprep.subr.bf16.mxu0 0
        %2109 = vmatpush1.bf16.msra.mxu0 0
        %2110 = vmatprep.subr.bf16.mxu0 0
        %2111 = vmatpush1.bf16.msra.mxu0 0
        %2112 = vmatprep.subr.bf16.mxu0 0
        %2113 = vmatpush1.bf16.msra.mxu0 0
        %2114 = vmatprep.subr.bf16.mxu0 0
        %2115 = vmatpush1.bf16.msra.mxu0 0
        %2116 = vmatprep.subr.bf16.mxu0 0
        %2117 = vmatpush1.bf16.msra.mxu0 0
        %2118 = vmatprep.subr.bf16.mxu0 0
        %2119 = vmatpush1.bf16.msra.mxu0 0
        %2120 = vmatprep.subr.bf16.mxu0 0
        %2121 = vmatpush1.bf16.msra.mxu0 0
        %2122 = vmatprep.subr.bf16.mxu0 0
        %2123 = vmatpush1.bf16.msra.mxu0 0
        %2124 = vmatprep.subr.bf16.mxu0 0
        %2125 = vmatpush1.bf16.msra.mxu0 0
        %2126 = vmatprep.subr.bf16.mxu0 0
        %2127 = vmatpush1.bf16.msra.mxu0 0
        %2128 = vmatprep.subr.bf16.mxu0 0
        %2129 = vmatpush1.bf16.msra.mxu0 0
        %2130 = vmatprep.subr.bf16.mxu0 0
        %2131 = vmatpush1.bf16.msra.mxu0 0
        %2132 = vmatprep.mubr.bf16.mxu0 0
        %2133 = vmatmul.mubr.bf16.gmra.mrb[0].mxu0 %v2053
        %v2134 = vpop.f32.mrb[0].mxu0
        %v2135 = vadd.f32 0.0, %v2134
        %v2136 = vpop.f32.mrb[0].mxu0
        %v2137 = vpop.f32.mrb[0].mxu0
        %v2138 = vadd.f32 0.0, %v2137
        %v2139 = vpop.f32.mrb[0].mxu0
        %2140 = vmatprep.mubr.bf16.mxu0 0
        %2141 = vmatmul.mubr.bf16.gmra.mrb[0].mxu0 %v2056
        %v2142 = vpop.f32.mrb[0].mxu0
        %v2143 = vadd.f32 0.0, %v2142
        %v2144 = vpop.f32.mrb[0].mxu0
        %v2145 = vpop.f32.mrb[0].mxu0
        %v2146 = vadd.f32 0.0, %v2145
        %v2147 = vpop.f32.mrb[0].mxu0
        %2148 = vmatprep.mubr.bf16.mxu0 0
        %2149 = vmatmul.mubr.bf16.gmra.mrb[0].mxu0 %v2059
        %v2150 = vpop.f32.mrb[0].mxu0
        %v2151 = vadd.f32 0.0, %v2150
        %v2152 = vpop.f32.mrb[0].mxu0
        %v2153 = vpop.f32.mrb[0].mxu0
        %v2154 = vadd.f32 0.0, %v2153
        %v2155 = vpop.f32.mrb[0].mxu0
        %2156 = vmatprep.mubr.bf16.mxu0 0
        %2157 = vmatmul.mubr.bf16.gmra.mrb[0].mxu0 %v2062
        %v2158 = vpop.f32.mrb[0].mxu0
        %v2159 = vadd.f32 0.0, %v2158
        %v2160 = vpop.f32.mrb[0].mxu0
        %v2161 = vpop.f32.mrb[0].mxu0
        %v2162 = vadd.f32 0.0, %v2161
        %v2163 = vpop.f32.mrb[0].mxu0
        %2164 = vmatprep.mubr.bf16.mxu0 0
        %2165 = vmatmul.mubr.bf16.gmra.mrb[0].mxu0 %v2065
        %v2166 = vpop.f32.mrb[0].mxu0
        %v2167 = vadd.f32 0.0, %v2166
        %v2168 = vpop.f32.mrb[0].mxu0
        %v2169 = vpop.f32.mrb[0].mxu0
        %v2170 = vadd.f32 0.0, %v2169
        %v2171 = vpop.f32.mrb[0].mxu0
        %2172 = vmatprep.mubr.bf16.mxu0 0
        %2173 = vmatmul.mubr.bf16.gmra.mrb[0].mxu0 %v2068
        %v2174 = vpop.f32.mrb[0].mxu0
        %v2175 = vadd.f32 0.0, %v2174
        %v2176 = vpop.f32.mrb[0].mxu0
        %v2177 = vpop.f32.mrb[0].mxu0
        %v2178 = vadd.f32 0.0, %v2177
        %v2179 = vpop.f32.mrb[0].mxu0
        %2180 = vmatprep.mubr.bf16.mxu0 0
        %2181 = vmatmul.mubr.bf16.gmra.mrb[0].mxu0 %v2071
        %v2182 = vpop.f32.mrb[0].mxu0
        %v2183 = vadd.f32 0.0, %v2182
        %v2184 = vpop.f32.mrb[0].mxu0
        %v2185 = vpop.f32.mrb[0].mxu0
        %v2186 = vadd.f32 0.0, %v2185
        %v2187 = vpop.f32.mrb[0].mxu0
        %2188 = vmatprep.mubr.bf16.mxu0 0
        %2189 = vmatmul.mubr.bf16.gmra.mrb[0].mxu0 %v2074
        %v2190 = vpop.f32.mrb[0].mxu0
        %v2191 = vadd.f32 0.0, %v2190
        %v2192 = vpop.f32.mrb[0].mxu0
        %v2193 = vpop.f32.mrb[0].mxu0
        %v2194 = vadd.f32 0.0, %v2193
        %v2195 = vpop.f32.mrb[0].mxu0
        %2196 = vmatprep.mubr.bf16.mxu0 0
        %2197 = vmatmul.mubr.bf16.gmra.mrb[0].mxu0 %v2077
        %v2198 = vpop.f32.mrb[0].mxu0
        %v2199 = vadd.f32 0.0, %v2198
        %v2200 = vpop.f32.mrb[0].mxu0
        %v2201 = vpop.f32.mrb[0].mxu0
        %v2202 = vadd.f32 0.0, %v2201
        %v2203 = vpop.f32.mrb[0].mxu0
        %2204 = vmatprep.mubr.bf16.mxu0 0
        %2205 = vmatmul.mubr.bf16.gmra.mrb[0].mxu0 %v2080
        %v2206 = vpop.f32.mrb[0].mxu0
        %v2207 = vadd.f32 0.0, %v2206
        %v2208 = vpop.f32.mrb[0].mxu0
        %v2209 = vpop.f32.mrb[0].mxu0
        %v2210 = vadd.f32 0.0, %v2209
        %v2211 = vpop.f32.mrb[0].mxu0
        %2212 = vmatprep.mubr.bf16.mxu0 0
        %2213 = vmatmul.mubr.bf16.gmra.mrb[0].mxu0 %v2083
        %v2214 = vpop.f32.mrb[0].mxu0
        %v2215 = vadd.f32 0.0, %v2214
        %v2216 = vpop.f32.mrb[0].mxu0
        %v2217 = vpop.f32.mrb[0].mxu0
        %v2218 = vadd.f32 0.0, %v2217
        %v2219 = vpop.f32.mrb[0].mxu0
        %2220 = vmatprep.mubr.bf16.mxu0 0
        %2221 = vmatmul.mubr.bf16.gmra.mrb[0].mxu0 %v2086
        %v2222 = vpop.f32.mrb[0].mxu0
        %v2223 = vadd.f32 0.0, %v2222
        %v2224 = vpop.f32.mrb[0].mxu0
        %v2225 = vpop.f32.mrb[0].mxu0
        %v2226 = vadd.f32 0.0, %v2225
        %v2227 = vpop.f32.mrb[0].mxu0
        %2228 = vmatprep.mubr.bf16.mxu0 0
        %2229 = vmatmul.mubr.bf16.gmra.mrb[0].mxu0 %v2089
        %v2230 = vpop.f32.mrb[0].mxu0
        %v2231 = vadd.f32 0.0, %v2230
        %v2232 = vpop.f32.mrb[0].mxu0
        %v2233 = vpop.f32.mrb[0].mxu0
        %v2234 = vadd.f32 0.0, %v2233
        %v2235 = vpop.f32.mrb[0].mxu0
        %2236 = vmatprep.mubr.bf16.mxu0 0
        %2237 = vmatmul.mubr.bf16.gmra.mrb[0].mxu0 %v2092
        %v2238 = vpop.f32.mrb[0].mxu0
        %v2239 = vadd.f32 0.0, %v2238
        %v2240 = vpop.f32.mrb[0].mxu0
        %v2241 = vpop.f32.mrb[0].mxu0
        %v2242 = vadd.f32 0.0, %v2241
        %v2243 = vpop.f32.mrb[0].mxu0
        %2244 = vmatprep.mubr.bf16.mxu0 0
        %2245 = vmatmul.mubr.bf16.gmra.mrb[0].mxu0 %v2095
        %v2246 = vpop.f32.mrb[0].mxu0
        %v2247 = vadd.f32 0.0, %v2246
        %v2248 = vpop.f32.mrb[0].mxu0
        %v2249 = vpop.f32.mrb[0].mxu0
        %v2250 = vadd.f32 0.0, %v2249
        %v2251 = vpop.f32.mrb[0].mxu0
        %2252 = vmatprep.mubr.bf16.mxu0 0
        %2253 = vmatmul.mubr.bf16.gmra.mrb[0].mxu0 %v2098
        %v2254 = vpop.f32.mrb[0].mxu0
        %v2255 = vadd.f32 0.0, %v2254
        %v2256 = vpop.f32.mrb[0].mxu0
        %v2257 = vpop.f32.mrb[0].mxu0
        %v2258 = vadd.f32 0.0, %v2257
        %v2259 = vpop.f32.mrb[0].mxu0
        %2260 = vdwg.mxu0
        %v2261 = vadd.f32 %v1682, %v2135
        %v2262 = vadd.f32 %v1685, %v2138
        %v2263 = vadd.f32 %v1690, %v2143
        %v2264 = vadd.f32 %v1693, %v2146
        %v2265 = vadd.f32 %v1698, %v2151
        %v2266 = vadd.f32 %v1701, %v2154
        %v2267 = vadd.f32 %v1706, %v2159
        %v2268 = vadd.f32 %v1709, %v2162
        %v2269 = vadd.f32 %v1714, %v2167
        %v2270 = vadd.f32 %v1717, %v2170
        %v2271 = vadd.f32 %v1722, %v2175
        %v2272 = vadd.f32 %v1725, %v2178
        %v2273 = vadd.f32 %v1730, %v2183
        %v2274 = vadd.f32 %v1733, %v2186
        %v2275 = vadd.f32 %v1738, %v2191
        %v2276 = vadd.f32 %v1741, %v2194
        %v2277 = vadd.f32 %v1746, %v2199
        %v2278 = vadd.f32 %v1749, %v2202
        %v2279 = vadd.f32 %v1754, %v2207
        %v2280 = vadd.f32 %v1757, %v2210
        %v2281 = vadd.f32 %v1762, %v2215
        %v2282 = vadd.f32 %v1765, %v2218
        %v2283 = vadd.f32 %v1770, %v2223
        %v2284 = vadd.f32 %v1773, %v2226
        %v2285 = vadd.f32 %v1778, %v2231
        %v2286 = vadd.f32 %v1781, %v2234
        %v2287 = vadd.f32 %v1786, %v2239
        %v2288 = vadd.f32 %v1789, %v2242
        %v2289 = vadd.f32 %v1794, %v2247
        %v2290 = vadd.f32 %v1797, %v2250
        %v2291 = vadd.f32 %v1802, %v2255
        %v2292 = vadd.f32 %v1805, %v2258
        %v2293 = vld [vmem:[%s643] sm:$0xf]
        %v2294 = vld [vmem:[%s643 + $0x4] sm:$0xf]
        %v2295 = vld [vmem:[%s643 + $0xc] sm:$0xf]
        %v2296 = vld [vmem:[%s643 + $0x10] sm:$0xf]
        %v2297 = vld [vmem:[%s643 + $0x18] sm:$0xf]
        %v2298 = vld [vmem:[%s643 + $0x1c] sm:$0xf]
        %v2299 = vld [vmem:[%s643 + $0x24] sm:$0xf]
        %v2300 = vld [vmem:[%s643 + $0x28] sm:$0xf]
        %v2301 = vld [vmem:[%s643 + $0x30] sm:$0xf]
        %v2302 = vld [vmem:[%s643 + $0x34] sm:$0xf]
        %v2303 = vld [vmem:[%s643 + $0x3c] sm:$0xf]
        %v2304 = vld [vmem:[%s643 + $0x40] sm:$0xf]
        %v2305 = vld [vmem:[%s643 + $0x48] sm:$0xf]
        %v2306 = vld [vmem:[%s643 + $0x4c] sm:$0xf]
        %v2307 = vld [vmem:[%s643 + $0x54] sm:$0xf]
        %v2308 = vld [vmem:[%s643 + $0x58] sm:$0xf]
        %v2309 = vld [vmem:[%s643 + $0x60] sm:$0xf]
        %v2310 = vld [vmem:[%s643 + $0x64] sm:$0xf]
        %v2311 = vld [vmem:[%s643 + $0x6c] sm:$0xf]
        %v2312 = vld [vmem:[%s643 + $0x70] sm:$0xf]
        %v2313 = vld [vmem:[%s643 + $0x78] sm:$0xf]
        %v2314 = vld [vmem:[%s643 + $0x7c] sm:$0xf]
        %v2315 = vld [vmem:[%s643 + $0x84] sm:$0xf]
        %v2316 = vld [vmem:[%s643 + $0x88] sm:$0xf]
        %v2317 = vld [vmem:[%s643 + $0x90] sm:$0xf]
        %v2318 = vld [vmem:[%s643 + $0x94] sm:$0xf]
        %v2319 = vld [vmem:[%s643 + $0x9c] sm:$0xf]
        %v2320 = vld [vmem:[%s643 + $0xa0] sm:$0xf]
        %v2321 = vld [vmem:[%s643 + $0xa8] sm:$0xf]
        %v2322 = vld [vmem:[%s643 + $0xac] sm:$0xf]
        %v2323 = vld [vmem:[%s643 + $0xb4] sm:$0xf]
        %v2324 = vld [vmem:[%s643 + $0xb8] sm:$0xf]
        %s2325 = scalar_lea.vmem [#allocation6], 96
        %v2326 = vld [vmem:[%s2325] sm:$0xf]
        %v2327 = vld [vmem:[%s2325 + $0x4] sm:$0xf]
        %v2328 = vld [vmem:[%s2325 + $0x8] sm:$0xf]
        %v2329 = vld [vmem:[%s2325 + $0xc] sm:$0xf]
        %v2330 = vld [vmem:[%s2325 + $0x10] sm:$0xf]
        %v2331 = vld [vmem:[%s2325 + $0x14] sm:$0xf]
        %v2332 = vld [vmem:[%s2325 + $0x18] sm:$0xf]
        %v2333 = vld [vmem:[%s2325 + $0x1c] sm:$0xf]
        %v2366 = vunpack.c.l.b16 %v2293
        %v2367 = vunpack.c.l.b16 %v2294
        %v2368 = vunpack.c.l.b16 %v2295
        %v2369 = vunpack.c.l.b16 %v2296
        %v2370 = vunpack.c.l.b16 %v2297
        %v2371 = vunpack.c.l.b16 %v2298
        %v2372 = vunpack.c.l.b16 %v2299
        %v2373 = vunpack.c.l.b16 %v2300
        %v2374 = vunpack.c.l.b16 %v2301
        %v2375 = vunpack.c.l.b16 %v2302
        %v2376 = vunpack.c.l.b16 %v2303
        %v2377 = vunpack.c.l.b16 %v2304
        %v2378 = vunpack.c.l.b16 %v2305
        %v2379 = vunpack.c.l.b16 %v2306
        %v2380 = vunpack.c.l.b16 %v2307
        %v2381 = vunpack.c.l.b16 %v2308
        %v2382 = vunpack.c.l.b16 %v2309
        %v2383 = vunpack.c.l.b16 %v2310
        %v2384 = vunpack.c.l.b16 %v2311
        %v2385 = vunpack.c.l.b16 %v2312
        %v2386 = vunpack.c.l.b16 %v2313
        %v2387 = vunpack.c.l.b16 %v2314
        %v2388 = vunpack.c.l.b16 %v2315
        %v2389 = vunpack.c.l.b16 %v2316
        %v2390 = vunpack.c.l.b16 %v2317
        %v2391 = vunpack.c.l.b16 %v2318
        %v2392 = vunpack.c.l.b16 %v2319
        %v2393 = vunpack.c.l.b16 %v2320
        %v2394 = vunpack.c.l.b16 %v2321
        %v2395 = vunpack.c.l.b16 %v2322
        %v2396 = vunpack.c.l.b16 %v2323
        %v2397 = vunpack.c.l.b16 %v2324
        %v2398 = vpack.c.b16 %v2367, %v2366
        %v2399 = vpack.c.b16 %v2369, %v2368
        %v2400 = vpack.c.b16 %v2371, %v2370
        %v2401 = vpack.c.b16 %v2373, %v2372
        %v2402 = vpack.c.b16 %v2375, %v2374
        %v2403 = vpack.c.b16 %v2377, %v2376
        %v2404 = vpack.c.b16 %v2379, %v2378
        %v2405 = vpack.c.b16 %v2381, %v2380
        %v2406 = vpack.c.b16 %v2383, %v2382
        %v2407 = vpack.c.b16 %v2385, %v2384
        %v2408 = vpack.c.b16 %v2387, %v2386
        %v2409 = vpack.c.b16 %v2389, %v2388
        %v2410 = vpack.c.b16 %v2391, %v2390
        %v2411 = vpack.c.b16 %v2393, %v2392
        %v2412 = vpack.c.b16 %v2395, %v2394
        %v2413 = vpack.c.b16 %v2397, %v2396
        %v2422 = vunpack.c.l.b16 %v2326
        %v2423 = vunpack.c.l.b16 %v2327
        %v2424 = vunpack.c.l.b16 %v2328
        %v2425 = vunpack.c.l.b16 %v2329
        %v2426 = vunpack.c.l.b16 %v2330
        %v2427 = vunpack.c.l.b16 %v2331
        %v2428 = vunpack.c.l.b16 %v2332
        %v2429 = vunpack.c.l.b16 %v2333
        %v2430 = vpack.c.b16 %v2423, %v2422
        %v2431 = vpack.c.b16 %v2425, %v2424
        %v2432 = vpack.c.b16 %v2427, %v2426
        %v2433 = vpack.c.b16 %v2429, %v2428
        %v2439 = vsel %vm1285, %v2398, 0
        %v2442 = vsel %vm1285, %v2399, 0
        %v2445 = vsel %vm1285, %v2400, 0
        %v2448 = vsel %vm1285, %v2401, 0
        %v2451 = vsel %vm1285, %v2402, 0
        %v2454 = vsel %vm1285, %v2403, 0
        %v2457 = vsel %vm1285, %v2404, 0
        %v2460 = vsel %vm1285, %v2405, 0
        %v2463 = vsel %vm1285, %v2406, 0
        %v2466 = vsel %vm1285, %v2407, 0
        %v2469 = vsel %vm1285, %v2408, 0
        %v2472 = vsel %vm1285, %v2409, 0
        %v2475 = vsel %vm1285, %v2410, 0
        %v2478 = vsel %vm1285, %v2411, 0
        %v2481 = vsel %vm1285, %v2412, 0
        %v2484 = vsel %vm1285, %v2413, 0
        %2486 = vmatprep.subr.bf16.mxu0 0
        %2487 = vmatpush1.bf16.msra.mxu0 %v2430
        %2488 = vmatprep.subr.bf16.mxu0 0
        %2489 = vmatpush1.bf16.msra.mxu0 %v2431
        %2490 = vmatprep.subr.bf16.mxu0 0
        %2491 = vmatpush1.bf16.msra.mxu0 %v2432
        %2492 = vmatprep.subr.bf16.mxu0 0
        %2493 = vmatpush1.bf16.msra.mxu0 %v2433
        %2494 = vmatprep.subr.bf16.mxu0 0
        %2495 = vmatpush1.bf16.msra.mxu0 0
        %2496 = vmatprep.subr.bf16.mxu0 0
        %2497 = vmatpush1.bf16.msra.mxu0 0
        %2498 = vmatprep.subr.bf16.mxu0 0
        %2499 = vmatpush1.bf16.msra.mxu0 0
        %2500 = vmatprep.subr.bf16.mxu0 0
        %2501 = vmatpush1.bf16.msra.mxu0 0
        %2502 = vmatprep.subr.bf16.mxu0 0
        %2503 = vmatpush1.bf16.msra.mxu0 0
        %2504 = vmatprep.subr.bf16.mxu0 0
        %2505 = vmatpush1.bf16.msra.mxu0 0
        %2506 = vmatprep.subr.bf16.mxu0 0
        %2507 = vmatpush1.bf16.msra.mxu0 0
        %2508 = vmatprep.subr.bf16.mxu0 0
        %2509 = vmatpush1.bf16.msra.mxu0 0
        %2510 = vmatprep.subr.bf16.mxu0 0
        %2511 = vmatpush1.bf16.msra.mxu0 0
        %2512 = vmatprep.subr.bf16.mxu0 0
        %2513 = vmatpush1.bf16.msra.mxu0 0
        %2514 = vmatprep.subr.bf16.mxu0 0
        %2515 = vmatpush1.bf16.msra.mxu0 0
        %2516 = vmatprep.subr.bf16.mxu0 0
        %2517 = vmatpush1.bf16.msra.mxu0 0
        %2518 = vmatprep.mubr.bf16.mxu0 0
        %2519 = vmatmul.mubr.bf16.gmra.mrb[0].mxu0 %v2439
        %v2520 = vpop.f32.mrb[0].mxu0
        %v2521 = vadd.f32 0.0, %v2520
        %v2522 = vpop.f32.mrb[0].mxu0
        %v2523 = vpop.f32.mrb[0].mxu0
        %v2524 = vadd.f32 0.0, %v2523
        %v2525 = vpop.f32.mrb[0].mxu0
        %2526 = vmatprep.mubr.bf16.mxu0 0
        %2527 = vmatmul.mubr.bf16.gmra.mrb[0].mxu0 %v2442
        %v2528 = vpop.f32.mrb[0].mxu0
        %v2529 = vadd.f32 0.0, %v2528
        %v2530 = vpop.f32.mrb[0].mxu0
        %v2531 = vpop.f32.mrb[0].mxu0
        %v2532 = vadd.f32 0.0, %v2531
        %v2533 = vpop.f32.mrb[0].mxu0
        %2534 = vmatprep.mubr.bf16.mxu0 0
        %2535 = vmatmul.mubr.bf16.gmra.mrb[0].mxu0 %v2445
        %v2536 = vpop.f32.mrb[0].mxu0
        %v2537 = vadd.f32 0.0, %v2536
        %v2538 = vpop.f32.mrb[0].mxu0
        %v2539 = vpop.f32.mrb[0].mxu0
        %v2540 = vadd.f32 0.0, %v2539
        %v2541 = vpop.f32.mrb[0].mxu0
        %2542 = vmatprep.mubr.bf16.mxu0 0
        %2543 = vmatmul.mubr.bf16.gmra.mrb[0].mxu0 %v2448
        %v2544 = vpop.f32.mrb[0].mxu0
        %v2545 = vadd.f32 0.0, %v2544
        %v2546 = vpop.f32.mrb[0].mxu0
        %v2547 = vpop.f32.mrb[0].mxu0
        %v2548 = vadd.f32 0.0, %v2547
        %v2549 = vpop.f32.mrb[0].mxu0
        %2550 = vmatprep.mubr.bf16.mxu0 0
        %2551 = vmatmul.mubr.bf16.gmra.mrb[0].mxu0 %v2451
        %v2552 = vpop.f32.mrb[0].mxu0
        %v2553 = vadd.f32 0.0, %v2552
        %v2554 = vpop.f32.mrb[0].mxu0
        %v2555 = vpop.f32.mrb[0].mxu0
        %v2556 = vadd.f32 0.0, %v2555
        %v2557 = vpop.f32.mrb[0].mxu0
        %2558 = vmatprep.mubr.bf16.mxu0 0
        %2559 = vmatmul.mubr.bf16.gmra.mrb[0].mxu0 %v2454
        %v2560 = vpop.f32.mrb[0].mxu0
        %v2561 = vadd.f32 0.0, %v2560
        %v2562 = vpop.f32.mrb[0].mxu0
        %v2563 = vpop.f32.mrb[0].mxu0
        %v2564 = vadd.f32 0.0, %v2563
        %v2565 = vpop.f32.mrb[0].mxu0
        %2566 = vmatprep.mubr.bf16.mxu0 0
        %2567 = vmatmul.mubr.bf16.gmra.mrb[0].mxu0 %v2457
        %v2568 = vpop.f32.mrb[0].mxu0
        %v2569 = vadd.f32 0.0, %v2568
        %v2570 = vpop.f32.mrb[0].mxu0
        %v2571 = vpop.f32.mrb[0].mxu0
        %v2572 = vadd.f32 0.0, %v2571
        %v2573 = vpop.f32.mrb[0].mxu0
        %2574 = vmatprep.mubr.bf16.mxu0 0
        %2575 = vmatmul.mubr.bf16.gmra.mrb[0].mxu0 %v2460
        %v2576 = vpop.f32.mrb[0].mxu0
        %v2577 = vadd.f32 0.0, %v2576
        %v2578 = vpop.f32.mrb[0].mxu0
        %v2579 = vpop.f32.mrb[0].mxu0
        %v2580 = vadd.f32 0.0, %v2579
        %v2581 = vpop.f32.mrb[0].mxu0
        %2582 = vmatprep.mubr.bf16.mxu0 0
        %2583 = vmatmul.mubr.bf16.gmra.mrb[0].mxu0 %v2463
        %v2584 = vpop.f32.mrb[0].mxu0
        %v2585 = vadd.f32 0.0, %v2584
        %v2586 = vpop.f32.mrb[0].mxu0
        %v2587 = vpop.f32.mrb[0].mxu0
        %v2588 = vadd.f32 0.0, %v2587
        %v2589 = vpop.f32.mrb[0].mxu0
        %2590 = vmatprep.mubr.bf16.mxu0 0
        %2591 = vmatmul.mubr.bf16.gmra.mrb[0].mxu0 %v2466
        %v2592 = vpop.f32.mrb[0].mxu0
        %v2593 = vadd.f32 0.0, %v2592
        %v2594 = vpop.f32.mrb[0].mxu0
        %v2595 = vpop.f32.mrb[0].mxu0
        %v2596 = vadd.f32 0.0, %v2595
        %v2597 = vpop.f32.mrb[0].mxu0
        %2598 = vmatprep.mubr.bf16.mxu0 0
        %2599 = vmatmul.mubr.bf16.gmra.mrb[0].mxu0 %v2469
        %v2600 = vpop.f32.mrb[0].mxu0
        %v2601 = vadd.f32 0.0, %v2600
        %v2602 = vpop.f32.mrb[0].mxu0
        %v2603 = vpop.f32.mrb[0].mxu0
        %v2604 = vadd.f32 0.0, %v2603
        %v2605 = vpop.f32.mrb[0].mxu0
        %2606 = vmatprep.mubr.bf16.mxu0 0
        %2607 = vmatmul.mubr.bf16.gmra.mrb[0].mxu0 %v2472
        %v2608 = vpop.f32.mrb[0].mxu0
        %v2609 = vadd.f32 0.0, %v2608
        %v2610 = vpop.f32.mrb[0].mxu0
        %v2611 = vpop.f32.mrb[0].mxu0
        %v2612 = vadd.f32 0.0, %v2611
        %v2613 = vpop.f32.mrb[0].mxu0
        %2614 = vmatprep.mubr.bf16.mxu0 0
        %2615 = vmatmul.mubr.bf16.gmra.mrb[0].mxu0 %v2475
        %v2616 = vpop.f32.mrb[0].mxu0
        %v2617 = vadd.f32 0.0, %v2616
        %v2618 = vpop.f32.mrb[0].mxu0
        %v2619 = vpop.f32.mrb[0].mxu0
        %v2620 = vadd.f32 0.0, %v2619
        %v2621 = vpop.f32.mrb[0].mxu0
        %2622 = vmatprep.mubr.bf16.mxu0 0
        %2623 = vmatmul.mubr.bf16.gmra.mrb[0].mxu0 %v2478
        %v2624 = vpop.f32.mrb[0].mxu0
        %v2625 = vadd.f32 0.0, %v2624
        %v2626 = vpop.f32.mrb[0].mxu0
        %v2627 = vpop.f32.mrb[0].mxu0
        %v2628 = vadd.f32 0.0, %v2627
        %v2629 = vpop.f32.mrb[0].mxu0
        %2630 = vmatprep.mubr.bf16.mxu0 0
        %2631 = vmatmul.mubr.bf16.gmra.mrb[0].mxu0 %v2481
        %v2632 = vpop.f32.mrb[0].mxu0
        %v2633 = vadd.f32 0.0, %v2632
        %v2634 = vpop.f32.mrb[0].mxu0
        %v2635 = vpop.f32.mrb[0].mxu0
        %v2636 = vadd.f32 0.0, %v2635
        %v2637 = vpop.f32.mrb[0].mxu0
        %2638 = vmatprep.mubr.bf16.mxu0 0
        %2639 = vmatmul.mubr.bf16.gmra.mrb[0].mxu0 %v2484
        %v2640 = vpop.f32.mrb[0].mxu0
        %v2641 = vadd.f32 0.0, %v2640
        %v2642 = vpop.f32.mrb[0].mxu0
        %v2643 = vpop.f32.mrb[0].mxu0
        %v2644 = vadd.f32 0.0, %v2643
        %v2645 = vpop.f32.mrb[0].mxu0
        %2646 = vdwg.mxu0
        %v2647 = vadd.f32 %v2261, %v2521
        %v2648 = vadd.f32 %v2262, %v2524
        %v2649 = vadd.f32 %v2263, %v2529
        %v2650 = vadd.f32 %v2264, %v2532
        %v2651 = vadd.f32 %v2265, %v2537
        %v2652 = vadd.f32 %v2266, %v2540
        %v2653 = vadd.f32 %v2267, %v2545
        %v2654 = vadd.f32 %v2268, %v2548
        %v2655 = vadd.f32 %v2269, %v2553
        %v2656 = vadd.f32 %v2270, %v2556
        %v2657 = vadd.f32 %v2271, %v2561
        %v2658 = vadd.f32 %v2272, %v2564
        %v2659 = vadd.f32 %v2273, %v2569
        %v2660 = vadd.f32 %v2274, %v2572
        %v2661 = vadd.f32 %v2275, %v2577
        %v2662 = vadd.f32 %v2276, %v2580
        %v2663 = vadd.f32 %v2277, %v2585
        %v2664 = vadd.f32 %v2278, %v2588
        %v2665 = vadd.f32 %v2279, %v2593
        %v2666 = vadd.f32 %v2280, %v2596
        %v2667 = vadd.f32 %v2281, %v2601
        %v2668 = vadd.f32 %v2282, %v2604
        %v2669 = vadd.f32 %v2283, %v2609
        %v2670 = vadd.f32 %v2284, %v2612
        %v2671 = vadd.f32 %v2285, %v2617
        %v2672 = vadd.f32 %v2286, %v2620
        %v2673 = vadd.f32 %v2287, %v2625
        %v2674 = vadd.f32 %v2288, %v2628
        %v2675 = vadd.f32 %v2289, %v2633
        %v2676 = vadd.f32 %v2290, %v2636
        %v2677 = vadd.f32 %v2291, %v2641
        %v2678 = vadd.f32 %v2292, %v2644
        %v2679 = vld [vmem:[%s643] sm:$0xf]
        %v2680 = vld [vmem:[%s643 + $0x4] sm:$0xf]
        %v2681 = vld [vmem:[%s643 + $0x8] sm:$0x1]
        %v2682 = vld [vmem:[%s643 + $0xc] sm:$0xf]
        %v2683 = vld [vmem:[%s643 + $0x10] sm:$0xf]
        %v2684 = vld [vmem:[%s643 + $0x14] sm:$0x1]
        %v2685 = vld [vmem:[%s643 + $0x18] sm:$0xf]
        %v2686 = vld [vmem:[%s643 + $0x1c] sm:$0xf]
        %v2687 = vld [vmem:[%s643 + $0x20] sm:$0x1]
        %v2688 = vld [vmem:[%s643 + $0x24] sm:$0xf]
        %v2689 = vld [vmem:[%s643 + $0x28] sm:$0xf]
        %v2690 = vld [vmem:[%s643 + $0x2c] sm:$0x1]
        %v2691 = vld [vmem:[%s643 + $0x30] sm:$0xf]
        %v2692 = vld [vmem:[%s643 + $0x34] sm:$0xf]
        %v2693 = vld [vmem:[%s643 + $0x38] sm:$0x1]
        %v2694 = vld [vmem:[%s643 + $0x3c] sm:$0xf]
        %v2695 = vld [vmem:[%s643 + $0x40] sm:$0xf]
        %v2696 = vld [vmem:[%s643 + $0x44] sm:$0x1]
        %v2697 = vld [vmem:[%s643 + $0x48] sm:$0xf]
        %v2698 = vld [vmem:[%s643 + $0x4c] sm:$0xf]
        %v2699 = vld [vmem:[%s643 + $0x50] sm:$0x1]
        %v2700 = vld [vmem:[%s643 + $0x54] sm:$0xf]
        %v2701 = vld [vmem:[%s643 + $0x58] sm:$0xf]
        %v2702 = vld [vmem:[%s643 + $0x5c] sm:$0x1]
        %v2703 = vld [vmem:[%s643 + $0x60] sm:$0xf]
        %v2704 = vld [vmem:[%s643 + $0x64] sm:$0xf]
        %v2705 = vld [vmem:[%s643 + $0x68] sm:$0x1]
        %v2706 = vld [vmem:[%s643 + $0x6c] sm:$0xf]
        %v2707 = vld [vmem:[%s643 + $0x70] sm:$0xf]
        %v2708 = vld [vmem:[%s643 + $0x74] sm:$0x1]
        %v2709 = vld [vmem:[%s643 + $0x78] sm:$0xf]
        %v2710 = vld [vmem:[%s643 + $0x7c] sm:$0xf]
        %v2711 = vld [vmem:[%s643 + $0x80] sm:$0x1]
        %v2712 = vld [vmem:[%s643 + $0x84] sm:$0xf]
        %v2713 = vld [vmem:[%s643 + $0x88] sm:$0xf]
        %v2714 = vld [vmem:[%s643 + $0x8c] sm:$0x1]
        %v2715 = vld [vmem:[%s643 + $0x90] sm:$0xf]
        %v2716 = vld [vmem:[%s643 + $0x94] sm:$0xf]
        %v2717 = vld [vmem:[%s643 + $0x98] sm:$0x1]
        %v2718 = vld [vmem:[%s643 + $0x9c] sm:$0xf]
        %v2719 = vld [vmem:[%s643 + $0xa0] sm:$0xf]
        %v2720 = vld [vmem:[%s643 + $0xa4] sm:$0x1]
        %v2721 = vld [vmem:[%s643 + $0xa8] sm:$0xf]
        %v2722 = vld [vmem:[%s643 + $0xac] sm:$0xf]
        %v2723 = vld [vmem:[%s643 + $0xb0] sm:$0x1]
        %v2724 = vld [vmem:[%s643 + $0xb4] sm:$0xf]
        %v2725 = vld [vmem:[%s643 + $0xb8] sm:$0xf]
        %v2726 = vld [vmem:[%s643 + $0xbc] sm:$0x1]
        %v2728 = vshrl.u32 %v2679, 16
        %v2730 = vrot.slane %v2728, 4
        %v2731 = vshll.u32 %v2679, 16
        %v2733 = vrot.slane %v2731, 5
        %v2734 = vor.u32 %v2730, %v2733
        %v2735 = vrot.slane %v2734, 4
        %v2737 = vshll.u32 %v2680, 16
        %v2739 = vrot.slane %v2737, 5
        %v2740 = vsel %vm819, %v2735, %v2739
        %v2741 = vshrl.u32 %v2680, 16
        %v2743 = vrot.slane %v2741, 4
        %v2744 = vor.u32 %v2743, %v2739
        %v2745 = vrot.slane %v2744, 4
        %v2747 = vshll.u32 %v2681, 16
        %v2749 = vrot.slane %v2747, 5
        %v2750 = vsel %vm819, %v2745, %v2749
        %v2752 = vshrl.u32 %v2682, 16
        %v2754 = vrot.slane %v2752, 4
        %v2755 = vshll.u32 %v2682, 16
        %v2757 = vrot.slane %v2755, 5
        %v2758 = vor.u32 %v2754, %v2757
        %v2759 = vrot.slane %v2758, 4
        %v2761 = vshll.u32 %v2683, 16
        %v2763 = vrot.slane %v2761, 5
        %v2764 = vsel %vm819, %v2759, %v2763
        %v2765 = vshrl.u32 %v2683, 16
        %v2767 = vrot.slane %v2765, 4
        %v2768 = vor.u32 %v2767, %v2763
        %v2769 = vrot.slane %v2768, 4
        %v2771 = vshll.u32 %v2684, 16
        %v2773 = vrot.slane %v2771, 5
        %v2774 = vsel %vm819, %v2769, %v2773
        %v2776 = vshrl.u32 %v2685, 16
        %v2778 = vrot.slane %v2776, 4
        %v2779 = vshll.u32 %v2685, 16
        %v2781 = vrot.slane %v2779, 5
        %v2782 = vor.u32 %v2778, %v2781
        %v2783 = vrot.slane %v2782, 4
        %v2785 = vshll.u32 %v2686, 16
        %v2787 = vrot.slane %v2785, 5
        %v2788 = vsel %vm819, %v2783, %v2787
        %v2789 = vshrl.u32 %v2686, 16
        %v2791 = vrot.slane %v2789, 4
        %v2792 = vor.u32 %v2791, %v2787
        %v2793 = vrot.slane %v2792, 4
        %v2795 = vshll.u32 %v2687, 16
        %v2797 = vrot.slane %v2795, 5
        %v2798 = vsel %vm819, %v2793, %v2797
        %v2800 = vshrl.u32 %v2688, 16
        %v2802 = vrot.slane %v2800, 4
        %v2803 = vshll.u32 %v2688, 16
        %v2805 = vrot.slane %v2803, 5
        %v2806 = vor.u32 %v2802, %v2805
        %v2807 = vrot.slane %v2806, 4
        %v2809 = vshll.u32 %v2689, 16
        %v2811 = vrot.slane %v2809, 5
        %v2812 = vsel %vm819, %v2807, %v2811
        %v2813 = vshrl.u32 %v2689, 16
        %v2815 = vrot.slane %v2813, 4
        %v2816 = vor.u32 %v2815, %v2811
        %v2817 = vrot.slane %v2816, 4
        %v2819 = vshll.u32 %v2690, 16
        %v2821 = vrot.slane %v2819, 5
        %v2822 = vsel %vm819, %v2817, %v2821
        %v2824 = vshrl.u32 %v2691, 16
        %v2826 = vrot.slane %v2824, 4
        %v2827 = vshll.u32 %v2691, 16
        %v2829 = vrot.slane %v2827, 5
        %v2830 = vor.u32 %v2826, %v2829
        %v2831 = vrot.slane %v2830, 4
        %v2833 = vshll.u32 %v2692, 16
        %v2835 = vrot.slane %v2833, 5
        %v2836 = vsel %vm819, %v2831, %v2835
        %v2837 = vshrl.u32 %v2692, 16
        %v2839 = vrot.slane %v2837, 4
        %v2840 = vor.u32 %v2839, %v2835
        %v2841 = vrot.slane %v2840, 4
        %v2843 = vshll.u32 %v2693, 16
        %v2845 = vrot.slane %v2843, 5
        %v2846 = vsel %vm819, %v2841, %v2845
        %v2848 = vshrl.u32 %v2694, 16
        %v2850 = vrot.slane %v2848, 4
        %v2851 = vshll.u32 %v2694, 16
        %v2853 = vrot.slane %v2851, 5
        %v2854 = vor.u32 %v2850, %v2853
        %v2855 = vrot.slane %v2854, 4
        %v2857 = vshll.u32 %v2695, 16
        %v2859 = vrot.slane %v2857, 5
        %v2860 = vsel %vm819, %v2855, %v2859
        %v2861 = vshrl.u32 %v2695, 16
        %v2863 = vrot.slane %v2861, 4
        %v2864 = vor.u32 %v2863, %v2859
        %v2865 = vrot.slane %v2864, 4
        %v2867 = vshll.u32 %v2696, 16
        %v2869 = vrot.slane %v2867, 5
        %v2870 = vsel %vm819, %v2865, %v2869
        %v2872 = vshrl.u32 %v2697, 16
        %v2874 = vrot.slane %v2872, 4
        %v2875 = vshll.u32 %v2697, 16
        %v2877 = vrot.slane %v2875, 5
        %v2878 = vor.u32 %v2874, %v2877
        %v2879 = vrot.slane %v2878, 4
        %v2881 = vshll.u32 %v2698, 16
        %v2883 = vrot.slane %v2881, 5
        %v2884 = vsel %vm819, %v2879, %v2883
        %v2885 = vshrl.u32 %v2698, 16
        %v2887 = vrot.slane %v2885, 4
        %v2888 = vor.u32 %v2887, %v2883
        %v2889 = vrot.slane %v2888, 4
        %v2891 = vshll.u32 %v2699, 16
        %v2893 = vrot.slane %v2891, 5
        %v2894 = vsel %vm819, %v2889, %v2893
        %v2896 = vshrl.u32 %v2700, 16
        %v2898 = vrot.slane %v2896, 4
        %v2899 = vshll.u32 %v2700, 16
        %v2901 = vrot.slane %v2899, 5
        %v2902 = vor.u32 %v2898, %v2901
        %v2903 = vrot.slane %v2902, 4
        %v2905 = vshll.u32 %v2701, 16
        %v2907 = vrot.slane %v2905, 5
        %v2908 = vsel %vm819, %v2903, %v2907
        %v2909 = vshrl.u32 %v2701, 16
        %v2911 = vrot.slane %v2909, 4
        %v2912 = vor.u32 %v2911, %v2907
        %v2913 = vrot.slane %v2912, 4
        %v2915 = vshll.u32 %v2702, 16
        %v2917 = vrot.slane %v2915, 5
        %v2918 = vsel %vm819, %v2913, %v2917
        %v2920 = vshrl.u32 %v2703, 16
        %v2922 = vrot.slane %v2920, 4
        %v2923 = vshll.u32 %v2703, 16
        %v2925 = vrot.slane %v2923, 5
        %v2926 = vor.u32 %v2922, %v2925
        %v2927 = vrot.slane %v2926, 4
        %v2929 = vshll.u32 %v2704, 16
        %v2931 = vrot.slane %v2929, 5
        %v2932 = vsel %vm819, %v2927, %v2931
        %v2933 = vshrl.u32 %v2704, 16
        %v2935 = vrot.slane %v2933, 4
        %v2936 = vor.u32 %v2935, %v2931
        %v2937 = vrot.slane %v2936, 4
        %v2939 = vshll.u32 %v2705, 16
        %v2941 = vrot.slane %v2939, 5
        %v2942 = vsel %vm819, %v2937, %v2941
        %v2944 = vshrl.u32 %v2706, 16
        %v2946 = vrot.slane %v2944, 4
        %v2947 = vshll.u32 %v2706, 16
        %v2949 = vrot.slane %v2947, 5
        %v2950 = vor.u32 %v2946, %v2949
        %v2951 = vrot.slane %v2950, 4
        %v2953 = vshll.u32 %v2707, 16
        %v2955 = vrot.slane %v2953, 5
        %v2956 = vsel %vm819, %v2951, %v2955
        %v2957 = vshrl.u32 %v2707, 16
        %v2959 = vrot.slane %v2957, 4
        %v2960 = vor.u32 %v2959, %v2955
        %v2961 = vrot.slane %v2960, 4
        %v2963 = vshll.u32 %v2708, 16
        %v2965 = vrot.slane %v2963, 5
        %v2966 = vsel %vm819, %v2961, %v2965
        %v2968 = vshrl.u32 %v2709, 16
        %v2970 = vrot.slane %v2968, 4
        %v2971 = vshll.u32 %v2709, 16
        %v2973 = vrot.slane %v2971, 5
        %v2974 = vor.u32 %v2970, %v2973
        %v2975 = vrot.slane %v2974, 4
        %v2977 = vshll.u32 %v2710, 16
        %v2979 = vrot.slane %v2977, 5
        %v2980 = vsel %vm819, %v2975, %v2979
        %v2981 = vshrl.u32 %v2710, 16
        %v2983 = vrot.slane %v2981, 4
        %v2984 = vor.u32 %v2983, %v2979
        %v2985 = vrot.slane %v2984, 4
        %v2987 = vshll.u32 %v2711, 16
        %v2989 = vrot.slane %v2987, 5
        %v2990 = vsel %vm819, %v2985, %v2989
        %v2992 = vshrl.u32 %v2712, 16
        %v2994 = vrot.slane %v2992, 4
        %v2995 = vshll.u32 %v2712, 16
        %v2997 = vrot.slane %v2995, 5
        %v2998 = vor.u32 %v2994, %v2997
        %v2999 = vrot.slane %v2998, 4
        %v3001 = vshll.u32 %v2713, 16
        %v3003 = vrot.slane %v3001, 5
        %v3004 = vsel %vm819, %v2999, %v3003
        %v3005 = vshrl.u32 %v2713, 16
        %v3007 = vrot.slane %v3005, 4
        %v3008 = vor.u32 %v3007, %v3003
        %v3009 = vrot.slane %v3008, 4
        %v3011 = vshll.u32 %v2714, 16
        %v3013 = vrot.slane %v3011, 5
        %v3014 = vsel %vm819, %v3009, %v3013
        %v3016 = vshrl.u32 %v2715, 16
        %v3018 = vrot.slane %v3016, 4
        %v3019 = vshll.u32 %v2715, 16
        %v3021 = vrot.slane %v3019, 5
        %v3022 = vor.u32 %v3018, %v3021
        %v3023 = vrot.slane %v3022, 4
        %v3025 = vshll.u32 %v2716, 16
        %v3027 = vrot.slane %v3025, 5
        %v3028 = vsel %vm819, %v3023, %v3027
        %v3029 = vshrl.u32 %v2716, 16
        %v3031 = vrot.slane %v3029, 4
        %v3032 = vor.u32 %v3031, %v3027
        %v3033 = vrot.slane %v3032, 4
        %v3035 = vshll.u32 %v2717, 16
        %v3037 = vrot.slane %v3035, 5
        %v3038 = vsel %vm819, %v3033, %v3037
        %v3040 = vshrl.u32 %v2718, 16
        %v3042 = vrot.slane %v3040, 4
        %v3043 = vshll.u32 %v2718, 16
        %v3045 = vrot.slane %v3043, 5
        %v3046 = vor.u32 %v3042, %v3045
        %v3047 = vrot.slane %v3046, 4
        %v3049 = vshll.u32 %v2719, 16
        %v3051 = vrot.slane %v3049, 5
        %v3052 = vsel %vm819, %v3047, %v3051
        %v3053 = vshrl.u32 %v2719, 16
        %v3055 = vrot.slane %v3053, 4
        %v3056 = vor.u32 %v3055, %v3051
        %v3057 = vrot.slane %v3056, 4
        %v3059 = vshll.u32 %v2720, 16
        %v3061 = vrot.slane %v3059, 5
        %v3062 = vsel %vm819, %v3057, %v3061
        %v3064 = vshrl.u32 %v2721, 16
        %v3066 = vrot.slane %v3064, 4
        %v3067 = vshll.u32 %v2721, 16
        %v3069 = vrot.slane %v3067, 5
        %v3070 = vor.u32 %v3066, %v3069
        %v3071 = vrot.slane %v3070, 4
        %v3073 = vshll.u32 %v2722, 16
        %v3075 = vrot.slane %v3073, 5
        %v3076 = vsel %vm819, %v3071, %v3075
        %v3077 = vshrl.u32 %v2722, 16
        %v3079 = vrot.slane %v3077, 4
        %v3080 = vor.u32 %v3079, %v3075
        %v3081 = vrot.slane %v3080, 4
        %v3083 = vshll.u32 %v2723, 16
        %v3085 = vrot.slane %v3083, 5
        %v3086 = vsel %vm819, %v3081, %v3085
        %v3088 = vshrl.u32 %v2724, 16
        %v3090 = vrot.slane %v3088, 4
        %v3091 = vshll.u32 %v2724, 16
        %v3093 = vrot.slane %v3091, 5
        %v3094 = vor.u32 %v3090, %v3093
        %v3095 = vrot.slane %v3094, 4
        %v3097 = vshll.u32 %v2725, 16
        %v3099 = vrot.slane %v3097, 5
        %v3100 = vsel %vm819, %v3095, %v3099
        %v3101 = vshrl.u32 %v2725, 16
        %v3103 = vrot.slane %v3101, 4
        %v3104 = vor.u32 %v3103, %v3099
        %v3105 = vrot.slane %v3104, 4
        %v3107 = vshll.u32 %v2726, 16
        %v3109 = vrot.slane %v3107, 5
        %v3110 = vsel %vm819, %v3105, %v3109
        %s3111 = scalar_lea.vmem [#allocation6], 128
        %v3112 = vld [vmem:[%s3111] sm:$0xf]
        %v3113 = vld [vmem:[%s3111 + $0x4] sm:$0xf]
        %v3114 = vld [vmem:[%s3111 + $0x8] sm:$0xf]
        %v3115 = vld [vmem:[%s3111 + $0xc] sm:$0xf]
        %v3116 = vld [vmem:[%s3111 + $0x10] sm:$0xf]
        %v3117 = vld [vmem:[%s3111 + $0x14] sm:$0xf]
        %v3118 = vld [vmem:[%s3111 + $0x18] sm:$0xf]
        %v3119 = vld [vmem:[%s3111 + $0x1c] sm:$0xf]
        %v3120 = vunpack.c.l.b16 %v2740
        %v3121 = vunpack.c.l.b16 %v2750
        %v3122 = vunpack.c.l.b16 %v2764
        %v3123 = vunpack.c.l.b16 %v2774
        %v3124 = vunpack.c.l.b16 %v2788
        %v3125 = vunpack.c.l.b16 %v2798
        %v3126 = vunpack.c.l.b16 %v2812
        %v3127 = vunpack.c.l.b16 %v2822
        %v3128 = vunpack.c.l.b16 %v2836
        %v3129 = vunpack.c.l.b16 %v2846
        %v3130 = vunpack.c.l.b16 %v2860
        %v3131 = vunpack.c.l.b16 %v2870
        %v3132 = vunpack.c.l.b16 %v2884
        %v3133 = vunpack.c.l.b16 %v2894
        %v3134 = vunpack.c.l.b16 %v2908
        %v3135 = vunpack.c.l.b16 %v2918
        %v3136 = vunpack.c.l.b16 %v2932
        %v3137 = vunpack.c.l.b16 %v2942
        %v3138 = vunpack.c.l.b16 %v2956
        %v3139 = vunpack.c.l.b16 %v2966
        %v3140 = vunpack.c.l.b16 %v2980
        %v3141 = vunpack.c.l.b16 %v2990
        %v3142 = vunpack.c.l.b16 %v3004
        %v3143 = vunpack.c.l.b16 %v3014
        %v3144 = vunpack.c.l.b16 %v3028
        %v3145 = vunpack.c.l.b16 %v3038
        %v3146 = vunpack.c.l.b16 %v3052
        %v3147 = vunpack.c.l.b16 %v3062
        %v3148 = vunpack.c.l.b16 %v3076
        %v3149 = vunpack.c.l.b16 %v3086
        %v3150 = vunpack.c.l.b16 %v3100
        %v3151 = vunpack.c.l.b16 %v3110
        %v3152 = vpack.c.b16 %v3121, %v3120
        %v3153 = vpack.c.b16 %v3123, %v3122
        %v3154 = vpack.c.b16 %v3125, %v3124
        %v3155 = vpack.c.b16 %v3127, %v3126
        %v3156 = vpack.c.b16 %v3129, %v3128
        %v3157 = vpack.c.b16 %v3131, %v3130
        %v3158 = vpack.c.b16 %v3133, %v3132
        %v3159 = vpack.c.b16 %v3135, %v3134
        %v3160 = vpack.c.b16 %v3137, %v3136
        %v3161 = vpack.c.b16 %v3139, %v3138
        %v3162 = vpack.c.b16 %v3141, %v3140
        %v3163 = vpack.c.b16 %v3143, %v3142
        %v3164 = vpack.c.b16 %v3145, %v3144
        %v3165 = vpack.c.b16 %v3147, %v3146
        %v3166 = vpack.c.b16 %v3149, %v3148
        %v3167 = vpack.c.b16 %v3151, %v3150
        %v3176 = vunpack.c.l.b16 %v3112
        %v3177 = vunpack.c.l.b16 %v3113
        %v3178 = vunpack.c.l.b16 %v3114
        %v3179 = vunpack.c.l.b16 %v3115
        %v3180 = vunpack.c.l.b16 %v3116
        %v3181 = vunpack.c.l.b16 %v3117
        %v3182 = vunpack.c.l.b16 %v3118
        %v3183 = vunpack.c.l.b16 %v3119
        %v3184 = vpack.c.b16 %v3177, %v3176
        %v3185 = vpack.c.b16 %v3179, %v3178
        %v3186 = vpack.c.b16 %v3181, %v3180
        %v3187 = vpack.c.b16 %v3183, %v3182
        %v3193 = vsel %vm1285, %v3152, 0
        %v3196 = vsel %vm1285, %v3153, 0
        %v3199 = vsel %vm1285, %v3154, 0
        %v3202 = vsel %vm1285, %v3155, 0
        %v3205 = vsel %vm1285, %v3156, 0
        %v3208 = vsel %vm1285, %v3157, 0
        %v3211 = vsel %vm1285, %v3158, 0
        %v3214 = vsel %vm1285, %v3159, 0
        %v3217 = vsel %vm1285, %v3160, 0
        %v3220 = vsel %vm1285, %v3161, 0
        %v3223 = vsel %vm1285, %v3162, 0
        %v3226 = vsel %vm1285, %v3163, 0
        %v3229 = vsel %vm1285, %v3164, 0
        %v3232 = vsel %vm1285, %v3165, 0
        %v3235 = vsel %vm1285, %v3166, 0
        %v3238 = vsel %vm1285, %v3167, 0
        %3240 = vmatprep.subr.bf16.mxu0 0
        %3241 = vmatpush1.bf16.msra.mxu0 %v3184
        %3242 = vmatprep.subr.bf16.mxu0 0
        %3243 = vmatpush1.bf16.msra.mxu0 %v3185
        %3244 = vmatprep.subr.bf16.mxu0 0
        %3245 = vmatpush1.bf16.msra.mxu0 %v3186
        %3246 = vmatprep.subr.bf16.mxu0 0
        %3247 = vmatpush1.bf16.msra.mxu0 %v3187
        %3248 = vmatprep.subr.bf16.mxu0 0
        %3249 = vmatpush1.bf16.msra.mxu0 0
        %3250 = vmatprep.subr.bf16.mxu0 0
        %3251 = vmatpush1.bf16.msra.mxu0 0
        %3252 = vmatprep.subr.bf16.mxu0 0
        %3253 = vmatpush1.bf16.msra.mxu0 0
        %3254 = vmatprep.subr.bf16.mxu0 0
        %3255 = vmatpush1.bf16.msra.mxu0 0
        %3256 = vmatprep.subr.bf16.mxu0 0
        %3257 = vmatpush1.bf16.msra.mxu0 0
        %3258 = vmatprep.subr.bf16.mxu0 0
        %3259 = vmatpush1.bf16.msra.mxu0 0
        %3260 = vmatprep.subr.bf16.mxu0 0
        %3261 = vmatpush1.bf16.msra.mxu0 0
        %3262 = vmatprep.subr.bf16.mxu0 0
        %3263 = vmatpush1.bf16.msra.mxu0 0
        %3264 = vmatprep.subr.bf16.mxu0 0
        %3265 = vmatpush1.bf16.msra.mxu0 0
        %3266 = vmatprep.subr.bf16.mxu0 0
        %3267 = vmatpush1.bf16.msra.mxu0 0
        %3268 = vmatprep.subr.bf16.mxu0 0
        %3269 = vmatpush1.bf16.msra.mxu0 0
        %3270 = vmatprep.subr.bf16.mxu0 0
        %3271 = vmatpush1.bf16.msra.mxu0 0
        %3272 = vmatprep.mubr.bf16.mxu0 0
        %3273 = vmatmul.mubr.bf16.gmra.mrb[0].mxu0 %v3193
        %v3274 = vpop.f32.mrb[0].mxu0
        %v3275 = vadd.f32 0.0, %v3274
        %v3276 = vpop.f32.mrb[0].mxu0
        %v3277 = vpop.f32.mrb[0].mxu0
        %v3278 = vadd.f32 0.0, %v3277
        %v3279 = vpop.f32.mrb[0].mxu0
        %3280 = vmatprep.mubr.bf16.mxu0 0
        %3281 = vmatmul.mubr.bf16.gmra.mrb[0].mxu0 %v3196
        %v3282 = vpop.f32.mrb[0].mxu0
        %v3283 = vadd.f32 0.0, %v3282
        %v3284 = vpop.f32.mrb[0].mxu0
        %v3285 = vpop.f32.mrb[0].mxu0
        %v3286 = vadd.f32 0.0, %v3285
        %v3287 = vpop.f32.mrb[0].mxu0
        %3288 = vmatprep.mubr.bf16.mxu0 0
        %3289 = vmatmul.mubr.bf16.gmra.mrb[0].mxu0 %v3199
        %v3290 = vpop.f32.mrb[0].mxu0
        %v3291 = vadd.f32 0.0, %v3290
        %v3292 = vpop.f32.mrb[0].mxu0
        %v3293 = vpop.f32.mrb[0].mxu0
        %v3294 = vadd.f32 0.0, %v3293
        %v3295 = vpop.f32.mrb[0].mxu0
        %3296 = vmatprep.mubr.bf16.mxu0 0
        %3297 = vmatmul.mubr.bf16.gmra.mrb[0].mxu0 %v3202
        %v3298 = vpop.f32.mrb[0].mxu0
        %v3299 = vadd.f32 0.0, %v3298
        %v3300 = vpop.f32.mrb[0].mxu0
        %v3301 = vpop.f32.mrb[0].mxu0
        %v3302 = vadd.f32 0.0, %v3301
        %v3303 = vpop.f32.mrb[0].mxu0
        %3304 = vmatprep.mubr.bf16.mxu0 0
        %3305 = vmatmul.mubr.bf16.gmra.mrb[0].mxu0 %v3205
        %v3306 = vpop.f32.mrb[0].mxu0
        %v3307 = vadd.f32 0.0, %v3306
        %v3308 = vpop.f32.mrb[0].mxu0
        %v3309 = vpop.f32.mrb[0].mxu0
        %v3310 = vadd.f32 0.0, %v3309
        %v3311 = vpop.f32.mrb[0].mxu0
        %3312 = vmatprep.mubr.bf16.mxu0 0
        %3313 = vmatmul.mubr.bf16.gmra.mrb[0].mxu0 %v3208
        %v3314 = vpop.f32.mrb[0].mxu0
        %v3315 = vadd.f32 0.0, %v3314
        %v3316 = vpop.f32.mrb[0].mxu0
        %v3317 = vpop.f32.mrb[0].mxu0
        %v3318 = vadd.f32 0.0, %v3317
        %v3319 = vpop.f32.mrb[0].mxu0
        %3320 = vmatprep.mubr.bf16.mxu0 0
        %3321 = vmatmul.mubr.bf16.gmra.mrb[0].mxu0 %v3211
        %v3322 = vpop.f32.mrb[0].mxu0
        %v3323 = vadd.f32 0.0, %v3322
        %v3324 = vpop.f32.mrb[0].mxu0
        %v3325 = vpop.f32.mrb[0].mxu0
        %v3326 = vadd.f32 0.0, %v3325
        %v3327 = vpop.f32.mrb[0].mxu0
        %3328 = vmatprep.mubr.bf16.mxu0 0
        %3329 = vmatmul.mubr.bf16.gmra.mrb[0].mxu0 %v3214
        %v3330 = vpop.f32.mrb[0].mxu0
        %v3331 = vadd.f32 0.0, %v3330
        %v3332 = vpop.f32.mrb[0].mxu0
        %v3333 = vpop.f32.mrb[0].mxu0
        %v3334 = vadd.f32 0.0, %v3333
        %v3335 = vpop.f32.mrb[0].mxu0
        %3336 = vmatprep.mubr.bf16.mxu0 0
        %3337 = vmatmul.mubr.bf16.gmra.mrb[0].mxu0 %v3217
        %v3338 = vpop.f32.mrb[0].mxu0
        %v3339 = vadd.f32 0.0, %v3338
        %v3340 = vpop.f32.mrb[0].mxu0
        %v3341 = vpop.f32.mrb[0].mxu0
        %v3342 = vadd.f32 0.0, %v3341
        %v3343 = vpop.f32.mrb[0].mxu0
        %3344 = vmatprep.mubr.bf16.mxu0 0
        %3345 = vmatmul.mubr.bf16.gmra.mrb[0].mxu0 %v3220
        %v3346 = vpop.f32.mrb[0].mxu0
        %v3347 = vadd.f32 0.0, %v3346
        %v3348 = vpop.f32.mrb[0].mxu0
        %v3349 = vpop.f32.mrb[0].mxu0
        %v3350 = vadd.f32 0.0, %v3349
        %v3351 = vpop.f32.mrb[0].mxu0
        %3352 = vmatprep.mubr.bf16.mxu0 0
        %3353 = vmatmul.mubr.bf16.gmra.mrb[0].mxu0 %v3223
        %v3354 = vpop.f32.mrb[0].mxu0
        %v3355 = vadd.f32 0.0, %v3354
        %v3356 = vpop.f32.mrb[0].mxu0
        %v3357 = vpop.f32.mrb[0].mxu0
        %v3358 = vadd.f32 0.0, %v3357
        %v3359 = vpop.f32.mrb[0].mxu0
        %3360 = vmatprep.mubr.bf16.mxu0 0
        %3361 = vmatmul.mubr.bf16.gmra.mrb[0].mxu0 %v3226
        %v3362 = vpop.f32.mrb[0].mxu0
        %v3363 = vadd.f32 0.0, %v3362
        %v3364 = vpop.f32.mrb[0].mxu0
        %v3365 = vpop.f32.mrb[0].mxu0
        %v3366 = vadd.f32 0.0, %v3365
        %v3367 = vpop.f32.mrb[0].mxu0
        %3368 = vmatprep.mubr.bf16.mxu0 0
        %3369 = vmatmul.mubr.bf16.gmra.mrb[0].mxu0 %v3229
        %v3370 = vpop.f32.mrb[0].mxu0
        %v3371 = vadd.f32 0.0, %v3370
        %v3372 = vpop.f32.mrb[0].mxu0
        %v3373 = vpop.f32.mrb[0].mxu0
        %v3374 = vadd.f32 0.0, %v3373
        %v3375 = vpop.f32.mrb[0].mxu0
        %3376 = vmatprep.mubr.bf16.mxu0 0
        %3377 = vmatmul.mubr.bf16.gmra.mrb[0].mxu0 %v3232
        %v3378 = vpop.f32.mrb[0].mxu0
        %v3379 = vadd.f32 0.0, %v3378
        %v3380 = vpop.f32.mrb[0].mxu0
        %v3381 = vpop.f32.mrb[0].mxu0
        %v3382 = vadd.f32 0.0, %v3381
        %v3383 = vpop.f32.mrb[0].mxu0
        %3384 = vmatprep.mubr.bf16.mxu0 0
        %3385 = vmatmul.mubr.bf16.gmra.mrb[0].mxu0 %v3235
        %v3386 = vpop.f32.mrb[0].mxu0
        %v3387 = vadd.f32 0.0, %v3386
        %v3388 = vpop.f32.mrb[0].mxu0
        %v3389 = vpop.f32.mrb[0].mxu0
        %v3390 = vadd.f32 0.0, %v3389
        %v3391 = vpop.f32.mrb[0].mxu0
        %3392 = vmatprep.mubr.bf16.mxu0 0
        %3393 = vmatmul.mubr.bf16.gmra.mrb[0].mxu0 %v3238
        %v3394 = vpop.f32.mrb[0].mxu0
        %v3395 = vadd.f32 0.0, %v3394
        %v3396 = vpop.f32.mrb[0].mxu0
        %v3397 = vpop.f32.mrb[0].mxu0
        %v3398 = vadd.f32 0.0, %v3397
        %v3399 = vpop.f32.mrb[0].mxu0
        %3400 = vdwg.mxu0
        %v3401 = vadd.f32 %v2647, %v3275
        %v3402 = vadd.f32 %v2648, %v3278
        %v3403 = vadd.f32 %v2649, %v3283
        %v3404 = vadd.f32 %v2650, %v3286
        %v3405 = vadd.f32 %v2651, %v3291
        %v3406 = vadd.f32 %v2652, %v3294
        %v3407 = vadd.f32 %v2653, %v3299
        %v3408 = vadd.f32 %v2654, %v3302
        %v3409 = vadd.f32 %v2655, %v3307
        %v3410 = vadd.f32 %v2656, %v3310
        %v3411 = vadd.f32 %v2657, %v3315
        %v3412 = vadd.f32 %v2658, %v3318
        %v3413 = vadd.f32 %v2659, %v3323
        %v3414 = vadd.f32 %v2660, %v3326
        %v3415 = vadd.f32 %v2661, %v3331
        %v3416 = vadd.f32 %v2662, %v3334
        %v3417 = vadd.f32 %v2663, %v3339
        %v3418 = vadd.f32 %v2664, %v3342
        %v3419 = vadd.f32 %v2665, %v3347
        %v3420 = vadd.f32 %v2666, %v3350
        %v3421 = vadd.f32 %v2667, %v3355
        %v3422 = vadd.f32 %v2668, %v3358
        %v3423 = vadd.f32 %v2669, %v3363
        %v3424 = vadd.f32 %v2670, %v3366
        %v3425 = vadd.f32 %v2671, %v3371
        %v3426 = vadd.f32 %v2672, %v3374
        %v3427 = vadd.f32 %v2673, %v3379
        %v3428 = vadd.f32 %v2674, %v3382
        %v3429 = vadd.f32 %v2675, %v3387
        %v3430 = vadd.f32 %v2676, %v3390
        %v3431 = vadd.f32 %v2677, %v3395
        %v3432 = vadd.f32 %v2678, %v3398
        %v3433 = vld [vmem:[%s643] sm:$0xe]
        %v3434 = vld [vmem:[%s643 + $0xc] sm:$0xe]
        %v3435 = vld [vmem:[%s643 + $0x18] sm:$0xe]
        %v3436 = vld [vmem:[%s643 + $0x24] sm:$0xe]
        %v3437 = vld [vmem:[%s643 + $0x30] sm:$0xe]
        %v3438 = vld [vmem:[%s643 + $0x3c] sm:$0xe]
        %v3439 = vld [vmem:[%s643 + $0x48] sm:$0xe]
        %v3440 = vld [vmem:[%s643 + $0x54] sm:$0xe]
        %v3441 = vld [vmem:[%s643 + $0x60] sm:$0xe]
        %v3442 = vld [vmem:[%s643 + $0x6c] sm:$0xe]
        %v3443 = vld [vmem:[%s643 + $0x78] sm:$0xe]
        %v3444 = vld [vmem:[%s643 + $0x84] sm:$0xe]
        %v3445 = vld [vmem:[%s643 + $0x90] sm:$0xe]
        %v3446 = vld [vmem:[%s643 + $0x9c] sm:$0xe]
        %v3447 = vld [vmem:[%s643 + $0xa8] sm:$0xe]
        %v3448 = vld [vmem:[%s643 + $0xb4] sm:$0xe]
        %v3497 = vrot.slane %v3433, 5
        %v3498 = vrot.slane %v3497, 4
        %v3499 = vrot.slane %v2680, 5
        %v3500 = vsel %vm1858, %v3498, %v3499
        %v3501 = vrot.slane %v3499, 4
        %v3502 = vrot.slane %v2681, 5
        %v3503 = vsel %vm1858, %v3501, %v3502
        %v3504 = vrot.slane %v3434, 5
        %v3505 = vrot.slane %v3504, 4
        %v3506 = vrot.slane %v2683, 5
        %v3507 = vsel %vm1858, %v3505, %v3506
        %v3508 = vrot.slane %v3506, 4
        %v3509 = vrot.slane %v2684, 5
        %v3510 = vsel %vm1858, %v3508, %v3509
        %v3511 = vrot.slane %v3435, 5
        %v3512 = vrot.slane %v3511, 4
        %v3513 = vrot.slane %v2686, 5
        %v3514 = vsel %vm1858, %v3512, %v3513
        %v3515 = vrot.slane %v3513, 4
        %v3516 = vrot.slane %v2687, 5
        %v3517 = vsel %vm1858, %v3515, %v3516
        %v3518 = vrot.slane %v3436, 5
        %v3519 = vrot.slane %v3518, 4
        %v3520 = vrot.slane %v2689, 5
        %v3521 = vsel %vm1858, %v3519, %v3520
        %v3522 = vrot.slane %v3520, 4
        %v3523 = vrot.slane %v2690, 5
        %v3524 = vsel %vm1858, %v3522, %v3523
        %v3525 = vrot.slane %v3437, 5
        %v3526 = vrot.slane %v3525, 4
        %v3527 = vrot.slane %v2692, 5
        %v3528 = vsel %vm1858, %v3526, %v3527
        %v3529 = vrot.slane %v3527, 4
        %v3530 = vrot.slane %v2693, 5
        %v3531 = vsel %vm1858, %v3529, %v3530
        %v3532 = vrot.slane %v3438, 5
        %v3533 = vrot.slane %v3532, 4
        %v3534 = vrot.slane %v2695, 5
        %v3535 = vsel %vm1858, %v3533, %v3534
        %v3536 = vrot.slane %v3534, 4
        %v3537 = vrot.slane %v2696, 5
        %v3538 = vsel %vm1858, %v3536, %v3537
        %v3539 = vrot.slane %v3439, 5
        %v3540 = vrot.slane %v3539, 4
        %v3541 = vrot.slane %v2698, 5
        %v3542 = vsel %vm1858, %v3540, %v3541
        %v3543 = vrot.slane %v3541, 4
        %v3544 = vrot.slane %v2699, 5
        %v3545 = vsel %vm1858, %v3543, %v3544
        %v3546 = vrot.slane %v3440, 5
        %v3547 = vrot.slane %v3546, 4
        %v3548 = vrot.slane %v2701, 5
        %v3549 = vsel %vm1858, %v3547, %v3548
        %v3550 = vrot.slane %v3548, 4
        %v3551 = vrot.slane %v2702, 5
        %v3552 = vsel %vm1858, %v3550, %v3551
        %v3553 = vrot.slane %v3441, 5
        %v3554 = vrot.slane %v3553, 4
        %v3555 = vrot.slane %v2704, 5
        %v3556 = vsel %vm1858, %v3554, %v3555
        %v3557 = vrot.slane %v3555, 4
        %v3558 = vrot.slane %v2705, 5
        %v3559 = vsel %vm1858, %v3557, %v3558
        %v3560 = vrot.slane %v3442, 5
        %v3561 = vrot.slane %v3560, 4
        %v3562 = vrot.slane %v2707, 5
        %v3563 = vsel %vm1858, %v3561, %v3562
        %v3564 = vrot.slane %v3562, 4
        %v3565 = vrot.slane %v2708, 5
        %v3566 = vsel %vm1858, %v3564, %v3565
        %v3567 = vrot.slane %v3443, 5
        %v3568 = vrot.slane %v3567, 4
        %v3569 = vrot.slane %v2710, 5
        %v3570 = vsel %vm1858, %v3568, %v3569
        %v3571 = vrot.slane %v3569, 4
        %v3572 = vrot.slane %v2711, 5
        %v3573 = vsel %vm1858, %v3571, %v3572
        %v3574 = vrot.slane %v3444, 5
        %v3575 = vrot.slane %v3574, 4
        %v3576 = vrot.slane %v2713, 5
        %v3577 = vsel %vm1858, %v3575, %v3576
        %v3578 = vrot.slane %v3576, 4
        %v3579 = vrot.slane %v2714, 5
        %v3580 = vsel %vm1858, %v3578, %v3579
        %v3581 = vrot.slane %v3445, 5
        %v3582 = vrot.slane %v3581, 4
        %v3583 = vrot.slane %v2716, 5
        %v3584 = vsel %vm1858, %v3582, %v3583
        %v3585 = vrot.slane %v3583, 4
        %v3586 = vrot.slane %v2717, 5
        %v3587 = vsel %vm1858, %v3585, %v3586
        %v3588 = vrot.slane %v3446, 5
        %v3589 = vrot.slane %v3588, 4
        %v3590 = vrot.slane %v2719, 5
        %v3591 = vsel %vm1858, %v3589, %v3590
        %v3592 = vrot.slane %v3590, 4
        %v3593 = vrot.slane %v2720, 5
        %v3594 = vsel %vm1858, %v3592, %v3593
        %v3595 = vrot.slane %v3447, 5
        %v3596 = vrot.slane %v3595, 4
        %v3597 = vrot.slane %v2722, 5
        %v3598 = vsel %vm1858, %v3596, %v3597
        %v3599 = vrot.slane %v3597, 4
        %v3600 = vrot.slane %v2723, 5
        %v3601 = vsel %vm1858, %v3599, %v3600
        %v3602 = vrot.slane %v3448, 5
        %v3603 = vrot.slane %v3602, 4
        %v3604 = vrot.slane %v2725, 5
        %v3605 = vsel %vm1858, %v3603, %v3604
        %v3606 = vrot.slane %v3604, 4
        %v3607 = vrot.slane %v2726, 5
        %v3608 = vsel %vm1858, %v3606, %v3607
        %s3609 = scalar_lea.vmem [#allocation6], 160
        %v3610 = vld [vmem:[%s3609] sm:$0xf]
        %v3611 = vld [vmem:[%s3609 + $0x4] sm:$0xf]
        %v3612 = vld [vmem:[%s3609 + $0x8] sm:$0xf]
        %v3613 = vld [vmem:[%s3609 + $0xc] sm:$0xf]
        %v3614 = vld [vmem:[%s3609 + $0x10] sm:$0xf]
        %v3615 = vld [vmem:[%s3609 + $0x14] sm:$0xf]
        %v3616 = vld [vmem:[%s3609 + $0x18] sm:$0xf]
        %v3617 = vld [vmem:[%s3609 + $0x1c] sm:$0xf]
        %v3618 = vunpack.c.l.b16 %v3500
        %v3619 = vunpack.c.l.b16 %v3503
        %v3620 = vunpack.c.l.b16 %v3507
        %v3621 = vunpack.c.l.b16 %v3510
        %v3622 = vunpack.c.l.b16 %v3514
        %v3623 = vunpack.c.l.b16 %v3517
        %v3624 = vunpack.c.l.b16 %v3521
        %v3625 = vunpack.c.l.b16 %v3524
        %v3626 = vunpack.c.l.b16 %v3528
        %v3627 = vunpack.c.l.b16 %v3531
        %v3628 = vunpack.c.l.b16 %v3535
        %v3629 = vunpack.c.l.b16 %v3538
        %v3630 = vunpack.c.l.b16 %v3542
        %v3631 = vunpack.c.l.b16 %v3545
        %v3632 = vunpack.c.l.b16 %v3549
        %v3633 = vunpack.c.l.b16 %v3552
        %v3634 = vunpack.c.l.b16 %v3556
        %v3635 = vunpack.c.l.b16 %v3559
        %v3636 = vunpack.c.l.b16 %v3563
        %v3637 = vunpack.c.l.b16 %v3566
        %v3638 = vunpack.c.l.b16 %v3570
        %v3639 = vunpack.c.l.b16 %v3573
        %v3640 = vunpack.c.l.b16 %v3577
        %v3641 = vunpack.c.l.b16 %v3580
        %v3642 = vunpack.c.l.b16 %v3584
        %v3643 = vunpack.c.l.b16 %v3587
        %v3644 = vunpack.c.l.b16 %v3591
        %v3645 = vunpack.c.l.b16 %v3594
        %v3646 = vunpack.c.l.b16 %v3598
        %v3647 = vunpack.c.l.b16 %v3601
        %v3648 = vunpack.c.l.b16 %v3605
        %v3649 = vunpack.c.l.b16 %v3608
        %v3650 = vpack.c.b16 %v3619, %v3618
        %v3651 = vpack.c.b16 %v3621, %v3620
        %v3652 = vpack.c.b16 %v3623, %v3622
        %v3653 = vpack.c.b16 %v3625, %v3624
        %v3654 = vpack.c.b16 %v3627, %v3626
        %v3655 = vpack.c.b16 %v3629, %v3628
        %v3656 = vpack.c.b16 %v3631, %v3630
        %v3657 = vpack.c.b16 %v3633, %v3632
        %v3658 = vpack.c.b16 %v3635, %v3634
        %v3659 = vpack.c.b16 %v3637, %v3636
        %v3660 = vpack.c.b16 %v3639, %v3638
        %v3661 = vpack.c.b16 %v3641, %v3640
        %v3662 = vpack.c.b16 %v3643, %v3642
        %v3663 = vpack.c.b16 %v3645, %v3644
        %v3664 = vpack.c.b16 %v3647, %v3646
        %v3665 = vpack.c.b16 %v3649, %v3648
        %v3674 = vunpack.c.l.b16 %v3610
        %v3675 = vunpack.c.l.b16 %v3611
        %v3676 = vunpack.c.l.b16 %v3612
        %v3677 = vunpack.c.l.b16 %v3613
        %v3678 = vunpack.c.l.b16 %v3614
        %v3679 = vunpack.c.l.b16 %v3615
        %v3680 = vunpack.c.l.b16 %v3616
        %v3681 = vunpack.c.l.b16 %v3617
        %v3682 = vpack.c.b16 %v3675, %v3674
        %v3683 = vpack.c.b16 %v3677, %v3676
        %v3684 = vpack.c.b16 %v3679, %v3678
        %v3685 = vpack.c.b16 %v3681, %v3680
        %v3691 = vsel %vm1285, %v3650, 0
        %v3694 = vsel %vm1285, %v3651, 0
        %v3697 = vsel %vm1285, %v3652, 0
        %v3700 = vsel %vm1285, %v3653, 0
        %v3703 = vsel %vm1285, %v3654, 0
        %v3706 = vsel %vm1285, %v3655, 0
        %v3709 = vsel %vm1285, %v3656, 0
        %v3712 = vsel %vm1285, %v3657, 0
        %v3715 = vsel %vm1285, %v3658, 0
        %v3718 = vsel %vm1285, %v3659, 0
        %v3721 = vsel %vm1285, %v3660, 0
        %v3724 = vsel %vm1285, %v3661, 0
        %v3727 = vsel %vm1285, %v3662, 0
        %v3730 = vsel %vm1285, %v3663, 0
        %v3733 = vsel %vm1285, %v3664, 0
        %v3736 = vsel %vm1285, %v3665, 0
        %3738 = vmatprep.subr.bf16.mxu0 0
        %3739 = vmatpush1.bf16.msra.mxu0 %v3682
        %3740 = vmatprep.subr.bf16.mxu0 0
        %3741 = vmatpush1.bf16.msra.mxu0 %v3683
        %3742 = vmatprep.subr.bf16.mxu0 0
        %3743 = vmatpush1.bf16.msra.mxu0 %v3684
        %3744 = vmatprep.subr.bf16.mxu0 0
        %3745 = vmatpush1.bf16.msra.mxu0 %v3685
        %3746 = vmatprep.subr.bf16.mxu0 0
        %3747 = vmatpush1.bf16.msra.mxu0 0
        %3748 = vmatprep.subr.bf16.mxu0 0
        %3749 = vmatpush1.bf16.msra.mxu0 0
        %3750 = vmatprep.subr.bf16.mxu0 0
        %3751 = vmatpush1.bf16.msra.mxu0 0
        %3752 = vmatprep.subr.bf16.mxu0 0
        %3753 = vmatpush1.bf16.msra.mxu0 0
        %3754 = vmatprep.subr.bf16.mxu0 0
        %3755 = vmatpush1.bf16.msra.mxu0 0
        %3756 = vmatprep.subr.bf16.mxu0 0
        %3757 = vmatpush1.bf16.msra.mxu0 0
        %3758 = vmatprep.subr.bf16.mxu0 0
        %3759 = vmatpush1.bf16.msra.mxu0 0
        %3760 = vmatprep.subr.bf16.mxu0 0
        %3761 = vmatpush1.bf16.msra.mxu0 0
        %3762 = vmatprep.subr.bf16.mxu0 0
        %3763 = vmatpush1.bf16.msra.mxu0 0
        %3764 = vmatprep.subr.bf16.mxu0 0
        %3765 = vmatpush1.bf16.msra.mxu0 0
        %3766 = vmatprep.subr.bf16.mxu0 0
        %3767 = vmatpush1.bf16.msra.mxu0 0
        %3768 = vmatprep.subr.bf16.mxu0 0
        %3769 = vmatpush1.bf16.msra.mxu0 0
        %3770 = vmatprep.mubr.bf16.mxu0 0
        %3771 = vmatmul.mubr.bf16.gmra.mrb[0].mxu0 %v3691
        %v3772 = vpop.f32.mrb[0].mxu0
        %v3773 = vadd.f32 0.0, %v3772
        %v3774 = vpop.f32.mrb[0].mxu0
        %v3775 = vpop.f32.mrb[0].mxu0
        %v3776 = vadd.f32 0.0, %v3775
        %v3777 = vpop.f32.mrb[0].mxu0
        %3778 = vmatprep.mubr.bf16.mxu0 0
        %3779 = vmatmul.mubr.bf16.gmra.mrb[0].mxu0 %v3694
        %v3780 = vpop.f32.mrb[0].mxu0
        %v3781 = vadd.f32 0.0, %v3780
        %v3782 = vpop.f32.mrb[0].mxu0
        %v3783 = vpop.f32.mrb[0].mxu0
        %v3784 = vadd.f32 0.0, %v3783
        %v3785 = vpop.f32.mrb[0].mxu0
        %3786 = vmatprep.mubr.bf16.mxu0 0
        %3787 = vmatmul.mubr.bf16.gmra.mrb[0].mxu0 %v3697
        %v3788 = vpop.f32.mrb[0].mxu0
        %v3789 = vadd.f32 0.0, %v3788
        %v3790 = vpop.f32.mrb[0].mxu0
        %v3791 = vpop.f32.mrb[0].mxu0
        %v3792 = vadd.f32 0.0, %v3791
        %v3793 = vpop.f32.mrb[0].mxu0
        %3794 = vmatprep.mubr.bf16.mxu0 0
        %3795 = vmatmul.mubr.bf16.gmra.mrb[0].mxu0 %v3700
        %v3796 = vpop.f32.mrb[0].mxu0
        %v3797 = vadd.f32 0.0, %v3796
        %v3798 = vpop.f32.mrb[0].mxu0
        %v3799 = vpop.f32.mrb[0].mxu0
        %v3800 = vadd.f32 0.0, %v3799
        %v3801 = vpop.f32.mrb[0].mxu0
        %3802 = vmatprep.mubr.bf16.mxu0 0
        %3803 = vmatmul.mubr.bf16.gmra.mrb[0].mxu0 %v3703
        %v3804 = vpop.f32.mrb[0].mxu0
        %v3805 = vadd.f32 0.0, %v3804
        %v3806 = vpop.f32.mrb[0].mxu0
        %v3807 = vpop.f32.mrb[0].mxu0
        %v3808 = vadd.f32 0.0, %v3807
        %v3809 = vpop.f32.mrb[0].mxu0
        %3810 = vmatprep.mubr.bf16.mxu0 0
        %3811 = vmatmul.mubr.bf16.gmra.mrb[0].mxu0 %v3706
        %v3812 = vpop.f32.mrb[0].mxu0
        %v3813 = vadd.f32 0.0, %v3812
        %v3814 = vpop.f32.mrb[0].mxu0
        %v3815 = vpop.f32.mrb[0].mxu0
        %v3816 = vadd.f32 0.0, %v3815
        %v3817 = vpop.f32.mrb[0].mxu0
        %3818 = vmatprep.mubr.bf16.mxu0 0
        %3819 = vmatmul.mubr.bf16.gmra.mrb[0].mxu0 %v3709
        %v3820 = vpop.f32.mrb[0].mxu0
        %v3821 = vadd.f32 0.0, %v3820
        %v3822 = vpop.f32.mrb[0].mxu0
        %v3823 = vpop.f32.mrb[0].mxu0
        %v3824 = vadd.f32 0.0, %v3823
        %v3825 = vpop.f32.mrb[0].mxu0
        %3826 = vmatprep.mubr.bf16.mxu0 0
        %3827 = vmatmul.mubr.bf16.gmra.mrb[0].mxu0 %v3712
        %v3828 = vpop.f32.mrb[0].mxu0
        %v3829 = vadd.f32 0.0, %v3828
        %v3830 = vpop.f32.mrb[0].mxu0
        %v3831 = vpop.f32.mrb[0].mxu0
        %v3832 = vadd.f32 0.0, %v3831
        %v3833 = vpop.f32.mrb[0].mxu0
        %3834 = vmatprep.mubr.bf16.mxu0 0
        %3835 = vmatmul.mubr.bf16.gmra.mrb[0].mxu0 %v3715
        %v3836 = vpop.f32.mrb[0].mxu0
        %v3837 = vadd.f32 0.0, %v3836
        %v3838 = vpop.f32.mrb[0].mxu0
        %v3839 = vpop.f32.mrb[0].mxu0
        %v3840 = vadd.f32 0.0, %v3839
        %v3841 = vpop.f32.mrb[0].mxu0
        %3842 = vmatprep.mubr.bf16.mxu0 0
        %3843 = vmatmul.mubr.bf16.gmra.mrb[0].mxu0 %v3718
        %v3844 = vpop.f32.mrb[0].mxu0
        %v3845 = vadd.f32 0.0, %v3844
        %v3846 = vpop.f32.mrb[0].mxu0
        %v3847 = vpop.f32.mrb[0].mxu0
        %v3848 = vadd.f32 0.0, %v3847
        %v3849 = vpop.f32.mrb[0].mxu0
        %3850 = vmatprep.mubr.bf16.mxu0 0
        %3851 = vmatmul.mubr.bf16.gmra.mrb[0].mxu0 %v3721
        %v3852 = vpop.f32.mrb[0].mxu0
        %v3853 = vadd.f32 0.0, %v3852
        %v3854 = vpop.f32.mrb[0].mxu0
        %v3855 = vpop.f32.mrb[0].mxu0
        %v3856 = vadd.f32 0.0, %v3855
        %v3857 = vpop.f32.mrb[0].mxu0
        %3858 = vmatprep.mubr.bf16.mxu0 0
        %3859 = vmatmul.mubr.bf16.gmra.mrb[0].mxu0 %v3724
        %v3860 = vpop.f32.mrb[0].mxu0
        %v3861 = vadd.f32 0.0, %v3860
        %v3862 = vpop.f32.mrb[0].mxu0
        %v3863 = vpop.f32.mrb[0].mxu0
        %v3864 = vadd.f32 0.0, %v3863
        %v3865 = vpop.f32.mrb[0].mxu0
        %3866 = vmatprep.mubr.bf16.mxu0 0
        %3867 = vmatmul.mubr.bf16.gmra.mrb[0].mxu0 %v3727
        %v3868 = vpop.f32.mrb[0].mxu0
        %v3869 = vadd.f32 0.0, %v3868
        %v3870 = vpop.f32.mrb[0].mxu0
        %v3871 = vpop.f32.mrb[0].mxu0
        %v3872 = vadd.f32 0.0, %v3871
        %v3873 = vpop.f32.mrb[0].mxu0
        %3874 = vmatprep.mubr.bf16.mxu0 0
        %3875 = vmatmul.mubr.bf16.gmra.mrb[0].mxu0 %v3730
        %v3876 = vpop.f32.mrb[0].mxu0
        %v3877 = vadd.f32 0.0, %v3876
        %v3878 = vpop.f32.mrb[0].mxu0
        %v3879 = vpop.f32.mrb[0].mxu0
        %v3880 = vadd.f32 0.0, %v3879
        %v3881 = vpop.f32.mrb[0].mxu0
        %3882 = vmatprep.mubr.bf16.mxu0 0
        %3883 = vmatmul.mubr.bf16.gmra.mrb[0].mxu0 %v3733
        %v3884 = vpop.f32.mrb[0].mxu0
        %v3885 = vadd.f32 0.0, %v3884
        %v3886 = vpop.f32.mrb[0].mxu0
        %v3887 = vpop.f32.mrb[0].mxu0
        %v3888 = vadd.f32 0.0, %v3887
        %v3889 = vpop.f32.mrb[0].mxu0
        %3890 = vmatprep.mubr.bf16.mxu0 0
        %3891 = vmatmul.mubr.bf16.gmra.mrb[0].mxu0 %v3736
        %v3892 = vpop.f32.mrb[0].mxu0
        %v3893 = vadd.f32 0.0, %v3892
        %v3894 = vpop.f32.mrb[0].mxu0
        %v3895 = vpop.f32.mrb[0].mxu0
        %v3896 = vadd.f32 0.0, %v3895
        %v3897 = vpop.f32.mrb[0].mxu0
        %3898 = vdwg.mxu0
        %v3899 = vadd.f32 %v3401, %v3773
        %v3900 = vadd.f32 %v3402, %v3776
        %v3901 = vadd.f32 %v3403, %v3781
        %v3902 = vadd.f32 %v3404, %v3784
        %v3903 = vadd.f32 %v3405, %v3789
        %v3904 = vadd.f32 %v3406, %v3792
        %v3905 = vadd.f32 %v3407, %v3797
        %v3906 = vadd.f32 %v3408, %v3800
        %v3907 = vadd.f32 %v3409, %v3805
        %v3908 = vadd.f32 %v3410, %v3808
        %v3909 = vadd.f32 %v3411, %v3813
        %v3910 = vadd.f32 %v3412, %v3816
        %v3911 = vadd.f32 %v3413, %v3821
        %v3912 = vadd.f32 %v3414, %v3824
        %v3913 = vadd.f32 %v3415, %v3829
        %v3914 = vadd.f32 %v3416, %v3832
        %v3915 = vadd.f32 %v3417, %v3837
        %v3916 = vadd.f32 %v3418, %v3840
        %v3917 = vadd.f32 %v3419, %v3845
        %v3918 = vadd.f32 %v3420, %v3848
        %v3919 = vadd.f32 %v3421, %v3853
        %v3920 = vadd.f32 %v3422, %v3856
        %v3921 = vadd.f32 %v3423, %v3861
        %v3922 = vadd.f32 %v3424, %v3864
        %v3923 = vadd.f32 %v3425, %v3869
        %v3924 = vadd.f32 %v3426, %v3872
        %v3925 = vadd.f32 %v3427, %v3877
        %v3926 = vadd.f32 %v3428, %v3880
        %v3927 = vadd.f32 %v3429, %v3885
        %v3928 = vadd.f32 %v3430, %v3888
        %v3929 = vadd.f32 %v3431, %v3893
        %v3930 = vadd.f32 %v3432, %v3896
        %s3931 = scalar_lea.vmem [#allocation2], 24
        %v3932 = vld [vmem:[%s3931] sm:$0xf]
        %v3933 = vld [vmem:[%s3931 + $0x4] sm:$0xf]
        %v3934 = vld [vmem:[%s3931 + $0xc] sm:$0xf]
        %v3935 = vld [vmem:[%s3931 + $0x10] sm:$0xf]
        %v3936 = vld [vmem:[%s3931 + $0x18] sm:$0xf]
        %v3937 = vld [vmem:[%s3931 + $0x1c] sm:$0xf]
        %v3938 = vld [vmem:[%s3931 + $0x24] sm:$0xf]
        %v3939 = vld [vmem:[%s3931 + $0x28] sm:$0xf]
        %v3940 = vld [vmem:[%s3931 + $0x30] sm:$0xf]
        %v3941 = vld [vmem:[%s3931 + $0x34] sm:$0xf]
        %v3942 = vld [vmem:[%s3931 + $0x3c] sm:$0xf]
        %v3943 = vld [vmem:[%s3931 + $0x40] sm:$0xf]
        %v3944 = vld [vmem:[%s3931 + $0x48] sm:$0xf]
        %v3945 = vld [vmem:[%s3931 + $0x4c] sm:$0xf]
        %v3946 = vld [vmem:[%s3931 + $0x54] sm:$0xf]
        %v3947 = vld [vmem:[%s3931 + $0x58] sm:$0xf]
        %v3948 = vld [vmem:[%s3931 + $0x60] sm:$0xf]
        %v3949 = vld [vmem:[%s3931 + $0x64] sm:$0xf]
        %v3950 = vld [vmem:[%s3931 + $0x6c] sm:$0xf]
        %v3951 = vld [vmem:[%s3931 + $0x70] sm:$0xf]
        %v3952 = vld [vmem:[%s3931 + $0x78] sm:$0xf]
        %v3953 = vld [vmem:[%s3931 + $0x7c] sm:$0xf]
        %v3954 = vld [vmem:[%s3931 + $0x84] sm:$0xf]
        %v3955 = vld [vmem:[%s3931 + $0x88] sm:$0xf]
        %v3956 = vld [vmem:[%s3931 + $0x90] sm:$0xf]
        %v3957 = vld [vmem:[%s3931 + $0x94] sm:$0xf]
        %v3958 = vld [vmem:[%s3931 + $0x9c] sm:$0xf]
        %v3959 = vld [vmem:[%s3931 + $0xa0] sm:$0xf]
        %v3960 = vld [vmem:[%s3931 + $0xa8] sm:$0xf]
        %v3961 = vld [vmem:[%s3931 + $0xac] sm:$0xf]
        %v3962 = vld [vmem:[%s3931 + $0xb4] sm:$0xf]
        %v3963 = vld [vmem:[%s3931 + $0xb8] sm:$0xf]
        %s3964 = scalar_lea.vmem [#allocation6], 192
        %v3965 = vld [vmem:[%s3964] sm:$0xf]
        %v3966 = vld [vmem:[%s3964 + $0x4] sm:$0xf]
        %v3967 = vld [vmem:[%s3964 + $0x8] sm:$0xf]
        %v3968 = vld [vmem:[%s3964 + $0xc] sm:$0xf]
        %v3969 = vld [vmem:[%s3964 + $0x10] sm:$0xf]
        %v3970 = vld [vmem:[%s3964 + $0x14] sm:$0xf]
        %v3971 = vld [vmem:[%s3964 + $0x18] sm:$0xf]
        %v3972 = vld [vmem:[%s3964 + $0x1c] sm:$0xf]
        %v4005 = vunpack.c.l.b16 %v3932
        %v4006 = vunpack.c.l.b16 %v3933
        %v4007 = vunpack.c.l.b16 %v3934
        %v4008 = vunpack.c.l.b16 %v3935
        %v4009 = vunpack.c.l.b16 %v3936
        %v4010 = vunpack.c.l.b16 %v3937
        %v4011 = vunpack.c.l.b16 %v3938
        %v4012 = vunpack.c.l.b16 %v3939
        %v4013 = vunpack.c.l.b16 %v3940
        %v4014 = vunpack.c.l.b16 %v3941
        %v4015 = vunpack.c.l.b16 %v3942
        %v4016 = vunpack.c.l.b16 %v3943
        %v4017 = vunpack.c.l.b16 %v3944
        %v4018 = vunpack.c.l.b16 %v3945
        %v4019 = vunpack.c.l.b16 %v3946
        %v4020 = vunpack.c.l.b16 %v3947
        %v4021 = vunpack.c.l.b16 %v3948
        %v4022 = vunpack.c.l.b16 %v3949
        %v4023 = vunpack.c.l.b16 %v3950
        %v4024 = vunpack.c.l.b16 %v3951
        %v4025 = vunpack.c.l.b16 %v3952
        %v4026 = vunpack.c.l.b16 %v3953
        %v4027 = vunpack.c.l.b16 %v3954
        %v4028 = vunpack.c.l.b16 %v3955
        %v4029 = vunpack.c.l.b16 %v3956
        %v4030 = vunpack.c.l.b16 %v3957
        %v4031 = vunpack.c.l.b16 %v3958
        %v4032 = vunpack.c.l.b16 %v3959
        %v4033 = vunpack.c.l.b16 %v3960
        %v4034 = vunpack.c.l.b16 %v3961
        %v4035 = vunpack.c.l.b16 %v3962
        %v4036 = vunpack.c.l.b16 %v3963
        %v4037 = vpack.c.b16 %v4006, %v4005
        %v4038 = vpack.c.b16 %v4008, %v4007
        %v4039 = vpack.c.b16 %v4010, %v4009
        %v4040 = vpack.c.b16 %v4012, %v4011
        %v4041 = vpack.c.b16 %v4014, %v4013
        %v4042 = vpack.c.b16 %v4016, %v4015
        %v4043 = vpack.c.b16 %v4018, %v4017
        %v4044 = vpack.c.b16 %v4020, %v4019
        %v4045 = vpack.c.b16 %v4022, %v4021
        %v4046 = vpack.c.b16 %v4024, %v4023
        %v4047 = vpack.c.b16 %v4026, %v4025
        %v4048 = vpack.c.b16 %v4028, %v4027
        %v4049 = vpack.c.b16 %v4030, %v4029
        %v4050 = vpack.c.b16 %v4032, %v4031
        %v4051 = vpack.c.b16 %v4034, %v4033
        %v4052 = vpack.c.b16 %v4036, %v4035
        %v4061 = vunpack.c.l.b16 %v3965
        %v4062 = vunpack.c.l.b16 %v3966
        %v4063 = vunpack.c.l.b16 %v3967
        %v4064 = vunpack.c.l.b16 %v3968
        %v4065 = vunpack.c.l.b16 %v3969
        %v4066 = vunpack.c.l.b16 %v3970
        %v4067 = vunpack.c.l.b16 %v3971
        %v4068 = vunpack.c.l.b16 %v3972
        %v4069 = vpack.c.b16 %v4062, %v4061
        %v4070 = vpack.c.b16 %v4064, %v4063
        %v4071 = vpack.c.b16 %v4066, %v4065
        %v4072 = vpack.c.b16 %v4068, %v4067
        %v4078 = vsel %vm1285, %v4037, 0
        %v4081 = vsel %vm1285, %v4038, 0
        %v4084 = vsel %vm1285, %v4039, 0
        %v4087 = vsel %vm1285, %v4040, 0
        %v4090 = vsel %vm1285, %v4041, 0
        %v4093 = vsel %vm1285, %v4042, 0
        %v4096 = vsel %vm1285, %v4043, 0
        %v4099 = vsel %vm1285, %v4044, 0
        %v4102 = vsel %vm1285, %v4045, 0
        %v4105 = vsel %vm1285, %v4046, 0
        %v4108 = vsel %vm1285, %v4047, 0
        %v4111 = vsel %vm1285, %v4048, 0
        %v4114 = vsel %vm1285, %v4049, 0
        %v4117 = vsel %vm1285, %v4050, 0
        %v4120 = vsel %vm1285, %v4051, 0
        %v4123 = vsel %vm1285, %v4052, 0
        %4125 = vmatprep.subr.bf16.mxu0 0
        %4126 = vmatpush1.bf16.msra.mxu0 %v4069
        %4127 = vmatprep.subr.bf16.mxu0 0
        %4128 = vmatpush1.bf16.msra.mxu0 %v4070
        %4129 = vmatprep.subr.bf16.mxu0 0
        %4130 = vmatpush1.bf16.msra.mxu0 %v4071
        %4131 = vmatprep.subr.bf16.mxu0 0
        %4132 = vmatpush1.bf16.msra.mxu0 %v4072
        %4133 = vmatprep.subr.bf16.mxu0 0
        %4134 = vmatpush1.bf16.msra.mxu0 0
        %4135 = vmatprep.subr.bf16.mxu0 0
        %4136 = vmatpush1.bf16.msra.mxu0 0
        %4137 = vmatprep.subr.bf16.mxu0 0
        %4138 = vmatpush1.bf16.msra.mxu0 0
        %4139 = vmatprep.subr.bf16.mxu0 0
        %4140 = vmatpush1.bf16.msra.mxu0 0
        %4141 = vmatprep.subr.bf16.mxu0 0
        %4142 = vmatpush1.bf16.msra.mxu0 0
        %4143 = vmatprep.subr.bf16.mxu0 0
        %4144 = vmatpush1.bf16.msra.mxu0 0
        %4145 = vmatprep.subr.bf16.mxu0 0
        %4146 = vmatpush1.bf16.msra.mxu0 0
        %4147 = vmatprep.subr.bf16.mxu0 0
        %4148 = vmatpush1.bf16.msra.mxu0 0
        %4149 = vmatprep.subr.bf16.mxu0 0
        %4150 = vmatpush1.bf16.msra.mxu0 0
        %4151 = vmatprep.subr.bf16.mxu0 0
        %4152 = vmatpush1.bf16.msra.mxu0 0
        %4153 = vmatprep.subr.bf16.mxu0 0
        %4154 = vmatpush1.bf16.msra.mxu0 0
        %4155 = vmatprep.subr.bf16.mxu0 0
        %4156 = vmatpush1.bf16.msra.mxu0 0
        %4157 = vmatprep.mubr.bf16.mxu0 0
        %4158 = vmatmul.mubr.bf16.gmra.mrb[0].mxu0 %v4078
        %v4159 = vpop.f32.mrb[0].mxu0
        %v4160 = vadd.f32 0.0, %v4159
        %v4161 = vpop.f32.mrb[0].mxu0
        %v4162 = vpop.f32.mrb[0].mxu0
        %v4163 = vadd.f32 0.0, %v4162
        %v4164 = vpop.f32.mrb[0].mxu0
        %4165 = vmatprep.mubr.bf16.mxu0 0
        %4166 = vmatmul.mubr.bf16.gmra.mrb[0].mxu0 %v4081
        %v4167 = vpop.f32.mrb[0].mxu0
        %v4168 = vadd.f32 0.0, %v4167
        %v4169 = vpop.f32.mrb[0].mxu0
        %v4170 = vpop.f32.mrb[0].mxu0
        %v4171 = vadd.f32 0.0, %v4170
        %v4172 = vpop.f32.mrb[0].mxu0
        %4173 = vmatprep.mubr.bf16.mxu0 0
        %4174 = vmatmul.mubr.bf16.gmra.mrb[0].mxu0 %v4084
        %v4175 = vpop.f32.mrb[0].mxu0
        %v4176 = vadd.f32 0.0, %v4175
        %v4177 = vpop.f32.mrb[0].mxu0
        %v4178 = vpop.f32.mrb[0].mxu0
        %v4179 = vadd.f32 0.0, %v4178
        %v4180 = vpop.f32.mrb[0].mxu0
        %4181 = vmatprep.mubr.bf16.mxu0 0
        %4182 = vmatmul.mubr.bf16.gmra.mrb[0].mxu0 %v4087
        %v4183 = vpop.f32.mrb[0].mxu0
        %v4184 = vadd.f32 0.0, %v4183
        %v4185 = vpop.f32.mrb[0].mxu0
        %v4186 = vpop.f32.mrb[0].mxu0
        %v4187 = vadd.f32 0.0, %v4186
        %v4188 = vpop.f32.mrb[0].mxu0
        %4189 = vmatprep.mubr.bf16.mxu0 0
        %4190 = vmatmul.mubr.bf16.gmra.mrb[0].mxu0 %v4090
        %v4191 = vpop.f32.mrb[0].mxu0
        %v4192 = vadd.f32 0.0, %v4191
        %v4193 = vpop.f32.mrb[0].mxu0
        %v4194 = vpop.f32.mrb[0].mxu0
        %v4195 = vadd.f32 0.0, %v4194
        %v4196 = vpop.f32.mrb[0].mxu0
        %4197 = vmatprep.mubr.bf16.mxu0 0
        %4198 = vmatmul.mubr.bf16.gmra.mrb[0].mxu0 %v4093
        %v4199 = vpop.f32.mrb[0].mxu0
        %v4200 = vadd.f32 0.0, %v4199
        %v4201 = vpop.f32.mrb[0].mxu0
        %v4202 = vpop.f32.mrb[0].mxu0
        %v4203 = vadd.f32 0.0, %v4202
        %v4204 = vpop.f32.mrb[0].mxu0
        %4205 = vmatprep.mubr.bf16.mxu0 0
        %4206 = vmatmul.mubr.bf16.gmra.mrb[0].mxu0 %v4096
        %v4207 = vpop.f32.mrb[0].mxu0
        %v4208 = vadd.f32 0.0, %v4207
        %v4209 = vpop.f32.mrb[0].mxu0
        %v4210 = vpop.f32.mrb[0].mxu0
        %v4211 = vadd.f32 0.0, %v4210
        %v4212 = vpop.f32.mrb[0].mxu0
        %4213 = vmatprep.mubr.bf16.mxu0 0
        %4214 = vmatmul.mubr.bf16.gmra.mrb[0].mxu0 %v4099
        %v4215 = vpop.f32.mrb[0].mxu0
        %v4216 = vadd.f32 0.0, %v4215
        %v4217 = vpop.f32.mrb[0].mxu0
        %v4218 = vpop.f32.mrb[0].mxu0
        %v4219 = vadd.f32 0.0, %v4218
        %v4220 = vpop.f32.mrb[0].mxu0
        %4221 = vmatprep.mubr.bf16.mxu0 0
        %4222 = vmatmul.mubr.bf16.gmra.mrb[0].mxu0 %v4102
        %v4223 = vpop.f32.mrb[0].mxu0
        %v4224 = vadd.f32 0.0, %v4223
        %v4225 = vpop.f32.mrb[0].mxu0
        %v4226 = vpop.f32.mrb[0].mxu0
        %v4227 = vadd.f32 0.0, %v4226
        %v4228 = vpop.f32.mrb[0].mxu0
        %4229 = vmatprep.mubr.bf16.mxu0 0
        %4230 = vmatmul.mubr.bf16.gmra.mrb[0].mxu0 %v4105
        %v4231 = vpop.f32.mrb[0].mxu0
        %v4232 = vadd.f32 0.0, %v4231
        %v4233 = vpop.f32.mrb[0].mxu0
        %v4234 = vpop.f32.mrb[0].mxu0
        %v4235 = vadd.f32 0.0, %v4234
        %v4236 = vpop.f32.mrb[0].mxu0
        %4237 = vmatprep.mubr.bf16.mxu0 0
        %4238 = vmatmul.mubr.bf16.gmra.mrb[0].mxu0 %v4108
        %v4239 = vpop.f32.mrb[0].mxu0
        %v4240 = vadd.f32 0.0, %v4239
        %v4241 = vpop.f32.mrb[0].mxu0
        %v4242 = vpop.f32.mrb[0].mxu0
        %v4243 = vadd.f32 0.0, %v4242
        %v4244 = vpop.f32.mrb[0].mxu0
        %4245 = vmatprep.mubr.bf16.mxu0 0
        %4246 = vmatmul.mubr.bf16.gmra.mrb[0].mxu0 %v4111
        %v4247 = vpop.f32.mrb[0].mxu0
        %v4248 = vadd.f32 0.0, %v4247
        %v4249 = vpop.f32.mrb[0].mxu0
        %v4250 = vpop.f32.mrb[0].mxu0
        %v4251 = vadd.f32 0.0, %v4250
        %v4252 = vpop.f32.mrb[0].mxu0
        %4253 = vmatprep.mubr.bf16.mxu0 0
        %4254 = vmatmul.mubr.bf16.gmra.mrb[0].mxu0 %v4114
        %v4255 = vpop.f32.mrb[0].mxu0
        %v4256 = vadd.f32 0.0, %v4255
        %v4257 = vpop.f32.mrb[0].mxu0
        %v4258 = vpop.f32.mrb[0].mxu0
        %v4259 = vadd.f32 0.0, %v4258
        %v4260 = vpop.f32.mrb[0].mxu0
        %4261 = vmatprep.mubr.bf16.mxu0 0
        %4262 = vmatmul.mubr.bf16.gmra.mrb[0].mxu0 %v4117
        %v4263 = vpop.f32.mrb[0].mxu0
        %v4264 = vadd.f32 0.0, %v4263
        %v4265 = vpop.f32.mrb[0].mxu0
        %v4266 = vpop.f32.mrb[0].mxu0
        %v4267 = vadd.f32 0.0, %v4266
        %v4268 = vpop.f32.mrb[0].mxu0
        %4269 = vmatprep.mubr.bf16.mxu0 0
        %4270 = vmatmul.mubr.bf16.gmra.mrb[0].mxu0 %v4120
        %v4271 = vpop.f32.mrb[0].mxu0
        %v4272 = vadd.f32 0.0, %v4271
        %v4273 = vpop.f32.mrb[0].mxu0
        %v4274 = vpop.f32.mrb[0].mxu0
        %v4275 = vadd.f32 0.0, %v4274
        %v4276 = vpop.f32.mrb[0].mxu0
        %4277 = vmatprep.mubr.bf16.mxu0 0
        %4278 = vmatmul.mubr.bf16.gmra.mrb[0].mxu0 %v4123
        %v4279 = vpop.f32.mrb[0].mxu0
        %v4280 = vadd.f32 0.0, %v4279
        %v4281 = vpop.f32.mrb[0].mxu0
        %v4282 = vpop.f32.mrb[0].mxu0
        %v4283 = vadd.f32 0.0, %v4282
        %v4284 = vpop.f32.mrb[0].mxu0
        %4285 = vdwg.mxu0
        %v4286 = vadd.f32 %v3899, %v4160
        %v4287 = vadd.f32 %v3900, %v4163
        %v4288 = vadd.f32 %v3901, %v4168
        %v4289 = vadd.f32 %v3902, %v4171
        %v4290 = vadd.f32 %v3903, %v4176
        %v4291 = vadd.f32 %v3904, %v4179
        %v4292 = vadd.f32 %v3905, %v4184
        %v4293 = vadd.f32 %v3906, %v4187
        %v4294 = vadd.f32 %v3907, %v4192
        %v4295 = vadd.f32 %v3908, %v4195
        %v4296 = vadd.f32 %v3909, %v4200
        %v4297 = vadd.f32 %v3910, %v4203
        %v4298 = vadd.f32 %v3911, %v4208
        %v4299 = vadd.f32 %v3912, %v4211
        %v4300 = vadd.f32 %v3913, %v4216
        %v4301 = vadd.f32 %v3914, %v4219
        %v4302 = vadd.f32 %v3915, %v4224
        %v4303 = vadd.f32 %v3916, %v4227
        %v4304 = vadd.f32 %v3917, %v4232
        %v4305 = vadd.f32 %v3918, %v4235
        %v4306 = vadd.f32 %v3919, %v4240
        %v4307 = vadd.f32 %v3920, %v4243
        %v4308 = vadd.f32 %v3921, %v4248
        %v4309 = vadd.f32 %v3922, %v4251
        %v4310 = vadd.f32 %v3923, %v4256
        %v4311 = vadd.f32 %v3924, %v4259
        %v4312 = vadd.f32 %v3925, %v4264
        %v4313 = vadd.f32 %v3926, %v4267
        %v4314 = vadd.f32 %v3927, %v4272
        %v4315 = vadd.f32 %v3928, %v4275
        %v4316 = vadd.f32 %v3929, %v4280
        %v4317 = vadd.f32 %v3930, %v4283
        %v4318 = vld [vmem:[%s3931] sm:$0xf]
        %v4319 = vld [vmem:[%s3931 + $0x4] sm:$0xf]
        %v4320 = vld [vmem:[%s3931 + $0x8] sm:$0x1]
        %v4321 = vld [vmem:[%s3931 + $0xc] sm:$0xf]
        %v4322 = vld [vmem:[%s3931 + $0x10] sm:$0xf]
        %v4323 = vld [vmem:[%s3931 + $0x14] sm:$0x1]
        %v4324 = vld [vmem:[%s3931 + $0x18] sm:$0xf]
        %v4325 = vld [vmem:[%s3931 + $0x1c] sm:$0xf]
        %v4326 = vld [vmem:[%s3931 + $0x20] sm:$0x1]
        %v4327 = vld [vmem:[%s3931 + $0x24] sm:$0xf]
        %v4328 = vld [vmem:[%s3931 + $0x28] sm:$0xf]
        %v4329 = vld [vmem:[%s3931 + $0x2c] sm:$0x1]
        %v4330 = vld [vmem:[%s3931 + $0x30] sm:$0xf]
        %v4331 = vld [vmem:[%s3931 + $0x34] sm:$0xf]
        %v4332 = vld [vmem:[%s3931 + $0x38] sm:$0x1]
        %v4333 = vld [vmem:[%s3931 + $0x3c] sm:$0xf]
        %v4334 = vld [vmem:[%s3931 + $0x40] sm:$0xf]
        %v4335 = vld [vmem:[%s3931 + $0x44] sm:$0x1]
        %v4336 = vld [vmem:[%s3931 + $0x48] sm:$0xf]
        %v4337 = vld [vmem:[%s3931 + $0x4c] sm:$0xf]
        %v4338 = vld [vmem:[%s3931 + $0x50] sm:$0x1]
        %v4339 = vld [vmem:[%s3931 + $0x54] sm:$0xf]
        %v4340 = vld [vmem:[%s3931 + $0x58] sm:$0xf]
        %v4341 = vld [vmem:[%s3931 + $0x5c] sm:$0x1]
        %v4342 = vld [vmem:[%s3931 + $0x60] sm:$0xf]
        %v4343 = vld [vmem:[%s3931 + $0x64] sm:$0xf]
        %v4344 = vld [vmem:[%s3931 + $0x68] sm:$0x1]
        %v4345 = vld [vmem:[%s3931 + $0x6c] sm:$0xf]
        %v4346 = vld [vmem:[%s3931 + $0x70] sm:$0xf]
        %v4347 = vld [vmem:[%s3931 + $0x74] sm:$0x1]
        %v4348 = vld [vmem:[%s3931 + $0x78] sm:$0xf]
        %v4349 = vld [vmem:[%s3931 + $0x7c] sm:$0xf]
        %v4350 = vld [vmem:[%s3931 + $0x80] sm:$0x1]
        %v4351 = vld [vmem:[%s3931 + $0x84] sm:$0xf]
        %v4352 = vld [vmem:[%s3931 + $0x88] sm:$0xf]
        %v4353 = vld [vmem:[%s3931 + $0x8c] sm:$0x1]
        %v4354 = vld [vmem:[%s3931 + $0x90] sm:$0xf]
        %v4355 = vld [vmem:[%s3931 + $0x94] sm:$0xf]
        %v4356 = vld [vmem:[%s3931 + $0x98] sm:$0x1]
        %v4357 = vld [vmem:[%s3931 + $0x9c] sm:$0xf]
        %v4358 = vld [vmem:[%s3931 + $0xa0] sm:$0xf]
        %v4359 = vld [vmem:[%s3931 + $0xa4] sm:$0x1]
        %v4360 = vld [vmem:[%s3931 + $0xa8] sm:$0xf]
        %v4361 = vld [vmem:[%s3931 + $0xac] sm:$0xf]
        %v4362 = vld [vmem:[%s3931 + $0xb0] sm:$0x1]
        %v4363 = vld [vmem:[%s3931 + $0xb4] sm:$0xf]
        %v4364 = vld [vmem:[%s3931 + $0xb8] sm:$0xf]
        %v4365 = vld [vmem:[%s3931 + $0xbc] sm:$0x1]
        %v4367 = vshrl.u32 %v4318, 16
        %v4369 = vrot.slane %v4367, 4
        %v4370 = vshll.u32 %v4318, 16
        %v4372 = vrot.slane %v4370, 5
        %v4373 = vor.u32 %v4369, %v4372
        %v4374 = vrot.slane %v4373, 4
        %v4376 = vshll.u32 %v4319, 16
        %v4378 = vrot.slane %v4376, 5
        %v4379 = vsel %vm819, %v4374, %v4378
        %v4380 = vshrl.u32 %v4319, 16
        %v4382 = vrot.slane %v4380, 4
        %v4383 = vor.u32 %v4382, %v4378
        %v4384 = vrot.slane %v4383, 4
        %v4386 = vshll.u32 %v4320, 16
        %v4388 = vrot.slane %v4386, 5
        %v4389 = vsel %vm819, %v4384, %v4388
        %v4391 = vshrl.u32 %v4321, 16
        %v4393 = vrot.slane %v4391, 4
        %v4394 = vshll.u32 %v4321, 16
        %v4396 = vrot.slane %v4394, 5
        %v4397 = vor.u32 %v4393, %v4396
        %v4398 = vrot.slane %v4397, 4
        %v4400 = vshll.u32 %v4322, 16
        %v4402 = vrot.slane %v4400, 5
        %v4403 = vsel %vm819, %v4398, %v4402
        %v4404 = vshrl.u32 %v4322, 16
        %v4406 = vrot.slane %v4404, 4
        %v4407 = vor.u32 %v4406, %v4402
        %v4408 = vrot.slane %v4407, 4
        %v4410 = vshll.u32 %v4323, 16
        %v4412 = vrot.slane %v4410, 5
        %v4413 = vsel %vm819, %v4408, %v4412
        %v4415 = vshrl.u32 %v4324, 16
        %v4417 = vrot.slane %v4415, 4
        %v4418 = vshll.u32 %v4324, 16
        %v4420 = vrot.slane %v4418, 5
        %v4421 = vor.u32 %v4417, %v4420
        %v4422 = vrot.slane %v4421, 4
        %v4424 = vshll.u32 %v4325, 16
        %v4426 = vrot.slane %v4424, 5
        %v4427 = vsel %vm819, %v4422, %v4426
        %v4428 = vshrl.u32 %v4325, 16
        %v4430 = vrot.slane %v4428, 4
        %v4431 = vor.u32 %v4430, %v4426
        %v4432 = vrot.slane %v4431, 4
        %v4434 = vshll.u32 %v4326, 16
        %v4436 = vrot.slane %v4434, 5
        %v4437 = vsel %vm819, %v4432, %v4436
        %v4439 = vshrl.u32 %v4327, 16
        %v4441 = vrot.slane %v4439, 4
        %v4442 = vshll.u32 %v4327, 16
        %v4444 = vrot.slane %v4442, 5
        %v4445 = vor.u32 %v4441, %v4444
        %v4446 = vrot.slane %v4445, 4
        %v4448 = vshll.u32 %v4328, 16
        %v4450 = vrot.slane %v4448, 5
        %v4451 = vsel %vm819, %v4446, %v4450
        %v4452 = vshrl.u32 %v4328, 16
        %v4454 = vrot.slane %v4452, 4
        %v4455 = vor.u32 %v4454, %v4450
        %v4456 = vrot.slane %v4455, 4
        %v4458 = vshll.u32 %v4329, 16
        %v4460 = vrot.slane %v4458, 5
        %v4461 = vsel %vm819, %v4456, %v4460
        %v4463 = vshrl.u32 %v4330, 16
        %v4465 = vrot.slane %v4463, 4
        %v4466 = vshll.u32 %v4330, 16
        %v4468 = vrot.slane %v4466, 5
        %v4469 = vor.u32 %v4465, %v4468
        %v4470 = vrot.slane %v4469, 4
        %v4472 = vshll.u32 %v4331, 16
        %v4474 = vrot.slane %v4472, 5
        %v4475 = vsel %vm819, %v4470, %v4474
        %v4476 = vshrl.u32 %v4331, 16
        %v4478 = vrot.slane %v4476, 4
        %v4479 = vor.u32 %v4478, %v4474
        %v4480 = vrot.slane %v4479, 4
        %v4482 = vshll.u32 %v4332, 16
        %v4484 = vrot.slane %v4482, 5
        %v4485 = vsel %vm819, %v4480, %v4484
        %v4487 = vshrl.u32 %v4333, 16
        %v4489 = vrot.slane %v4487, 4
        %v4490 = vshll.u32 %v4333, 16
        %v4492 = vrot.slane %v4490, 5
        %v4493 = vor.u32 %v4489, %v4492
        %v4494 = vrot.slane %v4493, 4
        %v4496 = vshll.u32 %v4334, 16
        %v4498 = vrot.slane %v4496, 5
        %v4499 = vsel %vm819, %v4494, %v4498
        %v4500 = vshrl.u32 %v4334, 16
        %v4502 = vrot.slane %v4500, 4
        %v4503 = vor.u32 %v4502, %v4498
        %v4504 = vrot.slane %v4503, 4
        %v4506 = vshll.u32 %v4335, 16
        %v4508 = vrot.slane %v4506, 5
        %v4509 = vsel %vm819, %v4504, %v4508
        %v4511 = vshrl.u32 %v4336, 16
        %v4513 = vrot.slane %v4511, 4
        %v4514 = vshll.u32 %v4336, 16
        %v4516 = vrot.slane %v4514, 5
        %v4517 = vor.u32 %v4513, %v4516
        %v4518 = vrot.slane %v4517, 4
        %v4520 = vshll.u32 %v4337, 16
        %v4522 = vrot.slane %v4520, 5
        %v4523 = vsel %vm819, %v4518, %v4522
        %v4524 = vshrl.u32 %v4337, 16
        %v4526 = vrot.slane %v4524, 4
        %v4527 = vor.u32 %v4526, %v4522
        %v4528 = vrot.slane %v4527, 4
        %v4530 = vshll.u32 %v4338, 16
        %v4532 = vrot.slane %v4530, 5
        %v4533 = vsel %vm819, %v4528, %v4532
        %v4535 = vshrl.u32 %v4339, 16
        %v4537 = vrot.slane %v4535, 4
        %v4538 = vshll.u32 %v4339, 16
        %v4540 = vrot.slane %v4538, 5
        %v4541 = vor.u32 %v4537, %v4540
        %v4542 = vrot.slane %v4541, 4
        %v4544 = vshll.u32 %v4340, 16
        %v4546 = vrot.slane %v4544, 5
        %v4547 = vsel %vm819, %v4542, %v4546
        %v4548 = vshrl.u32 %v4340, 16
        %v4550 = vrot.slane %v4548, 4
        %v4551 = vor.u32 %v4550, %v4546
        %v4552 = vrot.slane %v4551, 4
        %v4554 = vshll.u32 %v4341, 16
        %v4556 = vrot.slane %v4554, 5
        %v4557 = vsel %vm819, %v4552, %v4556
        %v4559 = vshrl.u32 %v4342, 16
        %v4561 = vrot.slane %v4559, 4
        %v4562 = vshll.u32 %v4342, 16
        %v4564 = vrot.slane %v4562, 5
        %v4565 = vor.u32 %v4561, %v4564
        %v4566 = vrot.slane %v4565, 4
        %v4568 = vshll.u32 %v4343, 16
        %v4570 = vrot.slane %v4568, 5
        %v4571 = vsel %vm819, %v4566, %v4570
        %v4572 = vshrl.u32 %v4343, 16
        %v4574 = vrot.slane %v4572, 4
        %v4575 = vor.u32 %v4574, %v4570
        %v4576 = vrot.slane %v4575, 4
        %v4578 = vshll.u32 %v4344, 16
        %v4580 = vrot.slane %v4578, 5
        %v4581 = vsel %vm819, %v4576, %v4580
        %v4583 = vshrl.u32 %v4345, 16
        %v4585 = vrot.slane %v4583, 4
        %v4586 = vshll.u32 %v4345, 16
        %v4588 = vrot.slane %v4586, 5
        %v4589 = vor.u32 %v4585, %v4588
        %v4590 = vrot.slane %v4589, 4
        %v4592 = vshll.u32 %v4346, 16
        %v4594 = vrot.slane %v4592, 5
        %v4595 = vsel %vm819, %v4590, %v4594
        %v4596 = vshrl.u32 %v4346, 16
        %v4598 = vrot.slane %v4596, 4
        %v4599 = vor.u32 %v4598, %v4594
        %v4600 = vrot.slane %v4599, 4
        %v4602 = vshll.u32 %v4347, 16
        %v4604 = vrot.slane %v4602, 5
        %v4605 = vsel %vm819, %v4600, %v4604
        %v4607 = vshrl.u32 %v4348, 16
        %v4609 = vrot.slane %v4607, 4
        %v4610 = vshll.u32 %v4348, 16
        %v4612 = vrot.slane %v4610, 5
        %v4613 = vor.u32 %v4609, %v4612
        %v4614 = vrot.slane %v4613, 4
        %v4616 = vshll.u32 %v4349, 16
        %v4618 = vrot.slane %v4616, 5
        %v4619 = vsel %vm819, %v4614, %v4618
        %v4620 = vshrl.u32 %v4349, 16
        %v4622 = vrot.slane %v4620, 4
        %v4623 = vor.u32 %v4622, %v4618
        %v4624 = vrot.slane %v4623, 4
        %v4626 = vshll.u32 %v4350, 16
        %v4628 = vrot.slane %v4626, 5
        %v4629 = vsel %vm819, %v4624, %v4628
        %v4631 = vshrl.u32 %v4351, 16
        %v4633 = vrot.slane %v4631, 4
        %v4634 = vshll.u32 %v4351, 16
        %v4636 = vrot.slane %v4634, 5
        %v4637 = vor.u32 %v4633, %v4636
        %v4638 = vrot.slane %v4637, 4
        %v4640 = vshll.u32 %v4352, 16
        %v4642 = vrot.slane %v4640, 5
        %v4643 = vsel %vm819, %v4638, %v4642
        %v4644 = vshrl.u32 %v4352, 16
        %v4646 = vrot.slane %v4644, 4
        %v4647 = vor.u32 %v4646, %v4642
        %v4648 = vrot.slane %v4647, 4
        %v4650 = vshll.u32 %v4353, 16
        %v4652 = vrot.slane %v4650, 5
        %v4653 = vsel %vm819, %v4648, %v4652
        %v4655 = vshrl.u32 %v4354, 16
        %v4657 = vrot.slane %v4655, 4
        %v4658 = vshll.u32 %v4354, 16
        %v4660 = vrot.slane %v4658, 5
        %v4661 = vor.u32 %v4657, %v4660
        %v4662 = vrot.slane %v4661, 4
        %v4664 = vshll.u32 %v4355, 16
        %v4666 = vrot.slane %v4664, 5
        %v4667 = vsel %vm819, %v4662, %v4666
        %v4668 = vshrl.u32 %v4355, 16
        %v4670 = vrot.slane %v4668, 4
        %v4671 = vor.u32 %v4670, %v4666
        %v4672 = vrot.slane %v4671, 4
        %v4674 = vshll.u32 %v4356, 16
        %v4676 = vrot.slane %v4674, 5
        %v4677 = vsel %vm819, %v4672, %v4676
        %v4679 = vshrl.u32 %v4357, 16
        %v4681 = vrot.slane %v4679, 4
        %v4682 = vshll.u32 %v4357, 16
        %v4684 = vrot.slane %v4682, 5
        %v4685 = vor.u32 %v4681, %v4684
        %v4686 = vrot.slane %v4685, 4
        %v4688 = vshll.u32 %v4358, 16
        %v4690 = vrot.slane %v4688, 5
        %v4691 = vsel %vm819, %v4686, %v4690
        %v4692 = vshrl.u32 %v4358, 16
        %v4694 = vrot.slane %v4692, 4
        %v4695 = vor.u32 %v4694, %v4690
        %v4696 = vrot.slane %v4695, 4
        %v4698 = vshll.u32 %v4359, 16
        %v4700 = vrot.slane %v4698, 5
        %v4701 = vsel %vm819, %v4696, %v4700
        %v4703 = vshrl.u32 %v4360, 16
        %v4705 = vrot.slane %v4703, 4
        %v4706 = vshll.u32 %v4360, 16
        %v4708 = vrot.slane %v4706, 5
        %v4709 = vor.u32 %v4705, %v4708
        %v4710 = vrot.slane %v4709, 4
        %v4712 = vshll.u32 %v4361, 16
        %v4714 = vrot.slane %v4712, 5
        %v4715 = vsel %vm819, %v4710, %v4714
        %v4716 = vshrl.u32 %v4361, 16
        %v4718 = vrot.slane %v4716, 4
        %v4719 = vor.u32 %v4718, %v4714
        %v4720 = vrot.slane %v4719, 4
        %v4722 = vshll.u32 %v4362, 16
        %v4724 = vrot.slane %v4722, 5
        %v4725 = vsel %vm819, %v4720, %v4724
        %v4727 = vshrl.u32 %v4363, 16
        %v4729 = vrot.slane %v4727, 4
        %v4730 = vshll.u32 %v4363, 16
        %v4732 = vrot.slane %v4730, 5
        %v4733 = vor.u32 %v4729, %v4732
        %v4734 = vrot.slane %v4733, 4
        %v4736 = vshll.u32 %v4364, 16
        %v4738 = vrot.slane %v4736, 5
        %v4739 = vsel %vm819, %v4734, %v4738
        %v4740 = vshrl.u32 %v4364, 16
        %v4742 = vrot.slane %v4740, 4
        %v4743 = vor.u32 %v4742, %v4738
        %v4744 = vrot.slane %v4743, 4
        %v4746 = vshll.u32 %v4365, 16
        %v4748 = vrot.slane %v4746, 5
        %v4749 = vsel %vm819, %v4744, %v4748
        %s4750 = scalar_lea.vmem [#allocation6], 224
        %v4751 = vld [vmem:[%s4750] sm:$0xf]
        %v4752 = vld [vmem:[%s4750 + $0x4] sm:$0xf]
        %v4753 = vld [vmem:[%s4750 + $0x8] sm:$0xf]
        %v4754 = vld [vmem:[%s4750 + $0xc] sm:$0xf]
        %v4755 = vld [vmem:[%s4750 + $0x10] sm:$0xf]
        %v4756 = vld [vmem:[%s4750 + $0x14] sm:$0xf]
        %v4757 = vld [vmem:[%s4750 + $0x18] sm:$0xf]
        %v4758 = vld [vmem:[%s4750 + $0x1c] sm:$0xf]
        %v4759 = vunpack.c.l.b16 %v4379
        %v4760 = vunpack.c.l.b16 %v4389
        %v4761 = vunpack.c.l.b16 %v4403
        %v4762 = vunpack.c.l.b16 %v4413
        %v4763 = vunpack.c.l.b16 %v4427
        %v4764 = vunpack.c.l.b16 %v4437
        %v4765 = vunpack.c.l.b16 %v4451
        %v4766 = vunpack.c.l.b16 %v4461
        %v4767 = vunpack.c.l.b16 %v4475
        %v4768 = vunpack.c.l.b16 %v4485
        %v4769 = vunpack.c.l.b16 %v4499
        %v4770 = vunpack.c.l.b16 %v4509
        %v4771 = vunpack.c.l.b16 %v4523
        %v4772 = vunpack.c.l.b16 %v4533
        %v4773 = vunpack.c.l.b16 %v4547
        %v4774 = vunpack.c.l.b16 %v4557
        %v4775 = vunpack.c.l.b16 %v4571
        %v4776 = vunpack.c.l.b16 %v4581
        %v4777 = vunpack.c.l.b16 %v4595
        %v4778 = vunpack.c.l.b16 %v4605
        %v4779 = vunpack.c.l.b16 %v4619
        %v4780 = vunpack.c.l.b16 %v4629
        %v4781 = vunpack.c.l.b16 %v4643
        %v4782 = vunpack.c.l.b16 %v4653
        %v4783 = vunpack.c.l.b16 %v4667
        %v4784 = vunpack.c.l.b16 %v4677
        %v4785 = vunpack.c.l.b16 %v4691
        %v4786 = vunpack.c.l.b16 %v4701
        %v4787 = vunpack.c.l.b16 %v4715
        %v4788 = vunpack.c.l.b16 %v4725
        %v4789 = vunpack.c.l.b16 %v4739
        %v4790 = vunpack.c.l.b16 %v4749
        %v4791 = vpack.c.b16 %v4760, %v4759
        %v4792 = vpack.c.b16 %v4762, %v4761
        %v4793 = vpack.c.b16 %v4764, %v4763
        %v4794 = vpack.c.b16 %v4766, %v4765
        %v4795 = vpack.c.b16 %v4768, %v4767
        %v4796 = vpack.c.b16 %v4770, %v4769
        %v4797 = vpack.c.b16 %v4772, %v4771
        %v4798 = vpack.c.b16 %v4774, %v4773
        %v4799 = vpack.c.b16 %v4776, %v4775
        %v4800 = vpack.c.b16 %v4778, %v4777
        %v4801 = vpack.c.b16 %v4780, %v4779
        %v4802 = vpack.c.b16 %v4782, %v4781
        %v4803 = vpack.c.b16 %v4784, %v4783
        %v4804 = vpack.c.b16 %v4786, %v4785
        %v4805 = vpack.c.b16 %v4788, %v4787
        %v4806 = vpack.c.b16 %v4790, %v4789
        %v4815 = vunpack.c.l.b16 %v4751
        %v4816 = vunpack.c.l.b16 %v4752
        %v4817 = vunpack.c.l.b16 %v4753
        %v4818 = vunpack.c.l.b16 %v4754
        %v4819 = vunpack.c.l.b16 %v4755
        %v4820 = vunpack.c.l.b16 %v4756
        %v4821 = vunpack.c.l.b16 %v4757
        %v4822 = vunpack.c.l.b16 %v4758
        %v4823 = vpack.c.b16 %v4816, %v4815
        %v4824 = vpack.c.b16 %v4818, %v4817
        %v4825 = vpack.c.b16 %v4820, %v4819
        %v4826 = vpack.c.b16 %v4822, %v4821
        %v4832 = vsel %vm1285, %v4791, 0
        %v4835 = vsel %vm1285, %v4792, 0
        %v4838 = vsel %vm1285, %v4793, 0
        %v4841 = vsel %vm1285, %v4794, 0
        %v4844 = vsel %vm1285, %v4795, 0
        %v4847 = vsel %vm1285, %v4796, 0
        %v4850 = vsel %vm1285, %v4797, 0
        %v4853 = vsel %vm1285, %v4798, 0
        %v4856 = vsel %vm1285, %v4799, 0
        %v4859 = vsel %vm1285, %v4800, 0
        %v4862 = vsel %vm1285, %v4801, 0
        %v4865 = vsel %vm1285, %v4802, 0
        %v4868 = vsel %vm1285, %v4803, 0
        %v4871 = vsel %vm1285, %v4804, 0
        %v4874 = vsel %vm1285, %v4805, 0
        %v4877 = vsel %vm1285, %v4806, 0
        %4879 = vmatprep.subr.bf16.mxu0 0
        %4880 = vmatpush1.bf16.msra.mxu0 %v4823
        %4881 = vmatprep.subr.bf16.mxu0 0
        %4882 = vmatpush1.bf16.msra.mxu0 %v4824
        %4883 = vmatprep.subr.bf16.mxu0 0
        %4884 = vmatpush1.bf16.msra.mxu0 %v4825
        %4885 = vmatprep.subr.bf16.mxu0 0
        %4886 = vmatpush1.bf16.msra.mxu0 %v4826
        %4887 = vmatprep.subr.bf16.mxu0 0
        %4888 = vmatpush1.bf16.msra.mxu0 0
        %4889 = vmatprep.subr.bf16.mxu0 0
        %4890 = vmatpush1.bf16.msra.mxu0 0
        %4891 = vmatprep.subr.bf16.mxu0 0
        %4892 = vmatpush1.bf16.msra.mxu0 0
        %4893 = vmatprep.subr.bf16.mxu0 0
        %4894 = vmatpush1.bf16.msra.mxu0 0
        %4895 = vmatprep.subr.bf16.mxu0 0
        %4896 = vmatpush1.bf16.msra.mxu0 0
        %4897 = vmatprep.subr.bf16.mxu0 0
        %4898 = vmatpush1.bf16.msra.mxu0 0
        %4899 = vmatprep.subr.bf16.mxu0 0
        %4900 = vmatpush1.bf16.msra.mxu0 0
        %4901 = vmatprep.subr.bf16.mxu0 0
        %4902 = vmatpush1.bf16.msra.mxu0 0
        %4903 = vmatprep.subr.bf16.mxu0 0
        %4904 = vmatpush1.bf16.msra.mxu0 0
        %4905 = vmatprep.subr.bf16.mxu0 0
        %4906 = vmatpush1.bf16.msra.mxu0 0
        %4907 = vmatprep.subr.bf16.mxu0 0
        %4908 = vmatpush1.bf16.msra.mxu0 0
        %4909 = vmatprep.subr.bf16.mxu0 0
        %4910 = vmatpush1.bf16.msra.mxu0 0
        %4911 = vmatprep.mubr.bf16.mxu0 0
        %4912 = vmatmul.mubr.bf16.gmra.mrb[0].mxu0 %v4832
        %v4913 = vpop.f32.mrb[0].mxu0
        %v4914 = vadd.f32 0.0, %v4913
        %v4915 = vpop.f32.mrb[0].mxu0
        %v4916 = vpop.f32.mrb[0].mxu0
        %v4917 = vadd.f32 0.0, %v4916
        %v4918 = vpop.f32.mrb[0].mxu0
        %4919 = vmatprep.mubr.bf16.mxu0 0
        %4920 = vmatmul.mubr.bf16.gmra.mrb[0].mxu0 %v4835
        %v4921 = vpop.f32.mrb[0].mxu0
        %v4922 = vadd.f32 0.0, %v4921
        %v4923 = vpop.f32.mrb[0].mxu0
        %v4924 = vpop.f32.mrb[0].mxu0
        %v4925 = vadd.f32 0.0, %v4924
        %v4926 = vpop.f32.mrb[0].mxu0
        %4927 = vmatprep.mubr.bf16.mxu0 0
        %4928 = vmatmul.mubr.bf16.gmra.mrb[0].mxu0 %v4838
        %v4929 = vpop.f32.mrb[0].mxu0
        %v4930 = vadd.f32 0.0, %v4929
        %v4931 = vpop.f32.mrb[0].mxu0
        %v4932 = vpop.f32.mrb[0].mxu0
        %v4933 = vadd.f32 0.0, %v4932
        %v4934 = vpop.f32.mrb[0].mxu0
        %4935 = vmatprep.mubr.bf16.mxu0 0
        %4936 = vmatmul.mubr.bf16.gmra.mrb[0].mxu0 %v4841
        %v4937 = vpop.f32.mrb[0].mxu0
        %v4938 = vadd.f32 0.0, %v4937
        %v4939 = vpop.f32.mrb[0].mxu0
        %v4940 = vpop.f32.mrb[0].mxu0
        %v4941 = vadd.f32 0.0, %v4940
        %v4942 = vpop.f32.mrb[0].mxu0
        %4943 = vmatprep.mubr.bf16.mxu0 0
        %4944 = vmatmul.mubr.bf16.gmra.mrb[0].mxu0 %v4844
        %v4945 = vpop.f32.mrb[0].mxu0
        %v4946 = vadd.f32 0.0, %v4945
        %v4947 = vpop.f32.mrb[0].mxu0
        %v4948 = vpop.f32.mrb[0].mxu0
        %v4949 = vadd.f32 0.0, %v4948
        %v4950 = vpop.f32.mrb[0].mxu0
        %4951 = vmatprep.mubr.bf16.mxu0 0
        %4952 = vmatmul.mubr.bf16.gmra.mrb[0].mxu0 %v4847
        %v4953 = vpop.f32.mrb[0].mxu0
        %v4954 = vadd.f32 0.0, %v4953
        %v4955 = vpop.f32.mrb[0].mxu0
        %v4956 = vpop.f32.mrb[0].mxu0
        %v4957 = vadd.f32 0.0, %v4956
        %v4958 = vpop.f32.mrb[0].mxu0
        %4959 = vmatprep.mubr.bf16.mxu0 0
        %4960 = vmatmul.mubr.bf16.gmra.mrb[0].mxu0 %v4850
        %v4961 = vpop.f32.mrb[0].mxu0
        %v4962 = vadd.f32 0.0, %v4961
        %v4963 = vpop.f32.mrb[0].mxu0
        %v4964 = vpop.f32.mrb[0].mxu0
        %v4965 = vadd.f32 0.0, %v4964
        %v4966 = vpop.f32.mrb[0].mxu0
        %4967 = vmatprep.mubr.bf16.mxu0 0
        %4968 = vmatmul.mubr.bf16.gmra.mrb[0].mxu0 %v4853
        %v4969 = vpop.f32.mrb[0].mxu0
        %v4970 = vadd.f32 0.0, %v4969
        %v4971 = vpop.f32.mrb[0].mxu0
        %v4972 = vpop.f32.mrb[0].mxu0
        %v4973 = vadd.f32 0.0, %v4972
        %v4974 = vpop.f32.mrb[0].mxu0
        %4975 = vmatprep.mubr.bf16.mxu0 0
        %4976 = vmatmul.mubr.bf16.gmra.mrb[0].mxu0 %v4856
        %v4977 = vpop.f32.mrb[0].mxu0
        %v4978 = vadd.f32 0.0, %v4977
        %v4979 = vpop.f32.mrb[0].mxu0
        %v4980 = vpop.f32.mrb[0].mxu0
        %v4981 = vadd.f32 0.0, %v4980
        %v4982 = vpop.f32.mrb[0].mxu0
        %4983 = vmatprep.mubr.bf16.mxu0 0
        %4984 = vmatmul.mubr.bf16.gmra.mrb[0].mxu0 %v4859
        %v4985 = vpop.f32.mrb[0].mxu0
        %v4986 = vadd.f32 0.0, %v4985
        %v4987 = vpop.f32.mrb[0].mxu0
        %v4988 = vpop.f32.mrb[0].mxu0
        %v4989 = vadd.f32 0.0, %v4988
        %v4990 = vpop.f32.mrb[0].mxu0
        %4991 = vmatprep.mubr.bf16.mxu0 0
        %4992 = vmatmul.mubr.bf16.gmra.mrb[0].mxu0 %v4862
        %v4993 = vpop.f32.mrb[0].mxu0
        %v4994 = vadd.f32 0.0, %v4993
        %v4995 = vpop.f32.mrb[0].mxu0
        %v4996 = vpop.f32.mrb[0].mxu0
        %v4997 = vadd.f32 0.0, %v4996
        %v4998 = vpop.f32.mrb[0].mxu0
        %4999 = vmatprep.mubr.bf16.mxu0 0
        %5000 = vmatmul.mubr.bf16.gmra.mrb[0].mxu0 %v4865
        %v5001 = vpop.f32.mrb[0].mxu0
        %v5002 = vadd.f32 0.0, %v5001
        %v5003 = vpop.f32.mrb[0].mxu0
        %v5004 = vpop.f32.mrb[0].mxu0
        %v5005 = vadd.f32 0.0, %v5004
        %v5006 = vpop.f32.mrb[0].mxu0
        %5007 = vmatprep.mubr.bf16.mxu0 0
        %5008 = vmatmul.mubr.bf16.gmra.mrb[0].mxu0 %v4868
        %v5009 = vpop.f32.mrb[0].mxu0
        %v5010 = vadd.f32 0.0, %v5009
        %v5011 = vpop.f32.mrb[0].mxu0
        %v5012 = vpop.f32.mrb[0].mxu0
        %v5013 = vadd.f32 0.0, %v5012
        %v5014 = vpop.f32.mrb[0].mxu0
        %5015 = vmatprep.mubr.bf16.mxu0 0
        %5016 = vmatmul.mubr.bf16.gmra.mrb[0].mxu0 %v4871
        %v5017 = vpop.f32.mrb[0].mxu0
        %v5018 = vadd.f32 0.0, %v5017
        %v5019 = vpop.f32.mrb[0].mxu0
        %v5020 = vpop.f32.mrb[0].mxu0
        %v5021 = vadd.f32 0.0, %v5020
        %v5022 = vpop.f32.mrb[0].mxu0
        %5023 = vmatprep.mubr.bf16.mxu0 0
        %5024 = vmatmul.mubr.bf16.gmra.mrb[0].mxu0 %v4874
        %v5025 = vpop.f32.mrb[0].mxu0
        %v5026 = vadd.f32 0.0, %v5025
        %v5027 = vpop.f32.mrb[0].mxu0
        %v5028 = vpop.f32.mrb[0].mxu0
        %v5029 = vadd.f32 0.0, %v5028
        %v5030 = vpop.f32.mrb[0].mxu0
        %5031 = vmatprep.mubr.bf16.mxu0 0
        %5032 = vmatmul.mubr.bf16.gmra.mrb[0].mxu0 %v4877
        %v5033 = vpop.f32.mrb[0].mxu0
        %v5034 = vadd.f32 0.0, %v5033
        %v5035 = vpop.f32.mrb[0].mxu0
        %v5036 = vpop.f32.mrb[0].mxu0
        %v5037 = vadd.f32 0.0, %v5036
        %v5038 = vpop.f32.mrb[0].mxu0
        %5039 = vdwg.mxu0
        %v5040 = vadd.f32 %v4286, %v4914
        %v5041 = vadd.f32 %v4287, %v4917
        %v5042 = vadd.f32 %v4288, %v4922
        %v5043 = vadd.f32 %v4289, %v4925
        %v5044 = vadd.f32 %v4290, %v4930
        %v5045 = vadd.f32 %v4291, %v4933
        %v5046 = vadd.f32 %v4292, %v4938
        %v5047 = vadd.f32 %v4293, %v4941
        %v5048 = vadd.f32 %v4294, %v4946
        %v5049 = vadd.f32 %v4295, %v4949
        %v5050 = vadd.f32 %v4296, %v4954
        %v5051 = vadd.f32 %v4297, %v4957
        %v5052 = vadd.f32 %v4298, %v4962
        %v5053 = vadd.f32 %v4299, %v4965
        %v5054 = vadd.f32 %v4300, %v4970
        %v5055 = vadd.f32 %v4301, %v4973
        %v5056 = vadd.f32 %v4302, %v4978
        %v5057 = vadd.f32 %v4303, %v4981
        %v5058 = vadd.f32 %v4304, %v4986
        %v5059 = vadd.f32 %v4305, %v4989
        %v5060 = vadd.f32 %v4306, %v4994
        %v5061 = vadd.f32 %v4307, %v4997
        %v5062 = vadd.f32 %v4308, %v5002
        %v5063 = vadd.f32 %v4309, %v5005
        %v5064 = vadd.f32 %v4310, %v5010
        %v5065 = vadd.f32 %v4311, %v5013
        %v5066 = vadd.f32 %v4312, %v5018
        %v5067 = vadd.f32 %v4313, %v5021
        %v5068 = vadd.f32 %v4314, %v5026
        %v5069 = vadd.f32 %v4315, %v5029
        %v5070 = vadd.f32 %v4316, %v5034
        %v5071 = vadd.f32 %v4317, %v5037
        %v5072 = vld [vmem:[%s3931] sm:$0xe]
        %v5073 = vld [vmem:[%s3931 + $0xc] sm:$0xe]
        %v5074 = vld [vmem:[%s3931 + $0x18] sm:$0xe]
        %v5075 = vld [vmem:[%s3931 + $0x24] sm:$0xe]
        %v5076 = vld [vmem:[%s3931 + $0x30] sm:$0xe]
        %v5077 = vld [vmem:[%s3931 + $0x3c] sm:$0xe]
        %v5078 = vld [vmem:[%s3931 + $0x48] sm:$0xe]
        %v5079 = vld [vmem:[%s3931 + $0x54] sm:$0xe]
        %v5080 = vld [vmem:[%s3931 + $0x60] sm:$0xe]
        %v5081 = vld [vmem:[%s3931 + $0x6c] sm:$0xe]
        %v5082 = vld [vmem:[%s3931 + $0x78] sm:$0xe]
        %v5083 = vld [vmem:[%s3931 + $0x84] sm:$0xe]
        %v5084 = vld [vmem:[%s3931 + $0x90] sm:$0xe]
        %v5085 = vld [vmem:[%s3931 + $0x9c] sm:$0xe]
        %v5086 = vld [vmem:[%s3931 + $0xa8] sm:$0xe]
        %v5087 = vld [vmem:[%s3931 + $0xb4] sm:$0xe]
        %v5136 = vrot.slane %v5072, 5
        %v5137 = vrot.slane %v5136, 4
        %v5138 = vrot.slane %v4319, 5
        %v5139 = vsel %vm1858, %v5137, %v5138
        %v5140 = vrot.slane %v5138, 4
        %v5141 = vrot.slane %v4320, 5
        %v5142 = vsel %vm1858, %v5140, %v5141
        %v5143 = vrot.slane %v5073, 5
        %v5144 = vrot.slane %v5143, 4
        %v5145 = vrot.slane %v4322, 5
        %v5146 = vsel %vm1858, %v5144, %v5145
        %v5147 = vrot.slane %v5145, 4
        %v5148 = vrot.slane %v4323, 5
        %v5149 = vsel %vm1858, %v5147, %v5148
        %v5150 = vrot.slane %v5074, 5
        %v5151 = vrot.slane %v5150, 4
        %v5152 = vrot.slane %v4325, 5
        %v5153 = vsel %vm1858, %v5151, %v5152
        %v5154 = vrot.slane %v5152, 4
        %v5155 = vrot.slane %v4326, 5
        %v5156 = vsel %vm1858, %v5154, %v5155
        %v5157 = vrot.slane %v5075, 5
        %v5158 = vrot.slane %v5157, 4
        %v5159 = vrot.slane %v4328, 5
        %v5160 = vsel %vm1858, %v5158, %v5159
        %v5161 = vrot.slane %v5159, 4
        %v5162 = vrot.slane %v4329, 5
        %v5163 = vsel %vm1858, %v5161, %v5162
        %v5164 = vrot.slane %v5076, 5
        %v5165 = vrot.slane %v5164, 4
        %v5166 = vrot.slane %v4331, 5
        %v5167 = vsel %vm1858, %v5165, %v5166
        %v5168 = vrot.slane %v5166, 4
        %v5169 = vrot.slane %v4332, 5
        %v5170 = vsel %vm1858, %v5168, %v5169
        %v5171 = vrot.slane %v5077, 5
        %v5172 = vrot.slane %v5171, 4
        %v5173 = vrot.slane %v4334, 5
        %v5174 = vsel %vm1858, %v5172, %v5173
        %v5175 = vrot.slane %v5173, 4
        %v5176 = vrot.slane %v4335, 5
        %v5177 = vsel %vm1858, %v5175, %v5176
        %v5178 = vrot.slane %v5078, 5
        %v5179 = vrot.slane %v5178, 4
        %v5180 = vrot.slane %v4337, 5
        %v5181 = vsel %vm1858, %v5179, %v5180
        %v5182 = vrot.slane %v5180, 4
        %v5183 = vrot.slane %v4338, 5
        %v5184 = vsel %vm1858, %v5182, %v5183
        %v5185 = vrot.slane %v5079, 5
        %v5186 = vrot.slane %v5185, 4
        %v5187 = vrot.slane %v4340, 5
        %v5188 = vsel %vm1858, %v5186, %v5187
        %v5189 = vrot.slane %v5187, 4
        %v5190 = vrot.slane %v4341, 5
        %v5191 = vsel %vm1858, %v5189, %v5190
        %v5192 = vrot.slane %v5080, 5
        %v5193 = vrot.slane %v5192, 4
        %v5194 = vrot.slane %v4343, 5
        %v5195 = vsel %vm1858, %v5193, %v5194
        %v5196 = vrot.slane %v5194, 4
        %v5197 = vrot.slane %v4344, 5
        %v5198 = vsel %vm1858, %v5196, %v5197
        %v5199 = vrot.slane %v5081, 5
        %v5200 = vrot.slane %v5199, 4
        %v5201 = vrot.slane %v4346, 5
        %v5202 = vsel %vm1858, %v5200, %v5201
        %v5203 = vrot.slane %v5201, 4
        %v5204 = vrot.slane %v4347, 5
        %v5205 = vsel %vm1858, %v5203, %v5204
        %v5206 = vrot.slane %v5082, 5
        %v5207 = vrot.slane %v5206, 4
        %v5208 = vrot.slane %v4349, 5
        %v5209 = vsel %vm1858, %v5207, %v5208
        %v5210 = vrot.slane %v5208, 4
        %v5211 = vrot.slane %v4350, 5
        %v5212 = vsel %vm1858, %v5210, %v5211
        %v5213 = vrot.slane %v5083, 5
        %v5214 = vrot.slane %v5213, 4
        %v5215 = vrot.slane %v4352, 5
        %v5216 = vsel %vm1858, %v5214, %v5215
        %v5217 = vrot.slane %v5215, 4
        %v5218 = vrot.slane %v4353, 5
        %v5219 = vsel %vm1858, %v5217, %v5218
        %v5220 = vrot.slane %v5084, 5
        %v5221 = vrot.slane %v5220, 4
        %v5222 = vrot.slane %v4355, 5
        %v5223 = vsel %vm1858, %v5221, %v5222
        %v5224 = vrot.slane %v5222, 4
        %v5225 = vrot.slane %v4356, 5
        %v5226 = vsel %vm1858, %v5224, %v5225
        %v5227 = vrot.slane %v5085, 5
        %v5228 = vrot.slane %v5227, 4
        %v5229 = vrot.slane %v4358, 5
        %v5230 = vsel %vm1858, %v5228, %v5229
        %v5231 = vrot.slane %v5229, 4
        %v5232 = vrot.slane %v4359, 5
        %v5233 = vsel %vm1858, %v5231, %v5232
        %v5234 = vrot.slane %v5086, 5
        %v5235 = vrot.slane %v5234, 4
        %v5236 = vrot.slane %v4361, 5
        %v5237 = vsel %vm1858, %v5235, %v5236
        %v5238 = vrot.slane %v5236, 4
        %v5239 = vrot.slane %v4362, 5
        %v5240 = vsel %vm1858, %v5238, %v5239
        %v5241 = vrot.slane %v5087, 5
        %v5242 = vrot.slane %v5241, 4
        %v5243 = vrot.slane %v4364, 5
        %v5244 = vsel %vm1858, %v5242, %v5243
        %v5245 = vrot.slane %v5243, 4
        %v5246 = vrot.slane %v4365, 5
        %v5247 = vsel %vm1858, %v5245, %v5246
        %s5248 = scalar_lea.vmem [#allocation6], 256
        %v5249 = vld [vmem:[%s5248] sm:$0xf]
        %v5250 = vld [vmem:[%s5248 + $0x4] sm:$0xf]
        %v5251 = vld [vmem:[%s5248 + $0x8] sm:$0xf]
        %v5252 = vld [vmem:[%s5248 + $0xc] sm:$0xf]
        %v5253 = vld [vmem:[%s5248 + $0x10] sm:$0xf]
        %v5254 = vld [vmem:[%s5248 + $0x14] sm:$0xf]
        %v5255 = vld [vmem:[%s5248 + $0x18] sm:$0xf]
        %v5256 = vld [vmem:[%s5248 + $0x1c] sm:$0xf]
        %v5257 = vunpack.c.l.b16 %v5139
        %v5258 = vunpack.c.l.b16 %v5142
        %v5259 = vunpack.c.l.b16 %v5146
        %v5260 = vunpack.c.l.b16 %v5149
        %v5261 = vunpack.c.l.b16 %v5153
        %v5262 = vunpack.c.l.b16 %v5156
        %v5263 = vunpack.c.l.b16 %v5160
        %v5264 = vunpack.c.l.b16 %v5163
        %v5265 = vunpack.c.l.b16 %v5167
        %v5266 = vunpack.c.l.b16 %v5170
        %v5267 = vunpack.c.l.b16 %v5174
        %v5268 = vunpack.c.l.b16 %v5177
        %v5269 = vunpack.c.l.b16 %v5181
        %v5270 = vunpack.c.l.b16 %v5184
        %v5271 = vunpack.c.l.b16 %v5188
        %v5272 = vunpack.c.l.b16 %v5191
        %v5273 = vunpack.c.l.b16 %v5195
        %v5274 = vunpack.c.l.b16 %v5198
        %v5275 = vunpack.c.l.b16 %v5202
        %v5276 = vunpack.c.l.b16 %v5205
        %v5277 = vunpack.c.l.b16 %v5209
        %v5278 = vunpack.c.l.b16 %v5212
        %v5279 = vunpack.c.l.b16 %v5216
        %v5280 = vunpack.c.l.b16 %v5219
        %v5281 = vunpack.c.l.b16 %v5223
        %v5282 = vunpack.c.l.b16 %v5226
        %v5283 = vunpack.c.l.b16 %v5230
        %v5284 = vunpack.c.l.b16 %v5233
        %v5285 = vunpack.c.l.b16 %v5237
        %v5286 = vunpack.c.l.b16 %v5240
        %v5287 = vunpack.c.l.b16 %v5244
        %v5288 = vunpack.c.l.b16 %v5247
        %v5289 = vpack.c.b16 %v5258, %v5257
        %v5290 = vpack.c.b16 %v5260, %v5259
        %v5291 = vpack.c.b16 %v5262, %v5261
        %v5292 = vpack.c.b16 %v5264, %v5263
        %v5293 = vpack.c.b16 %v5266, %v5265
        %v5294 = vpack.c.b16 %v5268, %v5267
        %v5295 = vpack.c.b16 %v5270, %v5269
        %v5296 = vpack.c.b16 %v5272, %v5271
        %v5297 = vpack.c.b16 %v5274, %v5273
        %v5298 = vpack.c.b16 %v5276, %v5275
        %v5299 = vpack.c.b16 %v5278, %v5277
        %v5300 = vpack.c.b16 %v5280, %v5279
        %v5301 = vpack.c.b16 %v5282, %v5281
        %v5302 = vpack.c.b16 %v5284, %v5283
        %v5303 = vpack.c.b16 %v5286, %v5285
        %v5304 = vpack.c.b16 %v5288, %v5287
        %v5313 = vunpack.c.l.b16 %v5249
        %v5314 = vunpack.c.l.b16 %v5250
        %v5315 = vunpack.c.l.b16 %v5251
        %v5316 = vunpack.c.l.b16 %v5252
        %v5317 = vunpack.c.l.b16 %v5253
        %v5318 = vunpack.c.l.b16 %v5254
        %v5319 = vunpack.c.l.b16 %v5255
        %v5320 = vunpack.c.l.b16 %v5256
        %v5321 = vpack.c.b16 %v5314, %v5313
        %v5322 = vpack.c.b16 %v5316, %v5315
        %v5323 = vpack.c.b16 %v5318, %v5317
        %v5324 = vpack.c.b16 %v5320, %v5319
        %v5330 = vsel %vm1285, %v5289, 0
        %v5333 = vsel %vm1285, %v5290, 0
        %v5336 = vsel %vm1285, %v5291, 0
        %v5339 = vsel %vm1285, %v5292, 0
        %v5342 = vsel %vm1285, %v5293, 0
        %v5345 = vsel %vm1285, %v5294, 0
        %v5348 = vsel %vm1285, %v5295, 0
        %v5351 = vsel %vm1285, %v5296, 0
        %v5354 = vsel %vm1285, %v5297, 0
        %v5357 = vsel %vm1285, %v5298, 0
        %v5360 = vsel %vm1285, %v5299, 0
        %v5363 = vsel %vm1285, %v5300, 0
        %v5366 = vsel %vm1285, %v5301, 0
        %v5369 = vsel %vm1285, %v5302, 0
        %v5372 = vsel %vm1285, %v5303, 0
        %v5375 = vsel %vm1285, %v5304, 0
        %5377 = vmatprep.subr.bf16.mxu0 0
        %5378 = vmatpush1.bf16.msra.mxu0 %v5321
        %5379 = vmatprep.subr.bf16.mxu0 0
        %5380 = vmatpush1.bf16.msra.mxu0 %v5322
        %5381 = vmatprep.subr.bf16.mxu0 0
        %5382 = vmatpush1.bf16.msra.mxu0 %v5323
        %5383 = vmatprep.subr.bf16.mxu0 0
        %5384 = vmatpush1.bf16.msra.mxu0 %v5324
        %5385 = vmatprep.subr.bf16.mxu0 0
        %5386 = vmatpush1.bf16.msra.mxu0 0
        %5387 = vmatprep.subr.bf16.mxu0 0
        %5388 = vmatpush1.bf16.msra.mxu0 0
        %5389 = vmatprep.subr.bf16.mxu0 0
        %5390 = vmatpush1.bf16.msra.mxu0 0
        %5391 = vmatprep.subr.bf16.mxu0 0
        %5392 = vmatpush1.bf16.msra.mxu0 0
        %5393 = vmatprep.subr.bf16.mxu0 0
        %5394 = vmatpush1.bf16.msra.mxu0 0
        %5395 = vmatprep.subr.bf16.mxu0 0
        %5396 = vmatpush1.bf16.msra.mxu0 0
        %5397 = vmatprep.subr.bf16.mxu0 0
        %5398 = vmatpush1.bf16.msra.mxu0 0
        %5399 = vmatprep.subr.bf16.mxu0 0
        %5400 = vmatpush1.bf16.msra.mxu0 0
        %5401 = vmatprep.subr.bf16.mxu0 0
        %5402 = vmatpush1.bf16.msra.mxu0 0
        %5403 = vmatprep.subr.bf16.mxu0 0
        %5404 = vmatpush1.bf16.msra.mxu0 0
        %5405 = vmatprep.subr.bf16.mxu0 0
        %5406 = vmatpush1.bf16.msra.mxu0 0
        %5407 = vmatprep.subr.bf16.mxu0 0
        %5408 = vmatpush1.bf16.msra.mxu0 0
        %5409 = vmatprep.mubr.bf16.mxu0 0
        %5410 = vmatmul.mubr.bf16.gmra.mrb[0].mxu0 %v5330
        %v5411 = vpop.f32.mrb[0].mxu0
        %v5412 = vadd.f32 0.0, %v5411
        %v5413 = vpop.f32.mrb[0].mxu0
        %v5414 = vpop.f32.mrb[0].mxu0
        %v5415 = vadd.f32 0.0, %v5414
        %v5416 = vpop.f32.mrb[0].mxu0
        %5417 = vmatprep.mubr.bf16.mxu0 0
        %5418 = vmatmul.mubr.bf16.gmra.mrb[0].mxu0 %v5333
        %v5419 = vpop.f32.mrb[0].mxu0
        %v5420 = vadd.f32 0.0, %v5419
        %v5421 = vpop.f32.mrb[0].mxu0
        %v5422 = vpop.f32.mrb[0].mxu0
        %v5423 = vadd.f32 0.0, %v5422
        %v5424 = vpop.f32.mrb[0].mxu0
        %5425 = vmatprep.mubr.bf16.mxu0 0
        %5426 = vmatmul.mubr.bf16.gmra.mrb[0].mxu0 %v5336
        %v5427 = vpop.f32.mrb[0].mxu0
        %v5428 = vadd.f32 0.0, %v5427
        %v5429 = vpop.f32.mrb[0].mxu0
        %v5430 = vpop.f32.mrb[0].mxu0
        %v5431 = vadd.f32 0.0, %v5430
        %v5432 = vpop.f32.mrb[0].mxu0
        %5433 = vmatprep.mubr.bf16.mxu0 0
        %5434 = vmatmul.mubr.bf16.gmra.mrb[0].mxu0 %v5339
        %v5435 = vpop.f32.mrb[0].mxu0
        %v5436 = vadd.f32 0.0, %v5435
        %v5437 = vpop.f32.mrb[0].mxu0
        %v5438 = vpop.f32.mrb[0].mxu0
        %v5439 = vadd.f32 0.0, %v5438
        %v5440 = vpop.f32.mrb[0].mxu0
        %5441 = vmatprep.mubr.bf16.mxu0 0
        %5442 = vmatmul.mubr.bf16.gmra.mrb[0].mxu0 %v5342
        %v5443 = vpop.f32.mrb[0].mxu0
        %v5444 = vadd.f32 0.0, %v5443
        %v5445 = vpop.f32.mrb[0].mxu0
        %v5446 = vpop.f32.mrb[0].mxu0
        %v5447 = vadd.f32 0.0, %v5446
        %v5448 = vpop.f32.mrb[0].mxu0
        %5449 = vmatprep.mubr.bf16.mxu0 0
        %5450 = vmatmul.mubr.bf16.gmra.mrb[0].mxu0 %v5345
        %v5451 = vpop.f32.mrb[0].mxu0
        %v5452 = vadd.f32 0.0, %v5451
        %v5453 = vpop.f32.mrb[0].mxu0
        %v5454 = vpop.f32.mrb[0].mxu0
        %v5455 = vadd.f32 0.0, %v5454
        %v5456 = vpop.f32.mrb[0].mxu0
        %5457 = vmatprep.mubr.bf16.mxu0 0
        %5458 = vmatmul.mubr.bf16.gmra.mrb[0].mxu0 %v5348
        %v5459 = vpop.f32.mrb[0].mxu0
        %v5460 = vadd.f32 0.0, %v5459
        %v5461 = vpop.f32.mrb[0].mxu0
        %v5462 = vpop.f32.mrb[0].mxu0
        %v5463 = vadd.f32 0.0, %v5462
        %v5464 = vpop.f32.mrb[0].mxu0
        %5465 = vmatprep.mubr.bf16.mxu0 0
        %5466 = vmatmul.mubr.bf16.gmra.mrb[0].mxu0 %v5351
        %v5467 = vpop.f32.mrb[0].mxu0
        %v5468 = vadd.f32 0.0, %v5467
        %v5469 = vpop.f32.mrb[0].mxu0
        %v5470 = vpop.f32.mrb[0].mxu0
        %v5471 = vadd.f32 0.0, %v5470
        %v5472 = vpop.f32.mrb[0].mxu0
        %5473 = vmatprep.mubr.bf16.mxu0 0
        %5474 = vmatmul.mubr.bf16.gmra.mrb[0].mxu0 %v5354
        %v5475 = vpop.f32.mrb[0].mxu0
        %v5476 = vadd.f32 0.0, %v5475
        %v5477 = vpop.f32.mrb[0].mxu0
        %v5478 = vpop.f32.mrb[0].mxu0
        %v5479 = vadd.f32 0.0, %v5478
        %v5480 = vpop.f32.mrb[0].mxu0
        %5481 = vmatprep.mubr.bf16.mxu0 0
        %5482 = vmatmul.mubr.bf16.gmra.mrb[0].mxu0 %v5357
        %v5483 = vpop.f32.mrb[0].mxu0
        %v5484 = vadd.f32 0.0, %v5483
        %v5485 = vpop.f32.mrb[0].mxu0
        %v5486 = vpop.f32.mrb[0].mxu0
        %v5487 = vadd.f32 0.0, %v5486
        %v5488 = vpop.f32.mrb[0].mxu0
        %5489 = vmatprep.mubr.bf16.mxu0 0
        %5490 = vmatmul.mubr.bf16.gmra.mrb[0].mxu0 %v5360
        %v5491 = vpop.f32.mrb[0].mxu0
        %v5492 = vadd.f32 0.0, %v5491
        %v5493 = vpop.f32.mrb[0].mxu0
        %v5494 = vpop.f32.mrb[0].mxu0
        %v5495 = vadd.f32 0.0, %v5494
        %v5496 = vpop.f32.mrb[0].mxu0
        %5497 = vmatprep.mubr.bf16.mxu0 0
        %5498 = vmatmul.mubr.bf16.gmra.mrb[0].mxu0 %v5363
        %v5499 = vpop.f32.mrb[0].mxu0
        %v5500 = vadd.f32 0.0, %v5499
        %v5501 = vpop.f32.mrb[0].mxu0
        %v5502 = vpop.f32.mrb[0].mxu0
        %v5503 = vadd.f32 0.0, %v5502
        %v5504 = vpop.f32.mrb[0].mxu0
        %5505 = vmatprep.mubr.bf16.mxu0 0
        %5506 = vmatmul.mubr.bf16.gmra.mrb[0].mxu0 %v5366
        %v5507 = vpop.f32.mrb[0].mxu0
        %v5508 = vadd.f32 0.0, %v5507
        %v5509 = vpop.f32.mrb[0].mxu0
        %v5510 = vpop.f32.mrb[0].mxu0
        %v5511 = vadd.f32 0.0, %v5510
        %v5512 = vpop.f32.mrb[0].mxu0
        %5513 = vmatprep.mubr.bf16.mxu0 0
        %5514 = vmatmul.mubr.bf16.gmra.mrb[0].mxu0 %v5369
        %v5515 = vpop.f32.mrb[0].mxu0
        %v5516 = vadd.f32 0.0, %v5515
        %v5517 = vpop.f32.mrb[0].mxu0
        %v5518 = vpop.f32.mrb[0].mxu0
        %v5519 = vadd.f32 0.0, %v5518
        %v5520 = vpop.f32.mrb[0].mxu0
        %5521 = vmatprep.mubr.bf16.mxu0 0
        %5522 = vmatmul.mubr.bf16.gmra.mrb[0].mxu0 %v5372
        %v5523 = vpop.f32.mrb[0].mxu0
        %v5524 = vadd.f32 0.0, %v5523
        %v5525 = vpop.f32.mrb[0].mxu0
        %v5526 = vpop.f32.mrb[0].mxu0
        %v5527 = vadd.f32 0.0, %v5526
        %v5528 = vpop.f32.mrb[0].mxu0
        %5529 = vmatprep.mubr.bf16.mxu0 0
        %5530 = vmatmul.mubr.bf16.gmra.mrb[0].mxu0 %v5375
        %v5531 = vpop.f32.mrb[0].mxu0
        %v5532 = vadd.f32 0.0, %v5531
        %v5533 = vpop.f32.mrb[0].mxu0
        %v5534 = vpop.f32.mrb[0].mxu0
        %v5535 = vadd.f32 0.0, %v5534
        %v5536 = vpop.f32.mrb[0].mxu0
        %5537 = vdwg.mxu0
        %v5538 = vadd.f32 %v5040, %v5412
        %v5539 = vadd.f32 %v5041, %v5415
        %v5540 = vadd.f32 %v5042, %v5420
        %v5541 = vadd.f32 %v5043, %v5423
        %v5542 = vadd.f32 %v5044, %v5428
        %v5543 = vadd.f32 %v5045, %v5431
        %v5544 = vadd.f32 %v5046, %v5436
        %v5545 = vadd.f32 %v5047, %v5439
        %v5546 = vadd.f32 %v5048, %v5444
        %v5547 = vadd.f32 %v5049, %v5447
        %v5548 = vadd.f32 %v5050, %v5452
        %v5549 = vadd.f32 %v5051, %v5455
        %v5550 = vadd.f32 %v5052, %v5460
        %v5551 = vadd.f32 %v5053, %v5463
        %v5552 = vadd.f32 %v5054, %v5468
        %v5553 = vadd.f32 %v5055, %v5471
        %v5554 = vadd.f32 %v5056, %v5476
        %v5555 = vadd.f32 %v5057, %v5479
        %v5556 = vadd.f32 %v5058, %v5484
        %v5557 = vadd.f32 %v5059, %v5487
        %v5558 = vadd.f32 %v5060, %v5492
        %v5559 = vadd.f32 %v5061, %v5495
        %v5560 = vadd.f32 %v5062, %v5500
        %v5561 = vadd.f32 %v5063, %v5503
        %v5562 = vadd.f32 %v5064, %v5508
        %v5563 = vadd.f32 %v5065, %v5511
        %v5564 = vadd.f32 %v5066, %v5516
        %v5565 = vadd.f32 %v5067, %v5519
        %v5566 = vadd.f32 %v5068, %v5524
        %v5567 = vadd.f32 %v5069, %v5527
        %v5568 = vadd.f32 %v5070, %v5532
        %v5569 = vadd.f32 %v5071, %v5535
        %v5570 = vadd.f32 %v5538, %v5539
        %v5571 = vadd.f32 %v5570, %v5540
        %v5572 = vadd.f32 %v5571, %v5541
        %v5573 = vadd.f32 %v5572, %v5542
        %v5574 = vadd.f32 %v5573, %v5543
        %v5575 = vadd.f32 %v5574, %v5544
        %v5576 = vadd.f32 %v5575, %v5545
        %v5577 = vadd.f32 %v5576, %v5546
        %v5578 = vadd.f32 %v5577, %v5547
        %v5579 = vadd.f32 %v5578, %v5548
        %v5580 = vadd.f32 %v5579, %v5549
        %v5581 = vadd.f32 %v5580, %v5550
        %v5582 = vadd.f32 %v5581, %v5551
        %v5583 = vadd.f32 %v5582, %v5552
        %v5584 = vadd.f32 %v5583, %v5553
        %v5585 = vadd.f32 %v5584, %v5554
        %v5586 = vadd.f32 %v5585, %v5555
        %v5587 = vadd.f32 %v5586, %v5556
        %v5588 = vadd.f32 %v5587, %v5557
        %v5589 = vadd.f32 %v5588, %v5558
        %v5590 = vadd.f32 %v5589, %v5559
        %v5591 = vadd.f32 %v5590, %v5560
        %v5592 = vadd.f32 %v5591, %v5561
        %v5593 = vadd.f32 %v5592, %v5562
        %v5594 = vadd.f32 %v5593, %v5563
        %v5595 = vadd.f32 %v5594, %v5564
        %v5596 = vadd.f32 %v5595, %v5565
        %v5597 = vadd.f32 %v5596, %v5566
        %v5598 = vadd.f32 %v5597, %v5567
        %v5599 = vadd.f32 %v5598, %v5568
        %v5600 = vadd.f32 %v5599, %v5569
        %v5601 = vrot.slane %v5600, 4
        %v5602 = vadd.f32 %v5600, %v5601
        %v5603 = vrot.slane %v5602, 2
        %v5604 = vadd.f32 %v5602, %v5603
        %v5605 = vrot.slane %v5604, 1
        %v5606 = vadd.f32 %v5604, %v5605
        %v5607 = vmul.f32 %v5538, %v5538
        %v5608 = vmul.f32 %v5539, %v5539
        %v5609 = vmul.f32 %v5540, %v5540
        %v5610 = vmul.f32 %v5541, %v5541
        %v5611 = vmul.f32 %v5542, %v5542
        %v5612 = vmul.f32 %v5543, %v5543
        %v5613 = vmul.f32 %v5544, %v5544
        %v5614 = vmul.f32 %v5545, %v5545
        %v5615 = vmul.f32 %v5546, %v5546
        %v5616 = vmul.f32 %v5547, %v5547
        %v5617 = vmul.f32 %v5548, %v5548
        %v5618 = vmul.f32 %v5549, %v5549
        %v5619 = vmul.f32 %v5550, %v5550
        %v5620 = vmul.f32 %v5551, %v5551
        %v5621 = vmul.f32 %v5552, %v5552
        %v5622 = vmul.f32 %v5553, %v5553
        %v5623 = vmul.f32 %v5554, %v5554
        %v5624 = vmul.f32 %v5555, %v5555
        %v5625 = vmul.f32 %v5556, %v5556
        %v5626 = vmul.f32 %v5557, %v5557
        %v5627 = vmul.f32 %v5558, %v5558
        %v5628 = vmul.f32 %v5559, %v5559
        %v5629 = vmul.f32 %v5560, %v5560
        %v5630 = vmul.f32 %v5561, %v5561
        %v5631 = vmul.f32 %v5562, %v5562
        %v5632 = vmul.f32 %v5563, %v5563
        %v5633 = vmul.f32 %v5564, %v5564
        %v5634 = vmul.f32 %v5565, %v5565
        %v5635 = vmul.f32 %v5566, %v5566
        %v5636 = vmul.f32 %v5567, %v5567
        %v5637 = vmul.f32 %v5568, %v5568
        %v5638 = vmul.f32 %v5569, %v5569
        %v5639 = vadd.f32 %v5607, %v5608
        %v5640 = vadd.f32 %v5639, %v5609
        %v5641 = vadd.f32 %v5640, %v5610
        %v5642 = vadd.f32 %v5641, %v5611
        %v5643 = vadd.f32 %v5642, %v5612
        %v5644 = vadd.f32 %v5643, %v5613
        %v5645 = vadd.f32 %v5644, %v5614
        %v5646 = vadd.f32 %v5645, %v5615
        %v5647 = vadd.f32 %v5646, %v5616
        %v5648 = vadd.f32 %v5647, %v5617
        %v5649 = vadd.f32 %v5648, %v5618
        %v5650 = vadd.f32 %v5649, %v5619
        %v5651 = vadd.f32 %v5650, %v5620
        %v5652 = vadd.f32 %v5651, %v5621
        %v5653 = vadd.f32 %v5652, %v5622
        %v5654 = vadd.f32 %v5653, %v5623
        %v5655 = vadd.f32 %v5654, %v5624
        %v5656 = vadd.f32 %v5655, %v5625
        %v5657 = vadd.f32 %v5656, %v5626
        %v5658 = vadd.f32 %v5657, %v5627
        %v5659 = vadd.f32 %v5658, %v5628
        %v5660 = vadd.f32 %v5659, %v5629
        %v5661 = vadd.f32 %v5660, %v5630
        %v5662 = vadd.f32 %v5661, %v5631
        %v5663 = vadd.f32 %v5662, %v5632
        %v5664 = vadd.f32 %v5663, %v5633
        %v5665 = vadd.f32 %v5664, %v5634
        %v5666 = vadd.f32 %v5665, %v5635
        %v5667 = vadd.f32 %v5666, %v5636
        %v5668 = vadd.f32 %v5667, %v5637
        %v5669 = vadd.f32 %v5668, %v5638
        %v5670 = vrot.slane %v5669, 4
        %v5671 = vadd.f32 %v5669, %v5670
        %v5672 = vrot.slane %v5671, 2
        %v5673 = vadd.f32 %v5671, %v5672
        %v5674 = vrot.slane %v5673, 1
        %v5675 = vadd.f32 %v5673, %v5674
        %v5676 = vld [vmem:[%s2] sm:$0xff]
        %v5677 = vld [vmem:[%s2 + $0x8] sm:$0xff]
        %v5678 = vld [vmem:[%s2 + $0x10] sm:$0xff]
        %v5679 = vld [vmem:[%s2 + $0x18] sm:$0xff]
        %v5680 = vld [vmem:[%s2 + $0x20] sm:$0xff]
        %v5681 = vld [vmem:[%s2 + $0x28] sm:$0xff]
        %v5682 = vld [vmem:[%s2 + $0x30] sm:$0xff]
        %v5683 = vld [vmem:[%s2 + $0x38] sm:$0xff]
        %v5684 = vld [vmem:[%s2 + $0x40] sm:$0xff]
        %v5685 = vld [vmem:[%s2 + $0x48] sm:$0xff]
        %v5686 = vld [vmem:[%s2 + $0x50] sm:$0xff]
        %v5687 = vld [vmem:[%s2 + $0x58] sm:$0xff]
        %v5688 = vld [vmem:[%s2 + $0x60] sm:$0xff]
        %v5689 = vld [vmem:[%s2 + $0x68] sm:$0xff]
        %v5690 = vld [vmem:[%s2 + $0x70] sm:$0xff]
        %v5691 = vld [vmem:[%s2 + $0x78] sm:$0xff]
        %5692 = vmatprep.subr.mxu0 0.0
        %v5693 = vand.u32 %v5676, 4294901760
        %5694 = vmatpush1.msra.mxu0 %v5693
        %5695 = vmatprep.subr.mxu0 0.0
        %v5696 = vand.u32 %v5677, 4294901760
        %5697 = vmatpush1.msra.mxu0 %v5696
        %5698 = vmatprep.subr.mxu0 0.0
        %v5699 = vand.u32 %v5678, 4294901760
        %5700 = vmatpush1.msra.mxu0 %v5699
        %5701 = vmatprep.subr.mxu0 0.0
        %v5702 = vand.u32 %v5679, 4294901760
        %5703 = vmatpush1.msra.mxu0 %v5702
        %5704 = vmatprep.subr.mxu0 0.0
        %v5705 = vand.u32 %v5680, 4294901760
        %5706 = vmatpush1.msra.mxu0 %v5705
        %5707 = vmatprep.subr.mxu0 0.0
        %v5708 = vand.u32 %v5681, 4294901760
        %5709 = vmatpush1.msra.mxu0 %v5708
        %5710 = vmatprep.subr.mxu0 0.0
        %v5711 = vand.u32 %v5682, 4294901760
        %5712 = vmatpush1.msra.mxu0 %v5711
        %5713 = vmatprep.subr.mxu0 0.0
        %v5714 = vand.u32 %v5683, 4294901760
        %5715 = vmatpush1.msra.mxu0 %v5714
        %5716 = vmatprep.subr.mxu0 0.0
        %v5717 = vand.u32 %v5684, 4294901760
        %5718 = vmatpush1.msra.mxu0 %v5717
        %5719 = vmatprep.subr.mxu0 0.0
        %v5720 = vand.u32 %v5685, 4294901760
        %5721 = vmatpush1.msra.mxu0 %v5720
        %5722 = vmatprep.subr.mxu0 0.0
        %v5723 = vand.u32 %v5686, 4294901760
        %5724 = vmatpush1.msra.mxu0 %v5723
        %5725 = vmatprep.subr.mxu0 0.0
        %v5726 = vand.u32 %v5687, 4294901760
        %5727 = vmatpush1.msra.mxu0 %v5726
        %5728 = vmatprep.subr.mxu0 0.0
        %v5729 = vand.u32 %v5688, 4294901760
        %5730 = vmatpush1.msra.mxu0 %v5729
        %5731 = vmatprep.subr.mxu0 0.0
        %v5732 = vand.u32 %v5689, 4294901760
        %5733 = vmatpush1.msra.mxu0 %v5732
        %5734 = vmatprep.subr.mxu0 0.0
        %v5735 = vand.u32 %v5690, 4294901760
        %5736 = vmatpush1.msra.mxu0 %v5735
        %5737 = vmatprep.subr.mxu0 0.0
        %v5738 = vand.u32 %v5691, 4294901760
        %5739 = vmatpush1.msra.mxu0 %v5738
        %5740 = vmatprep.subr.mxu0 0.0
        %5741 = vmatpush1.msra.mxu0 0.0
        %5742 = vmatprep.subr.mxu0 0.0
        %5743 = vmatpush1.msra.mxu0 0.0
        %5744 = vmatprep.subr.mxu0 0.0
        %5745 = vmatpush1.msra.mxu0 0.0
        %5746 = vmatprep.subr.mxu0 0.0
        %5747 = vmatpush1.msra.mxu0 0.0
        %5748 = vmatprep.subr.mxu0 0.0
        %5749 = vmatpush1.msra.mxu0 0.0
        %5750 = vmatprep.subr.mxu0 0.0
        %5751 = vmatpush1.msra.mxu0 0.0
        %5752 = vmatprep.subr.mxu0 0.0
        %5753 = vmatpush1.msra.mxu0 0.0
        %5754 = vmatprep.subr.mxu0 0.0
        %5755 = vmatpush1.msra.mxu0 0.0
        %5756 = vmatprep.subr.mxu0 0.0
        %5757 = vmatpush1.msra.mxu0 0.0
        %5758 = vmatprep.subr.mxu0 0.0
        %5759 = vmatpush1.msra.mxu0 0.0
        %5760 = vmatprep.subr.mxu0 0.0
        %5761 = vmatpush1.msra.mxu0 0.0
        %5762 = vmatprep.subr.mxu0 0.0
        %5763 = vmatpush1.msra.mxu0 0.0
        %5764 = vmatprep.subr.mxu0 0.0
        %5765 = vmatpush1.msra.mxu0 0.0
        %5766 = vmatprep.subr.mxu0 0.0
        %5767 = vmatpush1.msra.mxu0 0.0
        %5768 = vmatprep.subr.mxu0 0.0
        %5769 = vmatpush1.msra.mxu0 0.0
        %5770 = vmatprep.subr.mxu0 0.0
        %5771 = vmatpush1.msra.mxu0 0.0
        %5772 = vmatprep.mubr.f32.mxu0 0.0
        %v5773 = vand.u32 %v5606, 4294901760
        %v5774 = vsub.f32 %v5606, %v5773
        %v5775 = vand.u32 %v5774, 4294901760
        %v5776 = vsub.f32 %v5774, %v5775
        %v5777 = vand.u32 %v5776, 4294901760
        %5778 = vmatmul.mubr.f32.gmra.mrb[0].mxu0 %v5777
        %v5779 = vpop.f32.mrb[0].mxu0
        %v5780 = vadd.f32 0.0, %v5779
        %v5781 = vpop.f32.mrb[0].mxu0
        %5782 = vdwg.mxu0
        %5783 = vmatprep.subr.mxu0 0.0
        %v5784 = vand.u32 %v5676, 4294901760
        %v5785 = vsub.f32 %v5676, %v5784
        %v5786 = vand.u32 %v5785, 4294901760
        %v5787 = vsub.f32 %v5785, %v5786
        %v5788 = vand.u32 %v5787, 4294901760
        %5789 = vmatpush1.msra.mxu0 %v5788
        %5790 = vmatprep.subr.mxu0 0.0
        %v5791 = vand.u32 %v5677, 4294901760
        %v5792 = vsub.f32 %v5677, %v5791
        %v5793 = vand.u32 %v5792, 4294901760
        %v5794 = vsub.f32 %v5792, %v5793
        %v5795 = vand.u32 %v5794, 4294901760
        %5796 = vmatpush1.msra.mxu0 %v5795
        %5797 = vmatprep.subr.mxu0 0.0
        %v5798 = vand.u32 %v5678, 4294901760
        %v5799 = vsub.f32 %v5678, %v5798
        %v5800 = vand.u32 %v5799, 4294901760
        %v5801 = vsub.f32 %v5799, %v5800
        %v5802 = vand.u32 %v5801, 4294901760
        %5803 = vmatpush1.msra.mxu0 %v5802
        %5804 = vmatprep.subr.mxu0 0.0
        %v5805 = vand.u32 %v5679, 4294901760
        %v5806 = vsub.f32 %v5679, %v5805
        %v5807 = vand.u32 %v5806, 4294901760
        %v5808 = vsub.f32 %v5806, %v5807
        %v5809 = vand.u32 %v5808, 4294901760
        %5810 = vmatpush1.msra.mxu0 %v5809
        %5811 = vmatprep.subr.mxu0 0.0
        %v5812 = vand.u32 %v5680, 4294901760
        %v5813 = vsub.f32 %v5680, %v5812
        %v5814 = vand.u32 %v5813, 4294901760
        %v5815 = vsub.f32 %v5813, %v5814
        %v5816 = vand.u32 %v5815, 4294901760
        %5817 = vmatpush1.msra.mxu0 %v5816
        %5818 = vmatprep.subr.mxu0 0.0
        %v5819 = vand.u32 %v5681, 4294901760
        %v5820 = vsub.f32 %v5681, %v5819
        %v5821 = vand.u32 %v5820, 4294901760
        %v5822 = vsub.f32 %v5820, %v5821
        %v5823 = vand.u32 %v5822, 4294901760
        %5824 = vmatpush1.msra.mxu0 %v5823
        %5825 = vmatprep.subr.mxu0 0.0
        %v5826 = vand.u32 %v5682, 4294901760
        %v5827 = vsub.f32 %v5682, %v5826
        %v5828 = vand.u32 %v5827, 4294901760
        %v5829 = vsub.f32 %v5827, %v5828
        %v5830 = vand.u32 %v5829, 4294901760
        %5831 = vmatpush1.msra.mxu0 %v5830
        %5832 = vmatprep.subr.mxu0 0.0
        %v5833 = vand.u32 %v5683, 4294901760
        %v5834 = vsub.f32 %v5683, %v5833
        %v5835 = vand.u32 %v5834, 4294901760
        %v5836 = vsub.f32 %v5834, %v5835
        %v5837 = vand.u32 %v5836, 4294901760
        %5838 = vmatpush1.msra.mxu0 %v5837
        %5839 = vmatprep.subr.mxu0 0.0
        %v5840 = vand.u32 %v5684, 4294901760
        %v5841 = vsub.f32 %v5684, %v5840
        %v5842 = vand.u32 %v5841, 4294901760
        %v5843 = vsub.f32 %v5841, %v5842
        %v5844 = vand.u32 %v5843, 4294901760
        %5845 = vmatpush1.msra.mxu0 %v5844
        %5846 = vmatprep.subr.mxu0 0.0
        %v5847 = vand.u32 %v5685, 4294901760
        %v5848 = vsub.f32 %v5685, %v5847
        %v5849 = vand.u32 %v5848, 4294901760
        %v5850 = vsub.f32 %v5848, %v5849
        %v5851 = vand.u32 %v5850, 4294901760
        %5852 = vmatpush1.msra.mxu0 %v5851
        %5853 = vmatprep.subr.mxu0 0.0
        %v5854 = vand.u32 %v5686, 4294901760
        %v5855 = vsub.f32 %v5686, %v5854
        %v5856 = vand.u32 %v5855, 4294901760
        %v5857 = vsub.f32 %v5855, %v5856
        %v5858 = vand.u32 %v5857, 4294901760
        %5859 = vmatpush1.msra.mxu0 %v5858
        %5860 = vmatprep.subr.mxu0 0.0
        %v5861 = vand.u32 %v5687, 4294901760
        %v5862 = vsub.f32 %v5687, %v5861
        %v5863 = vand.u32 %v5862, 4294901760
        %v5864 = vsub.f32 %v5862, %v5863
        %v5865 = vand.u32 %v5864, 4294901760
        %5866 = vmatpush1.msra.mxu0 %v5865
        %5867 = vmatprep.subr.mxu0 0.0
        %v5868 = vand.u32 %v5688, 4294901760
        %v5869 = vsub.f32 %v5688, %v5868
        %v5870 = vand.u32 %v5869, 4294901760
        %v5871 = vsub.f32 %v5869, %v5870
        %v5872 = vand.u32 %v5871, 4294901760
        %5873 = vmatpush1.msra.mxu0 %v5872
        %5874 = vmatprep.subr.mxu0 0.0
        %v5875 = vand.u32 %v5689, 4294901760
        %v5876 = vsub.f32 %v5689, %v5875
        %v5877 = vand.u32 %v5876, 4294901760
        %v5878 = vsub.f32 %v5876, %v5877
        %v5879 = vand.u32 %v5878, 4294901760
        %5880 = vmatpush1.msra.mxu0 %v5879
        %5881 = vmatprep.subr.mxu0 0.0
        %v5882 = vand.u32 %v5690, 4294901760
        %v5883 = vsub.f32 %v5690, %v5882
        %v5884 = vand.u32 %v5883, 4294901760
        %v5885 = vsub.f32 %v5883, %v5884
        %v5886 = vand.u32 %v5885, 4294901760
        %5887 = vmatpush1.msra.mxu0 %v5886
        %5888 = vmatprep.subr.mxu0 0.0
        %v5889 = vand.u32 %v5691, 4294901760
        %v5890 = vsub.f32 %v5691, %v5889
        %v5891 = vand.u32 %v5890, 4294901760
        %v5892 = vsub.f32 %v5890, %v5891
        %v5893 = vand.u32 %v5892, 4294901760
        %5894 = vmatpush1.msra.mxu0 %v5893
        %5895 = vmatprep.subr.mxu0 0.0
        %5896 = vmatpush1.msra.mxu0 0.0
        %5897 = vmatprep.subr.mxu0 0.0
        %5898 = vmatpush1.msra.mxu0 0.0
        %5899 = vmatprep.subr.mxu0 0.0
        %5900 = vmatpush1.msra.mxu0 0.0
        %5901 = vmatprep.subr.mxu0 0.0
        %5902 = vmatpush1.msra.mxu0 0.0
        %5903 = vmatprep.subr.mxu0 0.0
        %5904 = vmatpush1.msra.mxu0 0.0
        %5905 = vmatprep.subr.mxu0 0.0
        %5906 = vmatpush1.msra.mxu0 0.0
        %5907 = vmatprep.subr.mxu0 0.0
        %5908 = vmatpush1.msra.mxu0 0.0
        %5909 = vmatprep.subr.mxu0 0.0
        %5910 = vmatpush1.msra.mxu0 0.0
        %5911 = vmatprep.subr.mxu0 0.0
        %5912 = vmatpush1.msra.mxu0 0.0
        %5913 = vmatprep.subr.mxu0 0.0
        %5914 = vmatpush1.msra.mxu0 0.0
        %5915 = vmatprep.subr.mxu0 0.0
        %5916 = vmatpush1.msra.mxu0 0.0
        %5917 = vmatprep.subr.mxu0 0.0
        %5918 = vmatpush1.msra.mxu0 0.0
        %5919 = vmatprep.subr.mxu0 0.0
        %5920 = vmatpush1.msra.mxu0 0.0
        %5921 = vmatprep.subr.mxu0 0.0
        %5922 = vmatpush1.msra.mxu0 0.0
        %5923 = vmatprep.subr.mxu0 0.0
        %5924 = vmatpush1.msra.mxu0 0.0
        %5925 = vmatprep.subr.mxu0 0.0
        %5926 = vmatpush1.msra.mxu0 0.0
        %5927 = vmatprep.mubr.f32.mxu0 0.0
        %v5928 = vand.u32 %v5606, 4294901760
        %5929 = vmatmul.mubr.f32.gmra.mrb[0].mxu0 %v5928
        %v5930 = vpop.f32.mrb[0].mxu0
        %v5931 = vadd.f32 %v5780, %v5930
        %v5932 = vpop.f32.mrb[0].mxu0
        %5933 = vdwg.mxu0
        %5934 = vmatprep.subr.mxu0 0.0
        %v5935 = vand.u32 %v5676, 4294901760
        %v5936 = vsub.f32 %v5676, %v5935
        %5937 = vmatpush1.msra.mxu0 %v5936
        %5938 = vmatprep.subr.mxu0 0.0
        %v5939 = vand.u32 %v5677, 4294901760
        %v5940 = vsub.f32 %v5677, %v5939
        %5941 = vmatpush1.msra.mxu0 %v5940
        %5942 = vmatprep.subr.mxu0 0.0
        %v5943 = vand.u32 %v5678, 4294901760
        %v5944 = vsub.f32 %v5678, %v5943
        %5945 = vmatpush1.msra.mxu0 %v5944
        %5946 = vmatprep.subr.mxu0 0.0
        %v5947 = vand.u32 %v5679, 4294901760
        %v5948 = vsub.f32 %v5679, %v5947
        %5949 = vmatpush1.msra.mxu0 %v5948
        %5950 = vmatprep.subr.mxu0 0.0
        %v5951 = vand.u32 %v5680, 4294901760
        %v5952 = vsub.f32 %v5680, %v5951
        %5953 = vmatpush1.msra.mxu0 %v5952
        %5954 = vmatprep.subr.mxu0 0.0
        %v5955 = vand.u32 %v5681, 4294901760
        %v5956 = vsub.f32 %v5681, %v5955
        %5957 = vmatpush1.msra.mxu0 %v5956
        %5958 = vmatprep.subr.mxu0 0.0
        %v5959 = vand.u32 %v5682, 4294901760
        %v5960 = vsub.f32 %v5682, %v5959
        %5961 = vmatpush1.msra.mxu0 %v5960
        %5962 = vmatprep.subr.mxu0 0.0
        %v5963 = vand.u32 %v5683, 4294901760
        %v5964 = vsub.f32 %v5683, %v5963
        %5965 = vmatpush1.msra.mxu0 %v5964
        %5966 = vmatprep.subr.mxu0 0.0
        %v5967 = vand.u32 %v5684, 4294901760
        %v5968 = vsub.f32 %v5684, %v5967
        %5969 = vmatpush1.msra.mxu0 %v5968
        %5970 = vmatprep.subr.mxu0 0.0
        %v5971 = vand.u32 %v5685, 4294901760
        %v5972 = vsub.f32 %v5685, %v5971
        %5973 = vmatpush1.msra.mxu0 %v5972
        %5974 = vmatprep.subr.mxu0 0.0
        %v5975 = vand.u32 %v5686, 4294901760
        %v5976 = vsub.f32 %v5686, %v5975
        %5977 = vmatpush1.msra.mxu0 %v5976
        %5978 = vmatprep.subr.mxu0 0.0
        %v5979 = vand.u32 %v5687, 4294901760
        %v5980 = vsub.f32 %v5687, %v5979
        %5981 = vmatpush1.msra.mxu0 %v5980
        %5982 = vmatprep.subr.mxu0 0.0
        %v5983 = vand.u32 %v5688, 4294901760
        %v5984 = vsub.f32 %v5688, %v5983
        %5985 = vmatpush1.msra.mxu0 %v5984
        %5986 = vmatprep.subr.mxu0 0.0
        %v5987 = vand.u32 %v5689, 4294901760
        %v5988 = vsub.f32 %v5689, %v5987
        %5989 = vmatpush1.msra.mxu0 %v5988
        %5990 = vmatprep.subr.mxu0 0.0
        %v5991 = vand.u32 %v5690, 4294901760
        %v5992 = vsub.f32 %v5690, %v5991
        %5993 = vmatpush1.msra.mxu0 %v5992
        %5994 = vmatprep.subr.mxu0 0.0
        %v5995 = vand.u32 %v5691, 4294901760
        %v5996 = vsub.f32 %v5691, %v5995
        %5997 = vmatpush1.msra.mxu0 %v5996
        %5998 = vmatprep.subr.mxu0 0.0
        %5999 = vmatpush1.msra.mxu0 0.0
        %6000 = vmatprep.subr.mxu0 0.0
        %6001 = vmatpush1.msra.mxu0 0.0
        %6002 = vmatprep.subr.mxu0 0.0
        %6003 = vmatpush1.msra.mxu0 0.0
        %6004 = vmatprep.subr.mxu0 0.0
        %6005 = vmatpush1.msra.mxu0 0.0
        %6006 = vmatprep.subr.mxu0 0.0
        %6007 = vmatpush1.msra.mxu0 0.0
        %6008 = vmatprep.subr.mxu0 0.0
        %6009 = vmatpush1.msra.mxu0 0.0
        %6010 = vmatprep.subr.mxu0 0.0
        %6011 = vmatpush1.msra.mxu0 0.0
        %6012 = vmatprep.subr.mxu0 0.0
        %6013 = vmatpush1.msra.mxu0 0.0
        %6014 = vmatprep.subr.mxu0 0.0
        %6015 = vmatpush1.msra.mxu0 0.0
        %6016 = vmatprep.subr.mxu0 0.0
        %6017 = vmatpush1.msra.mxu0 0.0
        %6018 = vmatprep.subr.mxu0 0.0
        %6019 = vmatpush1.msra.mxu0 0.0
        %6020 = vmatprep.subr.mxu0 0.0
        %6021 = vmatpush1.msra.mxu0 0.0
        %6022 = vmatprep.subr.mxu0 0.0
        %6023 = vmatpush1.msra.mxu0 0.0
        %6024 = vmatprep.subr.mxu0 0.0
        %6025 = vmatpush1.msra.mxu0 0.0
        %6026 = vmatprep.subr.mxu0 0.0
        %6027 = vmatpush1.msra.mxu0 0.0
        %6028 = vmatprep.subr.mxu0 0.0
        %6029 = vmatpush1.msra.mxu0 0.0
        %6030 = vmatprep.mubr.f32.mxu0 0.0
        %v6031 = vand.u32 %v5606, 4294901760
        %v6032 = vsub.f32 %v5606, %v6031
        %6033 = vmatmul.mubr.f32.gmra.mrb[0].mxu0 %v6032
        %v6034 = vpop.f32.mrb[0].mxu0
        %v6035 = vadd.f32 %v5931, %v6034
        %v6036 = vpop.f32.mrb[0].mxu0
        %6037 = vdwg.mxu0
        %6038 = vmatprep.subr.mxu0 0.0
        %v6039 = vand.u32 %v5676, 4294901760
        %6040 = vmatpush1.msra.mxu0 %v6039
        %6041 = vmatprep.subr.mxu0 0.0
        %v6042 = vand.u32 %v5677, 4294901760
        %6043 = vmatpush1.msra.mxu0 %v6042
        %6044 = vmatprep.subr.mxu0 0.0
        %v6045 = vand.u32 %v5678, 4294901760
        %6046 = vmatpush1.msra.mxu0 %v6045
        %6047 = vmatprep.subr.mxu0 0.0
        %v6048 = vand.u32 %v5679, 4294901760
        %6049 = vmatpush1.msra.mxu0 %v6048
        %6050 = vmatprep.subr.mxu0 0.0
        %v6051 = vand.u32 %v5680, 4294901760
        %6052 = vmatpush1.msra.mxu0 %v6051
        %6053 = vmatprep.subr.mxu0 0.0
        %v6054 = vand.u32 %v5681, 4294901760
        %6055 = vmatpush1.msra.mxu0 %v6054
        %6056 = vmatprep.subr.mxu0 0.0
        %v6057 = vand.u32 %v5682, 4294901760
        %6058 = vmatpush1.msra.mxu0 %v6057
        %6059 = vmatprep.subr.mxu0 0.0
        %v6060 = vand.u32 %v5683, 4294901760
        %6061 = vmatpush1.msra.mxu0 %v6060
        %6062 = vmatprep.subr.mxu0 0.0
        %v6063 = vand.u32 %v5684, 4294901760
        %6064 = vmatpush1.msra.mxu0 %v6063
        %6065 = vmatprep.subr.mxu0 0.0
        %v6066 = vand.u32 %v5685, 4294901760
        %6067 = vmatpush1.msra.mxu0 %v6066
        %6068 = vmatprep.subr.mxu0 0.0
        %v6069 = vand.u32 %v5686, 4294901760
        %6070 = vmatpush1.msra.mxu0 %v6069
        %6071 = vmatprep.subr.mxu0 0.0
        %v6072 = vand.u32 %v5687, 4294901760
        %6073 = vmatpush1.msra.mxu0 %v6072
        %6074 = vmatprep.subr.mxu0 0.0
        %v6075 = vand.u32 %v5688, 4294901760
        %6076 = vmatpush1.msra.mxu0 %v6075
        %6077 = vmatprep.subr.mxu0 0.0
        %v6078 = vand.u32 %v5689, 4294901760
        %6079 = vmatpush1.msra.mxu0 %v6078
        %6080 = vmatprep.subr.mxu0 0.0
        %v6081 = vand.u32 %v5690, 4294901760
        %6082 = vmatpush1.msra.mxu0 %v6081
        %6083 = vmatprep.subr.mxu0 0.0
        %v6084 = vand.u32 %v5691, 4294901760
        %6085 = vmatpush1.msra.mxu0 %v6084
        %6086 = vmatprep.subr.mxu0 0.0
        %6087 = vmatpush1.msra.mxu0 0.0
        %6088 = vmatprep.subr.mxu0 0.0
        %6089 = vmatpush1.msra.mxu0 0.0
        %6090 = vmatprep.subr.mxu0 0.0
        %6091 = vmatpush1.msra.mxu0 0.0
        %6092 = vmatprep.subr.mxu0 0.0
        %6093 = vmatpush1.msra.mxu0 0.0
        %6094 = vmatprep.subr.mxu0 0.0
        %6095 = vmatpush1.msra.mxu0 0.0
        %6096 = vmatprep.subr.mxu0 0.0
        %6097 = vmatpush1.msra.mxu0 0.0
        %6098 = vmatprep.subr.mxu0 0.0
        %6099 = vmatpush1.msra.mxu0 0.0
        %6100 = vmatprep.subr.mxu0 0.0
        %6101 = vmatpush1.msra.mxu0 0.0
        %6102 = vmatprep.subr.mxu0 0.0
        %6103 = vmatpush1.msra.mxu0 0.0
        %6104 = vmatprep.subr.mxu0 0.0
        %6105 = vmatpush1.msra.mxu0 0.0
        %6106 = vmatprep.subr.mxu0 0.0
        %6107 = vmatpush1.msra.mxu0 0.0
        %6108 = vmatprep.subr.mxu0 0.0
        %6109 = vmatpush1.msra.mxu0 0.0
        %6110 = vmatprep.subr.mxu0 0.0
        %6111 = vmatpush1.msra.mxu0 0.0
        %6112 = vmatprep.subr.mxu0 0.0
        %6113 = vmatpush1.msra.mxu0 0.0
        %6114 = vmatprep.subr.mxu0 0.0
        %6115 = vmatpush1.msra.mxu0 0.0
        %6116 = vmatprep.subr.mxu0 0.0
        %6117 = vmatpush1.msra.mxu0 0.0
        %6118 = vmatprep.mubr.f32.mxu0 0.0
        %v6119 = vand.u32 %v5606, 4294901760
        %v6120 = vsub.f32 %v5606, %v6119
        %v6121 = vand.u32 %v6120, 4294901760
        %6122 = vmatmul.mubr.f32.gmra.mrb[0].mxu0 %v6121
        %v6123 = vpop.f32.mrb[0].mxu0
        %v6124 = vadd.f32 %v6035, %v6123
        %v6125 = vpop.f32.mrb[0].mxu0
        %6126 = vdwg.mxu0
        %6127 = vmatprep.subr.mxu0 0.0
        %v6128 = vand.u32 %v5676, 4294901760
        %v6129 = vsub.f32 %v5676, %v6128
        %v6130 = vand.u32 %v6129, 4294901760
        %6131 = vmatpush1.msra.mxu0 %v6130
        %6132 = vmatprep.subr.mxu0 0.0
        %v6133 = vand.u32 %v5677, 4294901760
        %v6134 = vsub.f32 %v5677, %v6133
        %v6135 = vand.u32 %v6134, 4294901760
        %6136 = vmatpush1.msra.mxu0 %v6135
        %6137 = vmatprep.subr.mxu0 0.0
        %v6138 = vand.u32 %v5678, 4294901760
        %v6139 = vsub.f32 %v5678, %v6138
        %v6140 = vand.u32 %v6139, 4294901760
        %6141 = vmatpush1.msra.mxu0 %v6140
        %6142 = vmatprep.subr.mxu0 0.0
        %v6143 = vand.u32 %v5679, 4294901760
        %v6144 = vsub.f32 %v5679, %v6143
        %v6145 = vand.u32 %v6144, 4294901760
        %6146 = vmatpush1.msra.mxu0 %v6145
        %6147 = vmatprep.subr.mxu0 0.0
        %v6148 = vand.u32 %v5680, 4294901760
        %v6149 = vsub.f32 %v5680, %v6148
        %v6150 = vand.u32 %v6149, 4294901760
        %6151 = vmatpush1.msra.mxu0 %v6150
        %6152 = vmatprep.subr.mxu0 0.0
        %v6153 = vand.u32 %v5681, 4294901760
        %v6154 = vsub.f32 %v5681, %v6153
        %v6155 = vand.u32 %v6154, 4294901760
        %6156 = vmatpush1.msra.mxu0 %v6155
        %6157 = vmatprep.subr.mxu0 0.0
        %v6158 = vand.u32 %v5682, 4294901760
        %v6159 = vsub.f32 %v5682, %v6158
        %v6160 = vand.u32 %v6159, 4294901760
        %6161 = vmatpush1.msra.mxu0 %v6160
        %6162 = vmatprep.subr.mxu0 0.0
        %v6163 = vand.u32 %v5683, 4294901760
        %v6164 = vsub.f32 %v5683, %v6163
        %v6165 = vand.u32 %v6164, 4294901760
        %6166 = vmatpush1.msra.mxu0 %v6165
        %6167 = vmatprep.subr.mxu0 0.0
        %v6168 = vand.u32 %v5684, 4294901760
        %v6169 = vsub.f32 %v5684, %v6168
        %v6170 = vand.u32 %v6169, 4294901760
        %6171 = vmatpush1.msra.mxu0 %v6170
        %6172 = vmatprep.subr.mxu0 0.0
        %v6173 = vand.u32 %v5685, 4294901760
        %v6174 = vsub.f32 %v5685, %v6173
        %v6175 = vand.u32 %v6174, 4294901760
        %6176 = vmatpush1.msra.mxu0 %v6175
        %6177 = vmatprep.subr.mxu0 0.0
        %v6178 = vand.u32 %v5686, 4294901760
        %v6179 = vsub.f32 %v5686, %v6178
        %v6180 = vand.u32 %v6179, 4294901760
        %6181 = vmatpush1.msra.mxu0 %v6180
        %6182 = vmatprep.subr.mxu0 0.0
        %v6183 = vand.u32 %v5687, 4294901760
        %v6184 = vsub.f32 %v5687, %v6183
        %v6185 = vand.u32 %v6184, 4294901760
        %6186 = vmatpush1.msra.mxu0 %v6185
        %6187 = vmatprep.subr.mxu0 0.0
        %v6188 = vand.u32 %v5688, 4294901760
        %v6189 = vsub.f32 %v5688, %v6188
        %v6190 = vand.u32 %v6189, 4294901760
        %6191 = vmatpush1.msra.mxu0 %v6190
        %6192 = vmatprep.subr.mxu0 0.0
        %v6193 = vand.u32 %v5689, 4294901760
        %v6194 = vsub.f32 %v5689, %v6193
        %v6195 = vand.u32 %v6194, 4294901760
        %6196 = vmatpush1.msra.mxu0 %v6195
        %6197 = vmatprep.subr.mxu0 0.0
        %v6198 = vand.u32 %v5690, 4294901760
        %v6199 = vsub.f32 %v5690, %v6198
        %v6200 = vand.u32 %v6199, 4294901760
        %6201 = vmatpush1.msra.mxu0 %v6200
        %6202 = vmatprep.subr.mxu0 0.0
        %v6203 = vand.u32 %v5691, 4294901760
        %v6204 = vsub.f32 %v5691, %v6203
        %v6205 = vand.u32 %v6204, 4294901760
        %6206 = vmatpush1.msra.mxu0 %v6205
        %6207 = vmatprep.subr.mxu0 0.0
        %6208 = vmatpush1.msra.mxu0 0.0
        %6209 = vmatprep.subr.mxu0 0.0
        %6210 = vmatpush1.msra.mxu0 0.0
        %6211 = vmatprep.subr.mxu0 0.0
        %6212 = vmatpush1.msra.mxu0 0.0
        %6213 = vmatprep.subr.mxu0 0.0
        %6214 = vmatpush1.msra.mxu0 0.0
        %6215 = vmatprep.subr.mxu0 0.0
        %6216 = vmatpush1.msra.mxu0 0.0
        %6217 = vmatprep.subr.mxu0 0.0
        %6218 = vmatpush1.msra.mxu0 0.0
        %6219 = vmatprep.subr.mxu0 0.0
        %6220 = vmatpush1.msra.mxu0 0.0
        %6221 = vmatprep.subr.mxu0 0.0
        %6222 = vmatpush1.msra.mxu0 0.0
        %6223 = vmatprep.subr.mxu0 0.0
        %6224 = vmatpush1.msra.mxu0 0.0
        %6225 = vmatprep.subr.mxu0 0.0
        %6226 = vmatpush1.msra.mxu0 0.0
        %6227 = vmatprep.subr.mxu0 0.0
        %6228 = vmatpush1.msra.mxu0 0.0
        %6229 = vmatprep.subr.mxu0 0.0
        %6230 = vmatpush1.msra.mxu0 0.0
        %6231 = vmatprep.subr.mxu0 0.0
        %6232 = vmatpush1.msra.mxu0 0.0
        %6233 = vmatprep.subr.mxu0 0.0
        %6234 = vmatpush1.msra.mxu0 0.0
        %6235 = vmatprep.subr.mxu0 0.0
        %6236 = vmatpush1.msra.mxu0 0.0
        %6237 = vmatprep.subr.mxu0 0.0
        %6238 = vmatpush1.msra.mxu0 0.0
        %6239 = vmatprep.mubr.f32.mxu0 0.0
        %v6240 = vand.u32 %v5606, 4294901760
        %6241 = vmatmul.mubr.f32.gmra.mrb[0].mxu0 %v6240
        %v6242 = vpop.f32.mrb[0].mxu0
        %v6243 = vadd.f32 %v6124, %v6242
        %v6244 = vpop.f32.mrb[0].mxu0
        %6245 = vdwg.mxu0
        %6246 = vmatprep.subr.mxu0 0.0
        %v6247 = vand.u32 %v5676, 4294901760
        %6248 = vmatpush1.msra.mxu0 %v6247
        %6249 = vmatprep.subr.mxu0 0.0
        %v6250 = vand.u32 %v5677, 4294901760
        %6251 = vmatpush1.msra.mxu0 %v6250
        %6252 = vmatprep.subr.mxu0 0.0
        %v6253 = vand.u32 %v5678, 4294901760
        %6254 = vmatpush1.msra.mxu0 %v6253
        %6255 = vmatprep.subr.mxu0 0.0
        %v6256 = vand.u32 %v5679, 4294901760
        %6257 = vmatpush1.msra.mxu0 %v6256
        %6258 = vmatprep.subr.mxu0 0.0
        %v6259 = vand.u32 %v5680, 4294901760
        %6260 = vmatpush1.msra.mxu0 %v6259
        %6261 = vmatprep.subr.mxu0 0.0
        %v6262 = vand.u32 %v5681, 4294901760
        %6263 = vmatpush1.msra.mxu0 %v6262
        %6264 = vmatprep.subr.mxu0 0.0
        %v6265 = vand.u32 %v5682, 4294901760
        %6266 = vmatpush1.msra.mxu0 %v6265
        %6267 = vmatprep.subr.mxu0 0.0
        %v6268 = vand.u32 %v5683, 4294901760
        %6269 = vmatpush1.msra.mxu0 %v6268
        %6270 = vmatprep.subr.mxu0 0.0
        %v6271 = vand.u32 %v5684, 4294901760
        %6272 = vmatpush1.msra.mxu0 %v6271
        %6273 = vmatprep.subr.mxu0 0.0
        %v6274 = vand.u32 %v5685, 4294901760
        %6275 = vmatpush1.msra.mxu0 %v6274
        %6276 = vmatprep.subr.mxu0 0.0
        %v6277 = vand.u32 %v5686, 4294901760
        %6278 = vmatpush1.msra.mxu0 %v6277
        %6279 = vmatprep.subr.mxu0 0.0
        %v6280 = vand.u32 %v5687, 4294901760
        %6281 = vmatpush1.msra.mxu0 %v6280
        %6282 = vmatprep.subr.mxu0 0.0
        %v6283 = vand.u32 %v5688, 4294901760
        %6284 = vmatpush1.msra.mxu0 %v6283
        %6285 = vmatprep.subr.mxu0 0.0
        %v6286 = vand.u32 %v5689, 4294901760
        %6287 = vmatpush1.msra.mxu0 %v6286
        %6288 = vmatprep.subr.mxu0 0.0
        %v6289 = vand.u32 %v5690, 4294901760
        %6290 = vmatpush1.msra.mxu0 %v6289
        %6291 = vmatprep.subr.mxu0 0.0
        %v6292 = vand.u32 %v5691, 4294901760
        %6293 = vmatpush1.msra.mxu0 %v6292
        %6294 = vmatprep.subr.mxu0 0.0
        %6295 = vmatpush1.msra.mxu0 0.0
        %6296 = vmatprep.subr.mxu0 0.0
        %6297 = vmatpush1.msra.mxu0 0.0
        %6298 = vmatprep.subr.mxu0 0.0
        %6299 = vmatpush1.msra.mxu0 0.0
        %6300 = vmatprep.subr.mxu0 0.0
        %6301 = vmatpush1.msra.mxu0 0.0
        %6302 = vmatprep.subr.mxu0 0.0
        %6303 = vmatpush1.msra.mxu0 0.0
        %6304 = vmatprep.subr.mxu0 0.0
        %6305 = vmatpush1.msra.mxu0 0.0
        %6306 = vmatprep.subr.mxu0 0.0
        %6307 = vmatpush1.msra.mxu0 0.0
        %6308 = vmatprep.subr.mxu0 0.0
        %6309 = vmatpush1.msra.mxu0 0.0
        %6310 = vmatprep.subr.mxu0 0.0
        %6311 = vmatpush1.msra.mxu0 0.0
        %6312 = vmatprep.subr.mxu0 0.0
        %6313 = vmatpush1.msra.mxu0 0.0
        %6314 = vmatprep.subr.mxu0 0.0
        %6315 = vmatpush1.msra.mxu0 0.0
        %6316 = vmatprep.subr.mxu0 0.0
        %6317 = vmatpush1.msra.mxu0 0.0
        %6318 = vmatprep.subr.mxu0 0.0
        %6319 = vmatpush1.msra.mxu0 0.0
        %6320 = vmatprep.subr.mxu0 0.0
        %6321 = vmatpush1.msra.mxu0 0.0
        %6322 = vmatprep.subr.mxu0 0.0
        %6323 = vmatpush1.msra.mxu0 0.0
        %6324 = vmatprep.subr.mxu0 0.0
        %6325 = vmatpush1.msra.mxu0 0.0
        %6326 = vmatprep.mubr.f32.mxu0 0.0
        %v6327 = vand.u32 %v5606, 4294901760
        %6328 = vmatmul.mubr.f32.gmra.mrb[0].mxu0 %v6327
        %v6329 = vpop.f32.mrb[0].mxu0
        %v6330 = vadd.f32 %v6243, %v6329
        %v6331 = vpop.f32.mrb[0].mxu0
        %6332 = vdwg.mxu0
        %v6333 = vrcp.pop 4096.0
        %v6334 = vmul.f32 %v6330, %v6333
        %6335 = vmatprep.subr.mxu0 0.0
        %v6336 = vand.u32 %v5676, 4294901760
        %6337 = vmatpush1.msra.mxu0 %v6336
        %6338 = vmatprep.subr.mxu0 0.0
        %v6339 = vand.u32 %v5677, 4294901760
        %6340 = vmatpush1.msra.mxu0 %v6339
        %6341 = vmatprep.subr.mxu0 0.0
        %v6342 = vand.u32 %v5678, 4294901760
        %6343 = vmatpush1.msra.mxu0 %v6342
        %6344 = vmatprep.subr.mxu0 0.0
        %v6345 = vand.u32 %v5679, 4294901760
        %6346 = vmatpush1.msra.mxu0 %v6345
        %6347 = vmatprep.subr.mxu0 0.0
        %v6348 = vand.u32 %v5680, 4294901760
        %6349 = vmatpush1.msra.mxu0 %v6348
        %6350 = vmatprep.subr.mxu0 0.0
        %v6351 = vand.u32 %v5681, 4294901760
        %6352 = vmatpush1.msra.mxu0 %v6351
        %6353 = vmatprep.subr.mxu0 0.0
        %v6354 = vand.u32 %v5682, 4294901760
        %6355 = vmatpush1.msra.mxu0 %v6354
        %6356 = vmatprep.subr.mxu0 0.0
        %v6357 = vand.u32 %v5683, 4294901760
        %6358 = vmatpush1.msra.mxu0 %v6357
        %6359 = vmatprep.subr.mxu0 0.0
        %v6360 = vand.u32 %v5684, 4294901760
        %6361 = vmatpush1.msra.mxu0 %v6360
        %6362 = vmatprep.subr.mxu0 0.0
        %v6363 = vand.u32 %v5685, 4294901760
        %6364 = vmatpush1.msra.mxu0 %v6363
        %6365 = vmatprep.subr.mxu0 0.0
        %v6366 = vand.u32 %v5686, 4294901760
        %6367 = vmatpush1.msra.mxu0 %v6366
        %6368 = vmatprep.subr.mxu0 0.0
        %v6369 = vand.u32 %v5687, 4294901760
        %6370 = vmatpush1.msra.mxu0 %v6369
        %6371 = vmatprep.subr.mxu0 0.0
        %v6372 = vand.u32 %v5688, 4294901760
        %6373 = vmatpush1.msra.mxu0 %v6372
        %6374 = vmatprep.subr.mxu0 0.0
        %v6375 = vand.u32 %v5689, 4294901760
        %6376 = vmatpush1.msra.mxu0 %v6375
        %6377 = vmatprep.subr.mxu0 0.0
        %v6378 = vand.u32 %v5690, 4294901760
        %6379 = vmatpush1.msra.mxu0 %v6378
        %6380 = vmatprep.subr.mxu0 0.0
        %v6381 = vand.u32 %v5691, 4294901760
        %6382 = vmatpush1.msra.mxu0 %v6381
        %6383 = vmatprep.subr.mxu0 0.0
        %6384 = vmatpush1.msra.mxu0 0.0
        %6385 = vmatprep.subr.mxu0 0.0
        %6386 = vmatpush1.msra.mxu0 0.0
        %6387 = vmatprep.subr.mxu0 0.0
        %6388 = vmatpush1.msra.mxu0 0.0
        %6389 = vmatprep.subr.mxu0 0.0
        %6390 = vmatpush1.msra.mxu0 0.0
        %6391 = vmatprep.subr.mxu0 0.0
        %6392 = vmatpush1.msra.mxu0 0.0
        %6393 = vmatprep.subr.mxu0 0.0
        %6394 = vmatpush1.msra.mxu0 0.0
        %6395 = vmatprep.subr.mxu0 0.0
        %6396 = vmatpush1.msra.mxu0 0.0
        %6397 = vmatprep.subr.mxu0 0.0
        %6398 = vmatpush1.msra.mxu0 0.0
        %6399 = vmatprep.subr.mxu0 0.0
        %6400 = vmatpush1.msra.mxu0 0.0
        %6401 = vmatprep.subr.mxu0 0.0
        %6402 = vmatpush1.msra.mxu0 0.0
        %6403 = vmatprep.subr.mxu0 0.0
        %6404 = vmatpush1.msra.mxu0 0.0
        %6405 = vmatprep.subr.mxu0 0.0
        %6406 = vmatpush1.msra.mxu0 0.0
        %6407 = vmatprep.subr.mxu0 0.0
        %6408 = vmatpush1.msra.mxu0 0.0
        %6409 = vmatprep.subr.mxu0 0.0
        %6410 = vmatpush1.msra.mxu0 0.0
        %6411 = vmatprep.subr.mxu0 0.0
        %6412 = vmatpush1.msra.mxu0 0.0
        %6413 = vmatprep.subr.mxu0 0.0
        %6414 = vmatpush1.msra.mxu0 0.0
        %6415 = vmatprep.mubr.f32.mxu0 0.0
        %v6416 = vand.u32 %v5675, 4294901760
        %v6417 = vsub.f32 %v5675, %v6416
        %v6418 = vand.u32 %v6417, 4294901760
        %v6419 = vsub.f32 %v6417, %v6418
        %v6420 = vand.u32 %v6419, 4294901760
        %6421 = vmatmul.mubr.f32.gmra.mrb[0].mxu0 %v6420
        %v6422 = vpop.f32.mrb[0].mxu0
        %v6423 = vadd.f32 0.0, %v6422
        %v6424 = vpop.f32.mrb[0].mxu0
        %6425 = vdwg.mxu0
        %6426 = vmatprep.subr.mxu0 0.0
        %v6427 = vand.u32 %v5676, 4294901760
        %v6428 = vsub.f32 %v5676, %v6427
        %v6429 = vand.u32 %v6428, 4294901760
        %v6430 = vsub.f32 %v6428, %v6429
        %v6431 = vand.u32 %v6430, 4294901760
        %6432 = vmatpush1.msra.mxu0 %v6431
        %6433 = vmatprep.subr.mxu0 0.0
        %v6434 = vand.u32 %v5677, 4294901760
        %v6435 = vsub.f32 %v5677, %v6434
        %v6436 = vand.u32 %v6435, 4294901760
        %v6437 = vsub.f32 %v6435, %v6436
        %v6438 = vand.u32 %v6437, 4294901760
        %6439 = vmatpush1.msra.mxu0 %v6438
        %6440 = vmatprep.subr.mxu0 0.0
        %v6441 = vand.u32 %v5678, 4294901760
        %v6442 = vsub.f32 %v5678, %v6441
        %v6443 = vand.u32 %v6442, 4294901760
        %v6444 = vsub.f32 %v6442, %v6443
        %v6445 = vand.u32 %v6444, 4294901760
        %6446 = vmatpush1.msra.mxu0 %v6445
        %6447 = vmatprep.subr.mxu0 0.0
        %v6448 = vand.u32 %v5679, 4294901760
        %v6449 = vsub.f32 %v5679, %v6448
        %v6450 = vand.u32 %v6449, 4294901760
        %v6451 = vsub.f32 %v6449, %v6450
        %v6452 = vand.u32 %v6451, 4294901760
        %6453 = vmatpush1.msra.mxu0 %v6452
        %6454 = vmatprep.subr.mxu0 0.0
        %v6455 = vand.u32 %v5680, 4294901760
        %v6456 = vsub.f32 %v5680, %v6455
        %v6457 = vand.u32 %v6456, 4294901760
        %v6458 = vsub.f32 %v6456, %v6457
        %v6459 = vand.u32 %v6458, 4294901760
        %6460 = vmatpush1.msra.mxu0 %v6459
        %6461 = vmatprep.subr.mxu0 0.0
        %v6462 = vand.u32 %v5681, 4294901760
        %v6463 = vsub.f32 %v5681, %v6462
        %v6464 = vand.u32 %v6463, 4294901760
        %v6465 = vsub.f32 %v6463, %v6464
        %v6466 = vand.u32 %v6465, 4294901760
        %6467 = vmatpush1.msra.mxu0 %v6466
        %6468 = vmatprep.subr.mxu0 0.0
        %v6469 = vand.u32 %v5682, 4294901760
        %v6470 = vsub.f32 %v5682, %v6469
        %v6471 = vand.u32 %v6470, 4294901760
        %v6472 = vsub.f32 %v6470, %v6471
        %v6473 = vand.u32 %v6472, 4294901760
        %6474 = vmatpush1.msra.mxu0 %v6473
        %6475 = vmatprep.subr.mxu0 0.0
        %v6476 = vand.u32 %v5683, 4294901760
        %v6477 = vsub.f32 %v5683, %v6476
        %v6478 = vand.u32 %v6477, 4294901760
        %v6479 = vsub.f32 %v6477, %v6478
        %v6480 = vand.u32 %v6479, 4294901760
        %6481 = vmatpush1.msra.mxu0 %v6480
        %6482 = vmatprep.subr.mxu0 0.0
        %v6483 = vand.u32 %v5684, 4294901760
        %v6484 = vsub.f32 %v5684, %v6483
        %v6485 = vand.u32 %v6484, 4294901760
        %v6486 = vsub.f32 %v6484, %v6485
        %v6487 = vand.u32 %v6486, 4294901760
        %6488 = vmatpush1.msra.mxu0 %v6487
        %6489 = vmatprep.subr.mxu0 0.0
        %v6490 = vand.u32 %v5685, 4294901760
        %v6491 = vsub.f32 %v5685, %v6490
        %v6492 = vand.u32 %v6491, 4294901760
        %v6493 = vsub.f32 %v6491, %v6492
        %v6494 = vand.u32 %v6493, 4294901760
        %6495 = vmatpush1.msra.mxu0 %v6494
        %6496 = vmatprep.subr.mxu0 0.0
        %v6497 = vand.u32 %v5686, 4294901760
        %v6498 = vsub.f32 %v5686, %v6497
        %v6499 = vand.u32 %v6498, 4294901760
        %v6500 = vsub.f32 %v6498, %v6499
        %v6501 = vand.u32 %v6500, 4294901760
        %6502 = vmatpush1.msra.mxu0 %v6501
        %6503 = vmatprep.subr.mxu0 0.0
        %v6504 = vand.u32 %v5687, 4294901760
        %v6505 = vsub.f32 %v5687, %v6504
        %v6506 = vand.u32 %v6505, 4294901760
        %v6507 = vsub.f32 %v6505, %v6506
        %v6508 = vand.u32 %v6507, 4294901760
        %6509 = vmatpush1.msra.mxu0 %v6508
        %6510 = vmatprep.subr.mxu0 0.0
        %v6511 = vand.u32 %v5688, 4294901760
        %v6512 = vsub.f32 %v5688, %v6511
        %v6513 = vand.u32 %v6512, 4294901760
        %v6514 = vsub.f32 %v6512, %v6513
        %v6515 = vand.u32 %v6514, 4294901760
        %6516 = vmatpush1.msra.mxu0 %v6515
        %6517 = vmatprep.subr.mxu0 0.0
        %v6518 = vand.u32 %v5689, 4294901760
        %v6519 = vsub.f32 %v5689, %v6518
        %v6520 = vand.u32 %v6519, 4294901760
        %v6521 = vsub.f32 %v6519, %v6520
        %v6522 = vand.u32 %v6521, 4294901760
        %6523 = vmatpush1.msra.mxu0 %v6522
        %6524 = vmatprep.subr.mxu0 0.0
        %v6525 = vand.u32 %v5690, 4294901760
        %v6526 = vsub.f32 %v5690, %v6525
        %v6527 = vand.u32 %v6526, 4294901760
        %v6528 = vsub.f32 %v6526, %v6527
        %v6529 = vand.u32 %v6528, 4294901760
        %6530 = vmatpush1.msra.mxu0 %v6529
        %6531 = vmatprep.subr.mxu0 0.0
        %v6532 = vand.u32 %v5691, 4294901760
        %v6533 = vsub.f32 %v5691, %v6532
        %v6534 = vand.u32 %v6533, 4294901760
        %v6535 = vsub.f32 %v6533, %v6534
        %v6536 = vand.u32 %v6535, 4294901760
        %6537 = vmatpush1.msra.mxu0 %v6536
        %6538 = vmatprep.subr.mxu0 0.0
        %6539 = vmatpush1.msra.mxu0 0.0
        %6540 = vmatprep.subr.mxu0 0.0
        %6541 = vmatpush1.msra.mxu0 0.0
        %6542 = vmatprep.subr.mxu0 0.0
        %6543 = vmatpush1.msra.mxu0 0.0
        %6544 = vmatprep.subr.mxu0 0.0
        %6545 = vmatpush1.msra.mxu0 0.0
        %6546 = vmatprep.subr.mxu0 0.0
        %6547 = vmatpush1.msra.mxu0 0.0
        %6548 = vmatprep.subr.mxu0 0.0
        %6549 = vmatpush1.msra.mxu0 0.0
        %6550 = vmatprep.subr.mxu0 0.0
        %6551 = vmatpush1.msra.mxu0 0.0
        %6552 = vmatprep.subr.mxu0 0.0
        %6553 = vmatpush1.msra.mxu0 0.0
        %6554 = vmatprep.subr.mxu0 0.0
        %6555 = vmatpush1.msra.mxu0 0.0
        %6556 = vmatprep.subr.mxu0 0.0
        %6557 = vmatpush1.msra.mxu0 0.0
        %6558 = vmatprep.subr.mxu0 0.0
        %6559 = vmatpush1.msra.mxu0 0.0
        %6560 = vmatprep.subr.mxu0 0.0
        %6561 = vmatpush1.msra.mxu0 0.0
        %6562 = vmatprep.subr.mxu0 0.0
        %6563 = vmatpush1.msra.mxu0 0.0
        %6564 = vmatprep.subr.mxu0 0.0
        %6565 = vmatpush1.msra.mxu0 0.0
        %6566 = vmatprep.subr.mxu0 0.0
        %6567 = vmatpush1.msra.mxu0 0.0
        %6568 = vmatprep.subr.mxu0 0.0
        %6569 = vmatpush1.msra.mxu0 0.0
        %6570 = vmatprep.mubr.f32.mxu0 0.0
        %v6571 = vand.u32 %v5675, 4294901760
        %6572 = vmatmul.mubr.f32.gmra.mrb[0].mxu0 %v6571
        %v6573 = vpop.f32.mrb[0].mxu0
        %v6574 = vadd.f32 %v6423, %v6573
        %v6575 = vpop.f32.mrb[0].mxu0
        %6576 = vdwg.mxu0
        %6577 = vmatprep.subr.mxu0 0.0
        %v6578 = vand.u32 %v5676, 4294901760
        %v6579 = vsub.f32 %v5676, %v6578
        %6580 = vmatpush1.msra.mxu0 %v6579
        %6581 = vmatprep.subr.mxu0 0.0
        %v6582 = vand.u32 %v5677, 4294901760
        %v6583 = vsub.f32 %v5677, %v6582
        %6584 = vmatpush1.msra.mxu0 %v6583
        %6585 = vmatprep.subr.mxu0 0.0
        %v6586 = vand.u32 %v5678, 4294901760
        %v6587 = vsub.f32 %v5678, %v6586
        %6588 = vmatpush1.msra.mxu0 %v6587
        %6589 = vmatprep.subr.mxu0 0.0
        %v6590 = vand.u32 %v5679, 4294901760
        %v6591 = vsub.f32 %v5679, %v6590
        %6592 = vmatpush1.msra.mxu0 %v6591
        %6593 = vmatprep.subr.mxu0 0.0
        %v6594 = vand.u32 %v5680, 4294901760
        %v6595 = vsub.f32 %v5680, %v6594
        %6596 = vmatpush1.msra.mxu0 %v6595
        %6597 = vmatprep.subr.mxu0 0.0
        %v6598 = vand.u32 %v5681, 4294901760
        %v6599 = vsub.f32 %v5681, %v6598
        %6600 = vmatpush1.msra.mxu0 %v6599
        %6601 = vmatprep.subr.mxu0 0.0
        %v6602 = vand.u32 %v5682, 4294901760
        %v6603 = vsub.f32 %v5682, %v6602
        %6604 = vmatpush1.msra.mxu0 %v6603
        %6605 = vmatprep.subr.mxu0 0.0
        %v6606 = vand.u32 %v5683, 4294901760
        %v6607 = vsub.f32 %v5683, %v6606
        %6608 = vmatpush1.msra.mxu0 %v6607
        %6609 = vmatprep.subr.mxu0 0.0
        %v6610 = vand.u32 %v5684, 4294901760
        %v6611 = vsub.f32 %v5684, %v6610
        %6612 = vmatpush1.msra.mxu0 %v6611
        %6613 = vmatprep.subr.mxu0 0.0
        %v6614 = vand.u32 %v5685, 4294901760
        %v6615 = vsub.f32 %v5685, %v6614
        %6616 = vmatpush1.msra.mxu0 %v6615
        %6617 = vmatprep.subr.mxu0 0.0
        %v6618 = vand.u32 %v5686, 4294901760
        %v6619 = vsub.f32 %v5686, %v6618
        %6620 = vmatpush1.msra.mxu0 %v6619
        %6621 = vmatprep.subr.mxu0 0.0
        %v6622 = vand.u32 %v5687, 4294901760
        %v6623 = vsub.f32 %v5687, %v6622
        %6624 = vmatpush1.msra.mxu0 %v6623
        %6625 = vmatprep.subr.mxu0 0.0
        %v6626 = vand.u32 %v5688, 4294901760
        %v6627 = vsub.f32 %v5688, %v6626
        %6628 = vmatpush1.msra.mxu0 %v6627
        %6629 = vmatprep.subr.mxu0 0.0
        %v6630 = vand.u32 %v5689, 4294901760
        %v6631 = vsub.f32 %v5689, %v6630
        %6632 = vmatpush1.msra.mxu0 %v6631
        %6633 = vmatprep.subr.mxu0 0.0
        %v6634 = vand.u32 %v5690, 4294901760
        %v6635 = vsub.f32 %v5690, %v6634
        %6636 = vmatpush1.msra.mxu0 %v6635
        %6637 = vmatprep.subr.mxu0 0.0
        %v6638 = vand.u32 %v5691, 4294901760
        %v6639 = vsub.f32 %v5691, %v6638
        %6640 = vmatpush1.msra.mxu0 %v6639
        %6641 = vmatprep.subr.mxu0 0.0
        %6642 = vmatpush1.msra.mxu0 0.0
        %6643 = vmatprep.subr.mxu0 0.0
        %6644 = vmatpush1.msra.mxu0 0.0
        %6645 = vmatprep.subr.mxu0 0.0
        %6646 = vmatpush1.msra.mxu0 0.0
        %6647 = vmatprep.subr.mxu0 0.0
        %6648 = vmatpush1.msra.mxu0 0.0
        %6649 = vmatprep.subr.mxu0 0.0
        %6650 = vmatpush1.msra.mxu0 0.0
        %6651 = vmatprep.subr.mxu0 0.0
        %6652 = vmatpush1.msra.mxu0 0.0
        %6653 = vmatprep.subr.mxu0 0.0
        %6654 = vmatpush1.msra.mxu0 0.0
        %6655 = vmatprep.subr.mxu0 0.0
        %6656 = vmatpush1.msra.mxu0 0.0
        %6657 = vmatprep.subr.mxu0 0.0
        %6658 = vmatpush1.msra.mxu0 0.0
        %6659 = vmatprep.subr.mxu0 0.0
        %6660 = vmatpush1.msra.mxu0 0.0
        %6661 = vmatprep.subr.mxu0 0.0
        %6662 = vmatpush1.msra.mxu0 0.0
        %6663 = vmatprep.subr.mxu0 0.0
        %6664 = vmatpush1.msra.mxu0 0.0
        %6665 = vmatprep.subr.mxu0 0.0
        %6666 = vmatpush1.msra.mxu0 0.0
        %6667 = vmatprep.subr.mxu0 0.0
        %6668 = vmatpush1.msra.mxu0 0.0
        %6669 = vmatprep.subr.mxu0 0.0
        %6670 = vmatpush1.msra.mxu0 0.0
        %6671 = vmatprep.subr.mxu0 0.0
        %6672 = vmatpush1.msra.mxu0 0.0
        %6673 = vmatprep.mubr.f32.mxu0 0.0
        %v6674 = vand.u32 %v5675, 4294901760
        %v6675 = vsub.f32 %v5675, %v6674
        %6676 = vmatmul.mubr.f32.gmra.mrb[0].mxu0 %v6675
        %v6677 = vpop.f32.mrb[0].mxu0
        %v6678 = vadd.f32 %v6574, %v6677
        %v6679 = vpop.f32.mrb[0].mxu0
        %6680 = vdwg.mxu0
        %6681 = vmatprep.subr.mxu0 0.0
        %v6682 = vand.u32 %v5676, 4294901760
        %6683 = vmatpush1.msra.mxu0 %v6682
        %6684 = vmatprep.subr.mxu0 0.0
        %v6685 = vand.u32 %v5677, 4294901760
        %6686 = vmatpush1.msra.mxu0 %v6685
        %6687 = vmatprep.subr.mxu0 0.0
        %v6688 = vand.u32 %v5678, 4294901760
        %6689 = vmatpush1.msra.mxu0 %v6688
        %6690 = vmatprep.subr.mxu0 0.0
        %v6691 = vand.u32 %v5679, 4294901760
        %6692 = vmatpush1.msra.mxu0 %v6691
        %6693 = vmatprep.subr.mxu0 0.0
        %v6694 = vand.u32 %v5680, 4294901760
        %6695 = vmatpush1.msra.mxu0 %v6694
        %6696 = vmatprep.subr.mxu0 0.0
        %v6697 = vand.u32 %v5681, 4294901760
        %6698 = vmatpush1.msra.mxu0 %v6697
        %6699 = vmatprep.subr.mxu0 0.0
        %v6700 = vand.u32 %v5682, 4294901760
        %6701 = vmatpush1.msra.mxu0 %v6700
        %6702 = vmatprep.subr.mxu0 0.0
        %v6703 = vand.u32 %v5683, 4294901760
        %6704 = vmatpush1.msra.mxu0 %v6703
        %6705 = vmatprep.subr.mxu0 0.0
        %v6706 = vand.u32 %v5684, 4294901760
        %6707 = vmatpush1.msra.mxu0 %v6706
        %6708 = vmatprep.subr.mxu0 0.0
        %v6709 = vand.u32 %v5685, 4294901760
        %6710 = vmatpush1.msra.mxu0 %v6709
        %6711 = vmatprep.subr.mxu0 0.0
        %v6712 = vand.u32 %v5686, 4294901760
        %6713 = vmatpush1.msra.mxu0 %v6712
        %6714 = vmatprep.subr.mxu0 0.0
        %v6715 = vand.u32 %v5687, 4294901760
        %6716 = vmatpush1.msra.mxu0 %v6715
        %6717 = vmatprep.subr.mxu0 0.0
        %v6718 = vand.u32 %v5688, 4294901760
        %6719 = vmatpush1.msra.mxu0 %v6718
        %6720 = vmatprep.subr.mxu0 0.0
        %v6721 = vand.u32 %v5689, 4294901760
        %6722 = vmatpush1.msra.mxu0 %v6721
        %6723 = vmatprep.subr.mxu0 0.0
        %v6724 = vand.u32 %v5690, 4294901760
        %6725 = vmatpush1.msra.mxu0 %v6724
        %6726 = vmatprep.subr.mxu0 0.0
        %v6727 = vand.u32 %v5691, 4294901760
        %6728 = vmatpush1.msra.mxu0 %v6727
        %6729 = vmatprep.subr.mxu0 0.0
        %6730 = vmatpush1.msra.mxu0 0.0
        %6731 = vmatprep.subr.mxu0 0.0
        %6732 = vmatpush1.msra.mxu0 0.0
        %6733 = vmatprep.subr.mxu0 0.0
        %6734 = vmatpush1.msra.mxu0 0.0
        %6735 = vmatprep.subr.mxu0 0.0
        %6736 = vmatpush1.msra.mxu0 0.0
        %6737 = vmatprep.subr.mxu0 0.0
        %6738 = vmatpush1.msra.mxu0 0.0
        %6739 = vmatprep.subr.mxu0 0.0
        %6740 = vmatpush1.msra.mxu0 0.0
        %6741 = vmatprep.subr.mxu0 0.0
        %6742 = vmatpush1.msra.mxu0 0.0
        %6743 = vmatprep.subr.mxu0 0.0
        %6744 = vmatpush1.msra.mxu0 0.0
        %6745 = vmatprep.subr.mxu0 0.0
        %6746 = vmatpush1.msra.mxu0 0.0
        %6747 = vmatprep.subr.mxu0 0.0
        %6748 = vmatpush1.msra.mxu0 0.0
        %6749 = vmatprep.subr.mxu0 0.0
        %6750 = vmatpush1.msra.mxu0 0.0
        %6751 = vmatprep.subr.mxu0 0.0
        %6752 = vmatpush1.msra.mxu0 0.0
        %6753 = vmatprep.subr.mxu0 0.0
        %6754 = vmatpush1.msra.mxu0 0.0
        %6755 = vmatprep.subr.mxu0 0.0
        %6756 = vmatpush1.msra.mxu0 0.0
        %6757 = vmatprep.subr.mxu0 0.0
        %6758 = vmatpush1.msra.mxu0 0.0
        %6759 = vmatprep.subr.mxu0 0.0
        %6760 = vmatpush1.msra.mxu0 0.0
        %6761 = vmatprep.mubr.f32.mxu0 0.0
        %v6762 = vand.u32 %v5675, 4294901760
        %v6763 = vsub.f32 %v5675, %v6762
        %v6764 = vand.u32 %v6763, 4294901760
        %6765 = vmatmul.mubr.f32.gmra.mrb[0].mxu0 %v6764
        %v6766 = vpop.f32.mrb[0].mxu0
        %v6767 = vadd.f32 %v6678, %v6766
        %v6768 = vpop.f32.mrb[0].mxu0
        %6769 = vdwg.mxu0
        %6770 = vmatprep.subr.mxu0 0.0
        %v6771 = vand.u32 %v5676, 4294901760
        %v6772 = vsub.f32 %v5676, %v6771
        %v6773 = vand.u32 %v6772, 4294901760
        %6774 = vmatpush1.msra.mxu0 %v6773
        %6775 = vmatprep.subr.mxu0 0.0
        %v6776 = vand.u32 %v5677, 4294901760
        %v6777 = vsub.f32 %v5677, %v6776
        %v6778 = vand.u32 %v6777, 4294901760
        %6779 = vmatpush1.msra.mxu0 %v6778
        %6780 = vmatprep.subr.mxu0 0.0
        %v6781 = vand.u32 %v5678, 4294901760
        %v6782 = vsub.f32 %v5678, %v6781
        %v6783 = vand.u32 %v6782, 4294901760
        %6784 = vmatpush1.msra.mxu0 %v6783
        %6785 = vmatprep.subr.mxu0 0.0
        %v6786 = vand.u32 %v5679, 4294901760
        %v6787 = vsub.f32 %v5679, %v6786
        %v6788 = vand.u32 %v6787, 4294901760
        %6789 = vmatpush1.msra.mxu0 %v6788
        %6790 = vmatprep.subr.mxu0 0.0
        %v6791 = vand.u32 %v5680, 4294901760
        %v6792 = vsub.f32 %v5680, %v6791
        %v6793 = vand.u32 %v6792, 4294901760
        %6794 = vmatpush1.msra.mxu0 %v6793
        %6795 = vmatprep.subr.mxu0 0.0
        %v6796 = vand.u32 %v5681, 4294901760
        %v6797 = vsub.f32 %v5681, %v6796
        %v6798 = vand.u32 %v6797, 4294901760
        %6799 = vmatpush1.msra.mxu0 %v6798
        %6800 = vmatprep.subr.mxu0 0.0
        %v6801 = vand.u32 %v5682, 4294901760
        %v6802 = vsub.f32 %v5682, %v6801
        %v6803 = vand.u32 %v6802, 4294901760
        %6804 = vmatpush1.msra.mxu0 %v6803
        %6805 = vmatprep.subr.mxu0 0.0
        %v6806 = vand.u32 %v5683, 4294901760
        %v6807 = vsub.f32 %v5683, %v6806
        %v6808 = vand.u32 %v6807, 4294901760
        %6809 = vmatpush1.msra.mxu0 %v6808
        %6810 = vmatprep.subr.mxu0 0.0
        %v6811 = vand.u32 %v5684, 4294901760
        %v6812 = vsub.f32 %v5684, %v6811
        %v6813 = vand.u32 %v6812, 4294901760
        %6814 = vmatpush1.msra.mxu0 %v6813
        %6815 = vmatprep.subr.mxu0 0.0
        %v6816 = vand.u32 %v5685, 4294901760
        %v6817 = vsub.f32 %v5685, %v6816
        %v6818 = vand.u32 %v6817, 4294901760
        %6819 = vmatpush1.msra.mxu0 %v6818
        %6820 = vmatprep.subr.mxu0 0.0
        %v6821 = vand.u32 %v5686, 4294901760
        %v6822 = vsub.f32 %v5686, %v6821
        %v6823 = vand.u32 %v6822, 4294901760
        %6824 = vmatpush1.msra.mxu0 %v6823
        %6825 = vmatprep.subr.mxu0 0.0
        %v6826 = vand.u32 %v5687, 4294901760
        %v6827 = vsub.f32 %v5687, %v6826
        %v6828 = vand.u32 %v6827, 4294901760
        %6829 = vmatpush1.msra.mxu0 %v6828
        %6830 = vmatprep.subr.mxu0 0.0
        %v6831 = vand.u32 %v5688, 4294901760
        %v6832 = vsub.f32 %v5688, %v6831
        %v6833 = vand.u32 %v6832, 4294901760
        %6834 = vmatpush1.msra.mxu0 %v6833
        %6835 = vmatprep.subr.mxu0 0.0
        %v6836 = vand.u32 %v5689, 4294901760
        %v6837 = vsub.f32 %v5689, %v6836
        %v6838 = vand.u32 %v6837, 4294901760
        %6839 = vmatpush1.msra.mxu0 %v6838
        %6840 = vmatprep.subr.mxu0 0.0
        %v6841 = vand.u32 %v5690, 4294901760
        %v6842 = vsub.f32 %v5690, %v6841
        %v6843 = vand.u32 %v6842, 4294901760
        %6844 = vmatpush1.msra.mxu0 %v6843
        %6845 = vmatprep.subr.mxu0 0.0
        %v6846 = vand.u32 %v5691, 4294901760
        %v6847 = vsub.f32 %v5691, %v6846
        %v6848 = vand.u32 %v6847, 4294901760
        %6849 = vmatpush1.msra.mxu0 %v6848
        %6850 = vmatprep.subr.mxu0 0.0
        %6851 = vmatpush1.msra.mxu0 0.0
        %6852 = vmatprep.subr.mxu0 0.0
        %6853 = vmatpush1.msra.mxu0 0.0
        %6854 = vmatprep.subr.mxu0 0.0
        %6855 = vmatpush1.msra.mxu0 0.0
        %6856 = vmatprep.subr.mxu0 0.0
        %6857 = vmatpush1.msra.mxu0 0.0
        %6858 = vmatprep.subr.mxu0 0.0
        %6859 = vmatpush1.msra.mxu0 0.0
        %6860 = vmatprep.subr.mxu0 0.0
        %6861 = vmatpush1.msra.mxu0 0.0
        %6862 = vmatprep.subr.mxu0 0.0
        %6863 = vmatpush1.msra.mxu0 0.0
        %6864 = vmatprep.subr.mxu0 0.0
        %6865 = vmatpush1.msra.mxu0 0.0
        %6866 = vmatprep.subr.mxu0 0.0
        %6867 = vmatpush1.msra.mxu0 0.0
        %6868 = vmatprep.subr.mxu0 0.0
        %6869 = vmatpush1.msra.mxu0 0.0
        %6870 = vmatprep.subr.mxu0 0.0
        %6871 = vmatpush1.msra.mxu0 0.0
        %6872 = vmatprep.subr.mxu0 0.0
        %6873 = vmatpush1.msra.mxu0 0.0
        %6874 = vmatprep.subr.mxu0 0.0
        %6875 = vmatpush1.msra.mxu0 0.0
        %6876 = vmatprep.subr.mxu0 0.0
        %6877 = vmatpush1.msra.mxu0 0.0
        %6878 = vmatprep.subr.mxu0 0.0
        %6879 = vmatpush1.msra.mxu0 0.0
        %6880 = vmatprep.subr.mxu0 0.0
        %6881 = vmatpush1.msra.mxu0 0.0
        %6882 = vmatprep.mubr.f32.mxu0 0.0
        %v6883 = vand.u32 %v5675, 4294901760
        %6884 = vmatmul.mubr.f32.gmra.mrb[0].mxu0 %v6883
        %v6885 = vpop.f32.mrb[0].mxu0
        %v6886 = vadd.f32 %v6767, %v6885
        %v6887 = vpop.f32.mrb[0].mxu0
        %6888 = vdwg.mxu0
        %6889 = vmatprep.subr.mxu0 0.0
        %v6890 = vand.u32 %v5676, 4294901760
        %6891 = vmatpush1.msra.mxu0 %v6890
        %6892 = vmatprep.subr.mxu0 0.0
        %v6893 = vand.u32 %v5677, 4294901760
        %6894 = vmatpush1.msra.mxu0 %v6893
        %6895 = vmatprep.subr.mxu0 0.0
        %v6896 = vand.u32 %v5678, 4294901760
        %6897 = vmatpush1.msra.mxu0 %v6896
        %6898 = vmatprep.subr.mxu0 0.0
        %v6899 = vand.u32 %v5679, 4294901760
        %6900 = vmatpush1.msra.mxu0 %v6899
        %6901 = vmatprep.subr.mxu0 0.0
        %v6902 = vand.u32 %v5680, 4294901760
        %6903 = vmatpush1.msra.mxu0 %v6902
        %6904 = vmatprep.subr.mxu0 0.0
        %v6905 = vand.u32 %v5681, 4294901760
        %6906 = vmatpush1.msra.mxu0 %v6905
        %6907 = vmatprep.subr.mxu0 0.0
        %v6908 = vand.u32 %v5682, 4294901760
        %6909 = vmatpush1.msra.mxu0 %v6908
        %6910 = vmatprep.subr.mxu0 0.0
        %v6911 = vand.u32 %v5683, 4294901760
        %6912 = vmatpush1.msra.mxu0 %v6911
        %6913 = vmatprep.subr.mxu0 0.0
        %v6914 = vand.u32 %v5684, 4294901760
        %6915 = vmatpush1.msra.mxu0 %v6914
        %6916 = vmatprep.subr.mxu0 0.0
        %v6917 = vand.u32 %v5685, 4294901760
        %6918 = vmatpush1.msra.mxu0 %v6917
        %6919 = vmatprep.subr.mxu0 0.0
        %v6920 = vand.u32 %v5686, 4294901760
        %6921 = vmatpush1.msra.mxu0 %v6920
        %6922 = vmatprep.subr.mxu0 0.0
        %v6923 = vand.u32 %v5687, 4294901760
        %6924 = vmatpush1.msra.mxu0 %v6923
        %6925 = vmatprep.subr.mxu0 0.0
        %v6926 = vand.u32 %v5688, 4294901760
        %6927 = vmatpush1.msra.mxu0 %v6926
        %6928 = vmatprep.subr.mxu0 0.0
        %v6929 = vand.u32 %v5689, 4294901760
        %6930 = vmatpush1.msra.mxu0 %v6929
        %6931 = vmatprep.subr.mxu0 0.0
        %v6932 = vand.u32 %v5690, 4294901760
        %6933 = vmatpush1.msra.mxu0 %v6932
        %6934 = vmatprep.subr.mxu0 0.0
        %v6935 = vand.u32 %v5691, 4294901760
        %6936 = vmatpush1.msra.mxu0 %v6935
        %6937 = vmatprep.subr.mxu0 0.0
        %6938 = vmatpush1.msra.mxu0 0.0
        %6939 = vmatprep.subr.mxu0 0.0
        %6940 = vmatpush1.msra.mxu0 0.0
        %6941 = vmatprep.subr.mxu0 0.0
        %6942 = vmatpush1.msra.mxu0 0.0
        %6943 = vmatprep.subr.mxu0 0.0
        %6944 = vmatpush1.msra.mxu0 0.0
        %6945 = vmatprep.subr.mxu0 0.0
        %6946 = vmatpush1.msra.mxu0 0.0
        %6947 = vmatprep.subr.mxu0 0.0
        %6948 = vmatpush1.msra.mxu0 0.0
        %6949 = vmatprep.subr.mxu0 0.0
        %6950 = vmatpush1.msra.mxu0 0.0
        %6951 = vmatprep.subr.mxu0 0.0
        %6952 = vmatpush1.msra.mxu0 0.0
        %6953 = vmatprep.subr.mxu0 0.0
        %6954 = vmatpush1.msra.mxu0 0.0
        %6955 = vmatprep.subr.mxu0 0.0
        %6956 = vmatpush1.msra.mxu0 0.0
        %6957 = vmatprep.subr.mxu0 0.0
        %6958 = vmatpush1.msra.mxu0 0.0
        %6959 = vmatprep.subr.mxu0 0.0
        %6960 = vmatpush1.msra.mxu0 0.0
        %6961 = vmatprep.subr.mxu0 0.0
        %6962 = vmatpush1.msra.mxu0 0.0
        %6963 = vmatprep.subr.mxu0 0.0
        %6964 = vmatpush1.msra.mxu0 0.0
        %6965 = vmatprep.subr.mxu0 0.0
        %6966 = vmatpush1.msra.mxu0 0.0
        %6967 = vmatprep.subr.mxu0 0.0
        %6968 = vmatpush1.msra.mxu0 0.0
        %6969 = vmatprep.mubr.f32.mxu0 0.0
        %v6970 = vand.u32 %v5675, 4294901760
        %6971 = vmatmul.mubr.f32.gmra.mrb[0].mxu0 %v6970
        %v6972 = vpop.f32.mrb[0].mxu0
        %v6973 = vadd.f32 %v6886, %v6972
        %v6974 = vpop.f32.mrb[0].mxu0
        %6975 = vdwg.mxu0
        %v6976 = vmul.f32 %v6973, %v6333
        %v6977 = vmul.f32 %v6334, %v6334
        %v6978 = vsub.f32 %v6976, %v6977
        %v6979 = vadd.f32 %v6978, 1e-05
        %v6980 = vrsqrt.pop %v6979
        %v6981 = vld [vmem:[%s3] sm:$0xff]
        %vm6982 = vcmask 64512
        %v6984 = vsel %vm6982, %v6334, 0
        %6986 = vmatprep.subr.mxu0 0.0
        %v6987 = vand.u32 %v6981, 4294901760
        %6988 = vmatpush1.msra.mxu0 %v6987
        %6989 = vmatprep.subr.mxu0 0.0
        %6990 = vmatpush1.msra.mxu0 0.0
        %6991 = vmatprep.subr.mxu0 0.0
        %6992 = vmatpush1.msra.mxu0 0.0
        %6993 = vmatprep.subr.mxu0 0.0
        %6994 = vmatpush1.msra.mxu0 0.0
        %6995 = vmatprep.subr.mxu0 0.0
        %6996 = vmatpush1.msra.mxu0 0.0
        %6997 = vmatprep.subr.mxu0 0.0
        %6998 = vmatpush1.msra.mxu0 0.0
        %6999 = vmatprep.subr.mxu0 0.0
        %7000 = vmatpush1.msra.mxu0 0.0
        %7001 = vmatprep.subr.mxu0 0.0
        %7002 = vmatpush1.msra.mxu0 0.0
        %7003 = vmatprep.subr.mxu0 0.0
        %7004 = vmatpush1.msra.mxu0 0.0
        %7005 = vmatprep.subr.mxu0 0.0
        %7006 = vmatpush1.msra.mxu0 0.0
        %7007 = vmatprep.subr.mxu0 0.0
        %7008 = vmatpush1.msra.mxu0 0.0
        %7009 = vmatprep.subr.mxu0 0.0
        %7010 = vmatpush1.msra.mxu0 0.0
        %7011 = vmatprep.subr.mxu0 0.0
        %7012 = vmatpush1.msra.mxu0 0.0
        %7013 = vmatprep.subr.mxu0 0.0
        %7014 = vmatpush1.msra.mxu0 0.0
        %7015 = vmatprep.subr.mxu0 0.0
        %7016 = vmatpush1.msra.mxu0 0.0
        %7017 = vmatprep.subr.mxu0 0.0
        %7018 = vmatpush1.msra.mxu0 0.0
        %7019 = vmatprep.subr.mxu0 0.0
        %7020 = vmatpush1.msra.mxu0 0.0
        %7021 = vmatprep.subr.mxu0 0.0
        %7022 = vmatpush1.msra.mxu0 0.0
        %7023 = vmatprep.subr.mxu0 0.0
        %7024 = vmatpush1.msra.mxu0 0.0
        %7025 = vmatprep.subr.mxu0 0.0
        %7026 = vmatpush1.msra.mxu0 0.0
        %7027 = vmatprep.subr.mxu0 0.0
        %7028 = vmatpush1.msra.mxu0 0.0
        %7029 = vmatprep.subr.mxu0 0.0
        %7030 = vmatpush1.msra.mxu0 0.0
        %7031 = vmatprep.subr.mxu0 0.0
        %7032 = vmatpush1.msra.mxu0 0.0
        %7033 = vmatprep.subr.mxu0 0.0
        %7034 = vmatpush1.msra.mxu0 0.0
        %7035 = vmatprep.subr.mxu0 0.0
        %7036 = vmatpush1.msra.mxu0 0.0
        %7037 = vmatprep.subr.mxu0 0.0
        %7038 = vmatpush1.msra.mxu0 0.0
        %7039 = vmatprep.subr.mxu0 0.0
        %7040 = vmatpush1.msra.mxu0 0.0
        %7041 = vmatprep.subr.mxu0 0.0
        %7042 = vmatpush1.msra.mxu0 0.0
        %7043 = vmatprep.subr.mxu0 0.0
        %7044 = vmatpush1.msra.mxu0 0.0
        %7045 = vmatprep.subr.mxu0 0.0
        %7046 = vmatpush1.msra.mxu0 0.0
        %7047 = vmatprep.subr.mxu0 0.0
        %7048 = vmatpush1.msra.mxu0 0.0
        %7049 = vmatprep.subr.mxu0 0.0
        %7050 = vmatpush1.msra.mxu0 0.0
        %7051 = vmatprep.mubr.f32.mxu0 0.0
        %v7052 = vand.u32 %v6984, 4294901760
        %v7053 = vsub.f32 %v6984, %v7052
        %v7054 = vand.u32 %v7053, 4294901760
        %v7055 = vsub.f32 %v7053, %v7054
        %v7056 = vand.u32 %v7055, 4294901760
        %7057 = vmatmul.mubr.f32.gmra.mrb[0].mxu0 %v7056
        %v7058 = vpop.f32.mrb[0].mxu0
        %v7059 = vadd.f32 0.0, %v7058
        %v7060 = vpop.f32.mrb[0].mxu0
        %7061 = vdwg.mxu0
        %7062 = vmatprep.subr.mxu0 0.0
        %v7063 = vand.u32 %v6981, 4294901760
        %v7064 = vsub.f32 %v6981, %v7063
        %v7065 = vand.u32 %v7064, 4294901760
        %v7066 = vsub.f32 %v7064, %v7065
        %v7067 = vand.u32 %v7066, 4294901760
        %7068 = vmatpush1.msra.mxu0 %v7067
        %7069 = vmatprep.subr.mxu0 0.0
        %7070 = vmatpush1.msra.mxu0 0.0
        %7071 = vmatprep.subr.mxu0 0.0
        %7072 = vmatpush1.msra.mxu0 0.0
        %7073 = vmatprep.subr.mxu0 0.0
        %7074 = vmatpush1.msra.mxu0 0.0
        %7075 = vmatprep.subr.mxu0 0.0
        %7076 = vmatpush1.msra.mxu0 0.0
        %7077 = vmatprep.subr.mxu0 0.0
        %7078 = vmatpush1.msra.mxu0 0.0
        %7079 = vmatprep.subr.mxu0 0.0
        %7080 = vmatpush1.msra.mxu0 0.0
        %7081 = vmatprep.subr.mxu0 0.0
        %7082 = vmatpush1.msra.mxu0 0.0
        %7083 = vmatprep.subr.mxu0 0.0
        %7084 = vmatpush1.msra.mxu0 0.0
        %7085 = vmatprep.subr.mxu0 0.0
        %7086 = vmatpush1.msra.mxu0 0.0
        %7087 = vmatprep.subr.mxu0 0.0
        %7088 = vmatpush1.msra.mxu0 0.0
        %7089 = vmatprep.subr.mxu0 0.0
        %7090 = vmatpush1.msra.mxu0 0.0
        %7091 = vmatprep.subr.mxu0 0.0
        %7092 = vmatpush1.msra.mxu0 0.0
        %7093 = vmatprep.subr.mxu0 0.0
        %7094 = vmatpush1.msra.mxu0 0.0
        %7095 = vmatprep.subr.mxu0 0.0
        %7096 = vmatpush1.msra.mxu0 0.0
        %7097 = vmatprep.subr.mxu0 0.0
        %7098 = vmatpush1.msra.mxu0 0.0
        %7099 = vmatprep.subr.mxu0 0.0
        %7100 = vmatpush1.msra.mxu0 0.0
        %7101 = vmatprep.subr.mxu0 0.0
        %7102 = vmatpush1.msra.mxu0 0.0
        %7103 = vmatprep.subr.mxu0 0.0
        %7104 = vmatpush1.msra.mxu0 0.0
        %7105 = vmatprep.subr.mxu0 0.0
        %7106 = vmatpush1.msra.mxu0 0.0
        %7107 = vmatprep.subr.mxu0 0.0
        %7108 = vmatpush1.msra.mxu0 0.0
        %7109 = vmatprep.subr.mxu0 0.0
        %7110 = vmatpush1.msra.mxu0 0.0
        %7111 = vmatprep.subr.mxu0 0.0
        %7112 = vmatpush1.msra.mxu0 0.0
        %7113 = vmatprep.subr.mxu0 0.0
        %7114 = vmatpush1.msra.mxu0 0.0
        %7115 = vmatprep.subr.mxu0 0.0
        %7116 = vmatpush1.msra.mxu0 0.0
        %7117 = vmatprep.subr.mxu0 0.0
        %7118 = vmatpush1.msra.mxu0 0.0
        %7119 = vmatprep.subr.mxu0 0.0
        %7120 = vmatpush1.msra.mxu0 0.0
        %7121 = vmatprep.subr.mxu0 0.0
        %7122 = vmatpush1.msra.mxu0 0.0
        %7123 = vmatprep.subr.mxu0 0.0
        %7124 = vmatpush1.msra.mxu0 0.0
        %7125 = vmatprep.subr.mxu0 0.0
        %7126 = vmatpush1.msra.mxu0 0.0
        %7127 = vmatprep.subr.mxu0 0.0
        %7128 = vmatpush1.msra.mxu0 0.0
        %7129 = vmatprep.subr.mxu0 0.0
        %7130 = vmatpush1.msra.mxu0 0.0
        %7131 = vmatprep.mubr.f32.mxu0 0.0
        %v7132 = vand.u32 %v6984, 4294901760
        %7133 = vmatmul.mubr.f32.gmra.mrb[0].mxu0 %v7132
        %v7134 = vpop.f32.mrb[0].mxu0
        %v7135 = vadd.f32 %v7059, %v7134
        %v7136 = vpop.f32.mrb[0].mxu0
        %7137 = vdwg.mxu0
        %7138 = vmatprep.subr.mxu0 0.0
        %v7139 = vand.u32 %v6981, 4294901760
        %v7140 = vsub.f32 %v6981, %v7139
        %7141 = vmatpush1.msra.mxu0 %v7140
        %7142 = vmatprep.subr.mxu0 0.0
        %7143 = vmatpush1.msra.mxu0 0.0
        %7144 = vmatprep.subr.mxu0 0.0
        %7145 = vmatpush1.msra.mxu0 0.0
        %7146 = vmatprep.subr.mxu0 0.0
        %7147 = vmatpush1.msra.mxu0 0.0
        %7148 = vmatprep.subr.mxu0 0.0
        %7149 = vmatpush1.msra.mxu0 0.0
        %7150 = vmatprep.subr.mxu0 0.0
        %7151 = vmatpush1.msra.mxu0 0.0
        %7152 = vmatprep.subr.mxu0 0.0
        %7153 = vmatpush1.msra.mxu0 0.0
        %7154 = vmatprep.subr.mxu0 0.0
        %7155 = vmatpush1.msra.mxu0 0.0
        %7156 = vmatprep.subr.mxu0 0.0
        %7157 = vmatpush1.msra.mxu0 0.0
        %7158 = vmatprep.subr.mxu0 0.0
        %7159 = vmatpush1.msra.mxu0 0.0
        %7160 = vmatprep.subr.mxu0 0.0
        %7161 = vmatpush1.msra.mxu0 0.0
        %7162 = vmatprep.subr.mxu0 0.0
        %7163 = vmatpush1.msra.mxu0 0.0
        %7164 = vmatprep.subr.mxu0 0.0
        %7165 = vmatpush1.msra.mxu0 0.0
        %7166 = vmatprep.subr.mxu0 0.0
        %7167 = vmatpush1.msra.mxu0 0.0
        %7168 = vmatprep.subr.mxu0 0.0
        %7169 = vmatpush1.msra.mxu0 0.0
        %7170 = vmatprep.subr.mxu0 0.0
        %7171 = vmatpush1.msra.mxu0 0.0
        %7172 = vmatprep.subr.mxu0 0.0
        %7173 = vmatpush1.msra.mxu0 0.0
        %7174 = vmatprep.subr.mxu0 0.0
        %7175 = vmatpush1.msra.mxu0 0.0
        %7176 = vmatprep.subr.mxu0 0.0
        %7177 = vmatpush1.msra.mxu0 0.0
        %7178 = vmatprep.subr.mxu0 0.0
        %7179 = vmatpush1.msra.mxu0 0.0
        %7180 = vmatprep.subr.mxu0 0.0
        %7181 = vmatpush1.msra.mxu0 0.0
        %7182 = vmatprep.subr.mxu0 0.0
        %7183 = vmatpush1.msra.mxu0 0.0
        %7184 = vmatprep.subr.mxu0 0.0
        %7185 = vmatpush1.msra.mxu0 0.0
        %7186 = vmatprep.subr.mxu0 0.0
        %7187 = vmatpush1.msra.mxu0 0.0
        %7188 = vmatprep.subr.mxu0 0.0
        %7189 = vmatpush1.msra.mxu0 0.0
        %7190 = vmatprep.subr.mxu0 0.0
        %7191 = vmatpush1.msra.mxu0 0.0
        %7192 = vmatprep.subr.mxu0 0.0
        %7193 = vmatpush1.msra.mxu0 0.0
        %7194 = vmatprep.subr.mxu0 0.0
        %7195 = vmatpush1.msra.mxu0 0.0
        %7196 = vmatprep.subr.mxu0 0.0
        %7197 = vmatpush1.msra.mxu0 0.0
        %7198 = vmatprep.subr.mxu0 0.0
        %7199 = vmatpush1.msra.mxu0 0.0
        %7200 = vmatprep.subr.mxu0 0.0
        %7201 = vmatpush1.msra.mxu0 0.0
        %7202 = vmatprep.subr.mxu0 0.0
        %7203 = vmatpush1.msra.mxu0 0.0
        %7204 = vmatprep.mubr.f32.mxu0 0.0
        %v7205 = vand.u32 %v6984, 4294901760
        %v7206 = vsub.f32 %v6984, %v7205
        %7207 = vmatmul.mubr.f32.gmra.mrb[0].mxu0 %v7206
        %v7208 = vpop.f32.mrb[0].mxu0
        %v7209 = vadd.f32 %v7135, %v7208
        %v7210 = vpop.f32.mrb[0].mxu0
        %7211 = vdwg.mxu0
        %7212 = vmatprep.subr.mxu0 0.0
        %v7213 = vand.u32 %v6981, 4294901760
        %7214 = vmatpush1.msra.mxu0 %v7213
        %7215 = vmatprep.subr.mxu0 0.0
        %7216 = vmatpush1.msra.mxu0 0.0
        %7217 = vmatprep.subr.mxu0 0.0
        %7218 = vmatpush1.msra.mxu0 0.0
        %7219 = vmatprep.subr.mxu0 0.0
        %7220 = vmatpush1.msra.mxu0 0.0
        %7221 = vmatprep.subr.mxu0 0.0
        %7222 = vmatpush1.msra.mxu0 0.0
        %7223 = vmatprep.subr.mxu0 0.0
        %7224 = vmatpush1.msra.mxu0 0.0
        %7225 = vmatprep.subr.mxu0 0.0
        %7226 = vmatpush1.msra.mxu0 0.0
        %7227 = vmatprep.subr.mxu0 0.0
        %7228 = vmatpush1.msra.mxu0 0.0
        %7229 = vmatprep.subr.mxu0 0.0
        %7230 = vmatpush1.msra.mxu0 0.0
        %7231 = vmatprep.subr.mxu0 0.0
        %7232 = vmatpush1.msra.mxu0 0.0
        %7233 = vmatprep.subr.mxu0 0.0
        %7234 = vmatpush1.msra.mxu0 0.0
        %7235 = vmatprep.subr.mxu0 0.0
        %7236 = vmatpush1.msra.mxu0 0.0
        %7237 = vmatprep.subr.mxu0 0.0
        %7238 = vmatpush1.msra.mxu0 0.0
        %7239 = vmatprep.subr.mxu0 0.0
        %7240 = vmatpush1.msra.mxu0 0.0
        %7241 = vmatprep.subr.mxu0 0.0
        %7242 = vmatpush1.msra.mxu0 0.0
        %7243 = vmatprep.subr.mxu0 0.0
        %7244 = vmatpush1.msra.mxu0 0.0
        %7245 = vmatprep.subr.mxu0 0.0
        %7246 = vmatpush1.msra.mxu0 0.0
        %7247 = vmatprep.subr.mxu0 0.0
        %7248 = vmatpush1.msra.mxu0 0.0
        %7249 = vmatprep.subr.mxu0 0.0
        %7250 = vmatpush1.msra.mxu0 0.0
        %7251 = vmatprep.subr.mxu0 0.0
        %7252 = vmatpush1.msra.mxu0 0.0
        %7253 = vmatprep.subr.mxu0 0.0
        %7254 = vmatpush1.msra.mxu0 0.0
        %7255 = vmatprep.subr.mxu0 0.0
        %7256 = vmatpush1.msra.mxu0 0.0
        %7257 = vmatprep.subr.mxu0 0.0
        %7258 = vmatpush1.msra.mxu0 0.0
        %7259 = vmatprep.subr.mxu0 0.0
        %7260 = vmatpush1.msra.mxu0 0.0
        %7261 = vmatprep.subr.mxu0 0.0
        %7262 = vmatpush1.msra.mxu0 0.0
        %7263 = vmatprep.subr.mxu0 0.0
        %7264 = vmatpush1.msra.mxu0 0.0
        %7265 = vmatprep.subr.mxu0 0.0
        %7266 = vmatpush1.msra.mxu0 0.0
        %7267 = vmatprep.subr.mxu0 0.0
        %7268 = vmatpush1.msra.mxu0 0.0
        %7269 = vmatprep.subr.mxu0 0.0
        %7270 = vmatpush1.msra.mxu0 0.0
        %7271 = vmatprep.subr.mxu0 0.0
        %7272 = vmatpush1.msra.mxu0 0.0
        %7273 = vmatprep.subr.mxu0 0.0
        %7274 = vmatpush1.msra.mxu0 0.0
        %7275 = vmatprep.subr.mxu0 0.0
        %7276 = vmatpush1.msra.mxu0 0.0
        %7277 = vmatprep.mubr.f32.mxu0 0.0
        %v7278 = vand.u32 %v6984, 4294901760
        %v7279 = vsub.f32 %v6984, %v7278
        %v7280 = vand.u32 %v7279, 4294901760
        %7281 = vmatmul.mubr.f32.gmra.mrb[0].mxu0 %v7280
        %v7282 = vpop.f32.mrb[0].mxu0
        %v7283 = vadd.f32 %v7209, %v7282
        %v7284 = vpop.f32.mrb[0].mxu0
        %7285 = vdwg.mxu0
        %7286 = vmatprep.subr.mxu0 0.0
        %v7287 = vand.u32 %v6981, 4294901760
        %v7288 = vsub.f32 %v6981, %v7287
        %v7289 = vand.u32 %v7288, 4294901760
        %7290 = vmatpush1.msra.mxu0 %v7289
        %7291 = vmatprep.subr.mxu0 0.0
        %7292 = vmatpush1.msra.mxu0 0.0
        %7293 = vmatprep.subr.mxu0 0.0
        %7294 = vmatpush1.msra.mxu0 0.0
        %7295 = vmatprep.subr.mxu0 0.0
        %7296 = vmatpush1.msra.mxu0 0.0
        %7297 = vmatprep.subr.mxu0 0.0
        %7298 = vmatpush1.msra.mxu0 0.0
        %7299 = vmatprep.subr.mxu0 0.0
        %7300 = vmatpush1.msra.mxu0 0.0
        %7301 = vmatprep.subr.mxu0 0.0
        %7302 = vmatpush1.msra.mxu0 0.0
        %7303 = vmatprep.subr.mxu0 0.0
        %7304 = vmatpush1.msra.mxu0 0.0
        %7305 = vmatprep.subr.mxu0 0.0
        %7306 = vmatpush1.msra.mxu0 0.0
        %7307 = vmatprep.subr.mxu0 0.0
        %7308 = vmatpush1.msra.mxu0 0.0
        %7309 = vmatprep.subr.mxu0 0.0
        %7310 = vmatpush1.msra.mxu0 0.0
        %7311 = vmatprep.subr.mxu0 0.0
        %7312 = vmatpush1.msra.mxu0 0.0
        %7313 = vmatprep.subr.mxu0 0.0
        %7314 = vmatpush1.msra.mxu0 0.0
        %7315 = vmatprep.subr.mxu0 0.0
        %7316 = vmatpush1.msra.mxu0 0.0
        %7317 = vmatprep.subr.mxu0 0.0
        %7318 = vmatpush1.msra.mxu0 0.0
        %7319 = vmatprep.subr.mxu0 0.0
        %7320 = vmatpush1.msra.mxu0 0.0
        %7321 = vmatprep.subr.mxu0 0.0
        %7322 = vmatpush1.msra.mxu0 0.0
        %7323 = vmatprep.subr.mxu0 0.0
        %7324 = vmatpush1.msra.mxu0 0.0
        %7325 = vmatprep.subr.mxu0 0.0
        %7326 = vmatpush1.msra.mxu0 0.0
        %7327 = vmatprep.subr.mxu0 0.0
        %7328 = vmatpush1.msra.mxu0 0.0
        %7329 = vmatprep.subr.mxu0 0.0
        %7330 = vmatpush1.msra.mxu0 0.0
        %7331 = vmatprep.subr.mxu0 0.0
        %7332 = vmatpush1.msra.mxu0 0.0
        %7333 = vmatprep.subr.mxu0 0.0
        %7334 = vmatpush1.msra.mxu0 0.0
        %7335 = vmatprep.subr.mxu0 0.0
        %7336 = vmatpush1.msra.mxu0 0.0
        %7337 = vmatprep.subr.mxu0 0.0
        %7338 = vmatpush1.msra.mxu0 0.0
        %7339 = vmatprep.subr.mxu0 0.0
        %7340 = vmatpush1.msra.mxu0 0.0
        %7341 = vmatprep.subr.mxu0 0.0
        %7342 = vmatpush1.msra.mxu0 0.0
        %7343 = vmatprep.subr.mxu0 0.0
        %7344 = vmatpush1.msra.mxu0 0.0
        %7345 = vmatprep.subr.mxu0 0.0
        %7346 = vmatpush1.msra.mxu0 0.0
        %7347 = vmatprep.subr.mxu0 0.0
        %7348 = vmatpush1.msra.mxu0 0.0
        %7349 = vmatprep.subr.mxu0 0.0
        %7350 = vmatpush1.msra.mxu0 0.0
        %7351 = vmatprep.subr.mxu0 0.0
        %7352 = vmatpush1.msra.mxu0 0.0
        %7353 = vmatprep.mubr.f32.mxu0 0.0
        %v7354 = vand.u32 %v6984, 4294901760
        %7355 = vmatmul.mubr.f32.gmra.mrb[0].mxu0 %v7354
        %v7356 = vpop.f32.mrb[0].mxu0
        %v7357 = vadd.f32 %v7283, %v7356
        %v7358 = vpop.f32.mrb[0].mxu0
        %7359 = vdwg.mxu0
        %7360 = vmatprep.subr.mxu0 0.0
        %v7361 = vand.u32 %v6981, 4294901760
        %7362 = vmatpush1.msra.mxu0 %v7361
        %7363 = vmatprep.subr.mxu0 0.0
        %7364 = vmatpush1.msra.mxu0 0.0
        %7365 = vmatprep.subr.mxu0 0.0
        %7366 = vmatpush1.msra.mxu0 0.0
        %7367 = vmatprep.subr.mxu0 0.0
        %7368 = vmatpush1.msra.mxu0 0.0
        %7369 = vmatprep.subr.mxu0 0.0
        %7370 = vmatpush1.msra.mxu0 0.0
        %7371 = vmatprep.subr.mxu0 0.0
        %7372 = vmatpush1.msra.mxu0 0.0
        %7373 = vmatprep.subr.mxu0 0.0
        %7374 = vmatpush1.msra.mxu0 0.0
        %7375 = vmatprep.subr.mxu0 0.0
        %7376 = vmatpush1.msra.mxu0 0.0
        %7377 = vmatprep.subr.mxu0 0.0
        %7378 = vmatpush1.msra.mxu0 0.0
        %7379 = vmatprep.subr.mxu0 0.0
        %7380 = vmatpush1.msra.mxu0 0.0
        %7381 = vmatprep.subr.mxu0 0.0
        %7382 = vmatpush1.msra.mxu0 0.0
        %7383 = vmatprep.subr.mxu0 0.0
        %7384 = vmatpush1.msra.mxu0 0.0
        %7385 = vmatprep.subr.mxu0 0.0
        %7386 = vmatpush1.msra.mxu0 0.0
        %7387 = vmatprep.subr.mxu0 0.0
        %7388 = vmatpush1.msra.mxu0 0.0
        %7389 = vmatprep.subr.mxu0 0.0
        %7390 = vmatpush1.msra.mxu0 0.0
        %7391 = vmatprep.subr.mxu0 0.0
        %7392 = vmatpush1.msra.mxu0 0.0
        %7393 = vmatprep.subr.mxu0 0.0
        %7394 = vmatpush1.msra.mxu0 0.0
        %7395 = vmatprep.subr.mxu0 0.0
        %7396 = vmatpush1.msra.mxu0 0.0
        %7397 = vmatprep.subr.mxu0 0.0
        %7398 = vmatpush1.msra.mxu0 0.0
        %7399 = vmatprep.subr.mxu0 0.0
        %7400 = vmatpush1.msra.mxu0 0.0
        %7401 = vmatprep.subr.mxu0 0.0
        %7402 = vmatpush1.msra.mxu0 0.0
        %7403 = vmatprep.subr.mxu0 0.0
        %7404 = vmatpush1.msra.mxu0 0.0
        %7405 = vmatprep.subr.mxu0 0.0
        %7406 = vmatpush1.msra.mxu0 0.0
        %7407 = vmatprep.subr.mxu0 0.0
        %7408 = vmatpush1.msra.mxu0 0.0
        %7409 = vmatprep.subr.mxu0 0.0
        %7410 = vmatpush1.msra.mxu0 0.0
        %7411 = vmatprep.subr.mxu0 0.0
        %7412 = vmatpush1.msra.mxu0 0.0
        %7413 = vmatprep.subr.mxu0 0.0
        %7414 = vmatpush1.msra.mxu0 0.0
        %7415 = vmatprep.subr.mxu0 0.0
        %7416 = vmatpush1.msra.mxu0 0.0
        %7417 = vmatprep.subr.mxu0 0.0
        %7418 = vmatpush1.msra.mxu0 0.0
        %7419 = vmatprep.subr.mxu0 0.0
        %7420 = vmatpush1.msra.mxu0 0.0
        %7421 = vmatprep.subr.mxu0 0.0
        %7422 = vmatpush1.msra.mxu0 0.0
        %7423 = vmatprep.subr.mxu0 0.0
        %7424 = vmatpush1.msra.mxu0 0.0
        %7425 = vmatprep.mubr.f32.mxu0 0.0
        %v7426 = vand.u32 %v6984, 4294901760
        %7427 = vmatmul.mubr.f32.gmra.mrb[0].mxu0 %v7426
        %v7428 = vpop.f32.mrb[0].mxu0
        %v7429 = vadd.f32 %v7357, %v7428
        %v7430 = vpop.f32.mrb[0].mxu0
        %7431 = vdwg.mxu0
        %v7433 = vsel %vm6982, %v6980, 0
        %7435 = vmatprep.subr.mxu0 0.0
        %v7436 = vand.u32 %v6981, 4294901760
        %7437 = vmatpush1.msra.mxu0 %v7436
        %7438 = vmatprep.subr.mxu0 0.0
        %7439 = vmatpush1.msra.mxu0 0.0
        %7440 = vmatprep.subr.mxu0 0.0
        %7441 = vmatpush1.msra.mxu0 0.0
        %7442 = vmatprep.subr.mxu0 0.0
        %7443 = vmatpush1.msra.mxu0 0.0
        %7444 = vmatprep.subr.mxu0 0.0
        %7445 = vmatpush1.msra.mxu0 0.0
        %7446 = vmatprep.subr.mxu0 0.0
        %7447 = vmatpush1.msra.mxu0 0.0
        %7448 = vmatprep.subr.mxu0 0.0
        %7449 = vmatpush1.msra.mxu0 0.0
        %7450 = vmatprep.subr.mxu0 0.0
        %7451 = vmatpush1.msra.mxu0 0.0
        %7452 = vmatprep.subr.mxu0 0.0
        %7453 = vmatpush1.msra.mxu0 0.0
        %7454 = vmatprep.subr.mxu0 0.0
        %7455 = vmatpush1.msra.mxu0 0.0
        %7456 = vmatprep.subr.mxu0 0.0
        %7457 = vmatpush1.msra.mxu0 0.0
        %7458 = vmatprep.subr.mxu0 0.0
        %7459 = vmatpush1.msra.mxu0 0.0
        %7460 = vmatprep.subr.mxu0 0.0
        %7461 = vmatpush1.msra.mxu0 0.0
        %7462 = vmatprep.subr.mxu0 0.0
        %7463 = vmatpush1.msra.mxu0 0.0
        %7464 = vmatprep.subr.mxu0 0.0
        %7465 = vmatpush1.msra.mxu0 0.0
        %7466 = vmatprep.subr.mxu0 0.0
        %7467 = vmatpush1.msra.mxu0 0.0
        %7468 = vmatprep.subr.mxu0 0.0
        %7469 = vmatpush1.msra.mxu0 0.0
        %7470 = vmatprep.subr.mxu0 0.0
        %7471 = vmatpush1.msra.mxu0 0.0
        %7472 = vmatprep.subr.mxu0 0.0
        %7473 = vmatpush1.msra.mxu0 0.0
        %7474 = vmatprep.subr.mxu0 0.0
        %7475 = vmatpush1.msra.mxu0 0.0
        %7476 = vmatprep.subr.mxu0 0.0
        %7477 = vmatpush1.msra.mxu0 0.0
        %7478 = vmatprep.subr.mxu0 0.0
        %7479 = vmatpush1.msra.mxu0 0.0
        %7480 = vmatprep.subr.mxu0 0.0
        %7481 = vmatpush1.msra.mxu0 0.0
        %7482 = vmatprep.subr.mxu0 0.0
        %7483 = vmatpush1.msra.mxu0 0.0
        %7484 = vmatprep.subr.mxu0 0.0
        %7485 = vmatpush1.msra.mxu0 0.0
        %7486 = vmatprep.subr.mxu0 0.0
        %7487 = vmatpush1.msra.mxu0 0.0
        %7488 = vmatprep.subr.mxu0 0.0
        %7489 = vmatpush1.msra.mxu0 0.0
        %7490 = vmatprep.subr.mxu0 0.0
        %7491 = vmatpush1.msra.mxu0 0.0
        %7492 = vmatprep.subr.mxu0 0.0
        %7493 = vmatpush1.msra.mxu0 0.0
        %7494 = vmatprep.subr.mxu0 0.0
        %7495 = vmatpush1.msra.mxu0 0.0
        %7496 = vmatprep.subr.mxu0 0.0
        %7497 = vmatpush1.msra.mxu0 0.0
        %7498 = vmatprep.subr.mxu0 0.0
        %7499 = vmatpush1.msra.mxu0 0.0
        %7500 = vmatprep.mubr.f32.mxu0 0.0
        %v7501 = vand.u32 %v7433, 4294901760
        %v7502 = vsub.f32 %v7433, %v7501
        %v7503 = vand.u32 %v7502, 4294901760
        %v7504 = vsub.f32 %v7502, %v7503
        %v7505 = vand.u32 %v7504, 4294901760
        %7506 = vmatmul.mubr.f32.gmra.mrb[0].mxu0 %v7505
        %v7507 = vpop.f32.mrb[0].mxu0
        %v7508 = vadd.f32 0.0, %v7507
        %v7509 = vpop.f32.mrb[0].mxu0
        %7510 = vdwg.mxu0
        %7511 = vmatprep.subr.mxu0 0.0
        %v7512 = vand.u32 %v6981, 4294901760
        %v7513 = vsub.f32 %v6981, %v7512
        %v7514 = vand.u32 %v7513, 4294901760
        %v7515 = vsub.f32 %v7513, %v7514
        %v7516 = vand.u32 %v7515, 4294901760
        %7517 = vmatpush1.msra.mxu0 %v7516
        %7518 = vmatprep.subr.mxu0 0.0
        %7519 = vmatpush1.msra.mxu0 0.0
        %7520 = vmatprep.subr.mxu0 0.0
        %7521 = vmatpush1.msra.mxu0 0.0
        %7522 = vmatprep.subr.mxu0 0.0
        %7523 = vmatpush1.msra.mxu0 0.0
        %7524 = vmatprep.subr.mxu0 0.0
        %7525 = vmatpush1.msra.mxu0 0.0
        %7526 = vmatprep.subr.mxu0 0.0
        %7527 = vmatpush1.msra.mxu0 0.0
        %7528 = vmatprep.subr.mxu0 0.0
        %7529 = vmatpush1.msra.mxu0 0.0
        %7530 = vmatprep.subr.mxu0 0.0
        %7531 = vmatpush1.msra.mxu0 0.0
        %7532 = vmatprep.subr.mxu0 0.0
        %7533 = vmatpush1.msra.mxu0 0.0
        %7534 = vmatprep.subr.mxu0 0.0
        %7535 = vmatpush1.msra.mxu0 0.0
        %7536 = vmatprep.subr.mxu0 0.0
        %7537 = vmatpush1.msra.mxu0 0.0
        %7538 = vmatprep.subr.mxu0 0.0
        %7539 = vmatpush1.msra.mxu0 0.0
        %7540 = vmatprep.subr.mxu0 0.0
        %7541 = vmatpush1.msra.mxu0 0.0
        %7542 = vmatprep.subr.mxu0 0.0
        %7543 = vmatpush1.msra.mxu0 0.0
        %7544 = vmatprep.subr.mxu0 0.0
        %7545 = vmatpush1.msra.mxu0 0.0
        %7546 = vmatprep.subr.mxu0 0.0
        %7547 = vmatpush1.msra.mxu0 0.0
        %7548 = vmatprep.subr.mxu0 0.0
        %7549 = vmatpush1.msra.mxu0 0.0
        %7550 = vmatprep.subr.mxu0 0.0
        %7551 = vmatpush1.msra.mxu0 0.0
        %7552 = vmatprep.subr.mxu0 0.0
        %7553 = vmatpush1.msra.mxu0 0.0
        %7554 = vmatprep.subr.mxu0 0.0
        %7555 = vmatpush1.msra.mxu0 0.0
        %7556 = vmatprep.subr.mxu0 0.0
        %7557 = vmatpush1.msra.mxu0 0.0
        %7558 = vmatprep.subr.mxu0 0.0
        %7559 = vmatpush1.msra.mxu0 0.0
        %7560 = vmatprep.subr.mxu0 0.0
        %7561 = vmatpush1.msra.mxu0 0.0
        %7562 = vmatprep.subr.mxu0 0.0
        %7563 = vmatpush1.msra.mxu0 0.0
        %7564 = vmatprep.subr.mxu0 0.0
        %7565 = vmatpush1.msra.mxu0 0.0
        %7566 = vmatprep.subr.mxu0 0.0
        %7567 = vmatpush1.msra.mxu0 0.0
        %7568 = vmatprep.subr.mxu0 0.0
        %7569 = vmatpush1.msra.mxu0 0.0
        %7570 = vmatprep.subr.mxu0 0.0
        %7571 = vmatpush1.msra.mxu0 0.0
        %7572 = vmatprep.subr.mxu0 0.0
        %7573 = vmatpush1.msra.mxu0 0.0
        %7574 = vmatprep.subr.mxu0 0.0
        %7575 = vmatpush1.msra.mxu0 0.0
        %7576 = vmatprep.subr.mxu0 0.0
        %7577 = vmatpush1.msra.mxu0 0.0
        %7578 = vmatprep.subr.mxu0 0.0
        %7579 = vmatpush1.msra.mxu0 0.0
        %7580 = vmatprep.mubr.f32.mxu0 0.0
        %v7581 = vand.u32 %v7433, 4294901760
        %7582 = vmatmul.mubr.f32.gmra.mrb[0].mxu0 %v7581
        %v7583 = vpop.f32.mrb[0].mxu0
        %v7584 = vadd.f32 %v7508, %v7583
        %v7585 = vpop.f32.mrb[0].mxu0
        %7586 = vdwg.mxu0
        %7587 = vmatprep.subr.mxu0 0.0
        %v7588 = vand.u32 %v6981, 4294901760
        %v7589 = vsub.f32 %v6981, %v7588
        %7590 = vmatpush1.msra.mxu0 %v7589
        %7591 = vmatprep.subr.mxu0 0.0
        %7592 = vmatpush1.msra.mxu0 0.0
        %7593 = vmatprep.subr.mxu0 0.0
        %7594 = vmatpush1.msra.mxu0 0.0
        %7595 = vmatprep.subr.mxu0 0.0
        %7596 = vmatpush1.msra.mxu0 0.0
        %7597 = vmatprep.subr.mxu0 0.0
        %7598 = vmatpush1.msra.mxu0 0.0
        %7599 = vmatprep.subr.mxu0 0.0
        %7600 = vmatpush1.msra.mxu0 0.0
        %7601 = vmatprep.subr.mxu0 0.0
        %7602 = vmatpush1.msra.mxu0 0.0
        %7603 = vmatprep.subr.mxu0 0.0
        %7604 = vmatpush1.msra.mxu0 0.0
        %7605 = vmatprep.subr.mxu0 0.0
        %7606 = vmatpush1.msra.mxu0 0.0
        %7607 = vmatprep.subr.mxu0 0.0
        %7608 = vmatpush1.msra.mxu0 0.0
        %7609 = vmatprep.subr.mxu0 0.0
        %7610 = vmatpush1.msra.mxu0 0.0
        %7611 = vmatprep.subr.mxu0 0.0
        %7612 = vmatpush1.msra.mxu0 0.0
        %7613 = vmatprep.subr.mxu0 0.0
        %7614 = vmatpush1.msra.mxu0 0.0
        %7615 = vmatprep.subr.mxu0 0.0
        %7616 = vmatpush1.msra.mxu0 0.0
        %7617 = vmatprep.subr.mxu0 0.0
        %7618 = vmatpush1.msra.mxu0 0.0
        %7619 = vmatprep.subr.mxu0 0.0
        %7620 = vmatpush1.msra.mxu0 0.0
        %7621 = vmatprep.subr.mxu0 0.0
        %7622 = vmatpush1.msra.mxu0 0.0
        %7623 = vmatprep.subr.mxu0 0.0
        %7624 = vmatpush1.msra.mxu0 0.0
        %7625 = vmatprep.subr.mxu0 0.0
        %7626 = vmatpush1.msra.mxu0 0.0
        %7627 = vmatprep.subr.mxu0 0.0
        %7628 = vmatpush1.msra.mxu0 0.0
        %7629 = vmatprep.subr.mxu0 0.0
        %7630 = vmatpush1.msra.mxu0 0.0
        %7631 = vmatprep.subr.mxu0 0.0
        %7632 = vmatpush1.msra.mxu0 0.0
        %7633 = vmatprep.subr.mxu0 0.0
        %7634 = vmatpush1.msra.mxu0 0.0
        %7635 = vmatprep.subr.mxu0 0.0
        %7636 = vmatpush1.msra.mxu0 0.0
        %7637 = vmatprep.subr.mxu0 0.0
        %7638 = vmatpush1.msra.mxu0 0.0
        %7639 = vmatprep.subr.mxu0 0.0
        %7640 = vmatpush1.msra.mxu0 0.0
        %7641 = vmatprep.subr.mxu0 0.0
        %7642 = vmatpush1.msra.mxu0 0.0
        %7643 = vmatprep.subr.mxu0 0.0
        %7644 = vmatpush1.msra.mxu0 0.0
        %7645 = vmatprep.subr.mxu0 0.0
        %7646 = vmatpush1.msra.mxu0 0.0
        %7647 = vmatprep.subr.mxu0 0.0
        %7648 = vmatpush1.msra.mxu0 0.0
        %7649 = vmatprep.subr.mxu0 0.0
        %7650 = vmatpush1.msra.mxu0 0.0
        %7651 = vmatprep.subr.mxu0 0.0
        %7652 = vmatpush1.msra.mxu0 0.0
        %7653 = vmatprep.mubr.f32.mxu0 0.0
        %v7654 = vand.u32 %v7433, 4294901760
        %v7655 = vsub.f32 %v7433, %v7654
        %7656 = vmatmul.mubr.f32.gmra.mrb[0].mxu0 %v7655
        %v7657 = vpop.f32.mrb[0].mxu0
        %v7658 = vadd.f32 %v7584, %v7657
        %v7659 = vpop.f32.mrb[0].mxu0
        %7660 = vdwg.mxu0
        %7661 = vmatprep.subr.mxu0 0.0
        %v7662 = vand.u32 %v6981, 4294901760
        %7663 = vmatpush1.msra.mxu0 %v7662
        %7664 = vmatprep.subr.mxu0 0.0
        %7665 = vmatpush1.msra.mxu0 0.0
        %7666 = vmatprep.subr.mxu0 0.0
        %7667 = vmatpush1.msra.mxu0 0.0
        %7668 = vmatprep.subr.mxu0 0.0
        %7669 = vmatpush1.msra.mxu0 0.0
        %7670 = vmatprep.subr.mxu0 0.0
        %7671 = vmatpush1.msra.mxu0 0.0
        %7672 = vmatprep.subr.mxu0 0.0
        %7673 = vmatpush1.msra.mxu0 0.0
        %7674 = vmatprep.subr.mxu0 0.0
        %7675 = vmatpush1.msra.mxu0 0.0
        %7676 = vmatprep.subr.mxu0 0.0
        %7677 = vmatpush1.msra.mxu0 0.0
        %7678 = vmatprep.subr.mxu0 0.0
        %7679 = vmatpush1.msra.mxu0 0.0
        %7680 = vmatprep.subr.mxu0 0.0
        %7681 = vmatpush1.msra.mxu0 0.0
        %7682 = vmatprep.subr.mxu0 0.0
        %7683 = vmatpush1.msra.mxu0 0.0
        %7684 = vmatprep.subr.mxu0 0.0
        %7685 = vmatpush1.msra.mxu0 0.0
        %7686 = vmatprep.subr.mxu0 0.0
        %7687 = vmatpush1.msra.mxu0 0.0
        %7688 = vmatprep.subr.mxu0 0.0
        %7689 = vmatpush1.msra.mxu0 0.0
        %7690 = vmatprep.subr.mxu0 0.0
        %7691 = vmatpush1.msra.mxu0 0.0
        %7692 = vmatprep.subr.mxu0 0.0
        %7693 = vmatpush1.msra.mxu0 0.0
        %7694 = vmatprep.subr.mxu0 0.0
        %7695 = vmatpush1.msra.mxu0 0.0
        %7696 = vmatprep.subr.mxu0 0.0
        %7697 = vmatpush1.msra.mxu0 0.0
        %7698 = vmatprep.subr.mxu0 0.0
        %7699 = vmatpush1.msra.mxu0 0.0
        %7700 = vmatprep.subr.mxu0 0.0
        %7701 = vmatpush1.msra.mxu0 0.0
        %7702 = vmatprep.subr.mxu0 0.0
        %7703 = vmatpush1.msra.mxu0 0.0
        %7704 = vmatprep.subr.mxu0 0.0
        %7705 = vmatpush1.msra.mxu0 0.0
        %7706 = vmatprep.subr.mxu0 0.0
        %7707 = vmatpush1.msra.mxu0 0.0
        %7708 = vmatprep.subr.mxu0 0.0
        %7709 = vmatpush1.msra.mxu0 0.0
        %7710 = vmatprep.subr.mxu0 0.0
        %7711 = vmatpush1.msra.mxu0 0.0
        %7712 = vmatprep.subr.mxu0 0.0
        %7713 = vmatpush1.msra.mxu0 0.0
        %7714 = vmatprep.subr.mxu0 0.0
        %7715 = vmatpush1.msra.mxu0 0.0
        %7716 = vmatprep.subr.mxu0 0.0
        %7717 = vmatpush1.msra.mxu0 0.0
        %7718 = vmatprep.subr.mxu0 0.0
        %7719 = vmatpush1.msra.mxu0 0.0
        %7720 = vmatprep.subr.mxu0 0.0
        %7721 = vmatpush1.msra.mxu0 0.0
        %7722 = vmatprep.subr.mxu0 0.0
        %7723 = vmatpush1.msra.mxu0 0.0
        %7724 = vmatprep.subr.mxu0 0.0
        %7725 = vmatpush1.msra.mxu0 0.0
        %7726 = vmatprep.mubr.f32.mxu0 0.0
        %v7727 = vand.u32 %v7433, 4294901760
        %v7728 = vsub.f32 %v7433, %v7727
        %v7729 = vand.u32 %v7728, 4294901760
        %7730 = vmatmul.mubr.f32.gmra.mrb[0].mxu0 %v7729
        %v7731 = vpop.f32.mrb[0].mxu0
        %v7732 = vadd.f32 %v7658, %v7731
        %v7733 = vpop.f32.mrb[0].mxu0
        %7734 = vdwg.mxu0
        %7735 = vmatprep.subr.mxu0 0.0
        %v7736 = vand.u32 %v6981, 4294901760
        %v7737 = vsub.f32 %v6981, %v7736
        %v7738 = vand.u32 %v7737, 4294901760
        %7739 = vmatpush1.msra.mxu0 %v7738
        %7740 = vmatprep.subr.mxu0 0.0
        %7741 = vmatpush1.msra.mxu0 0.0
        %7742 = vmatprep.subr.mxu0 0.0
        %7743 = vmatpush1.msra.mxu0 0.0
        %7744 = vmatprep.subr.mxu0 0.0
        %7745 = vmatpush1.msra.mxu0 0.0
        %7746 = vmatprep.subr.mxu0 0.0
        %7747 = vmatpush1.msra.mxu0 0.0
        %7748 = vmatprep.subr.mxu0 0.0
        %7749 = vmatpush1.msra.mxu0 0.0
        %7750 = vmatprep.subr.mxu0 0.0
        %7751 = vmatpush1.msra.mxu0 0.0
        %7752 = vmatprep.subr.mxu0 0.0
        %7753 = vmatpush1.msra.mxu0 0.0
        %7754 = vmatprep.subr.mxu0 0.0
        %7755 = vmatpush1.msra.mxu0 0.0
        %7756 = vmatprep.subr.mxu0 0.0
        %7757 = vmatpush1.msra.mxu0 0.0
        %7758 = vmatprep.subr.mxu0 0.0
        %7759 = vmatpush1.msra.mxu0 0.0
        %7760 = vmatprep.subr.mxu0 0.0
        %7761 = vmatpush1.msra.mxu0 0.0
        %7762 = vmatprep.subr.mxu0 0.0
        %7763 = vmatpush1.msra.mxu0 0.0
        %7764 = vmatprep.subr.mxu0 0.0
        %7765 = vmatpush1.msra.mxu0 0.0
        %7766 = vmatprep.subr.mxu0 0.0
        %7767 = vmatpush1.msra.mxu0 0.0
        %7768 = vmatprep.subr.mxu0 0.0
        %7769 = vmatpush1.msra.mxu0 0.0
        %7770 = vmatprep.subr.mxu0 0.0
        %7771 = vmatpush1.msra.mxu0 0.0
        %7772 = vmatprep.subr.mxu0 0.0
        %7773 = vmatpush1.msra.mxu0 0.0
        %7774 = vmatprep.subr.mxu0 0.0
        %7775 = vmatpush1.msra.mxu0 0.0
        %7776 = vmatprep.subr.mxu0 0.0
        %7777 = vmatpush1.msra.mxu0 0.0
        %7778 = vmatprep.subr.mxu0 0.0
        %7779 = vmatpush1.msra.mxu0 0.0
        %7780 = vmatprep.subr.mxu0 0.0
        %7781 = vmatpush1.msra.mxu0 0.0
        %7782 = vmatprep.subr.mxu0 0.0
        %7783 = vmatpush1.msra.mxu0 0.0
        %7784 = vmatprep.subr.mxu0 0.0
        %7785 = vmatpush1.msra.mxu0 0.0
        %7786 = vmatprep.subr.mxu0 0.0
        %7787 = vmatpush1.msra.mxu0 0.0
        %7788 = vmatprep.subr.mxu0 0.0
        %7789 = vmatpush1.msra.mxu0 0.0
        %7790 = vmatprep.subr.mxu0 0.0
        %7791 = vmatpush1.msra.mxu0 0.0
        %7792 = vmatprep.subr.mxu0 0.0
        %7793 = vmatpush1.msra.mxu0 0.0
        %7794 = vmatprep.subr.mxu0 0.0
        %7795 = vmatpush1.msra.mxu0 0.0
        %7796 = vmatprep.subr.mxu0 0.0
        %7797 = vmatpush1.msra.mxu0 0.0
        %7798 = vmatprep.subr.mxu0 0.0
        %7799 = vmatpush1.msra.mxu0 0.0
        %7800 = vmatprep.subr.mxu0 0.0
        %7801 = vmatpush1.msra.mxu0 0.0
        %7802 = vmatprep.mubr.f32.mxu0 0.0
        %v7803 = vand.u32 %v7433, 4294901760
        %7804 = vmatmul.mubr.f32.gmra.mrb[0].mxu0 %v7803
        %v7805 = vpop.f32.mrb[0].mxu0
        %v7806 = vadd.f32 %v7732, %v7805
        %v7807 = vpop.f32.mrb[0].mxu0
        %7808 = vdwg.mxu0
        %7809 = vmatprep.subr.mxu0 0.0
        %v7810 = vand.u32 %v6981, 4294901760
        %7811 = vmatpush1.msra.mxu0 %v7810
        %7812 = vmatprep.subr.mxu0 0.0
        %7813 = vmatpush1.msra.mxu0 0.0
        %7814 = vmatprep.subr.mxu0 0.0
        %7815 = vmatpush1.msra.mxu0 0.0
        %7816 = vmatprep.subr.mxu0 0.0
        %7817 = vmatpush1.msra.mxu0 0.0
        %7818 = vmatprep.subr.mxu0 0.0
        %7819 = vmatpush1.msra.mxu0 0.0
        %7820 = vmatprep.subr.mxu0 0.0
        %7821 = vmatpush1.msra.mxu0 0.0
        %7822 = vmatprep.subr.mxu0 0.0
        %7823 = vmatpush1.msra.mxu0 0.0
        %7824 = vmatprep.subr.mxu0 0.0
        %7825 = vmatpush1.msra.mxu0 0.0
        %7826 = vmatprep.subr.mxu0 0.0
        %7827 = vmatpush1.msra.mxu0 0.0
        %7828 = vmatprep.subr.mxu0 0.0
        %7829 = vmatpush1.msra.mxu0 0.0
        %7830 = vmatprep.subr.mxu0 0.0
        %7831 = vmatpush1.msra.mxu0 0.0
        %7832 = vmatprep.subr.mxu0 0.0
        %7833 = vmatpush1.msra.mxu0 0.0
        %7834 = vmatprep.subr.mxu0 0.0
        %7835 = vmatpush1.msra.mxu0 0.0
        %7836 = vmatprep.subr.mxu0 0.0
        %7837 = vmatpush1.msra.mxu0 0.0
        %7838 = vmatprep.subr.mxu0 0.0
        %7839 = vmatpush1.msra.mxu0 0.0
        %7840 = vmatprep.subr.mxu0 0.0
        %7841 = vmatpush1.msra.mxu0 0.0
        %7842 = vmatprep.subr.mxu0 0.0
        %7843 = vmatpush1.msra.mxu0 0.0
        %7844 = vmatprep.subr.mxu0 0.0
        %7845 = vmatpush1.msra.mxu0 0.0
        %7846 = vmatprep.subr.mxu0 0.0
        %7847 = vmatpush1.msra.mxu0 0.0
        %7848 = vmatprep.subr.mxu0 0.0
        %7849 = vmatpush1.msra.mxu0 0.0
        %7850 = vmatprep.subr.mxu0 0.0
        %7851 = vmatpush1.msra.mxu0 0.0
        %7852 = vmatprep.subr.mxu0 0.0
        %7853 = vmatpush1.msra.mxu0 0.0
        %7854 = vmatprep.subr.mxu0 0.0
        %7855 = vmatpush1.msra.mxu0 0.0
        %7856 = vmatprep.subr.mxu0 0.0
        %7857 = vmatpush1.msra.mxu0 0.0
        %7858 = vmatprep.subr.mxu0 0.0
        %7859 = vmatpush1.msra.mxu0 0.0
        %7860 = vmatprep.subr.mxu0 0.0
        %7861 = vmatpush1.msra.mxu0 0.0
        %7862 = vmatprep.subr.mxu0 0.0
        %7863 = vmatpush1.msra.mxu0 0.0
        %7864 = vmatprep.subr.mxu0 0.0
        %7865 = vmatpush1.msra.mxu0 0.0
        %7866 = vmatprep.subr.mxu0 0.0
        %7867 = vmatpush1.msra.mxu0 0.0
        %7868 = vmatprep.subr.mxu0 0.0
        %7869 = vmatpush1.msra.mxu0 0.0
        %7870 = vmatprep.subr.mxu0 0.0
        %7871 = vmatpush1.msra.mxu0 0.0
        %7872 = vmatprep.subr.mxu0 0.0
        %7873 = vmatpush1.msra.mxu0 0.0
        %7874 = vmatprep.mubr.f32.mxu0 0.0
        %v7875 = vand.u32 %v7433, 4294901760
        %7876 = vmatmul.mubr.f32.gmra.mrb[0].mxu0 %v7875
        %v7877 = vpop.f32.mrb[0].mxu0
        %v7878 = vadd.f32 %v7806, %v7877
        %v7879 = vpop.f32.mrb[0].mxu0
        %7880 = vdwg.mxu0
        %v7881 = vlaneseq
        %v7882 = vshrl.u32 %v7881, 7
        %v7883 = vsub.s32 0, %v7882
        %v7884 = vrot.slane %v7429, %v7883
        %v7885 = vsub.f32 %v5538, %v7884
        %v7886 = vsub.f32 %v5539, %v7884
        %v7887 = vsub.f32 %v5540, %v7884
        %v7888 = vsub.f32 %v5541, %v7884
        %v7889 = vsub.f32 %v5542, %v7884
        %v7890 = vsub.f32 %v5543, %v7884
        %v7891 = vsub.f32 %v5544, %v7884
        %v7892 = vsub.f32 %v5545, %v7884
        %v7893 = vsub.f32 %v5546, %v7884
        %v7894 = vsub.f32 %v5547, %v7884
        %v7895 = vsub.f32 %v5548, %v7884
        %v7896 = vsub.f32 %v5549, %v7884
        %v7897 = vsub.f32 %v5550, %v7884
        %v7898 = vsub.f32 %v5551, %v7884
        %v7899 = vsub.f32 %v5552, %v7884
        %v7900 = vsub.f32 %v5553, %v7884
        %v7901 = vsub.f32 %v5554, %v7884
        %v7902 = vsub.f32 %v5555, %v7884
        %v7903 = vsub.f32 %v5556, %v7884
        %v7904 = vsub.f32 %v5557, %v7884
        %v7905 = vsub.f32 %v5558, %v7884
        %v7906 = vsub.f32 %v5559, %v7884
        %v7907 = vsub.f32 %v5560, %v7884
        %v7908 = vsub.f32 %v5561, %v7884
        %v7909 = vsub.f32 %v5562, %v7884
        %v7910 = vsub.f32 %v5563, %v7884
        %v7911 = vsub.f32 %v5564, %v7884
        %v7912 = vsub.f32 %v5565, %v7884
        %v7913 = vsub.f32 %v5566, %v7884
        %v7914 = vsub.f32 %v5567, %v7884
        %v7915 = vsub.f32 %v5568, %v7884
        %v7916 = vsub.f32 %v5569, %v7884
        %v7917 = vlaneseq
        %v7918 = vshrl.u32 %v7917, 7
        %v7919 = vsub.s32 0, %v7918
        %v7920 = vrot.slane %v7878, %v7919
        %v7921 = vmul.f32 %v7885, %v7920
        %v7922 = vmul.f32 %v7886, %v7920
        %v7923 = vmul.f32 %v7887, %v7920
        %v7924 = vmul.f32 %v7888, %v7920
        %v7925 = vmul.f32 %v7889, %v7920
        %v7926 = vmul.f32 %v7890, %v7920
        %v7927 = vmul.f32 %v7891, %v7920
        %v7928 = vmul.f32 %v7892, %v7920
        %v7929 = vmul.f32 %v7893, %v7920
        %v7930 = vmul.f32 %v7894, %v7920
        %v7931 = vmul.f32 %v7895, %v7920
        %v7932 = vmul.f32 %v7896, %v7920
        %v7933 = vmul.f32 %v7897, %v7920
        %v7934 = vmul.f32 %v7898, %v7920
        %v7935 = vmul.f32 %v7899, %v7920
        %v7936 = vmul.f32 %v7900, %v7920
        %v7937 = vmul.f32 %v7901, %v7920
        %v7938 = vmul.f32 %v7902, %v7920
        %v7939 = vmul.f32 %v7903, %v7920
        %v7940 = vmul.f32 %v7904, %v7920
        %v7941 = vmul.f32 %v7905, %v7920
        %v7942 = vmul.f32 %v7906, %v7920
        %v7943 = vmul.f32 %v7907, %v7920
        %v7944 = vmul.f32 %v7908, %v7920
        %v7945 = vmul.f32 %v7909, %v7920
        %v7946 = vmul.f32 %v7910, %v7920
        %v7947 = vmul.f32 %v7911, %v7920
        %v7948 = vmul.f32 %v7912, %v7920
        %v7949 = vmul.f32 %v7913, %v7920
        %v7950 = vmul.f32 %v7914, %v7920
        %v7951 = vmul.f32 %v7915, %v7920
        %v7952 = vmul.f32 %v7916, %v7920
        %vm7953 = vcmp.ge.f32.partialorder %v7921, 0.0
        %vm7954 = vcmp.ge.f32.partialorder %v7922, 0.0
        %vm7955 = vcmp.ge.f32.partialorder %v7923, 0.0
        %vm7956 = vcmp.ge.f32.partialorder %v7924, 0.0
        %vm7957 = vcmp.ge.f32.partialorder %v7925, 0.0
        %vm7958 = vcmp.ge.f32.partialorder %v7926, 0.0
        %vm7959 = vcmp.ge.f32.partialorder %v7927, 0.0
        %vm7960 = vcmp.ge.f32.partialorder %v7928, 0.0
        %vm7961 = vcmp.ge.f32.partialorder %v7929, 0.0
        %vm7962 = vcmp.ge.f32.partialorder %v7930, 0.0
        %vm7963 = vcmp.ge.f32.partialorder %v7931, 0.0
        %vm7964 = vcmp.ge.f32.partialorder %v7932, 0.0
        %vm7965 = vcmp.ge.f32.partialorder %v7933, 0.0
        %vm7966 = vcmp.ge.f32.partialorder %v7934, 0.0
        %vm7967 = vcmp.ge.f32.partialorder %v7935, 0.0
        %vm7968 = vcmp.ge.f32.partialorder %v7936, 0.0
        %vm7969 = vcmp.ge.f32.partialorder %v7937, 0.0
        %vm7970 = vcmp.ge.f32.partialorder %v7938, 0.0
        %vm7971 = vcmp.ge.f32.partialorder %v7939, 0.0
        %vm7972 = vcmp.ge.f32.partialorder %v7940, 0.0
        %vm7973 = vcmp.ge.f32.partialorder %v7941, 0.0
        %vm7974 = vcmp.ge.f32.partialorder %v7942, 0.0
        %vm7975 = vcmp.ge.f32.partialorder %v7943, 0.0
        %vm7976 = vcmp.ge.f32.partialorder %v7944, 0.0
        %vm7977 = vcmp.ge.f32.partialorder %v7945, 0.0
        %vm7978 = vcmp.ge.f32.partialorder %v7946, 0.0
        %vm7979 = vcmp.ge.f32.partialorder %v7947, 0.0
        %vm7980 = vcmp.ge.f32.partialorder %v7948, 0.0
        %vm7981 = vcmp.ge.f32.partialorder %v7949, 0.0
        %vm7982 = vcmp.ge.f32.partialorder %v7950, 0.0
        %vm7983 = vcmp.ge.f32.partialorder %v7951, 0.0
        %vm7984 = vcmp.ge.f32.partialorder %v7952, 0.0
        %v7985 = vmul.f32 %v7921, 0.2
        %v7986 = vmul.f32 %v7922, 0.2
        %v7987 = vmul.f32 %v7923, 0.2
        %v7988 = vmul.f32 %v7924, 0.2
        %v7989 = vmul.f32 %v7925, 0.2
        %v7990 = vmul.f32 %v7926, 0.2
        %v7991 = vmul.f32 %v7927, 0.2
        %v7992 = vmul.f32 %v7928, 0.2
        %v7993 = vmul.f32 %v7929, 0.2
        %v7994 = vmul.f32 %v7930, 0.2
        %v7995 = vmul.f32 %v7931, 0.2
        %v7996 = vmul.f32 %v7932, 0.2
        %v7997 = vmul.f32 %v7933, 0.2
        %v7998 = vmul.f32 %v7934, 0.2
        %v7999 = vmul.f32 %v7935, 0.2
        %v8000 = vmul.f32 %v7936, 0.2
        %v8001 = vmul.f32 %v7937, 0.2
        %v8002 = vmul.f32 %v7938, 0.2
        %v8003 = vmul.f32 %v7939, 0.2
        %v8004 = vmul.f32 %v7940, 0.2
        %v8005 = vmul.f32 %v7941, 0.2
        %v8006 = vmul.f32 %v7942, 0.2
        %v8007 = vmul.f32 %v7943, 0.2
        %v8008 = vmul.f32 %v7944, 0.2
        %v8009 = vmul.f32 %v7945, 0.2
        %v8010 = vmul.f32 %v7946, 0.2
        %v8011 = vmul.f32 %v7947, 0.2
        %v8012 = vmul.f32 %v7948, 0.2
        %v8013 = vmul.f32 %v7949, 0.2
        %v8014 = vmul.f32 %v7950, 0.2
        %v8015 = vmul.f32 %v7951, 0.2
        %v8016 = vmul.f32 %v7952, 0.2
        %v8017 = vsel %vm7953, %v7921, %v7985
        %v8018 = vsel %vm7954, %v7922, %v7986
        %v8019 = vsel %vm7955, %v7923, %v7987
        %v8020 = vsel %vm7956, %v7924, %v7988
        %v8021 = vsel %vm7957, %v7925, %v7989
        %v8022 = vsel %vm7958, %v7926, %v7990
        %v8023 = vsel %vm7959, %v7927, %v7991
        %v8024 = vsel %vm7960, %v7928, %v7992
        %v8025 = vsel %vm7961, %v7929, %v7993
        %v8026 = vsel %vm7962, %v7930, %v7994
        %v8027 = vsel %vm7963, %v7931, %v7995
        %v8028 = vsel %vm7964, %v7932, %v7996
        %v8029 = vsel %vm7965, %v7933, %v7997
        %v8030 = vsel %vm7966, %v7934, %v7998
        %v8031 = vsel %vm7967, %v7935, %v7999
        %v8032 = vsel %vm7968, %v7936, %v8000
        %v8033 = vsel %vm7969, %v7937, %v8001
        %v8034 = vsel %vm7970, %v7938, %v8002
        %v8035 = vsel %vm7971, %v7939, %v8003
        %v8036 = vsel %vm7972, %v7940, %v8004
        %v8037 = vsel %vm7973, %v7941, %v8005
        %v8038 = vsel %vm7974, %v7942, %v8006
        %v8039 = vsel %vm7975, %v7943, %v8007
        %v8040 = vsel %vm7976, %v7944, %v8008
        %v8041 = vsel %vm7977, %v7945, %v8009
        %v8042 = vsel %vm7978, %v7946, %v8010
        %v8043 = vsel %vm7979, %v7947, %v8011
        %v8044 = vsel %vm7980, %v7948, %v8012
        %v8045 = vsel %vm7981, %v7949, %v8013
        %v8046 = vsel %vm7982, %v7950, %v8014
        %v8047 = vsel %vm7983, %v7951, %v8015
        %v8048 = vsel %vm7984, %v7952, %v8016
        %v8049 = vpack.c.bf16 %v8018, %v8017
        %v8050 = vpack.c.bf16 %v8020, %v8019
        %v8051 = vpack.c.bf16 %v8022, %v8021
        %v8052 = vpack.c.bf16 %v8024, %v8023
        %v8053 = vpack.c.bf16 %v8026, %v8025
        %v8054 = vpack.c.bf16 %v8028, %v8027
        %v8055 = vpack.c.bf16 %v8030, %v8029
        %v8056 = vpack.c.bf16 %v8032, %v8031
        %v8057 = vpack.c.bf16 %v8034, %v8033
        %v8058 = vpack.c.bf16 %v8036, %v8035
        %v8059 = vpack.c.bf16 %v8038, %v8037
        %v8060 = vpack.c.bf16 %v8040, %v8039
        %v8061 = vpack.c.bf16 %v8042, %v8041
        %v8062 = vpack.c.bf16 %v8044, %v8043
        %v8063 = vpack.c.bf16 %v8046, %v8045
        %v8064 = vpack.c.bf16 %v8048, %v8047
        %v8081 = vunpack.c.l.b16 %v8049
        %v8082 = vunpack.c.h.b16 %v8049
        %v8083 = vunpack.c.l.b16 %v8050
        %v8084 = vunpack.c.h.b16 %v8050
        %v8085 = vunpack.c.l.b16 %v8051
        %v8086 = vunpack.c.h.b16 %v8051
        %v8087 = vunpack.c.l.b16 %v8052
        %v8088 = vunpack.c.h.b16 %v8052
        %v8089 = vunpack.c.l.b16 %v8053
        %v8090 = vunpack.c.h.b16 %v8053
        %v8091 = vunpack.c.l.b16 %v8054
        %v8092 = vunpack.c.h.b16 %v8054
        %v8093 = vunpack.c.l.b16 %v8055
        %v8094 = vunpack.c.h.b16 %v8055
        %v8095 = vunpack.c.l.b16 %v8056
        %v8096 = vunpack.c.h.b16 %v8056
        %v8097 = vunpack.c.l.b16 %v8057
        %v8098 = vunpack.c.h.b16 %v8057
        %v8099 = vunpack.c.l.b16 %v8058
        %v8100 = vunpack.c.h.b16 %v8058
        %v8101 = vunpack.c.l.b16 %v8059
        %v8102 = vunpack.c.h.b16 %v8059
        %v8103 = vunpack.c.l.b16 %v8060
        %v8104 = vunpack.c.h.b16 %v8060
        %v8105 = vunpack.c.l.b16 %v8061
        %v8106 = vunpack.c.h.b16 %v8061
        %v8107 = vunpack.c.l.b16 %v8062
        %v8108 = vunpack.c.h.b16 %v8062
        %v8109 = vunpack.c.l.b16 %v8063
        %v8110 = vunpack.c.h.b16 %v8063
        %v8111 = vunpack.c.l.b16 %v8064
        %v8112 = vunpack.c.h.b16 %v8064
        %v8113 = vpack.c.b16 %v8081, %v8081
        %v8114 = vpack.c.b16 %v8082, %v8082
        %v8115 = vpack.c.b16 %v8083, %v8083
        %v8116 = vpack.c.b16 %v8084, %v8084
        %v8117 = vpack.c.b16 %v8085, %v8085
        %v8118 = vpack.c.b16 %v8086, %v8086
        %v8119 = vpack.c.b16 %v8087, %v8087
        %v8120 = vpack.c.b16 %v8088, %v8088
        %v8121 = vpack.c.b16 %v8089, %v8089
        %v8122 = vpack.c.b16 %v8090, %v8090
        %v8123 = vpack.c.b16 %v8091, %v8091
        %v8124 = vpack.c.b16 %v8092, %v8092
        %v8125 = vpack.c.b16 %v8093, %v8093
        %v8126 = vpack.c.b16 %v8094, %v8094
        %v8127 = vpack.c.b16 %v8095, %v8095
        %v8128 = vpack.c.b16 %v8096, %v8096
        %v8129 = vpack.c.b16 %v8097, %v8097
        %v8130 = vpack.c.b16 %v8098, %v8098
        %v8131 = vpack.c.b16 %v8099, %v8099
        %v8132 = vpack.c.b16 %v8100, %v8100
        %v8133 = vpack.c.b16 %v8101, %v8101
        %v8134 = vpack.c.b16 %v8102, %v8102
        %v8135 = vpack.c.b16 %v8103, %v8103
        %v8136 = vpack.c.b16 %v8104, %v8104
        %v8137 = vpack.c.b16 %v8105, %v8105
        %v8138 = vpack.c.b16 %v8106, %v8106
        %v8139 = vpack.c.b16 %v8107, %v8107
        %v8140 = vpack.c.b16 %v8108, %v8108
        %v8141 = vpack.c.b16 %v8109, %v8109
        %v8142 = vpack.c.b16 %v8110, %v8110
        %v8143 = vpack.c.b16 %v8111, %v8111
        %v8144 = vpack.c.b16 %v8112, %v8112
        %8177 = vst [vmem:[%s230] sm:$0xf] %v8113
        %8178 = vst [vmem:[%s230 + $0x4] sm:$0xf] %v8114
        %8179 = vst [vmem:[%s230 + $0x8] sm:$0xf] %v8115
        %8180 = vst [vmem:[%s230 + $0xc] sm:$0xf] %v8116
        %8181 = vst [vmem:[%s230 + $0x10] sm:$0xf] %v8117
        %8182 = vst [vmem:[%s230 + $0x14] sm:$0xf] %v8118
        %8183 = vst [vmem:[%s230 + $0x18] sm:$0xf] %v8119
        %8184 = vst [vmem:[%s230 + $0x1c] sm:$0xf] %v8120
        %8185 = vst [vmem:[%s230 + $0x20] sm:$0xf] %v8121
        %8186 = vst [vmem:[%s230 + $0x24] sm:$0xf] %v8122
        %8187 = vst [vmem:[%s230 + $0x28] sm:$0xf] %v8123
        %8188 = vst [vmem:[%s230 + $0x2c] sm:$0xf] %v8124
        %8189 = vst [vmem:[%s230 + $0x30] sm:$0xf] %v8125
        %8190 = vst [vmem:[%s230 + $0x34] sm:$0xf] %v8126
        %8191 = vst [vmem:[%s230 + $0x38] sm:$0xf] %v8127
        %8192 = vst [vmem:[%s230 + $0x3c] sm:$0xf] %v8128
        %8193 = vst [vmem:[%s230 + $0x40] sm:$0xf] %v8129
        %8194 = vst [vmem:[%s230 + $0x44] sm:$0xf] %v8130
        %8195 = vst [vmem:[%s230 + $0x48] sm:$0xf] %v8131
        %8196 = vst [vmem:[%s230 + $0x4c] sm:$0xf] %v8132
        %8197 = vst [vmem:[%s230 + $0x50] sm:$0xf] %v8133
        %8198 = vst [vmem:[%s230 + $0x54] sm:$0xf] %v8134
        %8199 = vst [vmem:[%s230 + $0x58] sm:$0xf] %v8135
        %8200 = vst [vmem:[%s230 + $0x5c] sm:$0xf] %v8136
        %8201 = vst [vmem:[%s230 + $0x60] sm:$0xf] %v8137
        %8202 = vst [vmem:[%s230 + $0x64] sm:$0xf] %v8138
        %8203 = vst [vmem:[%s230 + $0x68] sm:$0xf] %v8139
        %8204 = vst [vmem:[%s230 + $0x6c] sm:$0xf] %v8140
        %8205 = vst [vmem:[%s230 + $0x70] sm:$0xf] %v8141
        %8206 = vst [vmem:[%s230 + $0x74] sm:$0xf] %v8142
        %8207 = vst [vmem:[%s230 + $0x78] sm:$0xf] %v8143
        %8208 = vst [vmem:[%s230 + $0x7c] sm:$0xf] %v8144
        %s8209 = sand.u32 %s119, 1
        %s8210 = scalar_lea.sflag [#allocation5], %s8209
        %s8211 = sand.u32 %s119, 1
        %s8212 = smul.addr %s8211, 128
        %s8213 = scalar_lea.vmem [#allocation8], %s8212
        // Predicated region
        $region45: #{tpu_custom_call.1} parent=35 // pred_check
          %p8214 = pneg %p129
        $region46: #{tpu_custom_call.1} parent=35 // pred_check_branch
          %8216 = sbr.rel (%p8214) target = $region48
        $region47: #{tpu_custom_call.1} parent=35 // pred_region
          %s8218 = ssub.s32 2048, 2048
          %8219 = vsyncadd %s8210, %s8218
          %s8220 = smul.addr %s22, 32
          %s8221 = smul.addr %s8220, 64
          %s8222 = scalar_lea.hbm %s4, %s8221
          %s8223 = sshll.u32 %s8213, 4
          %s8224 = int_to_ptr.vmem [resolvable:$true] %s8223
          %8229 = dma.vmem_to_hbm [thread:$0]  %s8224, 2048, %s8222, %s8210, 64, 64, 4
        $region48: #{tpu_custom_call.1} parent=35 // pred_fallthru
          _
      $region36: #{tpu_custom_call.1} parent=5 // pred_fallthru
        _
      %p8230 = scmp.le.s32.totalorder 2, %s17
      // Predicated region
      $region49: #{tpu_custom_call.1} parent=5 // pred_check
        %p8231 = pneg %p8230
      $region50: #{tpu_custom_call.1} parent=5 // pred_check_branch
        %8233 = sbr.rel (%p8231) target = $region52
      $region51: #{tpu_custom_call.1} parent=5 // pred_region
        %s8234 = ssub.s32 %s17, 2
        // Predicated region
        $region53: #{tpu_custom_call.1} parent=51 // pred_check
          %p8235 = pneg %p135
        $region54: #{tpu_custom_call.1} parent=51 // pred_check_branch
          %8237 = sbr.rel (%p8235) target = $region56
        $region55: #{tpu_custom_call.1} parent=51 // pred_region
          %s8238 = sand.u32 %s120, 1
          %s8239 = scalar_lea.sflag [#allocation5], %s8238
          %s8240 = sand.u32 %s120, 1
          %s8241 = smul.addr %s8240, 128
          %s8242 = scalar_lea.vmem [#allocation8], %s8241
          %8243 = dma.done %s8239, 2048
        $region56: #{tpu_custom_call.1} parent=51 // pred_fallthru
          _
      $region52: #{tpu_custom_call.1} parent=5 // pred_fallthru
        _
    $region6: #{tpu_custom_call.1} parent=1 // loop_footer
      %s21 = sadd.s32 1, %s17
    $region7: #{tpu_custom_call.1} parent=1 // loop_footer_branch
      %16 = sbr.rel target = $region3
    $region8: #{tpu_custom_call.1} parent=1 // loop_exit
      _
    %8244 = vsyncpa [#allocation4], 1
    %s8245 = scalar_lea.sflag [#allocation4], 1
    %8246 = vsyncpa %s8245, 1
    %8247 = vsyncpa [#allocation7], 1
    %8248 = vsyncpa [#allocation5], 1
    %s8249 = scalar_lea.sflag [#allocation5], 1
    %8250 = vsyncpa %s8249, 1

</llo_original>
